<compile_context>
chip_gen: v7x
topology: tpu7x:2x2x1
jax: 0.10.0
libtpu: 0.0.40
codegen_flags: <defaults>
</compile_context>

<pallas_src>
import functools
import numpy as np
import jax
import jax.numpy as jnp
from jax import lax
from jax.experimental import pallas as pl
from jax.experimental.pallas import tpu as pltpu

_SQRT2 = 1.4142135623730951
_EPS = 1e-5
_SUBLANE = 8


def _gelu_exact(x):
    # torch.nn.GELU() default is the exact (erf-based) GELU.
    return 0.5 * x * (1.0 + lax.erf(x / _SQRT2))


def _tap_masks(m_ref, *, with_depth):
    """Hoisted boundary predicates -> one (1, S_slab) bool (or None) per (dd, dh, dw) tap.

    m_ref rows (int32, nonzero == true), per flat voxel of the current slab (GLOBAL coords):
      0: h >= 1 (dh==-1)   1: h <= H-2 (dh==+1)   2: w >= 1 (dw==-1)   3: w <= W-2 (dw==+1)
      4: d >= 1 (dd==-1)   5: d <= D-2 (dd==+1)   -- depth rows only used for conv2.
    Conv1's depth padding is already baked into the zero-padded shifted input views, so
    with_depth=False and pure-depth taps need no select at all.
    """
    sel_h = {-1: m_ref[0:1, :] != 0, 0: None, 1: m_ref[1:2, :] != 0}
    sel_w = {-1: m_ref[2:3, :] != 0, 0: None, 1: m_ref[3:4, :] != 0}
    if with_depth:
        sel_d = {-1: m_ref[4:5, :] != 0, 0: None, 1: m_ref[5:6, :] != 0}
    else:
        sel_d = {-1: None, 0: None, 1: None}

    def _and(a, b):
        if a is None:
            return b
        if b is None:
            return a
        return jnp.logical_and(a, b)

    return {(dd, dh, dw): _and(_and(sel_h[dh], sel_w[dw]), sel_d[dd])
            for dd in (-1, 0, 1) for dh in (-1, 0, 1) for dw in (-1, 0, 1)}


def _fill_im2col(p_ref, views, masks, W):
    """Write the fused-K im2col for a 3x3x3 'same' conv into p_ref (27*C, S_slab).

    views = (v_lo, v_mid, v_hi): (C, S_slab) activations at depth offsets -1/0/+1 of every output
    voxel (global depth-shifted slabs, so slab halos come for free).  Row tap*C + c, column p ends
    up holding views[dd][c, p + dh*W + dw] when the true 3-D neighbour of output voxel p is inside
    the volume, else 0 (the conv's zero padding).  In-plane flat shifts that cross a plane (or
    slab) boundary are always h/w-masked, so clipping the shifted slice and zero-filling the
    remainder is exact -- including at slab edges.
    """
    C = views[0].shape[0]
    S = p_ref.shape[1]
    tap = 0
    for dd in (-1, 0, 1):
        src = views[dd + 1]
        for dh in (-1, 0, 1):
            for dw in (-1, 0, 1):
                off = dh * W + dw
                mk = masks[(dd, dh, dw)]
                r0, r1 = tap * C, (tap + 1) * C
                if off == 0:
                    v = src if mk is None else jnp.where(mk, src, 0)
                    p_ref[r0:r1, :] = v.astype(p_ref.dtype)
                elif off > 0:
                    span = S - off
                    v = src[:, off:]
                    if mk is not None:
                        v = jnp.where(mk[:, :span], v, 0)
                    p_ref[r0:r1, 0:span] = v.astype(p_ref.dtype)
                    p_ref[r0:r1, span:S] = jnp.zeros((C, off), p_ref.dtype)
                else:  # off < 0
                    span = S + off
                    v = src[:, :span]
                    if mk is not None:
                        v = jnp.where(mk[:, -off:], v, 0)
                    p_ref[r0:r1, -off:S] = v.astype(p_ref.dtype)
                    p_ref[r0:r1, 0:-off] = jnp.zeros((C, -off), p_ref.dtype)
                tap += 1


def _conv1_stats_kernel(xlo_ref, xmid_ref, xhi_ref, m_ref, w1_ref,
                        h1_ref, stats_ref, p_ref, acc_ref, *, W):
    # xlo/xmid/xhi : (1, Cpi, Ssl) depth-shifted input slabs     w1 : (Cpo, 27*Cpi)
    # h1           : (1, Cpo, Ssl) pre-norm conv1 output slab    stats : (1, Cpo, 2) sum/sumsq
    # p            : (27*Cpi, Ssl) im2col scratch                acc : (Cpo, 2) f32 accumulator
    s_idx = pl.program_id(1)
    masks = _tap_masks(m_ref, with_depth=False)
    _fill_im2col(p_ref, (xlo_ref[0], xmid_ref[0], xhi_ref[0]), masks, W)

    # conv1 as one fused-K MXU matmul; bias dropped (cancelled exactly by InstanceNorm).
    h1 = jnp.dot(w1_ref[...], p_ref[...], preferred_element_type=jnp.float32)
    h1_ref[0] = h1.astype(h1_ref.dtype)

    # per-channel sum / sum-of-squares accumulated across the slab ("arbitrary") axis
    @pl.when(s_idx == 0)
    def _init():
        acc_ref[...] = jnp.zeros_like(acc_ref)

    acc_ref[:, 0:1] += jnp.sum(h1, axis=1, keepdims=True)
    acc_ref[:, 1:2] += jnp.sum(h1 * h1, axis=1, keepdims=True)
    stats_ref[0] = acc_ref[...]


def _norm_conv2_kernel(h1lo_ref, h1mid_ref, h1hi_ref, m_ref, mean_ref, istd_ref,
                       w2_ref, b2_ref, o_ref, p_ref, *, W):
    # h1lo/mid/hi : (1, Cpo, Ssl) depth-shifted conv1 slabs   mean/istd : (1, Cpo, 1)
    # w2 : (Cpo, 27*Cpo)   b2 : (Cpo, 1)   o : (1, Cpo, Ssl)   p : (27*Cpo, Ssl) im2col scratch
    masks = _tap_masks(m_ref, with_depth=True)
    mean = mean_ref[0]
    istd = istd_ref[0]

    def norm_gelu(ref):
        return _gelu_exact((ref[0].astype(jnp.float32) - mean) * istd)

    y_lo, y_mid, y_hi = norm_gelu(h1lo_ref), norm_gelu(h1mid_ref), norm_gelu(h1hi_ref)

    _fill_im2col(p_ref, (y_lo, y_mid, y_hi), masks, W)
    h2 = jnp.dot(w2_ref[...], p_ref[...], preferred_element_type=jnp.float32) + b2_ref[...]
    o_ref[0] = (_gelu_exact(h2) + y_mid).astype(o_ref.dtype)


def _round_up(a, m):
    return ((a + m - 1) // m) * m


def _vmem_budget_bytes():
    try:
        cap = pltpu.get_tpu_info().vmem_capacity_bytes       # 64 MiB v7x, 128 MiB v5e/v6e
    except Exception:
        cap = 64 << 20                                        # assume the smallest generation
    return int(cap * 3 // 4)                                  # headroom for compiler scratch


def _pass_vmem_bytes(c_in_p, c_out_p, ssl, x_bytes, out_bytes, im2col_bytes):
    common = 2 * 8 * ssl * 4                                  # boundary-mask block (dbl-buffered)
    p1 = (common
          + 2 * 3 * c_in_p * ssl * x_bytes                    # 3 shifted input views
          + 2 * c_out_p * ssl * 4                             # h1 output slab (f32)
          + c_out_p * 27 * c_in_p * im2col_bytes              # weights
          + 27 * c_in_p * ssl * im2col_bytes)                 # im2col scratch
    p2 = (common
          + 2 * 3 * c_out_p * ssl * 4                         # 3 shifted h1 views (f32)
          + 2 * c_out_p * ssl * out_bytes                     # output slab
          + c_out_p * 27 * c_out_p * im2col_bytes             # weights
          + 27 * c_out_p * ssl * im2col_bytes)                # im2col scratch
    return p1, p2


def _pick_depth_tile(D, H, W, c_in_p, c_out_p, x_bytes, out_bytes, im2col_bytes, budget):
    valid, fitting = [], []
    for dt in range(1, D + 1):
        if D % dt:
            continue
        ssl = dt * H * W
        if (D // dt) > 1 and ssl % 128:
            continue   # slab blocks must keep the lane (last) dim a multiple of 128
        valid.append(dt)
        if max(_pass_vmem_bytes(c_in_p, c_out_p, ssl, x_bytes, out_bytes, im2col_bytes)) <= budget:
            fitting.append(dt)
    if fitting:
        return max(fitting)
    return min(valid) if valid else D


def conv_ins_block(x, w1, b1, w2, b2, *, depth_tile=None, im2col_dtype=jnp.bfloat16):
    """ConvInsBlock forward.  x: (N, Cin, D, H, W); w1: (27, Cin, Cout); w2: (27, Cout, Cout).

    Conv weights are the flattened (kd, kh, kw) taps of a torch Conv3d weight:
      weight.permute(2, 3, 4, 1, 0).reshape(27, Cin, Cout).
    b1 is accepted for API parity but unused: InstanceNorm3d (affine=False) subtracts the
    per-channel mean right after conv1, which cancels the bias exactly.
    Returns (N, Cout, D, H, W).
    """
    del b1
    N, Cin, D, H, W = x.shape
    Cout = w1.shape[-1]
    HW = H * W
    S = D * HW

    # channel padding to the sublane tile -> every im2col tap slab starts 8-row aligned
    cin_p = _round_up(Cin, _SUBLANE)
    cout_p = _round_up(Cout, _SUBLANE)

    x_bytes = jnp.dtype(x.dtype).itemsize
    im2col_bytes = jnp.dtype(im2col_dtype).itemsize
    budget = _vmem_budget_bytes()
    if depth_tile is None:
        depth_tile = _pick_depth_tile(D, H, W, cin_p, cout_p, x_bytes, x_bytes,
                                      im2col_bytes, budget // 2)
    if D % depth_tile:
        raise ValueError(f"depth_tile={depth_tile} must divide D={D}")
    n_slab = D // depth_tile
    ssl = depth_tile * HW
    if n_slab > 1 and ssl % 128:
        raise ValueError("depth_tile*H*W must be a multiple of 128 when tiling the depth axis")

    p1_need, p2_need = _pass_vmem_bytes(cin_p, cout_p, ssl, x_bytes, x_bytes, im2col_bytes)
    vmem1 = int(min(budget, max(32 << 20, 2 * p1_need)))
    vmem2 = int(min(budget, max(32 << 20, 2 * p2_need)))

    # --- inputs: pad channels, flatten spatial, build +/-1-depth shifted (zero padded) views ---
    xp = x if cin_p == Cin else jnp.pad(x, ((0, 0), (0, cin_p - Cin), (0, 0), (0, 0), (0, 0)))
    xp = xp.reshape(N, cin_p, D, HW)
    xpad = jnp.pad(xp, ((0, 0), (0, 0), (1, 1), (0, 0)))
    x_lo = xpad[:, :, 0:D].reshape(N, cin_p, S)        # value at depth d-1 (zero outside volume)
    x_mid = xp.reshape(N, cin_p, S)
    x_hi = xpad[:, :, 2:D + 2].reshape(N, cin_p, S)    # value at depth d+1 (zero outside volume)

    # --- fused-matmul weights (column = tap*Cpad + c), zero padded, im2col dtype ---
    w1p = jnp.zeros((27, cin_p, cout_p), jnp.float32).at[:, :Cin, :Cout].set(
        w1.astype(jnp.float32))
    w1m = w1p.reshape(27 * cin_p, cout_p).T.astype(im2col_dtype)        # (Cpo, 27*Cpi)
    w2p = jnp.zeros((27, cout_p, cout_p), jnp.float32).at[:, :Cout, :Cout].set(
        w2.astype(jnp.float32))
    w2m = w2p.reshape(27 * cout_p, cout_p).T.astype(im2col_dtype)       # (Cpo, 27*Cpo)
    b2c = jnp.zeros((cout_p, 1), jnp.float32).at[:Cout, 0].set(b2.astype(jnp.float32))

    # --- hoistable boundary predicates per flat voxel (GLOBAL coords, sliced per slab) ---
    di, hi, wi = np.meshgrid(np.arange(D), np.arange(H), np.arange(W), indexing="ij")
    di, hi, wi = di.reshape(-1), hi.reshape(-1), wi.reshape(-1)
    masks_np = np.zeros((8, S), np.int32)
    masks_np[0] = hi >= 1
    masks_np[1] = hi <= H - 2
    masks_np[2] = wi >= 1
    masks_np[3] = wi <= W - 2
    masks_np[4] = di >= 1
    masks_np[5] = di <= D - 2
    masks = jnp.asarray(masks_np)

    # ---------------- pass 1: conv1 + per-channel sum / sumsq ----------------
    h1, stats = pl.pallas_call(
        functools.partial(_conv1_stats_kernel, W=W),
        out_shape=(jax.ShapeDtypeStruct((N, cout_p, S), jnp.float32),
                   jax.ShapeDtypeStruct((N, cout_p, 2), jnp.float32)),
        grid_spec=pltpu.PrefetchScalarGridSpec(
            num_scalar_prefetch=0,
            grid=(N, n_slab),
            in_specs=[
                pl.BlockSpec((1, cin_p, ssl), lambda n, s: (n, 0, s)),
                pl.BlockSpec((1, cin_p, ssl), lambda n, s: (n, 0, s)),
                pl.BlockSpec((1, cin_p, ssl), lambda n, s: (n, 0, s)),
                pl.BlockSpec((8, ssl), lambda n, s: (0, s)),
                pl.BlockSpec((cout_p, 27 * cin_p), lambda n, s: (0, 0)),
            ],
            out_specs=(
                pl.BlockSpec((1, cout_p, ssl), lambda n, s: (n, 0, s)),
                pl.BlockSpec((1, cout_p, 2), lambda n, s: (n, 0, 0)),
            ),
            scratch_shapes=[
                pltpu.VMEM((27 * cin_p, ssl), im2col_dtype),    # the single im2col scratch
                pltpu.VMEM((cout_p, 2), jnp.float32),           # sum / sumsq accumulator
            ],
        ),
        compiler_params=pltpu.CompilerParams(
            dimension_semantics=("parallel", "arbitrary"),
            vmem_limit_bytes=vmem1),
    )(x_lo, x_mid, x_hi, masks, w1m)

    # ---------------- InstanceNorm statistics (tiny, plain JAX) ----------------
    nvox = float(S)
    mean = stats[:, :, 0] / nvox
    var = jnp.maximum(stats[:, :, 1] / nvox - mean * mean, 0.0)
    istd = lax.rsqrt(var + _EPS)
    mean = mean[:, :, None].astype(jnp.float32)
    istd = istd[:, :, None].astype(jnp.float32)

    # +/-1-depth shifted views of h1 (zero padded; out-of-volume taps are masked in-kernel)
    h1r = h1.reshape(N, cout_p, D, HW)
    h1pad = jnp.pad(h1r, ((0, 0), (0, 0), (1, 1), (0, 0)))
    h1_lo = h1pad[:, :, 0:D].reshape(N, cout_p, S)
    h1_hi = h1pad[:, :, 2:D + 2].reshape(N, cout_p, S)
    h1_mid = h1

    # ---------------- pass 2: normalize + GELU + conv2 + GELU + residual ----------------
    out = pl.pallas_call(
        functools.partial(_norm_conv2_kernel, W=W),
        out_shape=jax.ShapeDtypeStruct((N, cout_p, S), x.dtype),
        grid_spec=pltpu.PrefetchScalarGridSpec(
            num_scalar_prefetch=0,
            grid=(N, n_slab),
            in_specs=[
                pl.BlockSpec((1, cout_p, ssl), lambda n, s: (n, 0, s)),
                pl.BlockSpec((1, cout_p, ssl), lambda n, s: (n, 0, s)),
                pl.BlockSpec((1, cout_p, ssl), lambda n, s: (n, 0, s)),
                pl.BlockSpec((8, ssl), lambda n, s: (0, s)),
                pl.BlockSpec((1, cout_p, 1), lambda n, s: (n, 0, 0)),
                pl.BlockSpec((1, cout_p, 1), lambda n, s: (n, 0, 0)),
                pl.BlockSpec((cout_p, 27 * cout_p), lambda n, s: (0, 0)),
                pl.BlockSpec((cout_p, 1), lambda n, s: (0, 0)),
            ],
            out_specs=pl.BlockSpec((1, cout_p, ssl), lambda n, s: (n, 0, s)),
            scratch_shapes=[pltpu.VMEM((27 * cout_p, ssl), im2col_dtype)],
        ),
        compiler_params=pltpu.CompilerParams(
            dimension_semantics=("parallel", "parallel"),   # slab axis parallel too (v7x 2 TCs)
            vmem_limit_bytes=vmem2),
    )(h1_lo, h1_mid, h1_hi, masks, mean, istd, w2m, b2c)

    return out.reshape(N, cout_p, D, H, W)[:, :Cout]


def _reference(x, w1, b1, w2, b2):
    """Pure-JAX reference (same math as the PyTorch module) for the correctness check."""
    Cin = x.shape[1]
    Cout = w1.shape[-1]
    xt = jnp.transpose(x, (0, 2, 3, 4, 1))
    dn = ("NDHWC", "DHWIO", "NDHWC")
    hp = lax.conv_general_dilated(
        xt, w1.reshape(3, 3, 3, Cin, Cout), (1, 1, 1), "SAME",
        dimension_numbers=dn, precision=lax.Precision.HIGHEST) + b1
    mean = jnp.mean(hp, axis=(1, 2, 3), keepdims=True)
    var = jnp.mean((hp - mean) ** 2, axis=(1, 2, 3), keepdims=True)
    y = (hp - mean) / jnp.sqrt(var + _EPS)
    y = _gelu_exact(y)
    z = lax.conv_general_dilated(
        y, w2.reshape(3, 3, 3, Cout, Cout), (1, 1, 1), "SAME",
        dimension_numbers=dn, precision=lax.Precision.HIGHEST) + b2
    out = _gelu_exact(z) + y
    return jnp.transpose(out, (0, 4, 1, 2, 3))


if __name__ == "__main__":
    N, Cin, Cout = 2, 4, 8
    D = H = W = 16

    key = jax.random.PRNGKey(0)
    k_x, k_w1, k_b1, k_w2, k_b2 = jax.random.split(key, 5)

    x = jax.random.normal(k_x, (N, Cin, D, H, W), jnp.float32)
    # torch Conv3d weight (Cout, Cin, 3, 3, 3) -> permute(2, 3, 4, 1, 0).reshape(27, Cin, Cout)
    w1 = 0.1 * jax.random.normal(k_w1, (27, Cin, Cout), jnp.float32)
    b1 = 0.1 * jax.random.normal(k_b1, (Cout,), jnp.float32)
    w2 = 0.1 * jax.random.normal(k_w2, (27, Cout, Cout), jnp.float32)
    b2 = 0.1 * jax.random.normal(k_b2, (Cout,), jnp.float32)

    # depth_tile=4 -> 4 depth slabs: exercises the slab halos, the cross-slab sum/sumsq
    # accumulator and the channel padding (Cin=4 -> 8) on top of the batch grid axis.
    fwd = jax.jit(functools.partial(conv_ins_block, depth_tile=4))
    out = jax.block_until_ready(fwd(x, w1, b1, w2, b2))
    ref = jax.block_until_ready(_reference(x, w1, b1, w2, b2))

    # bf16 im2col + bf16 weights (f32 accumulation) => compare at bf16-level tolerance; genuine
    # indexing / masking bugs would show up as O(1) errors, far above this.
    np.testing.assert_allclose(np.asarray(out), np.asarray(ref), rtol=5e-2, atol=5e-2)
    assert out.shape == (N, Cout, D, H, W)
    print("KERNEL_OK")
</pallas_src>

<mosaic_0001>
module attributes {stable_mosaic.version = 11 : i64} {
  func.func @_conv1_stats_kernel(%arg0: i32, %arg1: i32, %arg2: memref<1x8x1024xf32, #tpu.memory_space<vmem>>, %arg3: memref<1x8x1024xf32, #tpu.memory_space<vmem>>, %arg4: memref<1x8x1024xf32, #tpu.memory_space<vmem>>, %arg5: memref<8x1024xi32, #tpu.memory_space<vmem>>, %arg6: memref<8x216xbf16, #tpu.memory_space<vmem>>, %arg7: memref<1x8x1024xf32, #tpu.memory_space<vmem>>, %arg8: memref<1x8x2xf32, #tpu.memory_space<vmem>>, %arg9: memref<216x1024xbf16, #tpu.memory_space<vmem>>, %arg10: memref<8x2xf32, #tpu.memory_space<vmem>>) attributes {dimension_semantics = [#tpu.dimension_semantics<parallel>, #tpu.dimension_semantics<arbitrary>], iteration_bounds = array<i64: 2, 4>, scalar_prefetch = 0 : i64, scratch_operands = 2 : i64, tpu.core_type = #tpu.core_type<tc>, window_params = [{transform_indices = @transform_0, window_bounds = array<i64: 1, 8, 1024>}, {transform_indices = @transform_1, window_bounds = array<i64: 1, 8, 1024>}, {transform_indices = @transform_2, window_bounds = array<i64: 1, 8, 1024>}, {transform_indices = @transform_3, window_bounds = array<i64: 8, 1024>}, {pipeline_mode = #tpu.pipeline_mode<synchronous>, transform_indices = @transform_4, window_bounds = array<i64: 8, 216>}, {transform_indices = @transform_5, window_bounds = array<i64: 1, 8, 1024>}, {transform_indices = @transform_6, window_bounds = array<i64: 1, 8, 2>}]} {
    %c0 = arith.constant 0 : index
    %c0_0 = arith.constant 0 : index
    %0 = vector.load %arg5[%c0, %c0_0] : memref<8x1024xi32, #tpu.memory_space<vmem>>, vector<1x1024xi32>
    %c0_i32 = arith.constant 0 : i32
    %1 = vector.broadcast %c0_i32 : i32 to vector<1x1024xi32>
    %2 = arith.cmpi ne, %0, %1 : vector<1x1024xi32>
    %c1 = arith.constant 1 : index
    %c0_1 = arith.constant 0 : index
    %3 = vector.load %arg5[%c1, %c0_1] : memref<8x1024xi32, #tpu.memory_space<vmem>>, vector<1x1024xi32>
    %c0_i32_2 = arith.constant 0 : i32
    %4 = vector.broadcast %c0_i32_2 : i32 to vector<1x1024xi32>
    %5 = arith.cmpi ne, %3, %4 : vector<1x1024xi32>
    %c2 = arith.constant 2 : index
    %c0_3 = arith.constant 0 : index
    %6 = vector.load %arg5[%c2, %c0_3] : memref<8x1024xi32, #tpu.memory_space<vmem>>, vector<1x1024xi32>
    %c0_i32_4 = arith.constant 0 : i32
    %7 = vector.broadcast %c0_i32_4 : i32 to vector<1x1024xi32>
    %8 = arith.cmpi ne, %6, %7 : vector<1x1024xi32>
    %c3 = arith.constant 3 : index
    %c0_5 = arith.constant 0 : index
    %9 = vector.load %arg5[%c3, %c0_5] : memref<8x1024xi32, #tpu.memory_space<vmem>>, vector<1x1024xi32>
    %c0_i32_6 = arith.constant 0 : i32
    %10 = vector.broadcast %c0_i32_6 : i32 to vector<1x1024xi32>
    %11 = arith.cmpi ne, %9, %10 : vector<1x1024xi32>
    %12 = arith.andi %2, %8 : vector<1x1024xi1>
    %13 = arith.andi %2, %11 : vector<1x1024xi1>
    %14 = arith.andi %5, %8 : vector<1x1024xi1>
    %15 = arith.andi %5, %11 : vector<1x1024xi1>
    %16 = arith.andi %2, %8 : vector<1x1024xi1>
    %17 = arith.andi %2, %11 : vector<1x1024xi1>
    %18 = arith.andi %5, %8 : vector<1x1024xi1>
    %19 = arith.andi %5, %11 : vector<1x1024xi1>
    %20 = arith.andi %2, %8 : vector<1x1024xi1>
    %21 = arith.andi %2, %11 : vector<1x1024xi1>
    %22 = arith.andi %5, %8 : vector<1x1024xi1>
    %23 = arith.andi %5, %11 : vector<1x1024xi1>
    %c0_7 = arith.constant 0 : index
    %c0_8 = arith.constant 0 : index
    %c0_9 = arith.constant 0 : index
    %24 = vector.load %arg2[%c0_7, %c0_8, %c0_9] : memref<1x8x1024xf32, #tpu.memory_space<vmem>>, vector<1x8x1024xf32>
    %25 = vector.shape_cast %24 : vector<1x8x1024xf32> to vector<8x1024xf32>
    %c0_10 = arith.constant 0 : index
    %c0_11 = arith.constant 0 : index
    %c0_12 = arith.constant 0 : index
    %26 = vector.load %arg3[%c0_10, %c0_11, %c0_12] : memref<1x8x1024xf32, #tpu.memory_space<vmem>>, vector<1x8x1024xf32>
    %27 = vector.shape_cast %26 : vector<1x8x1024xf32> to vector<8x1024xf32>
    %c0_13 = arith.constant 0 : index
    %c0_14 = arith.constant 0 : index
    %c0_15 = arith.constant 0 : index
    %28 = vector.load %arg4[%c0_13, %c0_14, %c0_15] : memref<1x8x1024xf32, #tpu.memory_space<vmem>>, vector<1x8x1024xf32>
    %29 = vector.shape_cast %28 : vector<1x8x1024xf32> to vector<8x1024xf32>
    %30 = vector.extract_strided_slice %25 {offsets = [0, 0], sizes = [8, 1007], strides = [1, 1]} : vector<8x1024xf32> to vector<8x1007xf32>
    %31 = vector.extract_strided_slice %12 {offsets = [0, 17], sizes = [1, 1007], strides = [1, 1]} : vector<1x1024xi1> to vector<1x1007xi1>
    %c0_i32_16 = arith.constant 0 : i32
    %32 = arith.sitofp %c0_i32_16 : i32 to f32
    %33 = vector.shape_cast %31 : vector<1x1007xi1> to vector<1x1007xi1>
    %34 = vector.broadcast %33 : vector<1x1007xi1> to vector<8x1007xi1>
    %35 = vector.broadcast %32 : f32 to vector<8x1007xf32>
    %36 = arith.select %34, %30, %35 : vector<8x1007xi1>, vector<8x1007xf32>
    %37 = arith.truncf %36 : vector<8x1007xf32> to vector<8x1007xbf16>
    %c0_17 = arith.constant 0 : index
    %c17 = arith.constant 17 : index
    %38 = vector.load %arg9[%c0_17, %c17] : memref<216x1024xbf16, #tpu.memory_space<vmem>>, vector<8x1007xbf16>
    tpu.vector_store %arg9[%c0_17, %c17], %37 {strides = array<i32>} : memref<216x1024xbf16, #tpu.memory_space<vmem>>, vector<8x1007xbf16>,
    %cst = arith.constant 0.000000e+00 : bf16
    %39 = vector.broadcast %cst : bf16 to vector<8x17xbf16>
    %c0_18 = arith.constant 0 : index
    %c0_19 = arith.constant 0 : index
    %40 = vector.load %arg9[%c0_18, %c0_19] : memref<216x1024xbf16, #tpu.memory_space<vmem>>, vector<8x17xbf16>
    tpu.vector_store %arg9[%c0_18, %c0_19], %39 {strides = array<i32>} : memref<216x1024xbf16, #tpu.memory_space<vmem>>, vector<8x17xbf16>,
    %41 = vector.extract_strided_slice %25 {offsets = [0, 0], sizes = [8, 1008], strides = [1, 1]} : vector<8x1024xf32> to vector<8x1008xf32>
    %42 = vector.extract_strided_slice %2 {offsets = [0, 16], sizes = [1, 1008], strides = [1, 1]} : vector<1x1024xi1> to vector<1x1008xi1>
    %c0_i32_20 = arith.constant 0 : i32
    %43 = arith.sitofp %c0_i32_20 : i32 to f32
    %44 = vector.shape_cast %42 : vector<1x1008xi1> to vector<1x1008xi1>
    %45 = vector.broadcast %44 : vector<1x1008xi1> to vector<8x1008xi1>
    %46 = vector.broadcast %43 : f32 to vector<8x1008xf32>
    %47 = arith.select %45, %41, %46 : vector<8x1008xi1>, vector<8x1008xf32>
    %48 = arith.truncf %47 : vector<8x1008xf32> to vector<8x1008xbf16>
    %c8 = arith.constant 8 : index
    %c16 = arith.constant 16 : index
    %49 = vector.load %arg9[%c8, %c16] : memref<216x1024xbf16, #tpu.memory_space<vmem>>, vector<8x1008xbf16>
    tpu.vector_store %arg9[%c8, %c16], %48 {strides = array<i32>} : memref<216x1024xbf16, #tpu.memory_space<vmem>>, vector<8x1008xbf16>,
    %cst_21 = arith.constant 0.000000e+00 : bf16
    %50 = vector.broadcast %cst_21 : bf16 to vector<8x16xbf16>
    %c8_22 = arith.constant 8 : index
    %c0_23 = arith.constant 0 : index
    %51 = vector.load %arg9[%c8_22, %c0_23] : memref<216x1024xbf16, #tpu.memory_space<vmem>>, vector<8x16xbf16>
    tpu.vector_store %arg9[%c8_22, %c0_23], %50 {strides = array<i32>} : memref<216x1024xbf16, #tpu.memory_space<vmem>>, vector<8x16xbf16>,
    %52 = vector.extract_strided_slice %25 {offsets = [0, 0], sizes = [8, 1009], strides = [1, 1]} : vector<8x1024xf32> to vector<8x1009xf32>
    %53 = vector.extract_strided_slice %13 {offsets = [0, 15], sizes = [1, 1009], strides = [1, 1]} : vector<1x1024xi1> to vector<1x1009xi1>
    %c0_i32_24 = arith.constant 0 : i32
    %54 = arith.sitofp %c0_i32_24 : i32 to f32
    %55 = vector.shape_cast %53 : vector<1x1009xi1> to vector<1x1009xi1>
    %56 = vector.broadcast %55 : vector<1x1009xi1> to vector<8x1009xi1>
    %57 = vector.broadcast %54 : f32 to vector<8x1009xf32>
    %58 = arith.select %56, %52, %57 : vector<8x1009xi1>, vector<8x1009xf32>
    %59 = arith.truncf %58 : vector<8x1009xf32> to vector<8x1009xbf16>
    %c16_25 = arith.constant 16 : index
    %c15 = arith.constant 15 : index
    %60 = vector.load %arg9[%c16_25, %c15] : memref<216x1024xbf16, #tpu.memory_space<vmem>>, vector<8x1009xbf16>
    tpu.vector_store %arg9[%c16_25, %c15], %59 {strides = array<i32>} : memref<216x1024xbf16, #tpu.memory_space<vmem>>, vector<8x1009xbf16>,
    %cst_26 = arith.constant 0.000000e+00 : bf16
    %61 = vector.broadcast %cst_26 : bf16 to vector<8x15xbf16>
    %c16_27 = arith.constant 16 : index
    %c0_28 = arith.constant 0 : index
    %62 = vector.load %arg9[%c16_27, %c0_28] : memref<216x1024xbf16, #tpu.memory_space<vmem>>, vector<8x15xbf16>
    tpu.vector_store %arg9[%c16_27, %c0_28], %61 {strides = array<i32>} : memref<216x1024xbf16, #tpu.memory_space<vmem>>, vector<8x15xbf16>,
    %63 = vector.extract_strided_slice %25 {offsets = [0, 0], sizes = [8, 1023], strides = [1, 1]} : vector<8x1024xf32> to vector<8x1023xf32>
    %64 = vector.extract_strided_slice %8 {offsets = [0, 1], sizes = [1, 1023], strides = [1, 1]} : vector<1x1024xi1> to vector<1x1023xi1>
    %c0_i32_29 = arith.constant 0 : i32
    %65 = arith.sitofp %c0_i32_29 : i32 to f32
    %66 = vector.shape_cast %64 : vector<1x1023xi1> to vector<1x1023xi1>
    %67 = vector.broadcast %66 : vector<1x1023xi1> to vector<8x1023xi1>
    %68 = vector.broadcast %65 : f32 to vector<8x1023xf32>
    %69 = arith.select %67, %63, %68 : vector<8x1023xi1>, vector<8x1023xf32>
    %70 = arith.truncf %69 : vector<8x1023xf32> to vector<8x1023xbf16>
    %c24 = arith.constant 24 : index
    %c1_30 = arith.constant 1 : index
    %71 = vector.load %arg9[%c24, %c1_30] : memref<216x1024xbf16, #tpu.memory_space<vmem>>, vector<8x1023xbf16>
    tpu.vector_store %arg9[%c24, %c1_30], %70 {strides = array<i32>} : memref<216x1024xbf16, #tpu.memory_space<vmem>>, vector<8x1023xbf16>,
    %cst_31 = arith.constant 0.000000e+00 : bf16
    %72 = vector.broadcast %cst_31 : bf16 to vector<8x1xbf16>
    %c24_32 = arith.constant 24 : index
    %c0_33 = arith.constant 0 : index
    %73 = vector.load %arg9[%c24_32, %c0_33] : memref<216x1024xbf16, #tpu.memory_space<vmem>>, vector<8x1xbf16>
    tpu.vector_store %arg9[%c24_32, %c0_33], %72 {strides = array<i32>} : memref<216x1024xbf16, #tpu.memory_space<vmem>>, vector<8x1xbf16>,
    %74 = arith.truncf %25 : vector<8x1024xf32> to vector<8x1024xbf16>
    %c32 = arith.constant 32 : index
    %c0_34 = arith.constant 0 : index
    %75 = vector.load %arg9[%c32, %c0_34] : memref<216x1024xbf16, #tpu.memory_space<vmem>>, vector<8x1024xbf16>
    tpu.vector_store %arg9[%c32, %c0_34], %74 {strides = array<i32>} : memref<216x1024xbf16, #tpu.memory_space<vmem>>, vector<8x1024xbf16>,
    %76 = vector.extract_strided_slice %25 {offsets = [0, 1], sizes = [8, 1023], strides = [1, 1]} : vector<8x1024xf32> to vector<8x1023xf32>
    %77 = vector.extract_strided_slice %11 {offsets = [0, 0], sizes = [1, 1023], strides = [1, 1]} : vector<1x1024xi1> to vector<1x1023xi1>
    %c0_i32_35 = arith.constant 0 : i32
    %78 = arith.sitofp %c0_i32_35 : i32 to f32
    %79 = vector.shape_cast %77 : vector<1x1023xi1> to vector<1x1023xi1>
    %80 = vector.broadcast %79 : vector<1x1023xi1> to vector<8x1023xi1>
    %81 = vector.broadcast %78 : f32 to vector<8x1023xf32>
    %82 = arith.select %80, %76, %81 : vector<8x1023xi1>, vector<8x1023xf32>
    %83 = arith.truncf %82 : vector<8x1023xf32> to vector<8x1023xbf16>
    %c40 = arith.constant 40 : index
    %c0_36 = arith.constant 0 : index
    %84 = vector.load %arg9[%c40, %c0_36] : memref<216x1024xbf16, #tpu.memory_space<vmem>>, vector<8x1023xbf16>
    tpu.vector_store %arg9[%c40, %c0_36], %83 {strides = array<i32>} : memref<216x1024xbf16, #tpu.memory_space<vmem>>, vector<8x1023xbf16>,
    %cst_37 = arith.constant 0.000000e+00 : bf16
    %85 = vector.broadcast %cst_37 : bf16 to vector<8x1xbf16>
    %c40_38 = arith.constant 40 : index
    %c1023 = arith.constant 1023 : index
    %86 = vector.load %arg9[%c40_38, %c1023] : memref<216x1024xbf16, #tpu.memory_space<vmem>>, vector<8x1xbf16>
    tpu.vector_store %arg9[%c40_38, %c1023], %85 {strides = array<i32>} : memref<216x1024xbf16, #tpu.memory_space<vmem>>, vector<8x1xbf16>,
    %87 = vector.extract_strided_slice %25 {offsets = [0, 15], sizes = [8, 1009], strides = [1, 1]} : vector<8x1024xf32> to vector<8x1009xf32>
    %88 = vector.extract_strided_slice %14 {offsets = [0, 0], sizes = [1, 1009], strides = [1, 1]} : vector<1x1024xi1> to vector<1x1009xi1>
    %c0_i32_39 = arith.constant 0 : i32
    %89 = arith.sitofp %c0_i32_39 : i32 to f32
    %90 = vector.shape_cast %88 : vector<1x1009xi1> to vector<1x1009xi1>
    %91 = vector.broadcast %90 : vector<1x1009xi1> to vector<8x1009xi1>
    %92 = vector.broadcast %89 : f32 to vector<8x1009xf32>
    %93 = arith.select %91, %87, %92 : vector<8x1009xi1>, vector<8x1009xf32>
    %94 = arith.truncf %93 : vector<8x1009xf32> to vector<8x1009xbf16>
    %c48 = arith.constant 48 : index
    %c0_40 = arith.constant 0 : index
    %95 = vector.load %arg9[%c48, %c0_40] : memref<216x1024xbf16, #tpu.memory_space<vmem>>, vector<8x1009xbf16>
    tpu.vector_store %arg9[%c48, %c0_40], %94 {strides = array<i32>} : memref<216x1024xbf16, #tpu.memory_space<vmem>>, vector<8x1009xbf16>,
    %cst_41 = arith.constant 0.000000e+00 : bf16
    %96 = vector.broadcast %cst_41 : bf16 to vector<8x15xbf16>
    %c48_42 = arith.constant 48 : index
    %c1009 = arith.constant 1009 : index
    %97 = vector.load %arg9[%c48_42, %c1009] : memref<216x1024xbf16, #tpu.memory_space<vmem>>, vector<8x15xbf16>
    tpu.vector_store %arg9[%c48_42, %c1009], %96 {strides = array<i32>} : memref<216x1024xbf16, #tpu.memory_space<vmem>>, vector<8x15xbf16>,
    %98 = vector.extract_strided_slice %25 {offsets = [0, 16], sizes = [8, 1008], strides = [1, 1]} : vector<8x1024xf32> to vector<8x1008xf32>
    %99 = vector.extract_strided_slice %5 {offsets = [0, 0], sizes = [1, 1008], strides = [1, 1]} : vector<1x1024xi1> to vector<1x1008xi1>
    %c0_i32_43 = arith.constant 0 : i32
    %100 = arith.sitofp %c0_i32_43 : i32 to f32
    %101 = vector.shape_cast %99 : vector<1x1008xi1> to vector<1x1008xi1>
    %102 = vector.broadcast %101 : vector<1x1008xi1> to vector<8x1008xi1>
    %103 = vector.broadcast %100 : f32 to vector<8x1008xf32>
    %104 = arith.select %102, %98, %103 : vector<8x1008xi1>, vector<8x1008xf32>
    %105 = arith.truncf %104 : vector<8x1008xf32> to vector<8x1008xbf16>
    %c56 = arith.constant 56 : index
    %c0_44 = arith.constant 0 : index
    %106 = vector.load %arg9[%c56, %c0_44] : memref<216x1024xbf16, #tpu.memory_space<vmem>>, vector<8x1008xbf16>
    tpu.vector_store %arg9[%c56, %c0_44], %105 {strides = array<i32>} : memref<216x1024xbf16, #tpu.memory_space<vmem>>, vector<8x1008xbf16>,
    %cst_45 = arith.constant 0.000000e+00 : bf16
    %107 = vector.broadcast %cst_45 : bf16 to vector<8x16xbf16>
    %c56_46 = arith.constant 56 : index
    %c1008 = arith.constant 1008 : index
    %108 = vector.load %arg9[%c56_46, %c1008] : memref<216x1024xbf16, #tpu.memory_space<vmem>>, vector<8x16xbf16>
    tpu.vector_store %arg9[%c56_46, %c1008], %107 {strides = array<i32>} : memref<216x1024xbf16, #tpu.memory_space<vmem>>, vector<8x16xbf16>,
    %109 = vector.extract_strided_slice %25 {offsets = [0, 17], sizes = [8, 1007], strides = [1, 1]} : vector<8x1024xf32> to vector<8x1007xf32>
    %110 = vector.extract_strided_slice %15 {offsets = [0, 0], sizes = [1, 1007], strides = [1, 1]} : vector<1x1024xi1> to vector<1x1007xi1>
    %c0_i32_47 = arith.constant 0 : i32
    %111 = arith.sitofp %c0_i32_47 : i32 to f32
    %112 = vector.shape_cast %110 : vector<1x1007xi1> to vector<1x1007xi1>
    %113 = vector.broadcast %112 : vector<1x1007xi1> to vector<8x1007xi1>
    %114 = vector.broadcast %111 : f32 to vector<8x1007xf32>
    %115 = arith.select %113, %109, %114 : vector<8x1007xi1>, vector<8x1007xf32>
    %116 = arith.truncf %115 : vector<8x1007xf32> to vector<8x1007xbf16>
    %c64 = arith.constant 64 : index
    %c0_48 = arith.constant 0 : index
    %117 = vector.load %arg9[%c64, %c0_48] : memref<216x1024xbf16, #tpu.memory_space<vmem>>, vector<8x1007xbf16>
    tpu.vector_store %arg9[%c64, %c0_48], %116 {strides = array<i32>} : memref<216x1024xbf16, #tpu.memory_space<vmem>>, vector<8x1007xbf16>,
    %cst_49 = arith.constant 0.000000e+00 : bf16
    %118 = vector.broadcast %cst_49 : bf16 to vector<8x17xbf16>
    %c64_50 = arith.constant 64 : index
    %c1007 = arith.constant 1007 : index
    %119 = vector.load %arg9[%c64_50, %c1007] : memref<216x1024xbf16, #tpu.memory_space<vmem>>, vector<8x17xbf16>
    tpu.vector_store %arg9[%c64_50, %c1007], %118 {strides = array<i32>} : memref<216x1024xbf16, #tpu.memory_space<vmem>>, vector<8x17xbf16>,
    %120 = vector.extract_strided_slice %27 {offsets = [0, 0], sizes = [8, 1007], strides = [1, 1]} : vector<8x1024xf32> to vector<8x1007xf32>
    %121 = vector.extract_strided_slice %16 {offsets = [0, 17], sizes = [1, 1007], strides = [1, 1]} : vector<1x1024xi1> to vector<1x1007xi1>
    %c0_i32_51 = arith.constant 0 : i32
    %122 = arith.sitofp %c0_i32_51 : i32 to f32
    %123 = vector.shape_cast %121 : vector<1x1007xi1> to vector<1x1007xi1>
    %124 = vector.broadcast %123 : vector<1x1007xi1> to vector<8x1007xi1>
    %125 = vector.broadcast %122 : f32 to vector<8x1007xf32>
    %126 = arith.select %124, %120, %125 : vector<8x1007xi1>, vector<8x1007xf32>
    %127 = arith.truncf %126 : vector<8x1007xf32> to vector<8x1007xbf16>
    %c72 = arith.constant 72 : index
    %c17_52 = arith.constant 17 : index
    %128 = vector.load %arg9[%c72, %c17_52] : memref<216x1024xbf16, #tpu.memory_space<vmem>>, vector<8x1007xbf16>
    tpu.vector_store %arg9[%c72, %c17_52], %127 {strides = array<i32>} : memref<216x1024xbf16, #tpu.memory_space<vmem>>, vector<8x1007xbf16>,
    %cst_53 = arith.constant 0.000000e+00 : bf16
    %129 = vector.broadcast %cst_53 : bf16 to vector<8x17xbf16>
    %c72_54 = arith.constant 72 : index
    %c0_55 = arith.constant 0 : index
    %130 = vector.load %arg9[%c72_54, %c0_55] : memref<216x1024xbf16, #tpu.memory_space<vmem>>, vector<8x17xbf16>
    tpu.vector_store %arg9[%c72_54, %c0_55], %129 {strides = array<i32>} : memref<216x1024xbf16, #tpu.memory_space<vmem>>, vector<8x17xbf16>,
    %131 = vector.extract_strided_slice %27 {offsets = [0, 0], sizes = [8, 1008], strides = [1, 1]} : vector<8x1024xf32> to vector<8x1008xf32>
    %132 = vector.extract_strided_slice %2 {offsets = [0, 16], sizes = [1, 1008], strides = [1, 1]} : vector<1x1024xi1> to vector<1x1008xi1>
    %c0_i32_56 = arith.constant 0 : i32
    %133 = arith.sitofp %c0_i32_56 : i32 to f32
    %134 = vector.shape_cast %132 : vector<1x1008xi1> to vector<1x1008xi1>
    %135 = vector.broadcast %134 : vector<1x1008xi1> to vector<8x1008xi1>
    %136 = vector.broadcast %133 : f32 to vector<8x1008xf32>
    %137 = arith.select %135, %131, %136 : vector<8x1008xi1>, vector<8x1008xf32>
    %138 = arith.truncf %137 : vector<8x1008xf32> to vector<8x1008xbf16>
    %c80 = arith.constant 80 : index
    %c16_57 = arith.constant 16 : index
    %139 = vector.load %arg9[%c80, %c16_57] : memref<216x1024xbf16, #tpu.memory_space<vmem>>, vector<8x1008xbf16>
    tpu.vector_store %arg9[%c80, %c16_57], %138 {strides = array<i32>} : memref<216x1024xbf16, #tpu.memory_space<vmem>>, vector<8x1008xbf16>,
    %cst_58 = arith.constant 0.000000e+00 : bf16
    %140 = vector.broadcast %cst_58 : bf16 to vector<8x16xbf16>
    %c80_59 = arith.constant 80 : index
    %c0_60 = arith.constant 0 : index
    %141 = vector.load %arg9[%c80_59, %c0_60] : memref<216x1024xbf16, #tpu.memory_space<vmem>>, vector<8x16xbf16>
    tpu.vector_store %arg9[%c80_59, %c0_60], %140 {strides = array<i32>} : memref<216x1024xbf16, #tpu.memory_space<vmem>>, vector<8x16xbf16>,
    %142 = vector.extract_strided_slice %27 {offsets = [0, 0], sizes = [8, 1009], strides = [1, 1]} : vector<8x1024xf32> to vector<8x1009xf32>
    %143 = vector.extract_strided_slice %17 {offsets = [0, 15], sizes = [1, 1009], strides = [1, 1]} : vector<1x1024xi1> to vector<1x1009xi1>
    %c0_i32_61 = arith.constant 0 : i32
    %144 = arith.sitofp %c0_i32_61 : i32 to f32
    %145 = vector.shape_cast %143 : vector<1x1009xi1> to vector<1x1009xi1>
    %146 = vector.broadcast %145 : vector<1x1009xi1> to vector<8x1009xi1>
    %147 = vector.broadcast %144 : f32 to vector<8x1009xf32>
    %148 = arith.select %146, %142, %147 : vector<8x1009xi1>, vector<8x1009xf32>
    %149 = arith.truncf %148 : vector<8x1009xf32> to vector<8x1009xbf16>
    %c88 = arith.constant 88 : index
    %c15_62 = arith.constant 15 : index
    %150 = vector.load %arg9[%c88, %c15_62] : memref<216x1024xbf16, #tpu.memory_space<vmem>>, vector<8x1009xbf16>
    tpu.vector_store %arg9[%c88, %c15_62], %149 {strides = array<i32>} : memref<216x1024xbf16, #tpu.memory_space<vmem>>, vector<8x1009xbf16>,
    %cst_63 = arith.constant 0.000000e+00 : bf16
    %151 = vector.broadcast %cst_63 : bf16 to vector<8x15xbf16>
    %c88_64 = arith.constant 88 : index
    %c0_65 = arith.constant 0 : index
    %152 = vector.load %arg9[%c88_64, %c0_65] : memref<216x1024xbf16, #tpu.memory_space<vmem>>, vector<8x15xbf16>
    tpu.vector_store %arg9[%c88_64, %c0_65], %151 {strides = array<i32>} : memref<216x1024xbf16, #tpu.memory_space<vmem>>, vector<8x15xbf16>,
    %153 = vector.extract_strided_slice %27 {offsets = [0, 0], sizes = [8, 1023], strides = [1, 1]} : vector<8x1024xf32> to vector<8x1023xf32>
    %154 = vector.extract_strided_slice %8 {offsets = [0, 1], sizes = [1, 1023], strides = [1, 1]} : vector<1x1024xi1> to vector<1x1023xi1>
    %c0_i32_66 = arith.constant 0 : i32
    %155 = arith.sitofp %c0_i32_66 : i32 to f32
    %156 = vector.shape_cast %154 : vector<1x1023xi1> to vector<1x1023xi1>
    %157 = vector.broadcast %156 : vector<1x1023xi1> to vector<8x1023xi1>
    %158 = vector.broadcast %155 : f32 to vector<8x1023xf32>
    %159 = arith.select %157, %153, %158 : vector<8x1023xi1>, vector<8x1023xf32>
    %160 = arith.truncf %159 : vector<8x1023xf32> to vector<8x1023xbf16>
    %c96 = arith.constant 96 : index
    %c1_67 = arith.constant 1 : index
    %161 = vector.load %arg9[%c96, %c1_67] : memref<216x1024xbf16, #tpu.memory_space<vmem>>, vector<8x1023xbf16>
    tpu.vector_store %arg9[%c96, %c1_67], %160 {strides = array<i32>} : memref<216x1024xbf16, #tpu.memory_space<vmem>>, vector<8x1023xbf16>,
    %cst_68 = arith.constant 0.000000e+00 : bf16
    %162 = vector.broadcast %cst_68 : bf16 to vector<8x1xbf16>
    %c96_69 = arith.constant 96 : index
    %c0_70 = arith.constant 0 : index
    %163 = vector.load %arg9[%c96_69, %c0_70] : memref<216x1024xbf16, #tpu.memory_space<vmem>>, vector<8x1xbf16>
    tpu.vector_store %arg9[%c96_69, %c0_70], %162 {strides = array<i32>} : memref<216x1024xbf16, #tpu.memory_space<vmem>>, vector<8x1xbf16>,
    %164 = arith.truncf %27 : vector<8x1024xf32> to vector<8x1024xbf16>
    %c104 = arith.constant 104 : index
    %c0_71 = arith.constant 0 : index
    %165 = vector.load %arg9[%c104, %c0_71] : memref<216x1024xbf16, #tpu.memory_space<vmem>>, vector<8x1024xbf16>
    tpu.vector_store %arg9[%c104, %c0_71], %164 {strides = array<i32>} : memref<216x1024xbf16, #tpu.memory_space<vmem>>, vector<8x1024xbf16>,
    %166 = vector.extract_strided_slice %27 {offsets = [0, 1], sizes = [8, 1023], strides = [1, 1]} : vector<8x1024xf32> to vector<8x1023xf32>
    %167 = vector.extract_strided_slice %11 {offsets = [0, 0], sizes = [1, 1023], strides = [1, 1]} : vector<1x1024xi1> to vector<1x1023xi1>
    %c0_i32_72 = arith.constant 0 : i32
    %168 = arith.sitofp %c0_i32_72 : i32 to f32
    %169 = vector.shape_cast %167 : vector<1x1023xi1> to vector<1x1023xi1>
    %170 = vector.broadcast %169 : vector<1x1023xi1> to vector<8x1023xi1>
    %171 = vector.broadcast %168 : f32 to vector<8x1023xf32>
    %172 = arith.select %170, %166, %171 : vector<8x1023xi1>, vector<8x1023xf32>
    %173 = arith.truncf %172 : vector<8x1023xf32> to vector<8x1023xbf16>
    %c112 = arith.constant 112 : index
    %c0_73 = arith.constant 0 : index
    %174 = vector.load %arg9[%c112, %c0_73] : memref<216x1024xbf16, #tpu.memory_space<vmem>>, vector<8x1023xbf16>
    tpu.vector_store %arg9[%c112, %c0_73], %173 {strides = array<i32>} : memref<216x1024xbf16, #tpu.memory_space<vmem>>, vector<8x1023xbf16>,
    %cst_74 = arith.constant 0.000000e+00 : bf16
    %175 = vector.broadcast %cst_74 : bf16 to vector<8x1xbf16>
    %c112_75 = arith.constant 112 : index
    %c1023_76 = arith.constant 1023 : index
    %176 = vector.load %arg9[%c112_75, %c1023_76] : memref<216x1024xbf16, #tpu.memory_space<vmem>>, vector<8x1xbf16>
    tpu.vector_store %arg9[%c112_75, %c1023_76], %175 {strides = array<i32>} : memref<216x1024xbf16, #tpu.memory_space<vmem>>, vector<8x1xbf16>,
    %177 = vector.extract_strided_slice %27 {offsets = [0, 15], sizes = [8, 1009], strides = [1, 1]} : vector<8x1024xf32> to vector<8x1009xf32>
    %178 = vector.extract_strided_slice %18 {offsets = [0, 0], sizes = [1, 1009], strides = [1, 1]} : vector<1x1024xi1> to vector<1x1009xi1>
    %c0_i32_77 = arith.constant 0 : i32
    %179 = arith.sitofp %c0_i32_77 : i32 to f32
    %180 = vector.shape_cast %178 : vector<1x1009xi1> to vector<1x1009xi1>
    %181 = vector.broadcast %180 : vector<1x1009xi1> to vector<8x1009xi1>
    %182 = vector.broadcast %179 : f32 to vector<8x1009xf32>
    %183 = arith.select %181, %177, %182 : vector<8x1009xi1>, vector<8x1009xf32>
    %184 = arith.truncf %183 : vector<8x1009xf32> to vector<8x1009xbf16>
    %c120 = arith.constant 120 : index
    %c0_78 = arith.constant 0 : index
    %185 = vector.load %arg9[%c120, %c0_78] : memref<216x1024xbf16, #tpu.memory_space<vmem>>, vector<8x1009xbf16>
    tpu.vector_store %arg9[%c120, %c0_78], %184 {strides = array<i32>} : memref<216x1024xbf16, #tpu.memory_space<vmem>>, vector<8x1009xbf16>,
    %cst_79 = arith.constant 0.000000e+00 : bf16
    %186 = vector.broadcast %cst_79 : bf16 to vector<8x15xbf16>
    %c120_80 = arith.constant 120 : index
    %c1009_81 = arith.constant 1009 : index
    %187 = vector.load %arg9[%c120_80, %c1009_81] : memref<216x1024xbf16, #tpu.memory_space<vmem>>, vector<8x15xbf16>
    tpu.vector_store %arg9[%c120_80, %c1009_81], %186 {strides = array<i32>} : memref<216x1024xbf16, #tpu.memory_space<vmem>>, vector<8x15xbf16>,
    %188 = vector.extract_strided_slice %27 {offsets = [0, 16], sizes = [8, 1008], strides = [1, 1]} : vector<8x1024xf32> to vector<8x1008xf32>
    %189 = vector.extract_strided_slice %5 {offsets = [0, 0], sizes = [1, 1008], strides = [1, 1]} : vector<1x1024xi1> to vector<1x1008xi1>
    %c0_i32_82 = arith.constant 0 : i32
    %190 = arith.sitofp %c0_i32_82 : i32 to f32
    %191 = vector.shape_cast %189 : vector<1x1008xi1> to vector<1x1008xi1>
    %192 = vector.broadcast %191 : vector<1x1008xi1> to vector<8x1008xi1>
    %193 = vector.broadcast %190 : f32 to vector<8x1008xf32>
    %194 = arith.select %192, %188, %193 : vector<8x1008xi1>, vector<8x1008xf32>
    %195 = arith.truncf %194 : vector<8x1008xf32> to vector<8x1008xbf16>
    %c128 = arith.constant 128 : index
    %c0_83 = arith.constant 0 : index
    %196 = vector.load %arg9[%c128, %c0_83] : memref<216x1024xbf16, #tpu.memory_space<vmem>>, vector<8x1008xbf16>
    tpu.vector_store %arg9[%c128, %c0_83], %195 {strides = array<i32>} : memref<216x1024xbf16, #tpu.memory_space<vmem>>, vector<8x1008xbf16>,
    %cst_84 = arith.constant 0.000000e+00 : bf16
    %197 = vector.broadcast %cst_84 : bf16 to vector<8x16xbf16>
    %c128_85 = arith.constant 128 : index
    %c1008_86 = arith.constant 1008 : index
    %198 = vector.load %arg9[%c128_85, %c1008_86] : memref<216x1024xbf16, #tpu.memory_space<vmem>>, vector<8x16xbf16>
    tpu.vector_store %arg9[%c128_85, %c1008_86], %197 {strides = array<i32>} : memref<216x1024xbf16, #tpu.memory_space<vmem>>, vector<8x16xbf16>,
    %199 = vector.extract_strided_slice %27 {offsets = [0, 17], sizes = [8, 1007], strides = [1, 1]} : vector<8x1024xf32> to vector<8x1007xf32>
    %200 = vector.extract_strided_slice %19 {offsets = [0, 0], sizes = [1, 1007], strides = [1, 1]} : vector<1x1024xi1> to vector<1x1007xi1>
    %c0_i32_87 = arith.constant 0 : i32
    %201 = arith.sitofp %c0_i32_87 : i32 to f32
    %202 = vector.shape_cast %200 : vector<1x1007xi1> to vector<1x1007xi1>
    %203 = vector.broadcast %202 : vector<1x1007xi1> to vector<8x1007xi1>
    %204 = vector.broadcast %201 : f32 to vector<8x1007xf32>
    %205 = arith.select %203, %199, %204 : vector<8x1007xi1>, vector<8x1007xf32>
    %206 = arith.truncf %205 : vector<8x1007xf32> to vector<8x1007xbf16>
    %c136 = arith.constant 136 : index
    %c0_88 = arith.constant 0 : index
    %207 = vector.load %arg9[%c136, %c0_88] : memref<216x1024xbf16, #tpu.memory_space<vmem>>, vector<8x1007xbf16>
    tpu.vector_store %arg9[%c136, %c0_88], %206 {strides = array<i32>} : memref<216x1024xbf16, #tpu.memory_space<vmem>>, vector<8x1007xbf16>,
    %cst_89 = arith.constant 0.000000e+00 : bf16
    %208 = vector.broadcast %cst_89 : bf16 to vector<8x17xbf16>
    %c136_90 = arith.constant 136 : index
    %c1007_91 = arith.constant 1007 : index
    %209 = vector.load %arg9[%c136_90, %c1007_91] : memref<216x1024xbf16, #tpu.memory_space<vmem>>, vector<8x17xbf16>
    tpu.vector_store %arg9[%c136_90, %c1007_91], %208 {strides = array<i32>} : memref<216x1024xbf16, #tpu.memory_space<vmem>>, vector<8x17xbf16>,
    %210 = vector.extract_strided_slice %29 {offsets = [0, 0], sizes = [8, 1007], strides = [1, 1]} : vector<8x1024xf32> to vector<8x1007xf32>
    %211 = vector.extract_strided_slice %20 {offsets = [0, 17], sizes = [1, 1007], strides = [1, 1]} : vector<1x1024xi1> to vector<1x1007xi1>
    %c0_i32_92 = arith.constant 0 : i32
    %212 = arith.sitofp %c0_i32_92 : i32 to f32
    %213 = vector.shape_cast %211 : vector<1x1007xi1> to vector<1x1007xi1>
    %214 = vector.broadcast %213 : vector<1x1007xi1> to vector<8x1007xi1>
    %215 = vector.broadcast %212 : f32 to vector<8x1007xf32>
    %216 = arith.select %214, %210, %215 : vector<8x1007xi1>, vector<8x1007xf32>
    %217 = arith.truncf %216 : vector<8x1007xf32> to vector<8x1007xbf16>
    %c144 = arith.constant 144 : index
    %c17_93 = arith.constant 17 : index
    %218 = vector.load %arg9[%c144, %c17_93] : memref<216x1024xbf16, #tpu.memory_space<vmem>>, vector<8x1007xbf16>
    tpu.vector_store %arg9[%c144, %c17_93], %217 {strides = array<i32>} : memref<216x1024xbf16, #tpu.memory_space<vmem>>, vector<8x1007xbf16>,
    %cst_94 = arith.constant 0.000000e+00 : bf16
    %219 = vector.broadcast %cst_94 : bf16 to vector<8x17xbf16>
    %c144_95 = arith.constant 144 : index
    %c0_96 = arith.constant 0 : index
    %220 = vector.load %arg9[%c144_95, %c0_96] : memref<216x1024xbf16, #tpu.memory_space<vmem>>, vector<8x17xbf16>
    tpu.vector_store %arg9[%c144_95, %c0_96], %219 {strides = array<i32>} : memref<216x1024xbf16, #tpu.memory_space<vmem>>, vector<8x17xbf16>,
    %221 = vector.extract_strided_slice %29 {offsets = [0, 0], sizes = [8, 1008], strides = [1, 1]} : vector<8x1024xf32> to vector<8x1008xf32>
    %222 = vector.extract_strided_slice %2 {offsets = [0, 16], sizes = [1, 1008], strides = [1, 1]} : vector<1x1024xi1> to vector<1x1008xi1>
    %c0_i32_97 = arith.constant 0 : i32
    %223 = arith.sitofp %c0_i32_97 : i32 to f32
    %224 = vector.shape_cast %222 : vector<1x1008xi1> to vector<1x1008xi1>
    %225 = vector.broadcast %224 : vector<1x1008xi1> to vector<8x1008xi1>
    %226 = vector.broadcast %223 : f32 to vector<8x1008xf32>
    %227 = arith.select %225, %221, %226 : vector<8x1008xi1>, vector<8x1008xf32>
    %228 = arith.truncf %227 : vector<8x1008xf32> to vector<8x1008xbf16>
    %c152 = arith.constant 152 : index
    %c16_98 = arith.constant 16 : index
    %229 = vector.load %arg9[%c152, %c16_98] : memref<216x1024xbf16, #tpu.memory_space<vmem>>, vector<8x1008xbf16>
    tpu.vector_store %arg9[%c152, %c16_98], %228 {strides = array<i32>} : memref<216x1024xbf16, #tpu.memory_space<vmem>>, vector<8x1008xbf16>,
    %cst_99 = arith.constant 0.000000e+00 : bf16
    %230 = vector.broadcast %cst_99 : bf16 to vector<8x16xbf16>
    %c152_100 = arith.constant 152 : index
    %c0_101 = arith.constant 0 : index
    %231 = vector.load %arg9[%c152_100, %c0_101] : memref<216x1024xbf16, #tpu.memory_space<vmem>>, vector<8x16xbf16>
    tpu.vector_store %arg9[%c152_100, %c0_101], %230 {strides = array<i32>} : memref<216x1024xbf16, #tpu.memory_space<vmem>>, vector<8x16xbf16>,
    %232 = vector.extract_strided_slice %29 {offsets = [0, 0], sizes = [8, 1009], strides = [1, 1]} : vector<8x1024xf32> to vector<8x1009xf32>
    %233 = vector.extract_strided_slice %21 {offsets = [0, 15], sizes = [1, 1009], strides = [1, 1]} : vector<1x1024xi1> to vector<1x1009xi1>
    %c0_i32_102 = arith.constant 0 : i32
    %234 = arith.sitofp %c0_i32_102 : i32 to f32
    %235 = vector.shape_cast %233 : vector<1x1009xi1> to vector<1x1009xi1>
    %236 = vector.broadcast %235 : vector<1x1009xi1> to vector<8x1009xi1>
    %237 = vector.broadcast %234 : f32 to vector<8x1009xf32>
    %238 = arith.select %236, %232, %237 : vector<8x1009xi1>, vector<8x1009xf32>
    %239 = arith.truncf %238 : vector<8x1009xf32> to vector<8x1009xbf16>
    %c160 = arith.constant 160 : index
    %c15_103 = arith.constant 15 : index
    %240 = vector.load %arg9[%c160, %c15_103] : memref<216x1024xbf16, #tpu.memory_space<vmem>>, vector<8x1009xbf16>
    tpu.vector_store %arg9[%c160, %c15_103], %239 {strides = array<i32>} : memref<216x1024xbf16, #tpu.memory_space<vmem>>, vector<8x1009xbf16>,
    %cst_104 = arith.constant 0.000000e+00 : bf16
    %241 = vector.broadcast %cst_104 : bf16 to vector<8x15xbf16>
    %c160_105 = arith.constant 160 : index
    %c0_106 = arith.constant 0 : index
    %242 = vector.load %arg9[%c160_105, %c0_106] : memref<216x1024xbf16, #tpu.memory_space<vmem>>, vector<8x15xbf16>
    tpu.vector_store %arg9[%c160_105, %c0_106], %241 {strides = array<i32>} : memref<216x1024xbf16, #tpu.memory_space<vmem>>, vector<8x15xbf16>,
    %243 = vector.extract_strided_slice %29 {offsets = [0, 0], sizes = [8, 1023], strides = [1, 1]} : vector<8x1024xf32> to vector<8x1023xf32>
    %244 = vector.extract_strided_slice %8 {offsets = [0, 1], sizes = [1, 1023], strides = [1, 1]} : vector<1x1024xi1> to vector<1x1023xi1>
    %c0_i32_107 = arith.constant 0 : i32
    %245 = arith.sitofp %c0_i32_107 : i32 to f32
    %246 = vector.shape_cast %244 : vector<1x1023xi1> to vector<1x1023xi1>
    %247 = vector.broadcast %246 : vector<1x1023xi1> to vector<8x1023xi1>
    %248 = vector.broadcast %245 : f32 to vector<8x1023xf32>
    %249 = arith.select %247, %243, %248 : vector<8x1023xi1>, vector<8x1023xf32>
    %250 = arith.truncf %249 : vector<8x1023xf32> to vector<8x1023xbf16>
    %c168 = arith.constant 168 : index
    %c1_108 = arith.constant 1 : index
    %251 = vector.load %arg9[%c168, %c1_108] : memref<216x1024xbf16, #tpu.memory_space<vmem>>, vector<8x1023xbf16>
    tpu.vector_store %arg9[%c168, %c1_108], %250 {strides = array<i32>} : memref<216x1024xbf16, #tpu.memory_space<vmem>>, vector<8x1023xbf16>,
    %cst_109 = arith.constant 0.000000e+00 : bf16
    %252 = vector.broadcast %cst_109 : bf16 to vector<8x1xbf16>
    %c168_110 = arith.constant 168 : index
    %c0_111 = arith.constant 0 : index
    %253 = vector.load %arg9[%c168_110, %c0_111] : memref<216x1024xbf16, #tpu.memory_space<vmem>>, vector<8x1xbf16>
    tpu.vector_store %arg9[%c168_110, %c0_111], %252 {strides = array<i32>} : memref<216x1024xbf16, #tpu.memory_space<vmem>>, vector<8x1xbf16>,
    %254 = arith.truncf %29 : vector<8x1024xf32> to vector<8x1024xbf16>
    %c176 = arith.constant 176 : index
    %c0_112 = arith.constant 0 : index
    %255 = vector.load %arg9[%c176, %c0_112] : memref<216x1024xbf16, #tpu.memory_space<vmem>>, vector<8x1024xbf16>
    tpu.vector_store %arg9[%c176, %c0_112], %254 {strides = array<i32>} : memref<216x1024xbf16, #tpu.memory_space<vmem>>, vector<8x1024xbf16>,
    %256 = vector.extract_strided_slice %29 {offsets = [0, 1], sizes = [8, 1023], strides = [1, 1]} : vector<8x1024xf32> to vector<8x1023xf32>
    %257 = vector.extract_strided_slice %11 {offsets = [0, 0], sizes = [1, 1023], strides = [1, 1]} : vector<1x1024xi1> to vector<1x1023xi1>
    %c0_i32_113 = arith.constant 0 : i32
    %258 = arith.sitofp %c0_i32_113 : i32 to f32
    %259 = vector.shape_cast %257 : vector<1x1023xi1> to vector<1x1023xi1>
    %260 = vector.broadcast %259 : vector<1x1023xi1> to vector<8x1023xi1>
    %261 = vector.broadcast %258 : f32 to vector<8x1023xf32>
    %262 = arith.select %260, %256, %261 : vector<8x1023xi1>, vector<8x1023xf32>
    %263 = arith.truncf %262 : vector<8x1023xf32> to vector<8x1023xbf16>
    %c184 = arith.constant 184 : index
    %c0_114 = arith.constant 0 : index
    %264 = vector.load %arg9[%c184, %c0_114] : memref<216x1024xbf16, #tpu.memory_space<vmem>>, vector<8x1023xbf16>
    tpu.vector_store %arg9[%c184, %c0_114], %263 {strides = array<i32>} : memref<216x1024xbf16, #tpu.memory_space<vmem>>, vector<8x1023xbf16>,
    %cst_115 = arith.constant 0.000000e+00 : bf16
    %265 = vector.broadcast %cst_115 : bf16 to vector<8x1xbf16>
    %c184_116 = arith.constant 184 : index
    %c1023_117 = arith.constant 1023 : index
    %266 = vector.load %arg9[%c184_116, %c1023_117] : memref<216x1024xbf16, #tpu.memory_space<vmem>>, vector<8x1xbf16>
    tpu.vector_store %arg9[%c184_116, %c1023_117], %265 {strides = array<i32>} : memref<216x1024xbf16, #tpu.memory_space<vmem>>, vector<8x1xbf16>,
    %267 = vector.extract_strided_slice %29 {offsets = [0, 15], sizes = [8, 1009], strides = [1, 1]} : vector<8x1024xf32> to vector<8x1009xf32>
    %268 = vector.extract_strided_slice %22 {offsets = [0, 0], sizes = [1, 1009], strides = [1, 1]} : vector<1x1024xi1> to vector<1x1009xi1>
    %c0_i32_118 = arith.constant 0 : i32
    %269 = arith.sitofp %c0_i32_118 : i32 to f32
    %270 = vector.shape_cast %268 : vector<1x1009xi1> to vector<1x1009xi1>
    %271 = vector.broadcast %270 : vector<1x1009xi1> to vector<8x1009xi1>
    %272 = vector.broadcast %269 : f32 to vector<8x1009xf32>
    %273 = arith.select %271, %267, %272 : vector<8x1009xi1>, vector<8x1009xf32>
    %274 = arith.truncf %273 : vector<8x1009xf32> to vector<8x1009xbf16>
    %c192 = arith.constant 192 : index
    %c0_119 = arith.constant 0 : index
    %275 = vector.load %arg9[%c192, %c0_119] : memref<216x1024xbf16, #tpu.memory_space<vmem>>, vector<8x1009xbf16>
    tpu.vector_store %arg9[%c192, %c0_119], %274 {strides = array<i32>} : memref<216x1024xbf16, #tpu.memory_space<vmem>>, vector<8x1009xbf16>,
    %cst_120 = arith.constant 0.000000e+00 : bf16
    %276 = vector.broadcast %cst_120 : bf16 to vector<8x15xbf16>
    %c192_121 = arith.constant 192 : index
    %c1009_122 = arith.constant 1009 : index
    %277 = vector.load %arg9[%c192_121, %c1009_122] : memref<216x1024xbf16, #tpu.memory_space<vmem>>, vector<8x15xbf16>
    tpu.vector_store %arg9[%c192_121, %c1009_122], %276 {strides = array<i32>} : memref<216x1024xbf16, #tpu.memory_space<vmem>>, vector<8x15xbf16>,
    %278 = vector.extract_strided_slice %29 {offsets = [0, 16], sizes = [8, 1008], strides = [1, 1]} : vector<8x1024xf32> to vector<8x1008xf32>
    %279 = vector.extract_strided_slice %5 {offsets = [0, 0], sizes = [1, 1008], strides = [1, 1]} : vector<1x1024xi1> to vector<1x1008xi1>
    %c0_i32_123 = arith.constant 0 : i32
    %280 = arith.sitofp %c0_i32_123 : i32 to f32
    %281 = vector.shape_cast %279 : vector<1x1008xi1> to vector<1x1008xi1>
    %282 = vector.broadcast %281 : vector<1x1008xi1> to vector<8x1008xi1>
    %283 = vector.broadcast %280 : f32 to vector<8x1008xf32>
    %284 = arith.select %282, %278, %283 : vector<8x1008xi1>, vector<8x1008xf32>
    %285 = arith.truncf %284 : vector<8x1008xf32> to vector<8x1008xbf16>
    %c200 = arith.constant 200 : index
    %c0_124 = arith.constant 0 : index
    %286 = vector.load %arg9[%c200, %c0_124] : memref<216x1024xbf16, #tpu.memory_space<vmem>>, vector<8x1008xbf16>
    tpu.vector_store %arg9[%c200, %c0_124], %285 {strides = array<i32>} : memref<216x1024xbf16, #tpu.memory_space<vmem>>, vector<8x1008xbf16>,
    %cst_125 = arith.constant 0.000000e+00 : bf16
    %287 = vector.broadcast %cst_125 : bf16 to vector<8x16xbf16>
    %c200_126 = arith.constant 200 : index
    %c1008_127 = arith.constant 1008 : index
    %288 = vector.load %arg9[%c200_126, %c1008_127] : memref<216x1024xbf16, #tpu.memory_space<vmem>>, vector<8x16xbf16>
    tpu.vector_store %arg9[%c200_126, %c1008_127], %287 {strides = array<i32>} : memref<216x1024xbf16, #tpu.memory_space<vmem>>, vector<8x16xbf16>,
    %289 = vector.extract_strided_slice %29 {offsets = [0, 17], sizes = [8, 1007], strides = [1, 1]} : vector<8x1024xf32> to vector<8x1007xf32>
    %290 = vector.extract_strided_slice %23 {offsets = [0, 0], sizes = [1, 1007], strides = [1, 1]} : vector<1x1024xi1> to vector<1x1007xi1>
    %c0_i32_128 = arith.constant 0 : i32
    %291 = arith.sitofp %c0_i32_128 : i32 to f32
    %292 = vector.shape_cast %290 : vector<1x1007xi1> to vector<1x1007xi1>
    %293 = vector.broadcast %292 : vector<1x1007xi1> to vector<8x1007xi1>
    %294 = vector.broadcast %291 : f32 to vector<8x1007xf32>
    %295 = arith.select %293, %289, %294 : vector<8x1007xi1>, vector<8x1007xf32>
    %296 = arith.truncf %295 : vector<8x1007xf32> to vector<8x1007xbf16>
    %c208 = arith.constant 208 : index
    %c0_129 = arith.constant 0 : index
    %297 = vector.load %arg9[%c208, %c0_129] : memref<216x1024xbf16, #tpu.memory_space<vmem>>, vector<8x1007xbf16>
    tpu.vector_store %arg9[%c208, %c0_129], %296 {strides = array<i32>} : memref<216x1024xbf16, #tpu.memory_space<vmem>>, vector<8x1007xbf16>,
    %cst_130 = arith.constant 0.000000e+00 : bf16
    %298 = vector.broadcast %cst_130 : bf16 to vector<8x17xbf16>
    %c208_131 = arith.constant 208 : index
    %c1007_132 = arith.constant 1007 : index
    %299 = vector.load %arg9[%c208_131, %c1007_132] : memref<216x1024xbf16, #tpu.memory_space<vmem>>, vector<8x17xbf16>
    tpu.vector_store %arg9[%c208_131, %c1007_132], %298 {strides = array<i32>} : memref<216x1024xbf16, #tpu.memory_space<vmem>>, vector<8x17xbf16>,
    %c0_133 = arith.constant 0 : index
    %c0_134 = arith.constant 0 : index
    %300 = vector.load %arg6[%c0_133, %c0_134] : memref<8x216xbf16, #tpu.memory_space<vmem>>, vector<8x216xbf16>
    %c0_135 = arith.constant 0 : index
    %c0_136 = arith.constant 0 : index
    %301 = vector.load %arg9[%c0_135, %c0_136] : memref<216x1024xbf16, #tpu.memory_space<vmem>>, vector<216x1024xbf16>
    %cst_137 = arith.constant dense<0.000000e+00> : vector<8x1024xf32>
    %302 = tpu.matmul %300, %301, %cst_137 {dimension_numbers = #tpu.dot_dimension_numbers<[1], [0], [0], [1], [0, 0, 1, 1], [], []>} : vector<8x216xbf16>, vector<216x1024xbf16>, vector<8x1024xf32> -> vector<8x1024xf32>
    %c0_138 = arith.constant 0 : index
    %c0_139 = arith.constant 0 : index
    %c0_140 = arith.constant 0 : index
    %303 = vector.load %arg7[%c0_138, %c0_139, %c0_140] : memref<1x8x1024xf32, #tpu.memory_space<vmem>>, vector<1x8x1024xf32>
    %304 = vector.shape_cast %303 : vector<1x8x1024xf32> to vector<8x1024xf32>
    %305 = vector.shape_cast %302 : vector<8x1024xf32> to vector<1x8x1024xf32>
    tpu.vector_store %arg7[%c0_138, %c0_139, %c0_140], %305 {strides = array<i32>} : memref<1x8x1024xf32, #tpu.memory_space<vmem>>, vector<1x8x1024xf32>,
    %c0_i32_141 = arith.constant 0 : i32
    %306 = arith.cmpi eq, %arg1, %c0_i32_141 : i32
    %307 = arith.extui %306 : i1 to i32
    %c0_i32_142 = arith.constant 0 : i32
    %308 = arith.cmpi ne, %307, %c0_i32_142 : i32
    scf.if %308 {
      %cst_158 = arith.constant 0.000000e+00 : f32
      %324 = vector.broadcast %cst_158 : f32 to vector<8x2xf32>
      %c0_159 = arith.constant 0 : index
      %c0_160 = arith.constant 0 : index
      %325 = vector.load %arg10[%c0_159, %c0_160] : memref<8x2xf32, #tpu.memory_space<vmem>>, vector<8x2xf32>
      tpu.vector_store %arg10[%c0_159, %c0_160], %324 {strides = array<i32>} : memref<8x2xf32, #tpu.memory_space<vmem>>, vector<8x2xf32>,
    } else {
    }
    %c0_143 = arith.constant 0 : index
    %c0_144 = arith.constant 0 : index
    %309 = vector.load %arg10[%c0_143, %c0_144] : memref<8x2xf32, #tpu.memory_space<vmem>>, vector<8x1xf32>
    %cst_145 = arith.constant dense<0.000000e+00> : vector<8xf32>
    %310 = vector.multi_reduction <add>, %302, %cst_145 [1] : vector<8x1024xf32> to vector<8xf32>
    %311 = vector.shape_cast %310 : vector<8xf32> to vector<8x1xf32>
    %312 = arith.addf %309, %311 : vector<8x1xf32>
    %c0_146 = arith.constant 0 : index
    %c0_147 = arith.constant 0 : index
    %313 = vector.load %arg10[%c0_146, %c0_147] : memref<8x2xf32, #tpu.memory_space<vmem>>, vector<8x1xf32>
    tpu.vector_store %arg10[%c0_146, %c0_147], %312 {strides = array<i32>} : memref<8x2xf32, #tpu.memory_space<vmem>>, vector<8x1xf32>,
    %c0_148 = arith.constant 0 : index
    %c1_149 = arith.constant 1 : index
    %314 = vector.load %arg10[%c0_148, %c1_149] : memref<8x2xf32, #tpu.memory_space<vmem>>, vector<8x1xf32>
    %315 = arith.mulf %302, %302 : vector<8x1024xf32>
    %cst_150 = arith.constant dense<0.000000e+00> : vector<8xf32>
    %316 = vector.multi_reduction <add>, %315, %cst_150 [1] : vector<8x1024xf32> to vector<8xf32>
    %317 = vector.shape_cast %316 : vector<8xf32> to vector<8x1xf32>
    %318 = arith.addf %314, %317 : vector<8x1xf32>
    %c0_151 = arith.constant 0 : index
    %c1_152 = arith.constant 1 : index
    %319 = vector.load %arg10[%c0_151, %c1_152] : memref<8x2xf32, #tpu.memory_space<vmem>>, vector<8x1xf32>
    tpu.vector_store %arg10[%c0_151, %c1_152], %318 {strides = array<i32>} : memref<8x2xf32, #tpu.memory_space<vmem>>, vector<8x1xf32>,
    %c0_153 = arith.constant 0 : index
    %c0_154 = arith.constant 0 : index
    %320 = vector.load %arg10[%c0_153, %c0_154] : memref<8x2xf32, #tpu.memory_space<vmem>>, vector<8x2xf32>
    %c0_155 = arith.constant 0 : index
    %c0_156 = arith.constant 0 : index
    %c0_157 = arith.constant 0 : index
    %321 = vector.load %arg8[%c0_155, %c0_156, %c0_157] : memref<1x8x2xf32, #tpu.memory_space<vmem>>, vector<1x8x2xf32>
    %322 = vector.shape_cast %321 : vector<1x8x2xf32> to vector<8x2xf32>
    %323 = vector.shape_cast %320 : vector<8x2xf32> to vector<1x8x2xf32>
    tpu.vector_store %arg8[%c0_155, %c0_156, %c0_157], %323 {strides = array<i32>} : memref<1x8x2xf32, #tpu.memory_space<vmem>>, vector<1x8x2xf32>,
    return
  }
  func.func @transform_0(%arg0: i32, %arg1: i32) -> (i32, i32, i32) {
    %c0_i32 = arith.constant 0 : i32
    %c0_i32_0 = arith.constant 0 : i32
    return %arg0, %c0_i32, %arg1 : i32, i32, i32
  }
  func.func @transform_1(%arg0: i32, %arg1: i32) -> (i32, i32, i32) {
    %c0_i32 = arith.constant 0 : i32
    %c0_i32_0 = arith.constant 0 : i32
    return %arg0, %c0_i32, %arg1 : i32, i32, i32
  }
  func.func @transform_2(%arg0: i32, %arg1: i32) -> (i32, i32, i32) {
    %c0_i32 = arith.constant 0 : i32
    %c0_i32_0 = arith.constant 0 : i32
    return %arg0, %c0_i32, %arg1 : i32, i32, i32
  }
  func.func @transform_3(%arg0: i32, %arg1: i32) -> (i32, i32) {
    %c0_i32 = arith.constant 0 : i32
    %c0_i32_0 = arith.constant 0 : i32
    return %c0_i32, %arg1 : i32, i32
  }
  func.func @transform_4(%arg0: i32, %arg1: i32) -> (i32, i32) {
    %c0_i32 = arith.constant 0 : i32
    %c0_i32_0 = arith.constant 0 : i32
    %c0_i32_1 = arith.constant 0 : i32
    return %c0_i32, %c0_i32_0 : i32, i32
  }
  func.func @transform_5(%arg0: i32, %arg1: i32) -> (i32, i32, i32) {
    %c0_i32 = arith.constant 0 : i32
    %c0_i32_0 = arith.constant 0 : i32
    return %arg0, %c0_i32, %arg1 : i32, i32, i32
  }
  func.func @transform_6(%arg0: i32, %arg1: i32) -> (i32, i32, i32) {
    %c0_i32 = arith.constant 0 : i32
    %c0_i32_0 = arith.constant 0 : i32
    %c0_i32_1 = arith.constant 0 : i32
    return %arg0, %c0_i32, %c0_i32_0 : i32, i32, i32
  }
}

module attributes {stable_mosaic.version = 11 : i64} {
  func.func @_norm_conv2_kernel(%arg0: i32, %arg1: i32, %arg2: memref<1x8x1024xf32, #tpu.memory_space<vmem>>, %arg3: memref<1x8x1024xf32, #tpu.memory_space<vmem>>, %arg4: memref<1x8x1024xf32, #tpu.memory_space<vmem>>, %arg5: memref<8x1024xi32, #tpu.memory_space<vmem>>, %arg6: memref<1x8x1xf32, #tpu.memory_space<vmem>>, %arg7: memref<1x8x1xf32, #tpu.memory_space<vmem>>, %arg8: memref<8x216xbf16, #tpu.memory_space<vmem>>, %arg9: memref<8x1xf32, #tpu.memory_space<vmem>>, %arg10: memref<1x8x1024xf32, #tpu.memory_space<vmem>>, %arg11: memref<216x1024xbf16, #tpu.memory_space<vmem>>) attributes {dimension_semantics = [#tpu.dimension_semantics<parallel>, #tpu.dimension_semantics<parallel>], iteration_bounds = array<i64: 2, 4>, scalar_prefetch = 0 : i64, scratch_operands = 1 : i64, tpu.core_type = #tpu.core_type<tc>, window_params = [{transform_indices = @transform_0, window_bounds = array<i64: 1, 8, 1024>}, {transform_indices = @transform_1, window_bounds = array<i64: 1, 8, 1024>}, {transform_indices = @transform_2, window_bounds = array<i64: 1, 8, 1024>}, {transform_indices = @transform_3, window_bounds = array<i64: 8, 1024>}, {transform_indices = @transform_4, window_bounds = array<i64: 1, 8, 1>}, {transform_indices = @transform_5, window_bounds = array<i64: 1, 8, 1>}, {pipeline_mode = #tpu.pipeline_mode<synchronous>, transform_indices = @transform_6, window_bounds = array<i64: 8, 216>}, {pipeline_mode = #tpu.pipeline_mode<synchronous>, transform_indices = @transform_7, window_bounds = array<i64: 8, 1>}, {transform_indices = @transform_8, window_bounds = array<i64: 1, 8, 1024>}]} {
    %c0 = arith.constant 0 : index
    %c0_0 = arith.constant 0 : index
    %0 = vector.load %arg5[%c0, %c0_0] : memref<8x1024xi32, #tpu.memory_space<vmem>>, vector<1x1024xi32>
    %c0_i32 = arith.constant 0 : i32
    %1 = vector.broadcast %c0_i32 : i32 to vector<1x1024xi32>
    %2 = arith.cmpi ne, %0, %1 : vector<1x1024xi32>
    %c1 = arith.constant 1 : index
    %c0_1 = arith.constant 0 : index
    %3 = vector.load %arg5[%c1, %c0_1] : memref<8x1024xi32, #tpu.memory_space<vmem>>, vector<1x1024xi32>
    %c0_i32_2 = arith.constant 0 : i32
    %4 = vector.broadcast %c0_i32_2 : i32 to vector<1x1024xi32>
    %5 = arith.cmpi ne, %3, %4 : vector<1x1024xi32>
    %c2 = arith.constant 2 : index
    %c0_3 = arith.constant 0 : index
    %6 = vector.load %arg5[%c2, %c0_3] : memref<8x1024xi32, #tpu.memory_space<vmem>>, vector<1x1024xi32>
    %c0_i32_4 = arith.constant 0 : i32
    %7 = vector.broadcast %c0_i32_4 : i32 to vector<1x1024xi32>
    %8 = arith.cmpi ne, %6, %7 : vector<1x1024xi32>
    %c3 = arith.constant 3 : index
    %c0_5 = arith.constant 0 : index
    %9 = vector.load %arg5[%c3, %c0_5] : memref<8x1024xi32, #tpu.memory_space<vmem>>, vector<1x1024xi32>
    %c0_i32_6 = arith.constant 0 : i32
    %10 = vector.broadcast %c0_i32_6 : i32 to vector<1x1024xi32>
    %11 = arith.cmpi ne, %9, %10 : vector<1x1024xi32>
    %c4 = arith.constant 4 : index
    %c0_7 = arith.constant 0 : index
    %12 = vector.load %arg5[%c4, %c0_7] : memref<8x1024xi32, #tpu.memory_space<vmem>>, vector<1x1024xi32>
    %c0_i32_8 = arith.constant 0 : i32
    %13 = vector.broadcast %c0_i32_8 : i32 to vector<1x1024xi32>
    %14 = arith.cmpi ne, %12, %13 : vector<1x1024xi32>
    %c5 = arith.constant 5 : index
    %c0_9 = arith.constant 0 : index
    %15 = vector.load %arg5[%c5, %c0_9] : memref<8x1024xi32, #tpu.memory_space<vmem>>, vector<1x1024xi32>
    %c0_i32_10 = arith.constant 0 : i32
    %16 = vector.broadcast %c0_i32_10 : i32 to vector<1x1024xi32>
    %17 = arith.cmpi ne, %15, %16 : vector<1x1024xi32>
    %18 = arith.andi %2, %8 : vector<1x1024xi1>
    %19 = arith.andi %18, %14 : vector<1x1024xi1>
    %20 = arith.andi %2, %14 : vector<1x1024xi1>
    %21 = arith.andi %2, %11 : vector<1x1024xi1>
    %22 = arith.andi %21, %14 : vector<1x1024xi1>
    %23 = arith.andi %8, %14 : vector<1x1024xi1>
    %24 = arith.andi %11, %14 : vector<1x1024xi1>
    %25 = arith.andi %5, %8 : vector<1x1024xi1>
    %26 = arith.andi %25, %14 : vector<1x1024xi1>
    %27 = arith.andi %5, %14 : vector<1x1024xi1>
    %28 = arith.andi %5, %11 : vector<1x1024xi1>
    %29 = arith.andi %28, %14 : vector<1x1024xi1>
    %30 = arith.andi %2, %8 : vector<1x1024xi1>
    %31 = arith.andi %2, %11 : vector<1x1024xi1>
    %32 = arith.andi %5, %8 : vector<1x1024xi1>
    %33 = arith.andi %5, %11 : vector<1x1024xi1>
    %34 = arith.andi %2, %8 : vector<1x1024xi1>
    %35 = arith.andi %34, %17 : vector<1x1024xi1>
    %36 = arith.andi %2, %17 : vector<1x1024xi1>
    %37 = arith.andi %2, %11 : vector<1x1024xi1>
    %38 = arith.andi %37, %17 : vector<1x1024xi1>
    %39 = arith.andi %8, %17 : vector<1x1024xi1>
    %40 = arith.andi %11, %17 : vector<1x1024xi1>
    %41 = arith.andi %5, %8 : vector<1x1024xi1>
    %42 = arith.andi %41, %17 : vector<1x1024xi1>
    %43 = arith.andi %5, %17 : vector<1x1024xi1>
    %44 = arith.andi %5, %11 : vector<1x1024xi1>
    %45 = arith.andi %44, %17 : vector<1x1024xi1>
    %c0_11 = arith.constant 0 : index
    %c0_12 = arith.constant 0 : index
    %c0_13 = arith.constant 0 : index
    %46 = vector.load %arg6[%c0_11, %c0_12, %c0_13] : memref<1x8x1xf32, #tpu.memory_space<vmem>>, vector<1x8x1xf32>
    %47 = vector.shape_cast %46 : vector<1x8x1xf32> to vector<8x1xf32>
    %c0_14 = arith.constant 0 : index
    %c0_15 = arith.constant 0 : index
    %c0_16 = arith.constant 0 : index
    %48 = vector.load %arg7[%c0_14, %c0_15, %c0_16] : memref<1x8x1xf32, #tpu.memory_space<vmem>>, vector<1x8x1xf32>
    %49 = vector.shape_cast %48 : vector<1x8x1xf32> to vector<8x1xf32>
    %c0_17 = arith.constant 0 : index
    %c0_18 = arith.constant 0 : index
    %c0_19 = arith.constant 0 : index
    %50 = vector.load %arg2[%c0_17, %c0_18, %c0_19] : memref<1x8x1024xf32, #tpu.memory_space<vmem>>, vector<1x8x1024xf32>
    %51 = vector.shape_cast %50 : vector<1x8x1024xf32> to vector<8x1024xf32>
    %52 = vector.broadcast %47 : vector<8x1xf32> to vector<8x1024xf32>
    %53 = arith.subf %51, %52 : vector<8x1024xf32>
    %54 = vector.broadcast %49 : vector<8x1xf32> to vector<8x1024xf32>
    %55 = arith.mulf %53, %54 : vector<8x1024xf32>
    %cst = arith.constant 5.000000e-01 : f32
    %56 = vector.broadcast %cst : f32 to vector<8x1024xf32>
    %57 = arith.mulf %56, %55 : vector<8x1024xf32>
    %cst_20 = arith.constant 1.41421354 : f32
    %58 = vector.broadcast %cst_20 : f32 to vector<8x1024xf32>
    %59 = arith.divf %55, %58 : vector<8x1024xf32>
    %60 = math.erf %59 : vector<8x1024xf32>
    %cst_21 = arith.constant 1.000000e+00 : f32
    %61 = vector.broadcast %cst_21 : f32 to vector<8x1024xf32>
    %62 = arith.addf %61, %60 : vector<8x1024xf32>
    %63 = arith.mulf %57, %62 : vector<8x1024xf32>
    %c0_22 = arith.constant 0 : index
    %c0_23 = arith.constant 0 : index
    %c0_24 = arith.constant 0 : index
    %64 = vector.load %arg3[%c0_22, %c0_23, %c0_24] : memref<1x8x1024xf32, #tpu.memory_space<vmem>>, vector<1x8x1024xf32>
    %65 = vector.shape_cast %64 : vector<1x8x1024xf32> to vector<8x1024xf32>
    %66 = vector.broadcast %47 : vector<8x1xf32> to vector<8x1024xf32>
    %67 = arith.subf %65, %66 : vector<8x1024xf32>
    %68 = vector.broadcast %49 : vector<8x1xf32> to vector<8x1024xf32>
    %69 = arith.mulf %67, %68 : vector<8x1024xf32>
    %cst_25 = arith.constant 5.000000e-01 : f32
    %70 = vector.broadcast %cst_25 : f32 to vector<8x1024xf32>
    %71 = arith.mulf %70, %69 : vector<8x1024xf32>
    %cst_26 = arith.constant 1.41421354 : f32
    %72 = vector.broadcast %cst_26 : f32 to vector<8x1024xf32>
    %73 = arith.divf %69, %72 : vector<8x1024xf32>
    %74 = math.erf %73 : vector<8x1024xf32>
    %cst_27 = arith.constant 1.000000e+00 : f32
    %75 = vector.broadcast %cst_27 : f32 to vector<8x1024xf32>
    %76 = arith.addf %75, %74 : vector<8x1024xf32>
    %77 = arith.mulf %71, %76 : vector<8x1024xf32>
    %c0_28 = arith.constant 0 : index
    %c0_29 = arith.constant 0 : index
    %c0_30 = arith.constant 0 : index
    %78 = vector.load %arg4[%c0_28, %c0_29, %c0_30] : memref<1x8x1024xf32, #tpu.memory_space<vmem>>, vector<1x8x1024xf32>
    %79 = vector.shape_cast %78 : vector<1x8x1024xf32> to vector<8x1024xf32>
    %80 = vector.broadcast %47 : vector<8x1xf32> to vector<8x1024xf32>
    %81 = arith.subf %79, %80 : vector<8x1024xf32>
    %82 = vector.broadcast %49 : vector<8x1xf32> to vector<8x1024xf32>
    %83 = arith.mulf %81, %82 : vector<8x1024xf32>
    %cst_31 = arith.constant 5.000000e-01 : f32
    %84 = vector.broadcast %cst_31 : f32 to vector<8x1024xf32>
    %85 = arith.mulf %84, %83 : vector<8x1024xf32>
    %cst_32 = arith.constant 1.41421354 : f32
    %86 = vector.broadcast %cst_32 : f32 to vector<8x1024xf32>
    %87 = arith.divf %83, %86 : vector<8x1024xf32>
    %88 = math.erf %87 : vector<8x1024xf32>
    %cst_33 = arith.constant 1.000000e+00 : f32
    %89 = vector.broadcast %cst_33 : f32 to vector<8x1024xf32>
    %90 = arith.addf %89, %88 : vector<8x1024xf32>
    %91 = arith.mulf %85, %90 : vector<8x1024xf32>
    %92 = vector.extract_strided_slice %63 {offsets = [0, 0], sizes = [8, 1007], strides = [1, 1]} : vector<8x1024xf32> to vector<8x1007xf32>
    %93 = vector.extract_strided_slice %19 {offsets = [0, 17], sizes = [1, 1007], strides = [1, 1]} : vector<1x1024xi1> to vector<1x1007xi1>
    %c0_i32_34 = arith.constant 0 : i32
    %94 = arith.sitofp %c0_i32_34 : i32 to f32
    %95 = vector.shape_cast %93 : vector<1x1007xi1> to vector<1x1007xi1>
    %96 = vector.broadcast %95 : vector<1x1007xi1> to vector<8x1007xi1>
    %97 = vector.broadcast %94 : f32 to vector<8x1007xf32>
    %98 = arith.select %96, %92, %97 : vector<8x1007xi1>, vector<8x1007xf32>
    %99 = arith.truncf %98 : vector<8x1007xf32> to vector<8x1007xbf16>
    %c0_35 = arith.constant 0 : index
    %c17 = arith.constant 17 : index
    %100 = vector.load %arg11[%c0_35, %c17] : memref<216x1024xbf16, #tpu.memory_space<vmem>>, vector<8x1007xbf16>
    tpu.vector_store %arg11[%c0_35, %c17], %99 {strides = array<i32>} : memref<216x1024xbf16, #tpu.memory_space<vmem>>, vector<8x1007xbf16>,
    %cst_36 = arith.constant 0.000000e+00 : bf16
    %101 = vector.broadcast %cst_36 : bf16 to vector<8x17xbf16>
    %c0_37 = arith.constant 0 : index
    %c0_38 = arith.constant 0 : index
    %102 = vector.load %arg11[%c0_37, %c0_38] : memref<216x1024xbf16, #tpu.memory_space<vmem>>, vector<8x17xbf16>
    tpu.vector_store %arg11[%c0_37, %c0_38], %101 {strides = array<i32>} : memref<216x1024xbf16, #tpu.memory_space<vmem>>, vector<8x17xbf16>,
    %103 = vector.extract_strided_slice %63 {offsets = [0, 0], sizes = [8, 1008], strides = [1, 1]} : vector<8x1024xf32> to vector<8x1008xf32>
    %104 = vector.extract_strided_slice %20 {offsets = [0, 16], sizes = [1, 1008], strides = [1, 1]} : vector<1x1024xi1> to vector<1x1008xi1>
    %c0_i32_39 = arith.constant 0 : i32
    %105 = arith.sitofp %c0_i32_39 : i32 to f32
    %106 = vector.shape_cast %104 : vector<1x1008xi1> to vector<1x1008xi1>
    %107 = vector.broadcast %106 : vector<1x1008xi1> to vector<8x1008xi1>
    %108 = vector.broadcast %105 : f32 to vector<8x1008xf32>
    %109 = arith.select %107, %103, %108 : vector<8x1008xi1>, vector<8x1008xf32>
    %110 = arith.truncf %109 : vector<8x1008xf32> to vector<8x1008xbf16>
    %c8 = arith.constant 8 : index
    %c16 = arith.constant 16 : index
    %111 = vector.load %arg11[%c8, %c16] : memref<216x1024xbf16, #tpu.memory_space<vmem>>, vector<8x1008xbf16>
    tpu.vector_store %arg11[%c8, %c16], %110 {strides = array<i32>} : memref<216x1024xbf16, #tpu.memory_space<vmem>>, vector<8x1008xbf16>,
    %cst_40 = arith.constant 0.000000e+00 : bf16
    %112 = vector.broadcast %cst_40 : bf16 to vector<8x16xbf16>
    %c8_41 = arith.constant 8 : index
    %c0_42 = arith.constant 0 : index
    %113 = vector.load %arg11[%c8_41, %c0_42] : memref<216x1024xbf16, #tpu.memory_space<vmem>>, vector<8x16xbf16>
    tpu.vector_store %arg11[%c8_41, %c0_42], %112 {strides = array<i32>} : memref<216x1024xbf16, #tpu.memory_space<vmem>>, vector<8x16xbf16>,
    %114 = vector.extract_strided_slice %63 {offsets = [0, 0], sizes = [8, 1009], strides = [1, 1]} : vector<8x1024xf32> to vector<8x1009xf32>
    %115 = vector.extract_strided_slice %22 {offsets = [0, 15], sizes = [1, 1009], strides = [1, 1]} : vector<1x1024xi1> to vector<1x1009xi1>
    %c0_i32_43 = arith.constant 0 : i32
    %116 = arith.sitofp %c0_i32_43 : i32 to f32
    %117 = vector.shape_cast %115 : vector<1x1009xi1> to vector<1x1009xi1>
    %118 = vector.broadcast %117 : vector<1x1009xi1> to vector<8x1009xi1>
    %119 = vector.broadcast %116 : f32 to vector<8x1009xf32>
    %120 = arith.select %118, %114, %119 : vector<8x1009xi1>, vector<8x1009xf32>
    %121 = arith.truncf %120 : vector<8x1009xf32> to vector<8x1009xbf16>
    %c16_44 = arith.constant 16 : index
    %c15 = arith.constant 15 : index
    %122 = vector.load %arg11[%c16_44, %c15] : memref<216x1024xbf16, #tpu.memory_space<vmem>>, vector<8x1009xbf16>
    tpu.vector_store %arg11[%c16_44, %c15], %121 {strides = array<i32>} : memref<216x1024xbf16, #tpu.memory_space<vmem>>, vector<8x1009xbf16>,
    %cst_45 = arith.constant 0.000000e+00 : bf16
    %123 = vector.broadcast %cst_45 : bf16 to vector<8x15xbf16>
    %c16_46 = arith.constant 16 : index
    %c0_47 = arith.constant 0 : index
    %124 = vector.load %arg11[%c16_46, %c0_47] : memref<216x1024xbf16, #tpu.memory_space<vmem>>, vector<8x15xbf16>
    tpu.vector_store %arg11[%c16_46, %c0_47], %123 {strides = array<i32>} : memref<216x1024xbf16, #tpu.memory_space<vmem>>, vector<8x15xbf16>,
    %125 = vector.extract_strided_slice %63 {offsets = [0, 0], sizes = [8, 1023], strides = [1, 1]} : vector<8x1024xf32> to vector<8x1023xf32>
    %126 = vector.extract_strided_slice %23 {offsets = [0, 1], sizes = [1, 1023], strides = [1, 1]} : vector<1x1024xi1> to vector<1x1023xi1>
    %c0_i32_48 = arith.constant 0 : i32
    %127 = arith.sitofp %c0_i32_48 : i32 to f32
    %128 = vector.shape_cast %126 : vector<1x1023xi1> to vector<1x1023xi1>
    %129 = vector.broadcast %128 : vector<1x1023xi1> to vector<8x1023xi1>
    %130 = vector.broadcast %127 : f32 to vector<8x1023xf32>
    %131 = arith.select %129, %125, %130 : vector<8x1023xi1>, vector<8x1023xf32>
    %132 = arith.truncf %131 : vector<8x1023xf32> to vector<8x1023xbf16>
    %c24 = arith.constant 24 : index
    %c1_49 = arith.constant 1 : index
    %133 = vector.load %arg11[%c24, %c1_49] : memref<216x1024xbf16, #tpu.memory_space<vmem>>, vector<8x1023xbf16>
    tpu.vector_store %arg11[%c24, %c1_49], %132 {strides = array<i32>} : memref<216x1024xbf16, #tpu.memory_space<vmem>>, vector<8x1023xbf16>,
    %cst_50 = arith.constant 0.000000e+00 : bf16
    %134 = vector.broadcast %cst_50 : bf16 to vector<8x1xbf16>
    %c24_51 = arith.constant 24 : index
    %c0_52 = arith.constant 0 : index
    %135 = vector.load %arg11[%c24_51, %c0_52] : memref<216x1024xbf16, #tpu.memory_space<vmem>>, vector<8x1xbf16>
    tpu.vector_store %arg11[%c24_51, %c0_52], %134 {strides = array<i32>} : memref<216x1024xbf16, #tpu.memory_space<vmem>>, vector<8x1xbf16>,
    %c0_i32_53 = arith.constant 0 : i32
    %136 = arith.sitofp %c0_i32_53 : i32 to f32
    %137 = vector.shape_cast %14 : vector<1x1024xi1> to vector<1x1024xi1>
    %138 = vector.broadcast %137 : vector<1x1024xi1> to vector<8x1024xi1>
    %139 = vector.broadcast %136 : f32 to vector<8x1024xf32>
    %140 = arith.select %138, %63, %139 : vector<8x1024xi1>, vector<8x1024xf32>
    %141 = arith.truncf %140 : vector<8x1024xf32> to vector<8x1024xbf16>
    %c32 = arith.constant 32 : index
    %c0_54 = arith.constant 0 : index
    %142 = vector.load %arg11[%c32, %c0_54] : memref<216x1024xbf16, #tpu.memory_space<vmem>>, vector<8x1024xbf16>
    tpu.vector_store %arg11[%c32, %c0_54], %141 {strides = array<i32>} : memref<216x1024xbf16, #tpu.memory_space<vmem>>, vector<8x1024xbf16>,
    %143 = vector.extract_strided_slice %63 {offsets = [0, 1], sizes = [8, 1023], strides = [1, 1]} : vector<8x1024xf32> to vector<8x1023xf32>
    %144 = vector.extract_strided_slice %24 {offsets = [0, 0], sizes = [1, 1023], strides = [1, 1]} : vector<1x1024xi1> to vector<1x1023xi1>
    %c0_i32_55 = arith.constant 0 : i32
    %145 = arith.sitofp %c0_i32_55 : i32 to f32
    %146 = vector.shape_cast %144 : vector<1x1023xi1> to vector<1x1023xi1>
    %147 = vector.broadcast %146 : vector<1x1023xi1> to vector<8x1023xi1>
    %148 = vector.broadcast %145 : f32 to vector<8x1023xf32>
    %149 = arith.select %147, %143, %148 : vector<8x1023xi1>, vector<8x1023xf32>
    %150 = arith.truncf %149 : vector<8x1023xf32> to vector<8x1023xbf16>
    %c40 = arith.constant 40 : index
    %c0_56 = arith.constant 0 : index
    %151 = vector.load %arg11[%c40, %c0_56] : memref<216x1024xbf16, #tpu.memory_space<vmem>>, vector<8x1023xbf16>
    tpu.vector_store %arg11[%c40, %c0_56], %150 {strides = array<i32>} : memref<216x1024xbf16, #tpu.memory_space<vmem>>, vector<8x1023xbf16>,
    %cst_57 = arith.constant 0.000000e+00 : bf16
    %152 = vector.broadcast %cst_57 : bf16 to vector<8x1xbf16>
    %c40_58 = arith.constant 40 : index
    %c1023 = arith.constant 1023 : index
    %153 = vector.load %arg11[%c40_58, %c1023] : memref<216x1024xbf16, #tpu.memory_space<vmem>>, vector<8x1xbf16>
    tpu.vector_store %arg11[%c40_58, %c1023], %152 {strides = array<i32>} : memref<216x1024xbf16, #tpu.memory_space<vmem>>, vector<8x1xbf16>,
    %154 = vector.extract_strided_slice %63 {offsets = [0, 15], sizes = [8, 1009], strides = [1, 1]} : vector<8x1024xf32> to vector<8x1009xf32>
    %155 = vector.extract_strided_slice %26 {offsets = [0, 0], sizes = [1, 1009], strides = [1, 1]} : vector<1x1024xi1> to vector<1x1009xi1>
    %c0_i32_59 = arith.constant 0 : i32
    %156 = arith.sitofp %c0_i32_59 : i32 to f32
    %157 = vector.shape_cast %155 : vector<1x1009xi1> to vector<1x1009xi1>
    %158 = vector.broadcast %157 : vector<1x1009xi1> to vector<8x1009xi1>
    %159 = vector.broadcast %156 : f32 to vector<8x1009xf32>
    %160 = arith.select %158, %154, %159 : vector<8x1009xi1>, vector<8x1009xf32>
    %161 = arith.truncf %160 : vector<8x1009xf32> to vector<8x1009xbf16>
    %c48 = arith.constant 48 : index
    %c0_60 = arith.constant 0 : index
    %162 = vector.load %arg11[%c48, %c0_60] : memref<216x1024xbf16, #tpu.memory_space<vmem>>, vector<8x1009xbf16>
    tpu.vector_store %arg11[%c48, %c0_60], %161 {strides = array<i32>} : memref<216x1024xbf16, #tpu.memory_space<vmem>>, vector<8x1009xbf16>,
    %cst_61 = arith.constant 0.000000e+00 : bf16
    %163 = vector.broadcast %cst_61 : bf16 to vector<8x15xbf16>
    %c48_62 = arith.constant 48 : index
    %c1009 = arith.constant 1009 : index
    %164 = vector.load %arg11[%c48_62, %c1009] : memref<216x1024xbf16, #tpu.memory_space<vmem>>, vector<8x15xbf16>
    tpu.vector_store %arg11[%c48_62, %c1009], %163 {strides = array<i32>} : memref<216x1024xbf16, #tpu.memory_space<vmem>>, vector<8x15xbf16>,
    %165 = vector.extract_strided_slice %63 {offsets = [0, 16], sizes = [8, 1008], strides = [1, 1]} : vector<8x1024xf32> to vector<8x1008xf32>
    %166 = vector.extract_strided_slice %27 {offsets = [0, 0], sizes = [1, 1008], strides = [1, 1]} : vector<1x1024xi1> to vector<1x1008xi1>
    %c0_i32_63 = arith.constant 0 : i32
    %167 = arith.sitofp %c0_i32_63 : i32 to f32
    %168 = vector.shape_cast %166 : vector<1x1008xi1> to vector<1x1008xi1>
    %169 = vector.broadcast %168 : vector<1x1008xi1> to vector<8x1008xi1>
    %170 = vector.broadcast %167 : f32 to vector<8x1008xf32>
    %171 = arith.select %169, %165, %170 : vector<8x1008xi1>, vector<8x1008xf32>
    %172 = arith.truncf %171 : vector<8x1008xf32> to vector<8x1008xbf16>
    %c56 = arith.constant 56 : index
    %c0_64 = arith.constant 0 : index
    %173 = vector.load %arg11[%c56, %c0_64] : memref<216x1024xbf16, #tpu.memory_space<vmem>>, vector<8x1008xbf16>
    tpu.vector_store %arg11[%c56, %c0_64], %172 {strides = array<i32>} : memref<216x1024xbf16, #tpu.memory_space<vmem>>, vector<8x1008xbf16>,
    %cst_65 = arith.constant 0.000000e+00 : bf16
    %174 = vector.broadcast %cst_65 : bf16 to vector<8x16xbf16>
    %c56_66 = arith.constant 56 : index
    %c1008 = arith.constant 1008 : index
    %175 = vector.load %arg11[%c56_66, %c1008] : memref<216x1024xbf16, #tpu.memory_space<vmem>>, vector<8x16xbf16>
    tpu.vector_store %arg11[%c56_66, %c1008], %174 {strides = array<i32>} : memref<216x1024xbf16, #tpu.memory_space<vmem>>, vector<8x16xbf16>,
    %176 = vector.extract_strided_slice %63 {offsets = [0, 17], sizes = [8, 1007], strides = [1, 1]} : vector<8x1024xf32> to vector<8x1007xf32>
    %177 = vector.extract_strided_slice %29 {offsets = [0, 0], sizes = [1, 1007], strides = [1, 1]} : vector<1x1024xi1> to vector<1x1007xi1>
    %c0_i32_67 = arith.constant 0 : i32
    %178 = arith.sitofp %c0_i32_67 : i32 to f32
    %179 = vector.shape_cast %177 : vector<1x1007xi1> to vector<1x1007xi1>
    %180 = vector.broadcast %179 : vector<1x1007xi1> to vector<8x1007xi1>
    %181 = vector.broadcast %178 : f32 to vector<8x1007xf32>
    %182 = arith.select %180, %176, %181 : vector<8x1007xi1>, vector<8x1007xf32>
    %183 = arith.truncf %182 : vector<8x1007xf32> to vector<8x1007xbf16>
    %c64 = arith.constant 64 : index
    %c0_68 = arith.constant 0 : index
    %184 = vector.load %arg11[%c64, %c0_68] : memref<216x1024xbf16, #tpu.memory_space<vmem>>, vector<8x1007xbf16>
    tpu.vector_store %arg11[%c64, %c0_68], %183 {strides = array<i32>} : memref<216x1024xbf16, #tpu.memory_space<vmem>>, vector<8x1007xbf16>,
    %cst_69 = arith.constant 0.000000e+00 : bf16
    %185 = vector.broadcast %cst_69 : bf16 to vector<8x17xbf16>
    %c64_70 = arith.constant 64 : index
    %c1007 = arith.constant 1007 : index
    %186 = vector.load %arg11[%c64_70, %c1007] : memref<216x1024xbf16, #tpu.memory_space<vmem>>, vector<8x17xbf16>
    tpu.vector_store %arg11[%c64_70, %c1007], %185 {strides = array<i32>} : memref<216x1024xbf16, #tpu.memory_space<vmem>>, vector<8x17xbf16>,
    %187 = vector.extract_strided_slice %77 {offsets = [0, 0], sizes = [8, 1007], strides = [1, 1]} : vector<8x1024xf32> to vector<8x1007xf32>
    %188 = vector.extract_strided_slice %30 {offsets = [0, 17], sizes = [1, 1007], strides = [1, 1]} : vector<1x1024xi1> to vector<1x1007xi1>
    %c0_i32_71 = arith.constant 0 : i32
    %189 = arith.sitofp %c0_i32_71 : i32 to f32
    %190 = vector.shape_cast %188 : vector<1x1007xi1> to vector<1x1007xi1>
    %191 = vector.broadcast %190 : vector<1x1007xi1> to vector<8x1007xi1>
    %192 = vector.broadcast %189 : f32 to vector<8x1007xf32>
    %193 = arith.select %191, %187, %192 : vector<8x1007xi1>, vector<8x1007xf32>
    %194 = arith.truncf %193 : vector<8x1007xf32> to vector<8x1007xbf16>
    %c72 = arith.constant 72 : index
    %c17_72 = arith.constant 17 : index
    %195 = vector.load %arg11[%c72, %c17_72] : memref<216x1024xbf16, #tpu.memory_space<vmem>>, vector<8x1007xbf16>
    tpu.vector_store %arg11[%c72, %c17_72], %194 {strides = array<i32>} : memref<216x1024xbf16, #tpu.memory_space<vmem>>, vector<8x1007xbf16>,
    %cst_73 = arith.constant 0.000000e+00 : bf16
    %196 = vector.broadcast %cst_73 : bf16 to vector<8x17xbf16>
    %c72_74 = arith.constant 72 : index
    %c0_75 = arith.constant 0 : index
    %197 = vector.load %arg11[%c72_74, %c0_75] : memref<216x1024xbf16, #tpu.memory_space<vmem>>, vector<8x17xbf16>
    tpu.vector_store %arg11[%c72_74, %c0_75], %196 {strides = array<i32>} : memref<216x1024xbf16, #tpu.memory_space<vmem>>, vector<8x17xbf16>,
    %198 = vector.extract_strided_slice %77 {offsets = [0, 0], sizes = [8, 1008], strides = [1, 1]} : vector<8x1024xf32> to vector<8x1008xf32>
    %199 = vector.extract_strided_slice %2 {offsets = [0, 16], sizes = [1, 1008], strides = [1, 1]} : vector<1x1024xi1> to vector<1x1008xi1>
    %c0_i32_76 = arith.constant 0 : i32
    %200 = arith.sitofp %c0_i32_76 : i32 to f32
    %201 = vector.shape_cast %199 : vector<1x1008xi1> to vector<1x1008xi1>
    %202 = vector.broadcast %201 : vector<1x1008xi1> to vector<8x1008xi1>
    %203 = vector.broadcast %200 : f32 to vector<8x1008xf32>
    %204 = arith.select %202, %198, %203 : vector<8x1008xi1>, vector<8x1008xf32>
    %205 = arith.truncf %204 : vector<8x1008xf32> to vector<8x1008xbf16>
    %c80 = arith.constant 80 : index
    %c16_77 = arith.constant 16 : index
    %206 = vector.load %arg11[%c80, %c16_77] : memref<216x1024xbf16, #tpu.memory_space<vmem>>, vector<8x1008xbf16>
    tpu.vector_store %arg11[%c80, %c16_77], %205 {strides = array<i32>} : memref<216x1024xbf16, #tpu.memory_space<vmem>>, vector<8x1008xbf16>,
    %cst_78 = arith.constant 0.000000e+00 : bf16
    %207 = vector.broadcast %cst_78 : bf16 to vector<8x16xbf16>
    %c80_79 = arith.constant 80 : index
    %c0_80 = arith.constant 0 : index
    %208 = vector.load %arg11[%c80_79, %c0_80] : memref<216x1024xbf16, #tpu.memory_space<vmem>>, vector<8x16xbf16>
    tpu.vector_store %arg11[%c80_79, %c0_80], %207 {strides = array<i32>} : memref<216x1024xbf16, #tpu.memory_space<vmem>>, vector<8x16xbf16>,
    %209 = vector.extract_strided_slice %77 {offsets = [0, 0], sizes = [8, 1009], strides = [1, 1]} : vector<8x1024xf32> to vector<8x1009xf32>
    %210 = vector.extract_strided_slice %31 {offsets = [0, 15], sizes = [1, 1009], strides = [1, 1]} : vector<1x1024xi1> to vector<1x1009xi1>
    %c0_i32_81 = arith.constant 0 : i32
    %211 = arith.sitofp %c0_i32_81 : i32 to f32
    %212 = vector.shape_cast %210 : vector<1x1009xi1> to vector<1x1009xi1>
    %213 = vector.broadcast %212 : vector<1x1009xi1> to vector<8x1009xi1>
    %214 = vector.broadcast %211 : f32 to vector<8x1009xf32>
    %215 = arith.select %213, %209, %214 : vector<8x1009xi1>, vector<8x1009xf32>
    %216 = arith.truncf %215 : vector<8x1009xf32> to vector<8x1009xbf16>
    %c88 = arith.constant 88 : index
    %c15_82 = arith.constant 15 : index
    %217 = vector.load %arg11[%c88, %c15_82] : memref<216x1024xbf16, #tpu.memory_space<vmem>>, vector<8x1009xbf16>
    tpu.vector_store %arg11[%c88, %c15_82], %216 {strides = array<i32>} : memref<216x1024xbf16, #tpu.memory_space<vmem>>, vector<8x1009xbf16>,
    %cst_83 = arith.constant 0.000000e+00 : bf16
    %218 = vector.broadcast %cst_83 : bf16 to vector<8x15xbf16>
    %c88_84 = arith.constant 88 : index
    %c0_85 = arith.constant 0 : index
    %219 = vector.load %arg11[%c88_84, %c0_85] : memref<216x1024xbf16, #tpu.memory_space<vmem>>, vector<8x15xbf16>
    tpu.vector_store %arg11[%c88_84, %c0_85], %218 {strides = array<i32>} : memref<216x1024xbf16, #tpu.memory_space<vmem>>, vector<8x15xbf16>,
    %220 = vector.extract_strided_slice %77 {offsets = [0, 0], sizes = [8, 1023], strides = [1, 1]} : vector<8x1024xf32> to vector<8x1023xf32>
    %221 = vector.extract_strided_slice %8 {offsets = [0, 1], sizes = [1, 1023], strides = [1, 1]} : vector<1x1024xi1> to vector<1x1023xi1>
    %c0_i32_86 = arith.constant 0 : i32
    %222 = arith.sitofp %c0_i32_86 : i32 to f32
    %223 = vector.shape_cast %221 : vector<1x1023xi1> to vector<1x1023xi1>
    %224 = vector.broadcast %223 : vector<1x1023xi1> to vector<8x1023xi1>
    %225 = vector.broadcast %222 : f32 to vector<8x1023xf32>
    %226 = arith.select %224, %220, %225 : vector<8x1023xi1>, vector<8x1023xf32>
    %227 = arith.truncf %226 : vector<8x1023xf32> to vector<8x1023xbf16>
    %c96 = arith.constant 96 : index
    %c1_87 = arith.constant 1 : index
    %228 = vector.load %arg11[%c96, %c1_87] : memref<216x1024xbf16, #tpu.memory_space<vmem>>, vector<8x1023xbf16>
    tpu.vector_store %arg11[%c96, %c1_87], %227 {strides = array<i32>} : memref<216x1024xbf16, #tpu.memory_space<vmem>>, vector<8x1023xbf16>,
    %cst_88 = arith.constant 0.000000e+00 : bf16
    %229 = vector.broadcast %cst_88 : bf16 to vector<8x1xbf16>
    %c96_89 = arith.constant 96 : index
    %c0_90 = arith.constant 0 : index
    %230 = vector.load %arg11[%c96_89, %c0_90] : memref<216x1024xbf16, #tpu.memory_space<vmem>>, vector<8x1xbf16>
    tpu.vector_store %arg11[%c96_89, %c0_90], %229 {strides = array<i32>} : memref<216x1024xbf16, #tpu.memory_space<vmem>>, vector<8x1xbf16>,
    %231 = arith.truncf %77 : vector<8x1024xf32> to vector<8x1024xbf16>
    %c104 = arith.constant 104 : index
    %c0_91 = arith.constant 0 : index
    %232 = vector.load %arg11[%c104, %c0_91] : memref<216x1024xbf16, #tpu.memory_space<vmem>>, vector<8x1024xbf16>
    tpu.vector_store %arg11[%c104, %c0_91], %231 {strides = array<i32>} : memref<216x1024xbf16, #tpu.memory_space<vmem>>, vector<8x1024xbf16>,
    %233 = vector.extract_strided_slice %77 {offsets = [0, 1], sizes = [8, 1023], strides = [1, 1]} : vector<8x1024xf32> to vector<8x1023xf32>
    %234 = vector.extract_strided_slice %11 {offsets = [0, 0], sizes = [1, 1023], strides = [1, 1]} : vector<1x1024xi1> to vector<1x1023xi1>
    %c0_i32_92 = arith.constant 0 : i32
    %235 = arith.sitofp %c0_i32_92 : i32 to f32
    %236 = vector.shape_cast %234 : vector<1x1023xi1> to vector<1x1023xi1>
    %237 = vector.broadcast %236 : vector<1x1023xi1> to vector<8x1023xi1>
    %238 = vector.broadcast %235 : f32 to vector<8x1023xf32>
    %239 = arith.select %237, %233, %238 : vector<8x1023xi1>, vector<8x1023xf32>
    %240 = arith.truncf %239 : vector<8x1023xf32> to vector<8x1023xbf16>
    %c112 = arith.constant 112 : index
    %c0_93 = arith.constant 0 : index
    %241 = vector.load %arg11[%c112, %c0_93] : memref<216x1024xbf16, #tpu.memory_space<vmem>>, vector<8x1023xbf16>
    tpu.vector_store %arg11[%c112, %c0_93], %240 {strides = array<i32>} : memref<216x1024xbf16, #tpu.memory_space<vmem>>, vector<8x1023xbf16>,
    %cst_94 = arith.constant 0.000000e+00 : bf16
    %242 = vector.broadcast %cst_94 : bf16 to vector<8x1xbf16>
    %c112_95 = arith.constant 112 : index
    %c1023_96 = arith.constant 1023 : index
    %243 = vector.load %arg11[%c112_95, %c1023_96] : memref<216x1024xbf16, #tpu.memory_space<vmem>>, vector<8x1xbf16>
    tpu.vector_store %arg11[%c112_95, %c1023_96], %242 {strides = array<i32>} : memref<216x1024xbf16, #tpu.memory_space<vmem>>, vector<8x1xbf16>,
    %244 = vector.extract_strided_slice %77 {offsets = [0, 15], sizes = [8, 1009], strides = [1, 1]} : vector<8x1024xf32> to vector<8x1009xf32>
    %245 = vector.extract_strided_slice %32 {offsets = [0, 0], sizes = [1, 1009], strides = [1, 1]} : vector<1x1024xi1> to vector<1x1009xi1>
    %c0_i32_97 = arith.constant 0 : i32
    %246 = arith.sitofp %c0_i32_97 : i32 to f32
    %247 = vector.shape_cast %245 : vector<1x1009xi1> to vector<1x1009xi1>
    %248 = vector.broadcast %247 : vector<1x1009xi1> to vector<8x1009xi1>
    %249 = vector.broadcast %246 : f32 to vector<8x1009xf32>
    %250 = arith.select %248, %244, %249 : vector<8x1009xi1>, vector<8x1009xf32>
    %251 = arith.truncf %250 : vector<8x1009xf32> to vector<8x1009xbf16>
    %c120 = arith.constant 120 : index
    %c0_98 = arith.constant 0 : index
    %252 = vector.load %arg11[%c120, %c0_98] : memref<216x1024xbf16, #tpu.memory_space<vmem>>, vector<8x1009xbf16>
    tpu.vector_store %arg11[%c120, %c0_98], %251 {strides = array<i32>} : memref<216x1024xbf16, #tpu.memory_space<vmem>>, vector<8x1009xbf16>,
    %cst_99 = arith.constant 0.000000e+00 : bf16
    %253 = vector.broadcast %cst_99 : bf16 to vector<8x15xbf16>
    %c120_100 = arith.constant 120 : index
    %c1009_101 = arith.constant 1009 : index
    %254 = vector.load %arg11[%c120_100, %c1009_101] : memref<216x1024xbf16, #tpu.memory_space<vmem>>, vector<8x15xbf16>
    tpu.vector_store %arg11[%c120_100, %c1009_101], %253 {strides = array<i32>} : memref<216x1024xbf16, #tpu.memory_space<vmem>>, vector<8x15xbf16>,
    %255 = vector.extract_strided_slice %77 {offsets = [0, 16], sizes = [8, 1008], strides = [1, 1]} : vector<8x1024xf32> to vector<8x1008xf32>
    %256 = vector.extract_strided_slice %5 {offsets = [0, 0], sizes = [1, 1008], strides = [1, 1]} : vector<1x1024xi1> to vector<1x1008xi1>
    %c0_i32_102 = arith.constant 0 : i32
    %257 = arith.sitofp %c0_i32_102 : i32 to f32
    %258 = vector.shape_cast %256 : vector<1x1008xi1> to vector<1x1008xi1>
    %259 = vector.broadcast %258 : vector<1x1008xi1> to vector<8x1008xi1>
    %260 = vector.broadcast %257 : f32 to vector<8x1008xf32>
    %261 = arith.select %259, %255, %260 : vector<8x1008xi1>, vector<8x1008xf32>
    %262 = arith.truncf %261 : vector<8x1008xf32> to vector<8x1008xbf16>
    %c128 = arith.constant 128 : index
    %c0_103 = arith.constant 0 : index
    %263 = vector.load %arg11[%c128, %c0_103] : memref<216x1024xbf16, #tpu.memory_space<vmem>>, vector<8x1008xbf16>
    tpu.vector_store %arg11[%c128, %c0_103], %262 {strides = array<i32>} : memref<216x1024xbf16, #tpu.memory_space<vmem>>, vector<8x1008xbf16>,
    %cst_104 = arith.constant 0.000000e+00 : bf16
    %264 = vector.broadcast %cst_104 : bf16 to vector<8x16xbf16>
    %c128_105 = arith.constant 128 : index
    %c1008_106 = arith.constant 1008 : index
    %265 = vector.load %arg11[%c128_105, %c1008_106] : memref<216x1024xbf16, #tpu.memory_space<vmem>>, vector<8x16xbf16>
    tpu.vector_store %arg11[%c128_105, %c1008_106], %264 {strides = array<i32>} : memref<216x1024xbf16, #tpu.memory_space<vmem>>, vector<8x16xbf16>,
    %266 = vector.extract_strided_slice %77 {offsets = [0, 17], sizes = [8, 1007], strides = [1, 1]} : vector<8x1024xf32> to vector<8x1007xf32>
    %267 = vector.extract_strided_slice %33 {offsets = [0, 0], sizes = [1, 1007], strides = [1, 1]} : vector<1x1024xi1> to vector<1x1007xi1>
    %c0_i32_107 = arith.constant 0 : i32
    %268 = arith.sitofp %c0_i32_107 : i32 to f32
    %269 = vector.shape_cast %267 : vector<1x1007xi1> to vector<1x1007xi1>
    %270 = vector.broadcast %269 : vector<1x1007xi1> to vector<8x1007xi1>
    %271 = vector.broadcast %268 : f32 to vector<8x1007xf32>
    %272 = arith.select %270, %266, %271 : vector<8x1007xi1>, vector<8x1007xf32>
    %273 = arith.truncf %272 : vector<8x1007xf32> to vector<8x1007xbf16>
    %c136 = arith.constant 136 : index
    %c0_108 = arith.constant 0 : index
    %274 = vector.load %arg11[%c136, %c0_108] : memref<216x1024xbf16, #tpu.memory_space<vmem>>, vector<8x1007xbf16>
    tpu.vector_store %arg11[%c136, %c0_108], %273 {strides = array<i32>} : memref<216x1024xbf16, #tpu.memory_space<vmem>>, vector<8x1007xbf16>,
    %cst_109 = arith.constant 0.000000e+00 : bf16
    %275 = vector.broadcast %cst_109 : bf16 to vector<8x17xbf16>
    %c136_110 = arith.constant 136 : index
    %c1007_111 = arith.constant 1007 : index
    %276 = vector.load %arg11[%c136_110, %c1007_111] : memref<216x1024xbf16, #tpu.memory_space<vmem>>, vector<8x17xbf16>
    tpu.vector_store %arg11[%c136_110, %c1007_111], %275 {strides = array<i32>} : memref<216x1024xbf16, #tpu.memory_space<vmem>>, vector<8x17xbf16>,
    %277 = vector.extract_strided_slice %91 {offsets = [0, 0], sizes = [8, 1007], strides = [1, 1]} : vector<8x1024xf32> to vector<8x1007xf32>
    %278 = vector.extract_strided_slice %35 {offsets = [0, 17], sizes = [1, 1007], strides = [1, 1]} : vector<1x1024xi1> to vector<1x1007xi1>
    %c0_i32_112 = arith.constant 0 : i32
    %279 = arith.sitofp %c0_i32_112 : i32 to f32
    %280 = vector.shape_cast %278 : vector<1x1007xi1> to vector<1x1007xi1>
    %281 = vector.broadcast %280 : vector<1x1007xi1> to vector<8x1007xi1>
    %282 = vector.broadcast %279 : f32 to vector<8x1007xf32>
    %283 = arith.select %281, %277, %282 : vector<8x1007xi1>, vector<8x1007xf32>
    %284 = arith.truncf %283 : vector<8x1007xf32> to vector<8x1007xbf16>
    %c144 = arith.constant 144 : index
    %c17_113 = arith.constant 17 : index
    %285 = vector.load %arg11[%c144, %c17_113] : memref<216x1024xbf16, #tpu.memory_space<vmem>>, vector<8x1007xbf16>
    tpu.vector_store %arg11[%c144, %c17_113], %284 {strides = array<i32>} : memref<216x1024xbf16, #tpu.memory_space<vmem>>, vector<8x1007xbf16>,
    %cst_114 = arith.constant 0.000000e+00 : bf16
    %286 = vector.broadcast %cst_114 : bf16 to vector<8x17xbf16>
    %c144_115 = arith.constant 144 : index
    %c0_116 = arith.constant 0 : index
    %287 = vector.load %arg11[%c144_115, %c0_116] : memref<216x1024xbf16, #tpu.memory_space<vmem>>, vector<8x17xbf16>
    tpu.vector_store %arg11[%c144_115, %c0_116], %286 {strides = array<i32>} : memref<216x1024xbf16, #tpu.memory_space<vmem>>, vector<8x17xbf16>,
    %288 = vector.extract_strided_slice %91 {offsets = [0, 0], sizes = [8, 1008], strides = [1, 1]} : vector<8x1024xf32> to vector<8x1008xf32>
    %289 = vector.extract_strided_slice %36 {offsets = [0, 16], sizes = [1, 1008], strides = [1, 1]} : vector<1x1024xi1> to vector<1x1008xi1>
    %c0_i32_117 = arith.constant 0 : i32
    %290 = arith.sitofp %c0_i32_117 : i32 to f32
    %291 = vector.shape_cast %289 : vector<1x1008xi1> to vector<1x1008xi1>
    %292 = vector.broadcast %291 : vector<1x1008xi1> to vector<8x1008xi1>
    %293 = vector.broadcast %290 : f32 to vector<8x1008xf32>
    %294 = arith.select %292, %288, %293 : vector<8x1008xi1>, vector<8x1008xf32>
    %295 = arith.truncf %294 : vector<8x1008xf32> to vector<8x1008xbf16>
    %c152 = arith.constant 152 : index
    %c16_118 = arith.constant 16 : index
    %296 = vector.load %arg11[%c152, %c16_118] : memref<216x1024xbf16, #tpu.memory_space<vmem>>, vector<8x1008xbf16>
    tpu.vector_store %arg11[%c152, %c16_118], %295 {strides = array<i32>} : memref<216x1024xbf16, #tpu.memory_space<vmem>>, vector<8x1008xbf16>,
    %cst_119 = arith.constant 0.000000e+00 : bf16
    %297 = vector.broadcast %cst_119 : bf16 to vector<8x16xbf16>
    %c152_120 = arith.constant 152 : index
    %c0_121 = arith.constant 0 : index
    %298 = vector.load %arg11[%c152_120, %c0_121] : memref<216x1024xbf16, #tpu.memory_space<vmem>>, vector<8x16xbf16>
    tpu.vector_store %arg11[%c152_120, %c0_121], %297 {strides = array<i32>} : memref<216x1024xbf16, #tpu.memory_space<vmem>>, vector<8x16xbf16>,
    %299 = vector.extract_strided_slice %91 {offsets = [0, 0], sizes = [8, 1009], strides = [1, 1]} : vector<8x1024xf32> to vector<8x1009xf32>
    %300 = vector.extract_strided_slice %38 {offsets = [0, 15], sizes = [1, 1009], strides = [1, 1]} : vector<1x1024xi1> to vector<1x1009xi1>
    %c0_i32_122 = arith.constant 0 : i32
    %301 = arith.sitofp %c0_i32_122 : i32 to f32
    %302 = vector.shape_cast %300 : vector<1x1009xi1> to vector<1x1009xi1>
    %303 = vector.broadcast %302 : vector<1x1009xi1> to vector<8x1009xi1>
    %304 = vector.broadcast %301 : f32 to vector<8x1009xf32>
    %305 = arith.select %303, %299, %304 : vector<8x1009xi1>, vector<8x1009xf32>
    %306 = arith.truncf %305 : vector<8x1009xf32> to vector<8x1009xbf16>
    %c160 = arith.constant 160 : index
    %c15_123 = arith.constant 15 : index
    %307 = vector.load %arg11[%c160, %c15_123] : memref<216x1024xbf16, #tpu.memory_space<vmem>>, vector<8x1009xbf16>
    tpu.vector_store %arg11[%c160, %c15_123], %306 {strides = array<i32>} : memref<216x1024xbf16, #tpu.memory_space<vmem>>, vector<8x1009xbf16>,
    %cst_124 = arith.constant 0.000000e+00 : bf16
    %308 = vector.broadcast %cst_124 : bf16 to vector<8x15xbf16>
    %c160_125 = arith.constant 160 : index
    %c0_126 = arith.constant 0 : index
    %309 = vector.load %arg11[%c160_125, %c0_126] : memref<216x1024xbf16, #tpu.memory_space<vmem>>, vector<8x15xbf16>
    tpu.vector_store %arg11[%c160_125, %c0_126], %308 {strides = array<i32>} : memref<216x1024xbf16, #tpu.memory_space<vmem>>, vector<8x15xbf16>,
    %310 = vector.extract_strided_slice %91 {offsets = [0, 0], sizes = [8, 1023], strides = [1, 1]} : vector<8x1024xf32> to vector<8x1023xf32>
    %311 = vector.extract_strided_slice %39 {offsets = [0, 1], sizes = [1, 1023], strides = [1, 1]} : vector<1x1024xi1> to vector<1x1023xi1>
    %c0_i32_127 = arith.constant 0 : i32
    %312 = arith.sitofp %c0_i32_127 : i32 to f32
    %313 = vector.shape_cast %311 : vector<1x1023xi1> to vector<1x1023xi1>
    %314 = vector.broadcast %313 : vector<1x1023xi1> to vector<8x1023xi1>
    %315 = vector.broadcast %312 : f32 to vector<8x1023xf32>
    %316 = arith.select %314, %310, %315 : vector<8x1023xi1>, vector<8x1023xf32>
    %317 = arith.truncf %316 : vector<8x1023xf32> to vector<8x1023xbf16>
    %c168 = arith.constant 168 : index
    %c1_128 = arith.constant 1 : index
    %318 = vector.load %arg11[%c168, %c1_128] : memref<216x1024xbf16, #tpu.memory_space<vmem>>, vector<8x1023xbf16>
    tpu.vector_store %arg11[%c168, %c1_128], %317 {strides = array<i32>} : memref<216x1024xbf16, #tpu.memory_space<vmem>>, vector<8x1023xbf16>,
    %cst_129 = arith.constant 0.000000e+00 : bf16
    %319 = vector.broadcast %cst_129 : bf16 to vector<8x1xbf16>
    %c168_130 = arith.constant 168 : index
    %c0_131 = arith.constant 0 : index
    %320 = vector.load %arg11[%c168_130, %c0_131] : memref<216x1024xbf16, #tpu.memory_space<vmem>>, vector<8x1xbf16>
    tpu.vector_store %arg11[%c168_130, %c0_131], %319 {strides = array<i32>} : memref<216x1024xbf16, #tpu.memory_space<vmem>>, vector<8x1xbf16>,
    %c0_i32_132 = arith.constant 0 : i32
    %321 = arith.sitofp %c0_i32_132 : i32 to f32
    %322 = vector.shape_cast %17 : vector<1x1024xi1> to vector<1x1024xi1>
    %323 = vector.broadcast %322 : vector<1x1024xi1> to vector<8x1024xi1>
    %324 = vector.broadcast %321 : f32 to vector<8x1024xf32>
    %325 = arith.select %323, %91, %324 : vector<8x1024xi1>, vector<8x1024xf32>
    %326 = arith.truncf %325 : vector<8x1024xf32> to vector<8x1024xbf16>
    %c176 = arith.constant 176 : index
    %c0_133 = arith.constant 0 : index
    %327 = vector.load %arg11[%c176, %c0_133] : memref<216x1024xbf16, #tpu.memory_space<vmem>>, vector<8x1024xbf16>
    tpu.vector_store %arg11[%c176, %c0_133], %326 {strides = array<i32>} : memref<216x1024xbf16, #tpu.memory_space<vmem>>, vector<8x1024xbf16>,
    %328 = vector.extract_strided_slice %91 {offsets = [0, 1], sizes = [8, 1023], strides = [1, 1]} : vector<8x1024xf32> to vector<8x1023xf32>
    %329 = vector.extract_strided_slice %40 {offsets = [0, 0], sizes = [1, 1023], strides = [1, 1]} : vector<1x1024xi1> to vector<1x1023xi1>
    %c0_i32_134 = arith.constant 0 : i32
    %330 = arith.sitofp %c0_i32_134 : i32 to f32
    %331 = vector.shape_cast %329 : vector<1x1023xi1> to vector<1x1023xi1>
    %332 = vector.broadcast %331 : vector<1x1023xi1> to vector<8x1023xi1>
    %333 = vector.broadcast %330 : f32 to vector<8x1023xf32>
    %334 = arith.select %332, %328, %333 : vector<8x1023xi1>, vector<8x1023xf32>
    %335 = arith.truncf %334 : vector<8x1023xf32> to vector<8x1023xbf16>
    %c184 = arith.constant 184 : index
    %c0_135 = arith.constant 0 : index
    %336 = vector.load %arg11[%c184, %c0_135] : memref<216x1024xbf16, #tpu.memory_space<vmem>>, vector<8x1023xbf16>
    tpu.vector_store %arg11[%c184, %c0_135], %335 {strides = array<i32>} : memref<216x1024xbf16, #tpu.memory_space<vmem>>, vector<8x1023xbf16>,
    %cst_136 = arith.constant 0.000000e+00 : bf16
    %337 = vector.broadcast %cst_136 : bf16 to vector<8x1xbf16>
    %c184_137 = arith.constant 184 : index
    %c1023_138 = arith.constant 1023 : index
    %338 = vector.load %arg11[%c184_137, %c1023_138] : memref<216x1024xbf16, #tpu.memory_space<vmem>>, vector<8x1xbf16>
    tpu.vector_store %arg11[%c184_137, %c1023_138], %337 {strides = array<i32>} : memref<216x1024xbf16, #tpu.memory_space<vmem>>, vector<8x1xbf16>,
    %339 = vector.extract_strided_slice %91 {offsets = [0, 15], sizes = [8, 1009], strides = [1, 1]} : vector<8x1024xf32> to vector<8x1009xf32>
    %340 = vector.extract_strided_slice %42 {offsets = [0, 0], sizes = [1, 1009], strides = [1, 1]} : vector<1x1024xi1> to vector<1x1009xi1>
    %c0_i32_139 = arith.constant 0 : i32
    %341 = arith.sitofp %c0_i32_139 : i32 to f32
    %342 = vector.shape_cast %340 : vector<1x1009xi1> to vector<1x1009xi1>
    %343 = vector.broadcast %342 : vector<1x1009xi1> to vector<8x1009xi1>
    %344 = vector.broadcast %341 : f32 to vector<8x1009xf32>
    %345 = arith.select %343, %339, %344 : vector<8x1009xi1>, vector<8x1009xf32>
    %346 = arith.truncf %345 : vector<8x1009xf32> to vector<8x1009xbf16>
    %c192 = arith.constant 192 : index
    %c0_140 = arith.constant 0 : index
    %347 = vector.load %arg11[%c192, %c0_140] : memref<216x1024xbf16, #tpu.memory_space<vmem>>, vector<8x1009xbf16>
    tpu.vector_store %arg11[%c192, %c0_140], %346 {strides = array<i32>} : memref<216x1024xbf16, #tpu.memory_space<vmem>>, vector<8x1009xbf16>,
    %cst_141 = arith.constant 0.000000e+00 : bf16
    %348 = vector.broadcast %cst_141 : bf16 to vector<8x15xbf16>
    %c192_142 = arith.constant 192 : index
    %c1009_143 = arith.constant 1009 : index
    %349 = vector.load %arg11[%c192_142, %c1009_143] : memref<216x1024xbf16, #tpu.memory_space<vmem>>, vector<8x15xbf16>
    tpu.vector_store %arg11[%c192_142, %c1009_143], %348 {strides = array<i32>} : memref<216x1024xbf16, #tpu.memory_space<vmem>>, vector<8x15xbf16>,
    %350 = vector.extract_strided_slice %91 {offsets = [0, 16], sizes = [8, 1008], strides = [1, 1]} : vector<8x1024xf32> to vector<8x1008xf32>
    %351 = vector.extract_strided_slice %43 {offsets = [0, 0], sizes = [1, 1008], strides = [1, 1]} : vector<1x1024xi1> to vector<1x1008xi1>
    %c0_i32_144 = arith.constant 0 : i32
    %352 = arith.sitofp %c0_i32_144 : i32 to f32
    %353 = vector.shape_cast %351 : vector<1x1008xi1> to vector<1x1008xi1>
    %354 = vector.broadcast %353 : vector<1x1008xi1> to vector<8x1008xi1>
    %355 = vector.broadcast %352 : f32 to vector<8x1008xf32>
    %356 = arith.select %354, %350, %355 : vector<8x1008xi1>, vector<8x1008xf32>
    %357 = arith.truncf %356 : vector<8x1008xf32> to vector<8x1008xbf16>
    %c200 = arith.constant 200 : index
    %c0_145 = arith.constant 0 : index
    %358 = vector.load %arg11[%c200, %c0_145] : memref<216x1024xbf16, #tpu.memory_space<vmem>>, vector<8x1008xbf16>
    tpu.vector_store %arg11[%c200, %c0_145], %357 {strides = array<i32>} : memref<216x1024xbf16, #tpu.memory_space<vmem>>, vector<8x1008xbf16>,
    %cst_146 = arith.constant 0.000000e+00 : bf16
    %359 = vector.broadcast %cst_146 : bf16 to vector<8x16xbf16>
    %c200_147 = arith.constant 200 : index
    %c1008_148 = arith.constant 1008 : index
    %360 = vector.load %arg11[%c200_147, %c1008_148] : memref<216x1024xbf16, #tpu.memory_space<vmem>>, vector<8x16xbf16>
    tpu.vector_store %arg11[%c200_147, %c1008_148], %359 {strides = array<i32>} : memref<216x1024xbf16, #tpu.memory_space<vmem>>, vector<8x16xbf16>,
    %361 = vector.extract_strided_slice %91 {offsets = [0, 17], sizes = [8, 1007], strides = [1, 1]} : vector<8x1024xf32> to vector<8x1007xf32>
    %362 = vector.extract_strided_slice %45 {offsets = [0, 0], sizes = [1, 1007], strides = [1, 1]} : vector<1x1024xi1> to vector<1x1007xi1>
    %c0_i32_149 = arith.constant 0 : i32
    %363 = arith.sitofp %c0_i32_149 : i32 to f32
    %364 = vector.shape_cast %362 : vector<1x1007xi1> to vector<1x1007xi1>
    %365 = vector.broadcast %364 : vector<1x1007xi1> to vector<8x1007xi1>
    %366 = vector.broadcast %363 : f32 to vector<8x1007xf32>
    %367 = arith.select %365, %361, %366 : vector<8x1007xi1>, vector<8x1007xf32>
    %368 = arith.truncf %367 : vector<8x1007xf32> to vector<8x1007xbf16>
    %c208 = arith.constant 208 : index
    %c0_150 = arith.constant 0 : index
    %369 = vector.load %arg11[%c208, %c0_150] : memref<216x1024xbf16, #tpu.memory_space<vmem>>, vector<8x1007xbf16>
    tpu.vector_store %arg11[%c208, %c0_150], %368 {strides = array<i32>} : memref<216x1024xbf16, #tpu.memory_space<vmem>>, vector<8x1007xbf16>,
    %cst_151 = arith.constant 0.000000e+00 : bf16
    %370 = vector.broadcast %cst_151 : bf16 to vector<8x17xbf16>
    %c208_152 = arith.constant 208 : index
    %c1007_153 = arith.constant 1007 : index
    %371 = vector.load %arg11[%c208_152, %c1007_153] : memref<216x1024xbf16, #tpu.memory_space<vmem>>, vector<8x17xbf16>
    tpu.vector_store %arg11[%c208_152, %c1007_153], %370 {strides = array<i32>} : memref<216x1024xbf16, #tpu.memory_space<vmem>>, vector<8x17xbf16>,
    %c0_154 = arith.constant 0 : index
    %c0_155 = arith.constant 0 : index
    %372 = vector.load %arg8[%c0_154, %c0_155] : memref<8x216xbf16, #tpu.memory_space<vmem>>, vector<8x216xbf16>
    %c0_156 = arith.constant 0 : index
    %c0_157 = arith.constant 0 : index
    %373 = vector.load %arg11[%c0_156, %c0_157] : memref<216x1024xbf16, #tpu.memory_space<vmem>>, vector<216x1024xbf16>
    %cst_158 = arith.constant dense<0.000000e+00> : vector<8x1024xf32>
    %374 = tpu.matmul %372, %373, %cst_158 {dimension_numbers = #tpu.dot_dimension_numbers<[1], [0], [0], [1], [0, 0, 1, 1], [], []>} : vector<8x216xbf16>, vector<216x1024xbf16>, vector<8x1024xf32> -> vector<8x1024xf32>
    %c0_159 = arith.constant 0 : index
    %c0_160 = arith.constant 0 : index
    %375 = vector.load %arg9[%c0_159, %c0_160] : memref<8x1xf32, #tpu.memory_space<vmem>>, vector<8x1xf32>
    %376 = vector.broadcast %375 : vector<8x1xf32> to vector<8x1024xf32>
    %377 = arith.addf %374, %376 : vector<8x1024xf32>
    %cst_161 = arith.constant 5.000000e-01 : f32
    %378 = vector.broadcast %cst_161 : f32 to vector<8x1024xf32>
    %379 = arith.mulf %378, %377 : vector<8x1024xf32>
    %cst_162 = arith.constant 1.41421354 : f32
    %380 = vector.broadcast %cst_162 : f32 to vector<8x1024xf32>
    %381 = arith.divf %377, %380 : vector<8x1024xf32>
    %382 = math.erf %381 : vector<8x1024xf32>
    %cst_163 = arith.constant 1.000000e+00 : f32
    %383 = vector.broadcast %cst_163 : f32 to vector<8x1024xf32>
    %384 = arith.addf %383, %382 : vector<8x1024xf32>
    %385 = arith.mulf %379, %384 : vector<8x1024xf32>
    %386 = arith.addf %385, %77 : vector<8x1024xf32>
    %c0_164 = arith.constant 0 : index
    %c0_165 = arith.constant 0 : index
    %c0_166 = arith.constant 0 : index
    %387 = vector.load %arg10[%c0_164, %c0_165, %c0_166] : memref<1x8x1024xf32, #tpu.memory_space<vmem>>, vector<1x8x1024xf32>
    %388 = vector.shape_cast %387 : vector<1x8x1024xf32> to vector<8x1024xf32>
    %389 = vector.shape_cast %386 : vector<8x1024xf32> to vector<1x8x1024xf32>
    tpu.vector_store %arg10[%c0_164, %c0_165, %c0_166], %389 {strides = array<i32>} : memref<1x8x1024xf32, #tpu.memory_space<vmem>>, vector<1x8x1024xf32>,
    return
  }
  func.func @transform_0(%arg0: i32, %arg1: i32) -> (i32, i32, i32) {
    %c0_i32 = arith.constant 0 : i32
    %c0_i32_0 = arith.constant 0 : i32
    return %arg0, %c0_i32, %arg1 : i32, i32, i32
  }
  func.func @transform_1(%arg0: i32, %arg1: i32) -> (i32, i32, i32) {
    %c0_i32 = arith.constant 0 : i32
    %c0_i32_0 = arith.constant 0 : i32
    return %arg0, %c0_i32, %arg1 : i32, i32, i32
  }
  func.func @transform_2(%arg0: i32, %arg1: i32) -> (i32, i32, i32) {
    %c0_i32 = arith.constant 0 : i32
    %c0_i32_0 = arith.constant 0 : i32
    return %arg0, %c0_i32, %arg1 : i32, i32, i32
  }
  func.func @transform_3(%arg0: i32, %arg1: i32) -> (i32, i32) {
    %c0_i32 = arith.constant 0 : i32
    %c0_i32_0 = arith.constant 0 : i32
    return %c0_i32, %arg1 : i32, i32
  }
  func.func @transform_4(%arg0: i32, %arg1: i32) -> (i32, i32, i32) {
    %c0_i32 = arith.constant 0 : i32
    %c0_i32_0 = arith.constant 0 : i32
    %c0_i32_1 = arith.constant 0 : i32
    return %arg0, %c0_i32, %c0_i32_0 : i32, i32, i32
  }
  func.func @transform_5(%arg0: i32, %arg1: i32) -> (i32, i32, i32) {
    %c0_i32 = arith.constant 0 : i32
    %c0_i32_0 = arith.constant 0 : i32
    %c0_i32_1 = arith.constant 0 : i32
    return %arg0, %c0_i32, %c0_i32_0 : i32, i32, i32
  }
  func.func @transform_6(%arg0: i32, %arg1: i32) -> (i32, i32) {
    %c0_i32 = arith.constant 0 : i32
    %c0_i32_0 = arith.constant 0 : i32
    %c0_i32_1 = arith.constant 0 : i32
    return %c0_i32, %c0_i32_0 : i32, i32
  }
  func.func @transform_7(%arg0: i32, %arg1: i32) -> (i32, i32) {
    %c0_i32 = arith.constant 0 : i32
    %c0_i32_0 = arith.constant 0 : i32
    %c0_i32_1 = arith.constant 0 : i32
    return %c0_i32, %c0_i32_0 : i32, i32
  }
  func.func @transform_8(%arg0: i32, %arg1: i32) -> (i32, i32, i32) {
    %c0_i32 = arith.constant 0 : i32
    %c0_i32_0 = arith.constant 0 : i32
    return %arg0, %c0_i32, %arg1 : i32, i32, i32
  }
}

</mosaic_0001>

<llo_original>
// kernel: conv_ins_block.2
$region0: #{conv_ins_block.2}
  #allocation0 [shape = 'u32[]', space=smem, size = 0x4, offset = 0x4, fixed_abs, tag = 'smem constant byte address 0x4 - core index']
  #allocation1 [shape = 'u32[144,128]{1,0:T(1,128)}', space=vmem, size = 0x12000, scoped, tag = 'internal scratch']
  #allocation2 [shape = 'bf16[216,1024]{1,0:T(8,128)(2,1)}', space=vmem, size = 0x6c000, scoped, tag = 'scratch operand']
  #allocation3 [shape = 'f32[8,2]{1,0:T(8,128)}', space=vmem, size = 0x1000, scoped, tag = 'scratch operand']
  %s0 = inlined_call_operand.vmem [shape: f32[2,8,4096], index: 0, kind: input, shape index: {}]
  %s1 = inlined_call_operand.vmem [shape: f32[2,8,4096], index: 1, kind: input, shape index: {}]
  %s2 = inlined_call_operand.vmem [shape: f32[2,8,4096], index: 2, kind: input, shape index: {}]
  %s3 = inlined_call_operand.vmem [shape: s32[8,4096], index: 3, kind: input, shape index: {}]
  %s4 = inlined_call_operand.vmem [shape: bf16[8,216], index: 4, kind: input, shape index: {}]
  %s5 = inlined_call_operand.vmem [shape: f32[2,8,4096], index: 5, kind: output, shape index: {0}]
  %s6 = inlined_call_operand.vmem [shape: f32[2,8,2], index: 6, kind: output, shape index: {1}]
  %7 = xla_tuple %s5, %s6
  %s8 = sld [smem:[#allocation0]]
  $region65: #{conv_ins_block.2} parent=0
    _
  %s10 = ssub.s32 1, %s8
  %s11 = scalar_select 0, %s10, %s8
  loop: start=0, step=1, limit=10
  $region2: #{conv_ins_block.2} parent=0 // loop_pre_header
    _
  $region3: #{conv_ins_block.2} parent=0 // loop_header
    %s13 = sphi 0, %s17
    %p14 = scmp.ge.s32.totalorder %s13, 10
    %s20 = sphi 0, %s32
    %s21 = sphi 0, %s28
    %s22 = sphi 0, %s20
    %s23 = sphi 0, %s21
    %s24 = sphi 0, %s22
    %s25 = sphi 0, %s23
    %s37 = sphi 0, %s39
    %s40 = sphi 0, %s37
    %s41 = sphi 0, %s40
    %s57 = sphi 0, %s41
    %s65 = sphi 0, %s67
    %s68 = sphi 0, %s65
    %s69 = sphi 0, %s68
    %s85 = sphi 0, %s69
    %s93 = sphi 0, %s95
    %s96 = sphi 0, %s93
    %s97 = sphi 0, %s96
    %s113 = sphi 0, %s97
    %s119 = sphi 0, %s121
    %s122 = sphi 0, %s119
    %s123 = sphi 0, %s122
    %s139 = sphi 0, %s123
    %s143 = sphi 0, %s143
    %s145 = sphi 0, %s143
    %s146 = sphi 0, %s145
    %s160 = sphi 0, %s146
    %s168 = sphi 0, %s170
    %s171 = sphi 0, %s168
    %s172 = sphi 0, %s171
    %s188 = sphi 0, %s172
    %s194 = sphi 0, %s196
    %s197 = sphi 0, %s194
    %s198 = sphi 0, %s197
    %s214 = sphi 0, %s198
  $region4: #{conv_ins_block.2} parent=0 // loop_header_branch
    %16 = sbr.rel (%p14) target = $region8
  $region5: #{conv_ins_block.2} parent=0 // loop_body
    %s18 = ssub.s32 %s13, 1
    %s19 = ssub.s32 %s13, 2
    %s26 = sadd.s32 1, %s21
    %p27 = scmp.ge.s32.totalorder %s26, 4
    %s28 = scalar_select %p27, 0, %s26
    %s29 = sadd.s32 1, %s20
    %s30 = scalar_select %p27, %s29, %s20
    %p31 = scmp.ge.s32.totalorder %s30, 2
    %s32 = scalar_select %p31, 0, %s30
    %s33 = ssub.s32 %s20, %s32
    %s34 = ssub.s32 %s21, %s28
    %s35 = sor.u32 %s33, %s34
    %p36 = scmp.eq.s32.totalorder %s35, 0
    %s38 = sadd.s32 %s37, 1
    %s39 = scalar_select %p36, %s37, %s38
    %p42 = pneg %p36
    %p43 = scmp.eq.s32.totalorder %s13, 7
    %p44 = por %p42, %p43
    %p45 = scmp.ne.s32.totalorder %s37, %s40
    %p46 = scmp.eq.s32.totalorder %s13, 0
    %p47 = por %p45, %p46
    %p48 = scmp.ne.s32.totalorder %s37, %s40
    %p49 = scmp.eq.s32.totalorder %s18, 7
    %p50 = por %p48, %p49
    %p51 = scmp.ne.s32.totalorder %s40, %s41
    %p52 = scmp.eq.s32.totalorder %s18, 0
    %p53 = por %p51, %p52
    %p54 = scmp.ne.s32.totalorder %s40, %s41
    %p55 = scmp.eq.s32.totalorder %s19, 7
    %p56 = por %p54, %p55
    %p58 = scmp.ne.s32.totalorder %s41, %s57
    %p59 = scmp.eq.s32.totalorder %s19, 0
    %p60 = por %p58, %p59
    %s61 = ssub.s32 %s20, %s32
    %s62 = ssub.s32 %s21, %s28
    %s63 = sor.u32 %s61, %s62
    %p64 = scmp.eq.s32.totalorder %s63, 0
    %s66 = sadd.s32 %s65, 1
    %s67 = scalar_select %p64, %s65, %s66
    %p70 = pneg %p64
    %p71 = scmp.eq.s32.totalorder %s13, 7
    %p72 = por %p70, %p71
    %p73 = scmp.ne.s32.totalorder %s65, %s68
    %p74 = scmp.eq.s32.totalorder %s13, 0
    %p75 = por %p73, %p74
    %p76 = scmp.ne.s32.totalorder %s65, %s68
    %p77 = scmp.eq.s32.totalorder %s18, 7
    %p78 = por %p76, %p77
    %p79 = scmp.ne.s32.totalorder %s68, %s69
    %p80 = scmp.eq.s32.totalorder %s18, 0
    %p81 = por %p79, %p80
    %p82 = scmp.ne.s32.totalorder %s68, %s69
    %p83 = scmp.eq.s32.totalorder %s19, 7
    %p84 = por %p82, %p83
    %p86 = scmp.ne.s32.totalorder %s69, %s85
    %p87 = scmp.eq.s32.totalorder %s19, 0
    %p88 = por %p86, %p87
    %s89 = ssub.s32 %s20, %s32
    %s90 = ssub.s32 %s21, %s28
    %s91 = sor.u32 %s89, %s90
    %p92 = scmp.eq.s32.totalorder %s91, 0
    %s94 = sadd.s32 %s93, 1
    %s95 = scalar_select %p92, %s93, %s94
    %p98 = pneg %p92
    %p99 = scmp.eq.s32.totalorder %s13, 7
    %p100 = por %p98, %p99
    %p101 = scmp.ne.s32.totalorder %s93, %s96
    %p102 = scmp.eq.s32.totalorder %s13, 0
    %p103 = por %p101, %p102
    %p104 = scmp.ne.s32.totalorder %s93, %s96
    %p105 = scmp.eq.s32.totalorder %s18, 7
    %p106 = por %p104, %p105
    %p107 = scmp.ne.s32.totalorder %s96, %s97
    %p108 = scmp.eq.s32.totalorder %s18, 0
    %p109 = por %p107, %p108
    %p110 = scmp.ne.s32.totalorder %s96, %s97
    %p111 = scmp.eq.s32.totalorder %s19, 7
    %p112 = por %p110, %p111
    %p114 = scmp.ne.s32.totalorder %s97, %s113
    %p115 = scmp.eq.s32.totalorder %s19, 0
    %p116 = por %p114, %p115
    %s117 = ssub.s32 %s21, %s28
    %p118 = scmp.eq.s32.totalorder %s117, 0
    %s120 = sadd.s32 %s119, 1
    %s121 = scalar_select %p118, %s119, %s120
    %p124 = pneg %p118
    %p125 = scmp.eq.s32.totalorder %s13, 7
    %p126 = por %p124, %p125
    %p127 = scmp.ne.s32.totalorder %s119, %s122
    %p128 = scmp.eq.s32.totalorder %s13, 0
    %p129 = por %p127, %p128
    %p130 = scmp.ne.s32.totalorder %s119, %s122
    %p131 = scmp.eq.s32.totalorder %s18, 7
    %p132 = por %p130, %p131
    %p133 = scmp.ne.s32.totalorder %s122, %s123
    %p134 = scmp.eq.s32.totalorder %s18, 0
    %p135 = por %p133, %p134
    %p136 = scmp.ne.s32.totalorder %s122, %s123
    %p137 = scmp.eq.s32.totalorder %s19, 7
    %p138 = por %p136, %p137
    %p140 = scmp.ne.s32.totalorder %s123, %s139
    %p141 = scmp.eq.s32.totalorder %s19, 0
    %p142 = por %p140, %p141
    %s144 = sadd.s32 %s143, 1
    %p147 = scmp.eq.s32.totalorder %s13, 7
    %p148 = scmp.ne.s32.totalorder %s143, %s145
    %p149 = scmp.eq.s32.totalorder %s13, 0
    %p150 = por %p148, %p149
    %p151 = scmp.ne.s32.totalorder %s143, %s145
    %p152 = scmp.eq.s32.totalorder %s18, 7
    %p153 = por %p151, %p152
    %p154 = scmp.ne.s32.totalorder %s145, %s146
    %p155 = scmp.eq.s32.totalorder %s18, 0
    %p156 = por %p154, %p155
    %p157 = scmp.ne.s32.totalorder %s145, %s146
    %p158 = scmp.eq.s32.totalorder %s19, 7
    %p159 = por %p157, %p158
    %p161 = scmp.ne.s32.totalorder %s146, %s160
    %p162 = scmp.eq.s32.totalorder %s19, 0
    %p163 = por %p161, %p162
    %s164 = ssub.s32 %s20, %s32
    %s165 = ssub.s32 %s21, %s28
    %s166 = sor.u32 %s164, %s165
    %p167 = scmp.eq.s32.totalorder %s166, 0
    %s169 = sadd.s32 %s168, 1
    %s170 = scalar_select %p167, %s168, %s169
    %p173 = pneg %p167
    %p174 = scmp.eq.s32.totalorder %s13, 7
    %p175 = por %p173, %p174
    %p176 = scmp.ne.s32.totalorder %s168, %s171
    %p177 = scmp.eq.s32.totalorder %s13, 0
    %p178 = por %p176, %p177
    %p179 = scmp.ne.s32.totalorder %s168, %s171
    %p180 = scmp.eq.s32.totalorder %s18, 7
    %p181 = por %p179, %p180
    %p182 = scmp.ne.s32.totalorder %s171, %s172
    %p183 = scmp.eq.s32.totalorder %s18, 0
    %p184 = por %p182, %p183
    %p185 = scmp.ne.s32.totalorder %s171, %s172
    %p186 = scmp.eq.s32.totalorder %s19, 7
    %p187 = por %p185, %p186
    %p189 = scmp.ne.s32.totalorder %s172, %s188
    %p190 = scmp.eq.s32.totalorder %s19, 0
    %p191 = por %p189, %p190
    %s192 = ssub.s32 %s20, %s32
    %p193 = scmp.eq.s32.totalorder %s192, 0
    %s195 = sadd.s32 %s194, 1
    %s196 = scalar_select %p193, %s194, %s195
    %p199 = pneg %p193
    %p200 = scmp.eq.s32.totalorder %s13, 7
    %p201 = por %p199, %p200
    %p202 = scmp.ne.s32.totalorder %s194, %s197
    %p203 = scmp.eq.s32.totalorder %s13, 0
    %p204 = por %p202, %p203
    %p205 = scmp.ne.s32.totalorder %s194, %s197
    %p206 = scmp.eq.s32.totalorder %s18, 7
    %p207 = por %p205, %p206
    %p208 = scmp.ne.s32.totalorder %s197, %s198
    %p209 = scmp.eq.s32.totalorder %s18, 0
    %p210 = por %p208, %p209
    %p211 = scmp.ne.s32.totalorder %s197, %s198
    %p212 = scmp.eq.s32.totalorder %s19, 7
    %p213 = por %p211, %p212
    %p215 = scmp.ne.s32.totalorder %s198, %s214
    %p216 = scmp.eq.s32.totalorder %s19, 0
    %p217 = por %p215, %p216
    %p218 = scmp.le.s32.totalorder 1, %s13
    %p219 = scmp.lt.s32.totalorder %s13, 9
    %p220 = pnand %p218, %p219
    %p221 = pneg %p220
    // Predicated region
    $region9: #{conv_ins_block.2} parent=5 // pred_check
      _
    $region10: #{conv_ins_block.2} parent=5 // pred_check_branch
      %223 = sbr.rel (%p220) target = $region12
    $region11: #{conv_ins_block.2} parent=5 // pred_region
      %s224 = ssub.s32 %s13, 1
      // Predicated region
      $region13: #{conv_ins_block.2} parent=11 // pred_check
        %p225 = pneg %p156
      $region14: #{conv_ins_block.2} parent=11 // pred_check_branch
        %227 = sbr.rel (%p225) target = $region16
      $region15: #{conv_ins_block.2} parent=11 // pred_region
        _
      $region16: #{conv_ins_block.2} parent=11 // pred_fallthru
        _
    $region12: #{conv_ins_block.2} parent=5 // pred_fallthru
      _
    %p228 = scmp.lt.s32.totalorder %s13, 8
    // Predicated region
    $region17: #{conv_ins_block.2} parent=5 // pred_check
      %p229 = pneg %p228
    $region18: #{conv_ins_block.2} parent=5 // pred_check_branch
      %231 = sbr.rel (%p229) target = $region20
    $region19: #{conv_ins_block.2} parent=5 // pred_region
      // Predicated region
      $region21: #{conv_ins_block.2} parent=19 // pred_check
        %p232 = pneg %p47
      $region22: #{conv_ins_block.2} parent=19 // pred_check_branch
        %234 = sbr.rel (%p232) target = $region24
      $region23: #{conv_ins_block.2} parent=19 // pred_region
        %s235 = smul.u32 8, %s21
        %p236 = scmp.lt.s32.totalorder %s20, 1
        %s237 = scalar_select %p236, %s20, 1
        %p238 = scmp.lt.s32.totalorder %s235, 31
        %s239 = scalar_select %p238, %s235, 31
        %s240 = smul.addr %s237, 32
        %s241 = sadd.s32 %s239, %s240
        %s242 = smul.addr %s241, 8
        %s243 = scalar_lea.vmem %s0, %s242
        %s244 = smul.u32 8, %s21
      $region24: #{conv_ins_block.2} parent=19 // pred_fallthru
        _
      // Predicated region
      $region25: #{conv_ins_block.2} parent=19 // pred_check
        %p245 = pneg %p75
      $region26: #{conv_ins_block.2} parent=19 // pred_check_branch
        %247 = sbr.rel (%p245) target = $region28
      $region27: #{conv_ins_block.2} parent=19 // pred_region
        %s248 = smul.u32 8, %s21
        %p249 = scmp.lt.s32.totalorder %s20, 1
        %s250 = scalar_select %p249, %s20, 1
        %p251 = scmp.lt.s32.totalorder %s248, 31
        %s252 = scalar_select %p251, %s248, 31
        %s253 = smul.addr %s250, 32
        %s254 = sadd.s32 %s252, %s253
        %s255 = smul.addr %s254, 8
        %s256 = scalar_lea.vmem %s1, %s255
        %s257 = smul.u32 8, %s21
      $region28: #{conv_ins_block.2} parent=19 // pred_fallthru
        _
      // Predicated region
      $region29: #{conv_ins_block.2} parent=19 // pred_check
        %p258 = pneg %p103
      $region30: #{conv_ins_block.2} parent=19 // pred_check_branch
        %260 = sbr.rel (%p258) target = $region32
      $region31: #{conv_ins_block.2} parent=19 // pred_region
        %s261 = smul.u32 8, %s21
        %p262 = scmp.lt.s32.totalorder %s20, 1
        %s263 = scalar_select %p262, %s20, 1
        %p264 = scmp.lt.s32.totalorder %s261, 31
        %s265 = scalar_select %p264, %s261, 31
        %s266 = smul.addr %s263, 32
        %s267 = sadd.s32 %s265, %s266
        %s268 = smul.addr %s267, 8
        %s269 = scalar_lea.vmem %s2, %s268
        %s270 = smul.u32 8, %s21
      $region32: #{conv_ins_block.2} parent=19 // pred_fallthru
        _
      // Predicated region
      $region33: #{conv_ins_block.2} parent=19 // pred_check
        %p271 = pneg %p129
      $region34: #{conv_ins_block.2} parent=19 // pred_check_branch
        %273 = sbr.rel (%p271) target = $region36
      $region35: #{conv_ins_block.2} parent=19 // pred_region
        %s274 = smul.u32 8, %s21
        %p275 = scmp.lt.s32.totalorder %s274, 31
        %s276 = scalar_select %p275, %s274, 31
        %s277 = smul.addr %s276, 8
        %s278 = scalar_lea.vmem %s3, %s277
        %s279 = smul.u32 8, %s21
      $region36: #{conv_ins_block.2} parent=19 // pred_fallthru
        _
    $region20: #{conv_ins_block.2} parent=5 // pred_fallthru
      _
    %p280 = scmp.le.s32.totalorder 1, %s13
    %p281 = scmp.lt.s32.totalorder %s13, 9
    %p282 = pnand %p280, %p281
    %p283 = pneg %p282
    // Predicated region
    $region37: #{conv_ins_block.2} parent=5 // pred_check
      _
    $region38: #{conv_ins_block.2} parent=5 // pred_check_branch
      %285 = sbr.rel (%p282) target = $region40
    $region39: #{conv_ins_block.2} parent=5 // pred_region
      %s286 = ssub.s32 %s13, 1
      %s287 = smul.u32 8, %s23
      %p288 = scmp.lt.s32.totalorder %s22, 1
      %s289 = scalar_select %p288, %s22, 1
      %p290 = scmp.lt.s32.totalorder %s287, 31
      %s291 = scalar_select %p290, %s287, 31
      %s292 = smul.addr %s289, 32
      %s293 = sadd.s32 %s291, %s292
      %s294 = smul.addr %s293, 8
      %s295 = scalar_lea.vmem %s0, %s294
      %p296 = pneg %p53
      %p297 = pneg %p50
      %s298 = smul.u32 8, %s23
      %p299 = scmp.lt.s32.totalorder %s22, 1
      %s300 = scalar_select %p299, %s22, 1
      %p301 = scmp.lt.s32.totalorder %s298, 31
      %s302 = scalar_select %p301, %s298, 31
      %s303 = smul.addr %s300, 32
      %s304 = sadd.s32 %s302, %s303
      %s305 = smul.addr %s304, 8
      %s306 = scalar_lea.vmem %s1, %s305
      %p307 = pneg %p81
      %p308 = pneg %p78
      %s309 = smul.u32 8, %s23
      %p310 = scmp.lt.s32.totalorder %s22, 1
      %s311 = scalar_select %p310, %s22, 1
      %p312 = scmp.lt.s32.totalorder %s309, 31
      %s313 = scalar_select %p312, %s309, 31
      %s314 = smul.addr %s311, 32
      %s315 = sadd.s32 %s313, %s314
      %s316 = smul.addr %s315, 8
      %s317 = scalar_lea.vmem %s2, %s316
      %p318 = pneg %p109
      %p319 = pneg %p106
      %s320 = smul.u32 8, %s23
      %p321 = scmp.lt.s32.totalorder %s320, 31
      %s322 = scalar_select %p321, %s320, 31
      %s323 = smul.addr %s322, 8
      %s324 = scalar_lea.vmem %s3, %s323
      %p325 = pneg %p135
      %p326 = pneg %p132
      %p327 = pneg %p156
      %p328 = pneg %p153
      %p329 = pneg %p184
      %p330 = pneg %p181
      %s331 = smul.u32 8, %s23
      %p332 = scmp.lt.s32.totalorder %s22, 1
      %s333 = scalar_select %p332, %s22, 1
      %p334 = scmp.lt.s32.totalorder %s331, 31
      %s335 = scalar_select %p334, %s331, 31
      %s336 = smul.addr %s333, 32
      %s337 = sadd.s32 %s335, %s336
      %s338 = smul.addr %s337, 8
      %s339 = scalar_lea.vmem %s5, %s338
      %p340 = pneg %p210
      %p341 = pneg %p207
      %p342 = scmp.lt.s32.totalorder %s22, 1
      %s343 = scalar_select %p342, %s22, 1
      %s344 = smul.addr %s343, 8
      %s345 = scalar_lea.vmem %s6, %s344
      %s346 = smul.u32 8, %s23
      %p347 = scmp.lt.s32.totalorder %s22, 1
      %s348 = scalar_select %p347, %s22, 1
      %p349 = scmp.lt.s32.totalorder %s346, 31
      %s350 = scalar_select %p349, %s346, 31
      %s351 = smul.addr %s348, 32
      %s352 = sadd.s32 %s350, %s351
      %s353 = smul.addr %s352, 8
      %s354 = scalar_lea.vmem %s0, %s353
      %s355 = smul.u32 8, %s23
      %s356 = smul.u32 8, %s23
      %p357 = scmp.lt.s32.totalorder %s22, 1
      %s358 = scalar_select %p357, %s22, 1
      %p359 = scmp.lt.s32.totalorder %s356, 31
      %s360 = scalar_select %p359, %s356, 31
      %s361 = smul.addr %s358, 32
      %s362 = sadd.s32 %s360, %s361
      %s363 = smul.addr %s362, 8
      %s364 = scalar_lea.vmem %s1, %s363
      %s365 = smul.u32 8, %s23
      %s366 = smul.u32 8, %s23
      %p367 = scmp.lt.s32.totalorder %s22, 1
      %s368 = scalar_select %p367, %s22, 1
      %p369 = scmp.lt.s32.totalorder %s366, 31
      %s370 = scalar_select %p369, %s366, 31
      %s371 = smul.addr %s368, 32
      %s372 = sadd.s32 %s370, %s371
      %s373 = smul.addr %s372, 8
      %s374 = scalar_lea.vmem %s2, %s373
      %s375 = smul.u32 8, %s23
      %s376 = smul.u32 8, %s23
      %p377 = scmp.lt.s32.totalorder %s376, 31
      %s378 = scalar_select %p377, %s376, 31
      %s379 = smul.addr %s378, 8
      %s380 = scalar_lea.vmem %s3, %s379
      %s381 = smul.u32 8, %s23
      %s382 = smul.u32 8, %s23
      %p383 = scmp.lt.s32.totalorder %s22, 1
      %s384 = scalar_select %p383, %s22, 1
      %p385 = scmp.lt.s32.totalorder %s382, 31
      %s386 = scalar_select %p385, %s382, 31
      %s387 = smul.addr %s384, 32
      %s388 = sadd.s32 %s386, %s387
      %s389 = smul.addr %s388, 8
      %s390 = scalar_lea.vmem %s5, %s389
      %s391 = smul.u32 8, %s23
      %p392 = scmp.lt.s32.totalorder %s22, 1
      %s393 = scalar_select %p392, %s22, 1
      %s394 = smul.addr %s393, 8
      %s395 = scalar_lea.vmem %s6, %s394
      %v397 = vld [vmem:[%s380] ss:$8 sm:$0xf]
      %v398 = vld [vmem:[%s380] ss:$8 sm:$0xf0]
      %v399 = vor.u32 %v397, %v398
      %vm400 = vcmp.ne.s32.totalorder %v399, 0
      %s401 = scalar_lea.vmem %s380, 1
      %v402 = vld [vmem:[%s401] ss:$8 sm:$0xf]
      %v403 = vld [vmem:[%s401] ss:$8 sm:$0xf0]
      %v404 = vor.u32 %v402, %v403
      %vm405 = vcmp.ne.s32.totalorder %v404, 0
      %s406 = scalar_lea.vmem %s380, 2
      %v407 = vld [vmem:[%s406] ss:$8 sm:$0xf]
      %v408 = vld [vmem:[%s406] ss:$8 sm:$0xf0]
      %v409 = vor.u32 %v407, %v408
      %vm410 = vcmp.ne.s32.totalorder %v409, 0
      %s411 = scalar_lea.vmem %s380, 3
      %v412 = vld [vmem:[%s411] ss:$8 sm:$0xf]
      %v413 = vld [vmem:[%s411] ss:$8 sm:$0xf0]
      %v414 = vor.u32 %v412, %v413
      %vm415 = vcmp.ne.s32.totalorder %v414, 0
      %vm416 = vmand %vm400, %vm410
      %vm417 = vmand %vm400, %vm415
      %vm418 = vmand %vm405, %vm410
      %vm419 = vmand %vm405, %vm415
      %v420 = vld [vmem:[%s354] sm:$0xff]
      %v421 = vld [vmem:[%s354 + $0x8] sm:$0xff]
      %v422 = vld [vmem:[%s354 + $0x10] sm:$0xff]
      %v423 = vld [vmem:[%s354 + $0x18] sm:$0xff]
      %v424 = vld [vmem:[%s354 + $0x20] sm:$0xff]
      %v425 = vld [vmem:[%s354 + $0x28] sm:$0xff]
      %v426 = vld [vmem:[%s354 + $0x30] sm:$0xff]
      %v427 = vld [vmem:[%s354 + $0x38] sm:$0xff]
      %v428 = vld [vmem:[%s364] sm:$0xff]
      %v429 = vld [vmem:[%s364 + $0x8] sm:$0xff]
      %v430 = vld [vmem:[%s364 + $0x10] sm:$0xff]
      %v431 = vld [vmem:[%s364 + $0x18] sm:$0xff]
      %v432 = vld [vmem:[%s364 + $0x20] sm:$0xff]
      %v433 = vld [vmem:[%s364 + $0x28] sm:$0xff]
      %v434 = vld [vmem:[%s364 + $0x30] sm:$0xff]
      %v435 = vld [vmem:[%s364 + $0x38] sm:$0xff]
      %v436 = vld [vmem:[%s374] sm:$0xff]
      %v437 = vld [vmem:[%s374 + $0x8] sm:$0xff]
      %v438 = vld [vmem:[%s374 + $0x10] sm:$0xff]
      %v439 = vld [vmem:[%s374 + $0x18] sm:$0xff]
      %v440 = vld [vmem:[%s374 + $0x20] sm:$0xff]
      %v441 = vld [vmem:[%s374 + $0x28] sm:$0xff]
      %v442 = vld [vmem:[%s374 + $0x30] sm:$0xff]
      %v443 = vld [vmem:[%s374 + $0x38] sm:$0xff]
      %v444 = vsel %vm416, 1, 0
      %v445 = vlaneseq
      %v446 = vshrl.u32 %v445, 7
      %v447 = vsub.s32 0, %v446
      %v448 = vrot.slane %v444, %v447
      %v449 = vlaneseq
      %v450 = vshrl.u32 %v449, 7
      %v451 = vsub.s32 1, %v450
      %v452 = vrot.slane %v444, %v451
      %v453 = vlaneseq
      %v454 = vshrl.u32 %v453, 7
      %v455 = vsub.s32 2, %v454
      %v456 = vrot.slane %v444, %v455
      %v457 = vlaneseq
      %v458 = vshrl.u32 %v457, 7
      %v459 = vsub.s32 3, %v458
      %v460 = vrot.slane %v444, %v459
      %v461 = vlaneseq
      %v462 = vshrl.u32 %v461, 7
      %v463 = vsub.s32 4, %v462
      %v464 = vrot.slane %v444, %v463
      %v465 = vlaneseq
      %v466 = vshrl.u32 %v465, 7
      %v467 = vsub.s32 5, %v466
      %v468 = vrot.slane %v444, %v467
      %v469 = vlaneseq
      %v470 = vshrl.u32 %v469, 7
      %v471 = vsub.s32 6, %v470
      %v472 = vrot.slane %v444, %v471
      %v473 = vlaneseq
      %v474 = vshrl.u32 %v473, 7
      %v475 = vsub.s32 7, %v474
      %v476 = vrot.slane %v444, %v475
      %vm477 = vcmp.eq.s32.totalorder %v448, 1
      %vm478 = vcmp.eq.s32.totalorder %v452, 1
      %vm479 = vcmp.eq.s32.totalorder %v456, 1
      %vm480 = vcmp.eq.s32.totalorder %v460, 1
      %vm481 = vcmp.eq.s32.totalorder %v464, 1
      %vm482 = vcmp.eq.s32.totalorder %v468, 1
      %vm483 = vcmp.eq.s32.totalorder %v472, 1
      %vm484 = vcmp.eq.s32.totalorder %v476, 1
      %493 = vrot.lane.b32.xlu0 %v420, 17
      %v494 = vpop.permute.xlu0 %493
      %495 = vrot.lane.b32.xlu0 %v421, 17
      %v496 = vpop.permute.xlu0 %495
      %497 = vrot.lane.b32.xlu0 %v422, 17
      %v498 = vpop.permute.xlu0 %497
      %499 = vrot.lane.b32.xlu0 %v423, 17
      %v500 = vpop.permute.xlu0 %499
      %501 = vrot.lane.b32.xlu0 %v424, 17
      %v502 = vpop.permute.xlu0 %501
      %503 = vrot.lane.b32.xlu0 %v425, 17
      %v504 = vpop.permute.xlu0 %503
      %505 = vrot.lane.b32.xlu0 %v426, 17
      %v506 = vpop.permute.xlu0 %505
      %507 = vrot.lane.b32.xlu0 %v427, 17
      %v508 = vpop.permute.xlu0 %507
      %vm509 = vcmask 138240
      %v510 = vsel %vm509, %v494, %v496
      %v511 = vsel %vm509, %v496, %v498
      %v512 = vsel %vm509, %v498, %v500
      %v513 = vsel %vm509, %v500, %v502
      %v514 = vsel %vm509, %v502, %v504
      %v515 = vsel %vm509, %v504, %v506
      %v516 = vsel %vm509, %v506, %v508
      %v525 = vsel %vm477, %v494, 0.0
      %v526 = vsel %vm478, %v510, 0.0
      %v527 = vsel %vm479, %v511, 0.0
      %v528 = vsel %vm480, %v512, 0.0
      %v529 = vsel %vm481, %v513, 0.0
      %v530 = vsel %vm482, %v514, 0.0
      %v531 = vsel %vm483, %v515, 0.0
      %v532 = vsel %vm484, %v516, 0.0
      %v533 = vpack.c.bf16 %v525, %v525
      %v534 = vpack.c.bf16 %v526, %v526
      %v535 = vpack.c.bf16 %v527, %v527
      %v536 = vpack.c.bf16 %v528, %v528
      %v537 = vpack.c.bf16 %v529, %v529
      %v538 = vpack.c.bf16 %v530, %v530
      %v539 = vpack.c.bf16 %v531, %v531
      %v540 = vpack.c.bf16 %v532, %v532
      %v549 = vunpack.c.l.b16 %v533
      %v550 = vunpack.c.l.b16 %v534
      %v551 = vunpack.c.l.b16 %v535
      %v552 = vunpack.c.l.b16 %v536
      %v553 = vunpack.c.l.b16 %v537
      %v554 = vunpack.c.l.b16 %v538
      %v555 = vunpack.c.l.b16 %v539
      %v556 = vunpack.c.l.b16 %v540
      %v557 = vpack.c.b16 %v550, %v549
      %v558 = vpack.c.b16 %v552, %v551
      %v559 = vpack.c.b16 %v554, %v553
      %v560 = vpack.c.b16 %v556, %v555
      %vm565 = vcmask 1043592
      %vm566 = vcmask 1047556
      %vm567 = vmor %vm566, %vm565
      %568 = vst.msk [vmem:[#allocation2] sm:$0xff] %vm567, %v557
      %569 = vst [vmem:[#allocation2 + $0x8] sm:$0xff] %v558
      %570 = vst [vmem:[#allocation2 + $0x10] sm:$0xff] %v559
      %571 = vst [vmem:[#allocation2 + $0x18] sm:$0xff] %v560
      %vm572 = vcmask 134144
      %573 = vst.msk [vmem:[#allocation2] sm:$0xf] %vm572, 0
      %v574 = vsel %vm400, 1, 0
      %v575 = vlaneseq
      %v576 = vshrl.u32 %v575, 7
      %v577 = vsub.s32 0, %v576
      %v578 = vrot.slane %v574, %v577
      %v579 = vlaneseq
      %v580 = vshrl.u32 %v579, 7
      %v581 = vsub.s32 1, %v580
      %v582 = vrot.slane %v574, %v581
      %v583 = vlaneseq
      %v584 = vshrl.u32 %v583, 7
      %v585 = vsub.s32 2, %v584
      %v586 = vrot.slane %v574, %v585
      %v587 = vlaneseq
      %v588 = vshrl.u32 %v587, 7
      %v589 = vsub.s32 3, %v588
      %v590 = vrot.slane %v574, %v589
      %v591 = vlaneseq
      %v592 = vshrl.u32 %v591, 7
      %v593 = vsub.s32 4, %v592
      %v594 = vrot.slane %v574, %v593
      %v595 = vlaneseq
      %v596 = vshrl.u32 %v595, 7
      %v597 = vsub.s32 5, %v596
      %v598 = vrot.slane %v574, %v597
      %v599 = vlaneseq
      %v600 = vshrl.u32 %v599, 7
      %v601 = vsub.s32 6, %v600
      %v602 = vrot.slane %v574, %v601
      %v603 = vlaneseq
      %v604 = vshrl.u32 %v603, 7
      %v605 = vsub.s32 7, %v604
      %v606 = vrot.slane %v574, %v605
      %vm607 = vcmp.eq.s32.totalorder %v578, 1
      %vm608 = vcmp.eq.s32.totalorder %v582, 1
      %vm609 = vcmp.eq.s32.totalorder %v586, 1
      %vm610 = vcmp.eq.s32.totalorder %v590, 1
      %vm611 = vcmp.eq.s32.totalorder %v594, 1
      %vm612 = vcmp.eq.s32.totalorder %v598, 1
      %vm613 = vcmp.eq.s32.totalorder %v602, 1
      %vm614 = vcmp.eq.s32.totalorder %v606, 1
      %615 = vrot.lane.b32.xlu0 %v420, 16
      %v616 = vpop.permute.xlu0 %615
      %617 = vrot.lane.b32.xlu0 %v421, 16
      %v618 = vpop.permute.xlu0 %617
      %619 = vrot.lane.b32.xlu0 %v422, 16
      %v620 = vpop.permute.xlu0 %619
      %621 = vrot.lane.b32.xlu0 %v423, 16
      %v622 = vpop.permute.xlu0 %621
      %623 = vrot.lane.b32.xlu0 %v424, 16
      %v624 = vpop.permute.xlu0 %623
      %625 = vrot.lane.b32.xlu0 %v425, 16
      %v626 = vpop.permute.xlu0 %625
      %627 = vrot.lane.b32.xlu0 %v426, 16
      %v628 = vpop.permute.xlu0 %627
      %629 = vrot.lane.b32.xlu0 %v427, 16
      %v630 = vpop.permute.xlu0 %629
      %vm631 = vcmask 130048
      %v632 = vsel %vm631, %v616, %v618
      %v633 = vsel %vm631, %v618, %v620
      %v634 = vsel %vm631, %v620, %v622
      %v635 = vsel %vm631, %v622, %v624
      %v636 = vsel %vm631, %v624, %v626
      %v637 = vsel %vm631, %v626, %v628
      %v638 = vsel %vm631, %v628, %v630
      %v647 = vsel %vm607, %v616, 0.0
      %v648 = vsel %vm608, %v632, 0.0
      %v649 = vsel %vm609, %v633, 0.0
      %v650 = vsel %vm610, %v634, 0.0
      %v651 = vsel %vm611, %v635, 0.0
      %v652 = vsel %vm612, %v636, 0.0
      %v653 = vsel %vm613, %v637, 0.0
      %v654 = vsel %vm614, %v638, 0.0
      %v655 = vpack.c.bf16 %v647, %v647
      %v656 = vpack.c.bf16 %v648, %v648
      %v657 = vpack.c.bf16 %v649, %v649
      %v658 = vpack.c.bf16 %v650, %v650
      %v659 = vpack.c.bf16 %v651, %v651
      %v660 = vpack.c.bf16 %v652, %v652
      %v661 = vpack.c.bf16 %v653, %v653
      %v662 = vpack.c.bf16 %v654, %v654
      %v671 = vunpack.c.l.b16 %v655
      %v672 = vunpack.c.l.b16 %v656
      %v673 = vunpack.c.l.b16 %v657
      %v674 = vunpack.c.l.b16 %v658
      %v675 = vunpack.c.l.b16 %v659
      %v676 = vunpack.c.l.b16 %v660
      %v677 = vunpack.c.l.b16 %v661
      %v678 = vunpack.c.l.b16 %v662
      %v679 = vpack.c.b16 %v672, %v671
      %v680 = vpack.c.b16 %v674, %v673
      %v681 = vpack.c.b16 %v676, %v675
      %v682 = vpack.c.b16 %v678, %v677
      %vm687 = vcmask 1043584
      %vm688 = vmor %vm566, %vm687
      %689 = vst.msk [vmem:[#allocation2 + $0x20] sm:$0xff] %vm688, %v679
      %690 = vst [vmem:[#allocation2 + $0x28] sm:$0xff] %v680
      %691 = vst [vmem:[#allocation2 + $0x30] sm:$0xff] %v681
      %692 = vst [vmem:[#allocation2 + $0x38] sm:$0xff] %v682
      %vm693 = vcmask 125952
      %694 = vst.msk [vmem:[#allocation2 + $0x20] sm:$0xf] %vm693, 0
      %v695 = vsel %vm417, 1, 0
      %v696 = vlaneseq
      %v697 = vshrl.u32 %v696, 7
      %v698 = vsub.s32 0, %v697
      %v699 = vrot.slane %v695, %v698
      %v700 = vlaneseq
      %v701 = vshrl.u32 %v700, 7
      %v702 = vsub.s32 1, %v701
      %v703 = vrot.slane %v695, %v702
      %v704 = vlaneseq
      %v705 = vshrl.u32 %v704, 7
      %v706 = vsub.s32 2, %v705
      %v707 = vrot.slane %v695, %v706
      %v708 = vlaneseq
      %v709 = vshrl.u32 %v708, 7
      %v710 = vsub.s32 3, %v709
      %v711 = vrot.slane %v695, %v710
      %v712 = vlaneseq
      %v713 = vshrl.u32 %v712, 7
      %v714 = vsub.s32 4, %v713
      %v715 = vrot.slane %v695, %v714
      %v716 = vlaneseq
      %v717 = vshrl.u32 %v716, 7
      %v718 = vsub.s32 5, %v717
      %v719 = vrot.slane %v695, %v718
      %v720 = vlaneseq
      %v721 = vshrl.u32 %v720, 7
      %v722 = vsub.s32 6, %v721
      %v723 = vrot.slane %v695, %v722
      %v724 = vlaneseq
      %v725 = vshrl.u32 %v724, 7
      %v726 = vsub.s32 7, %v725
      %v727 = vrot.slane %v695, %v726
      %vm728 = vcmp.eq.s32.totalorder %v699, 1
      %vm729 = vcmp.eq.s32.totalorder %v703, 1
      %vm730 = vcmp.eq.s32.totalorder %v707, 1
      %vm731 = vcmp.eq.s32.totalorder %v711, 1
      %vm732 = vcmp.eq.s32.totalorder %v715, 1
      %vm733 = vcmp.eq.s32.totalorder %v719, 1
      %vm734 = vcmp.eq.s32.totalorder %v723, 1
      %vm735 = vcmp.eq.s32.totalorder %v727, 1
      %736 = vrot.lane.b32.xlu0 %v420, 15
      %v737 = vpop.permute.xlu0 %736
      %738 = vrot.lane.b32.xlu0 %v421, 15
      %v739 = vpop.permute.xlu0 %738
      %740 = vrot.lane.b32.xlu0 %v422, 15
      %v741 = vpop.permute.xlu0 %740
      %742 = vrot.lane.b32.xlu0 %v423, 15
      %v743 = vpop.permute.xlu0 %742
      %744 = vrot.lane.b32.xlu0 %v424, 15
      %v745 = vpop.permute.xlu0 %744
      %746 = vrot.lane.b32.xlu0 %v425, 15
      %v747 = vpop.permute.xlu0 %746
      %748 = vrot.lane.b32.xlu0 %v426, 15
      %v749 = vpop.permute.xlu0 %748
      %750 = vrot.lane.b32.xlu0 %v427, 15
      %v751 = vpop.permute.xlu0 %750
      %vm752 = vcmask 121856
      %v753 = vsel %vm752, %v737, %v739
      %v754 = vsel %vm752, %v739, %v741
      %v755 = vsel %vm752, %v741, %v743
      %v756 = vsel %vm752, %v743, %v745
      %v757 = vsel %vm752, %v745, %v747
      %v758 = vsel %vm752, %v747, %v749
      %v759 = vsel %vm752, %v749, %v751
      %v768 = vsel %vm728, %v737, 0.0
      %v769 = vsel %vm729, %v753, 0.0
      %v770 = vsel %vm730, %v754, 0.0
      %v771 = vsel %vm731, %v755, 0.0
      %v772 = vsel %vm732, %v756, 0.0
      %v773 = vsel %vm733, %v757, 0.0
      %v774 = vsel %vm734, %v758, 0.0
      %v775 = vsel %vm735, %v759, 0.0
      %v776 = vpack.c.bf16 %v768, %v768
      %v777 = vpack.c.bf16 %v769, %v769
      %v778 = vpack.c.bf16 %v770, %v770
      %v779 = vpack.c.bf16 %v771, %v771
      %v780 = vpack.c.bf16 %v772, %v772
      %v781 = vpack.c.bf16 %v773, %v773
      %v782 = vpack.c.bf16 %v774, %v774
      %v783 = vpack.c.bf16 %v775, %v775
      %v792 = vunpack.c.l.b16 %v776
      %v793 = vunpack.c.l.b16 %v777
      %v794 = vunpack.c.l.b16 %v778
      %v795 = vunpack.c.l.b16 %v779
      %v796 = vunpack.c.l.b16 %v780
      %v797 = vunpack.c.l.b16 %v781
      %v798 = vunpack.c.l.b16 %v782
      %v799 = vunpack.c.l.b16 %v783
      %v800 = vpack.c.b16 %v793, %v792
      %v801 = vpack.c.b16 %v795, %v794
      %v802 = vpack.c.b16 %v797, %v796
      %v803 = vpack.c.b16 %v799, %v798
      %vm808 = vcmask 1043576
      %vm809 = vmor %vm566, %vm808
      %810 = vst.msk [vmem:[#allocation2 + $0x40] sm:$0xff] %vm809, %v800
      %811 = vst [vmem:[#allocation2 + $0x48] sm:$0xff] %v801
      %812 = vst [vmem:[#allocation2 + $0x50] sm:$0xff] %v802
      %813 = vst [vmem:[#allocation2 + $0x58] sm:$0xff] %v803
      %vm814 = vcmask 117760
      %815 = vst.msk [vmem:[#allocation2 + $0x40] sm:$0xf] %vm814, 0
      %v816 = vsel %vm410, 1, 0
      %v817 = vlaneseq
      %v818 = vshrl.u32 %v817, 7
      %v819 = vsub.s32 0, %v818
      %v820 = vrot.slane %v816, %v819
      %v821 = vlaneseq
      %v822 = vshrl.u32 %v821, 7
      %v823 = vsub.s32 1, %v822
      %v824 = vrot.slane %v816, %v823
      %v825 = vlaneseq
      %v826 = vshrl.u32 %v825, 7
      %v827 = vsub.s32 2, %v826
      %v828 = vrot.slane %v816, %v827
      %v829 = vlaneseq
      %v830 = vshrl.u32 %v829, 7
      %v831 = vsub.s32 3, %v830
      %v832 = vrot.slane %v816, %v831
      %v833 = vlaneseq
      %v834 = vshrl.u32 %v833, 7
      %v835 = vsub.s32 4, %v834
      %v836 = vrot.slane %v816, %v835
      %v837 = vlaneseq
      %v838 = vshrl.u32 %v837, 7
      %v839 = vsub.s32 5, %v838
      %v840 = vrot.slane %v816, %v839
      %v841 = vlaneseq
      %v842 = vshrl.u32 %v841, 7
      %v843 = vsub.s32 6, %v842
      %v844 = vrot.slane %v816, %v843
      %v845 = vlaneseq
      %v846 = vshrl.u32 %v845, 7
      %v847 = vsub.s32 7, %v846
      %v848 = vrot.slane %v816, %v847
      %vm849 = vcmp.eq.s32.totalorder %v820, 1
      %vm850 = vcmp.eq.s32.totalorder %v824, 1
      %vm851 = vcmp.eq.s32.totalorder %v828, 1
      %vm852 = vcmp.eq.s32.totalorder %v832, 1
      %vm853 = vcmp.eq.s32.totalorder %v836, 1
      %vm854 = vcmp.eq.s32.totalorder %v840, 1
      %vm855 = vcmp.eq.s32.totalorder %v844, 1
      %vm856 = vcmp.eq.s32.totalorder %v848, 1
      %857 = vrot.lane.b32.xlu0 %v420, 1
      %v858 = vpop.permute.xlu0 %857
      %859 = vrot.lane.b32.xlu0 %v421, 1
      %v860 = vpop.permute.xlu0 %859
      %861 = vrot.lane.b32.xlu0 %v422, 1
      %v862 = vpop.permute.xlu0 %861
      %863 = vrot.lane.b32.xlu0 %v423, 1
      %v864 = vpop.permute.xlu0 %863
      %865 = vrot.lane.b32.xlu0 %v424, 1
      %v866 = vpop.permute.xlu0 %865
      %867 = vrot.lane.b32.xlu0 %v425, 1
      %v868 = vpop.permute.xlu0 %867
      %869 = vrot.lane.b32.xlu0 %v426, 1
      %v870 = vpop.permute.xlu0 %869
      %871 = vrot.lane.b32.xlu0 %v427, 1
      %v872 = vpop.permute.xlu0 %871
      %vm873 = vcmask 7168
      %v874 = vsel %vm873, %v858, %v860
      %v875 = vsel %vm873, %v860, %v862
      %v876 = vsel %vm873, %v862, %v864
      %v877 = vsel %vm873, %v864, %v866
      %v878 = vsel %vm873, %v866, %v868
      %v879 = vsel %vm873, %v868, %v870
      %v880 = vsel %vm873, %v870, %v872
      %v889 = vsel %vm849, %v858, 0.0
      %v890 = vsel %vm850, %v874, 0.0
      %v891 = vsel %vm851, %v875, 0.0
      %v892 = vsel %vm852, %v876, 0.0
      %v893 = vsel %vm853, %v877, 0.0
      %v894 = vsel %vm854, %v878, 0.0
      %v895 = vsel %vm855, %v879, 0.0
      %v896 = vsel %vm856, %v880, 0.0
      %v897 = vpack.c.bf16 %v889, %v889
      %v898 = vpack.c.bf16 %v890, %v890
      %v899 = vpack.c.bf16 %v891, %v891
      %v900 = vpack.c.bf16 %v892, %v892
      %v901 = vpack.c.bf16 %v893, %v893
      %v902 = vpack.c.bf16 %v894, %v894
      %v903 = vpack.c.bf16 %v895, %v895
      %v904 = vpack.c.bf16 %v896, %v896
      %v913 = vunpack.c.l.b16 %v897
      %v914 = vunpack.c.l.b16 %v898
      %v915 = vunpack.c.l.b16 %v899
      %v916 = vunpack.c.l.b16 %v900
      %v917 = vunpack.c.l.b16 %v901
      %v918 = vunpack.c.l.b16 %v902
      %v919 = vunpack.c.l.b16 %v903
      %v920 = vunpack.c.l.b16 %v904
      %v921 = vpack.c.b16 %v914, %v913
      %v922 = vpack.c.b16 %v916, %v915
      %v923 = vpack.c.b16 %v918, %v917
      %v924 = vpack.c.b16 %v920, %v919
      %vm929 = vcmask 1043464
      %vm930 = vmor %vm566, %vm929
      %931 = vst.msk [vmem:[#allocation2 + $0x60] sm:$0xff] %vm930, %v921
      %932 = vst [vmem:[#allocation2 + $0x68] sm:$0xff] %v922
      %933 = vst [vmem:[#allocation2 + $0x70] sm:$0xff] %v923
      %934 = vst [vmem:[#allocation2 + $0x78] sm:$0xff] %v924
      %vm935 = vcmask 3072
      %936 = vst.msk [vmem:[#allocation2 + $0x60] sm:$0xf] %vm935, 0
      %v937 = vpack.c.bf16 %v420, %v420
      %v938 = vpack.c.bf16 %v421, %v421
      %v939 = vpack.c.bf16 %v422, %v422
      %v940 = vpack.c.bf16 %v423, %v423
      %v941 = vpack.c.bf16 %v424, %v424
      %v942 = vpack.c.bf16 %v425, %v425
      %v943 = vpack.c.bf16 %v426, %v426
      %v944 = vpack.c.bf16 %v427, %v427
      %v953 = vunpack.c.l.b16 %v937
      %v954 = vunpack.c.l.b16 %v938
      %v955 = vunpack.c.l.b16 %v939
      %v956 = vunpack.c.l.b16 %v940
      %v957 = vunpack.c.l.b16 %v941
      %v958 = vunpack.c.l.b16 %v942
      %v959 = vunpack.c.l.b16 %v943
      %v960 = vunpack.c.l.b16 %v944
      %v961 = vpack.c.b16 %v954, %v953
      %v962 = vpack.c.b16 %v956, %v955
      %v963 = vpack.c.b16 %v958, %v957
      %v964 = vpack.c.b16 %v960, %v959
      %969 = vst [vmem:[#allocation2 + $0x80] sm:$0xff] %v961
      %970 = vst [vmem:[#allocation2 + $0x88] sm:$0xff] %v962
      %971 = vst [vmem:[#allocation2 + $0x90] sm:$0xff] %v963
      %972 = vst [vmem:[#allocation2 + $0x98] sm:$0xff] %v964
      %v973 = vsel %vm415, 1, 0
      %v974 = vlaneseq
      %v975 = vshrl.u32 %v974, 7
      %v976 = vsub.s32 0, %v975
      %v977 = vrot.slane %v973, %v976
      %v978 = vlaneseq
      %v979 = vshrl.u32 %v978, 7
      %v980 = vsub.s32 1, %v979
      %v981 = vrot.slane %v973, %v980
      %v982 = vlaneseq
      %v983 = vshrl.u32 %v982, 7
      %v984 = vsub.s32 2, %v983
      %v985 = vrot.slane %v973, %v984
      %v986 = vlaneseq
      %v987 = vshrl.u32 %v986, 7
      %v988 = vsub.s32 3, %v987
      %v989 = vrot.slane %v973, %v988
      %v990 = vlaneseq
      %v991 = vshrl.u32 %v990, 7
      %v992 = vsub.s32 4, %v991
      %v993 = vrot.slane %v973, %v992
      %v994 = vlaneseq
      %v995 = vshrl.u32 %v994, 7
      %v996 = vsub.s32 5, %v995
      %v997 = vrot.slane %v973, %v996
      %v998 = vlaneseq
      %v999 = vshrl.u32 %v998, 7
      %v1000 = vsub.s32 6, %v999
      %v1001 = vrot.slane %v973, %v1000
      %v1002 = vlaneseq
      %v1003 = vshrl.u32 %v1002, 7
      %v1004 = vsub.s32 7, %v1003
      %v1005 = vrot.slane %v973, %v1004
      %vm1006 = vcmp.eq.s32.totalorder %v977, 1
      %vm1007 = vcmp.eq.s32.totalorder %v981, 1
      %vm1008 = vcmp.eq.s32.totalorder %v985, 1
      %vm1009 = vcmp.eq.s32.totalorder %v989, 1
      %vm1010 = vcmp.eq.s32.totalorder %v993, 1
      %vm1011 = vcmp.eq.s32.totalorder %v997, 1
      %vm1012 = vcmp.eq.s32.totalorder %v1001, 1
      %vm1013 = vcmp.eq.s32.totalorder %v1005, 1
      %1014 = vrot.lane.b32.xlu0 %v420, 127
      %v1015 = vpop.permute.xlu0 %1014
      %1016 = vrot.lane.b32.xlu0 %v421, 127
      %v1017 = vpop.permute.xlu0 %1016
      %1018 = vrot.lane.b32.xlu0 %v422, 127
      %v1019 = vpop.permute.xlu0 %1018
      %1020 = vrot.lane.b32.xlu0 %v423, 127
      %v1021 = vpop.permute.xlu0 %1020
      %1022 = vrot.lane.b32.xlu0 %v424, 127
      %v1023 = vpop.permute.xlu0 %1022
      %1024 = vrot.lane.b32.xlu0 %v425, 127
      %v1025 = vpop.permute.xlu0 %1024
      %1026 = vrot.lane.b32.xlu0 %v426, 127
      %v1027 = vpop.permute.xlu0 %1026
      %1028 = vrot.lane.b32.xlu0 %v427, 127
      %v1029 = vpop.permute.xlu0 %1028
      %vm1030 = vcmask 1039360
      %v1031 = vsel %vm1030, %v1015, %v1017
      %v1032 = vsel %vm1030, %v1017, %v1019
      %v1033 = vsel %vm1030, %v1019, %v1021
      %v1034 = vsel %vm1030, %v1021, %v1023
      %v1035 = vsel %vm1030, %v1023, %v1025
      %v1036 = vsel %vm1030, %v1025, %v1027
      %v1037 = vsel %vm1030, %v1027, %v1029
      %v1046 = vsel %vm1006, %v1031, 0.0
      %v1047 = vsel %vm1007, %v1032, 0.0
      %v1048 = vsel %vm1008, %v1033, 0.0
      %v1049 = vsel %vm1009, %v1034, 0.0
      %v1050 = vsel %vm1010, %v1035, 0.0
      %v1051 = vsel %vm1011, %v1036, 0.0
      %v1052 = vsel %vm1012, %v1037, 0.0
      %v1053 = vsel %vm1013, %v1029, 0.0
      %v1054 = vpack.c.bf16 %v1046, %v1046
      %v1055 = vpack.c.bf16 %v1047, %v1047
      %v1056 = vpack.c.bf16 %v1048, %v1048
      %v1057 = vpack.c.bf16 %v1049, %v1049
      %v1058 = vpack.c.bf16 %v1050, %v1050
      %v1059 = vpack.c.bf16 %v1051, %v1051
      %v1060 = vpack.c.bf16 %v1052, %v1052
      %v1061 = vpack.c.bf16 %v1053, %v1053
      %v1070 = vunpack.c.l.b16 %v1054
      %v1071 = vunpack.c.l.b16 %v1055
      %v1072 = vunpack.c.l.b16 %v1056
      %v1073 = vunpack.c.l.b16 %v1057
      %v1074 = vunpack.c.l.b16 %v1058
      %v1075 = vunpack.c.l.b16 %v1059
      %v1076 = vunpack.c.l.b16 %v1060
      %v1077 = vunpack.c.l.b16 %v1061
      %v1078 = vpack.c.b16 %v1071, %v1070
      %v1079 = vpack.c.b16 %v1073, %v1072
      %v1080 = vpack.c.b16 %v1075, %v1074
      %v1081 = vpack.c.b16 %v1077, %v1076
      %1086 = vst [vmem:[#allocation2 + $0xa0] sm:$0xff] %v1078
      %1087 = vst [vmem:[#allocation2 + $0xa8] sm:$0xff] %v1079
      %1088 = vst [vmem:[#allocation2 + $0xb0] sm:$0xff] %v1080
      %vm1089 = vcmask 1043456
      %vm1090 = vcmask 1039364
      %vm1091 = vmor %vm1090, %vm1089
      %1092 = vst.msk [vmem:[#allocation2 + $0xb8] sm:$0xff] %vm1091, %v1081
      %vm1093 = vcmask 1044472
      %1094 = vst.msk [vmem:[#allocation2 + $0xbc] sm:$0xf] %vm1093, 0
      %v1095 = vsel %vm418, 1, 0
      %v1096 = vlaneseq
      %v1097 = vshrl.u32 %v1096, 7
      %v1098 = vsub.s32 0, %v1097
      %v1099 = vrot.slane %v1095, %v1098
      %v1100 = vlaneseq
      %v1101 = vshrl.u32 %v1100, 7
      %v1102 = vsub.s32 1, %v1101
      %v1103 = vrot.slane %v1095, %v1102
      %v1104 = vlaneseq
      %v1105 = vshrl.u32 %v1104, 7
      %v1106 = vsub.s32 2, %v1105
      %v1107 = vrot.slane %v1095, %v1106
      %v1108 = vlaneseq
      %v1109 = vshrl.u32 %v1108, 7
      %v1110 = vsub.s32 3, %v1109
      %v1111 = vrot.slane %v1095, %v1110
      %v1112 = vlaneseq
      %v1113 = vshrl.u32 %v1112, 7
      %v1114 = vsub.s32 4, %v1113
      %v1115 = vrot.slane %v1095, %v1114
      %v1116 = vlaneseq
      %v1117 = vshrl.u32 %v1116, 7
      %v1118 = vsub.s32 5, %v1117
      %v1119 = vrot.slane %v1095, %v1118
      %v1120 = vlaneseq
      %v1121 = vshrl.u32 %v1120, 7
      %v1122 = vsub.s32 6, %v1121
      %v1123 = vrot.slane %v1095, %v1122
      %v1124 = vlaneseq
      %v1125 = vshrl.u32 %v1124, 7
      %v1126 = vsub.s32 7, %v1125
      %v1127 = vrot.slane %v1095, %v1126
      %vm1128 = vcmp.eq.s32.totalorder %v1099, 1
      %vm1129 = vcmp.eq.s32.totalorder %v1103, 1
      %vm1130 = vcmp.eq.s32.totalorder %v1107, 1
      %vm1131 = vcmp.eq.s32.totalorder %v1111, 1
      %vm1132 = vcmp.eq.s32.totalorder %v1115, 1
      %vm1133 = vcmp.eq.s32.totalorder %v1119, 1
      %vm1134 = vcmp.eq.s32.totalorder %v1123, 1
      %vm1135 = vcmp.eq.s32.totalorder %v1127, 1
      %1136 = vrot.lane.b32.xlu0 %v420, 113
      %v1137 = vpop.permute.xlu0 %1136
      %1138 = vrot.lane.b32.xlu0 %v421, 113
      %v1139 = vpop.permute.xlu0 %1138
      %1140 = vrot.lane.b32.xlu0 %v422, 113
      %v1141 = vpop.permute.xlu0 %1140
      %1142 = vrot.lane.b32.xlu0 %v423, 113
      %v1143 = vpop.permute.xlu0 %1142
      %1144 = vrot.lane.b32.xlu0 %v424, 113
      %v1145 = vpop.permute.xlu0 %1144
      %1146 = vrot.lane.b32.xlu0 %v425, 113
      %v1147 = vpop.permute.xlu0 %1146
      %1148 = vrot.lane.b32.xlu0 %v426, 113
      %v1149 = vpop.permute.xlu0 %1148
      %1150 = vrot.lane.b32.xlu0 %v427, 113
      %v1151 = vpop.permute.xlu0 %1150
      %vm1152 = vcmask 924672
      %v1153 = vsel %vm1152, %v1137, %v1139
      %v1154 = vsel %vm1152, %v1139, %v1141
      %v1155 = vsel %vm1152, %v1141, %v1143
      %v1156 = vsel %vm1152, %v1143, %v1145
      %v1157 = vsel %vm1152, %v1145, %v1147
      %v1158 = vsel %vm1152, %v1147, %v1149
      %v1159 = vsel %vm1152, %v1149, %v1151
      %v1168 = vsel %vm1128, %v1153, 0.0
      %v1169 = vsel %vm1129, %v1154, 0.0
      %v1170 = vsel %vm1130, %v1155, 0.0
      %v1171 = vsel %vm1131, %v1156, 0.0
      %v1172 = vsel %vm1132, %v1157, 0.0
      %v1173 = vsel %vm1133, %v1158, 0.0
      %v1174 = vsel %vm1134, %v1159, 0.0
      %v1175 = vsel %vm1135, %v1151, 0.0
      %v1176 = vpack.c.bf16 %v1168, %v1168
      %v1177 = vpack.c.bf16 %v1169, %v1169
      %v1178 = vpack.c.bf16 %v1170, %v1170
      %v1179 = vpack.c.bf16 %v1171, %v1171
      %v1180 = vpack.c.bf16 %v1172, %v1172
      %v1181 = vpack.c.bf16 %v1173, %v1173
      %v1182 = vpack.c.bf16 %v1174, %v1174
      %v1183 = vpack.c.bf16 %v1175, %v1175
      %v1192 = vunpack.c.l.b16 %v1176
      %v1193 = vunpack.c.l.b16 %v1177
      %v1194 = vunpack.c.l.b16 %v1178
      %v1195 = vunpack.c.l.b16 %v1179
      %v1196 = vunpack.c.l.b16 %v1180
      %v1197 = vunpack.c.l.b16 %v1181
      %v1198 = vunpack.c.l.b16 %v1182
      %v1199 = vunpack.c.l.b16 %v1183
      %v1200 = vpack.c.b16 %v1193, %v1192
      %v1201 = vpack.c.b16 %v1195, %v1194
      %v1202 = vpack.c.b16 %v1197, %v1196
      %v1203 = vpack.c.b16 %v1199, %v1198
      %1208 = vst [vmem:[#allocation2 + $0xc0] sm:$0xff] %v1200
      %1209 = vst [vmem:[#allocation2 + $0xc8] sm:$0xff] %v1201
      %1210 = vst [vmem:[#allocation2 + $0xd0] sm:$0xff] %v1202
      %vm1211 = vcmask 924676
      %vm1212 = vmor %vm1211, %vm1089
      %1213 = vst.msk [vmem:[#allocation2 + $0xd8] sm:$0xff] %vm1212, %v1203
      %vm1214 = vcmask 1044360
      %1215 = vst.msk [vmem:[#allocation2 + $0xdc] sm:$0xf] %vm1214, 0
      %v1216 = vsel %vm405, 1, 0
      %v1217 = vlaneseq
      %v1218 = vshrl.u32 %v1217, 7
      %v1219 = vsub.s32 0, %v1218
      %v1220 = vrot.slane %v1216, %v1219
      %v1221 = vlaneseq
      %v1222 = vshrl.u32 %v1221, 7
      %v1223 = vsub.s32 1, %v1222
      %v1224 = vrot.slane %v1216, %v1223
      %v1225 = vlaneseq
      %v1226 = vshrl.u32 %v1225, 7
      %v1227 = vsub.s32 2, %v1226
      %v1228 = vrot.slane %v1216, %v1227
      %v1229 = vlaneseq
      %v1230 = vshrl.u32 %v1229, 7
      %v1231 = vsub.s32 3, %v1230
      %v1232 = vrot.slane %v1216, %v1231
      %v1233 = vlaneseq
      %v1234 = vshrl.u32 %v1233, 7
      %v1235 = vsub.s32 4, %v1234
      %v1236 = vrot.slane %v1216, %v1235
      %v1237 = vlaneseq
      %v1238 = vshrl.u32 %v1237, 7
      %v1239 = vsub.s32 5, %v1238
      %v1240 = vrot.slane %v1216, %v1239
      %v1241 = vlaneseq
      %v1242 = vshrl.u32 %v1241, 7
      %v1243 = vsub.s32 6, %v1242
      %v1244 = vrot.slane %v1216, %v1243
      %v1245 = vlaneseq
      %v1246 = vshrl.u32 %v1245, 7
      %v1247 = vsub.s32 7, %v1246
      %v1248 = vrot.slane %v1216, %v1247
      %vm1249 = vcmp.eq.s32.totalorder %v1220, 1
      %vm1250 = vcmp.eq.s32.totalorder %v1224, 1
      %vm1251 = vcmp.eq.s32.totalorder %v1228, 1
      %vm1252 = vcmp.eq.s32.totalorder %v1232, 1
      %vm1253 = vcmp.eq.s32.totalorder %v1236, 1
      %vm1254 = vcmp.eq.s32.totalorder %v1240, 1
      %vm1255 = vcmp.eq.s32.totalorder %v1244, 1
      %vm1256 = vcmp.eq.s32.totalorder %v1248, 1
      %1257 = vrot.lane.b32.xlu0 %v420, 112
      %v1258 = vpop.permute.xlu0 %1257
      %1259 = vrot.lane.b32.xlu0 %v421, 112
      %v1260 = vpop.permute.xlu0 %1259
      %1261 = vrot.lane.b32.xlu0 %v422, 112
      %v1262 = vpop.permute.xlu0 %1261
      %1263 = vrot.lane.b32.xlu0 %v423, 112
      %v1264 = vpop.permute.xlu0 %1263
      %1265 = vrot.lane.b32.xlu0 %v424, 112
      %v1266 = vpop.permute.xlu0 %1265
      %1267 = vrot.lane.b32.xlu0 %v425, 112
      %v1268 = vpop.permute.xlu0 %1267
      %1269 = vrot.lane.b32.xlu0 %v426, 112
      %v1270 = vpop.permute.xlu0 %1269
      %1271 = vrot.lane.b32.xlu0 %v427, 112
      %v1272 = vpop.permute.xlu0 %1271
      %vm1273 = vcmask 916480
      %v1274 = vsel %vm1273, %v1258, %v1260
      %v1275 = vsel %vm1273, %v1260, %v1262
      %v1276 = vsel %vm1273, %v1262, %v1264
      %v1277 = vsel %vm1273, %v1264, %v1266
      %v1278 = vsel %vm1273, %v1266, %v1268
      %v1279 = vsel %vm1273, %v1268, %v1270
      %v1280 = vsel %vm1273, %v1270, %v1272
      %v1289 = vsel %vm1249, %v1274, 0.0
      %v1290 = vsel %vm1250, %v1275, 0.0
      %v1291 = vsel %vm1251, %v1276, 0.0
      %v1292 = vsel %vm1252, %v1277, 0.0
      %v1293 = vsel %vm1253, %v1278, 0.0
      %v1294 = vsel %vm1254, %v1279, 0.0
      %v1295 = vsel %vm1255, %v1280, 0.0
      %v1296 = vsel %vm1256, %v1272, 0.0
      %v1297 = vpack.c.bf16 %v1289, %v1289
      %v1298 = vpack.c.bf16 %v1290, %v1290
      %v1299 = vpack.c.bf16 %v1291, %v1291
      %v1300 = vpack.c.bf16 %v1292, %v1292
      %v1301 = vpack.c.bf16 %v1293, %v1293
      %v1302 = vpack.c.bf16 %v1294, %v1294
      %v1303 = vpack.c.bf16 %v1295, %v1295
      %v1304 = vpack.c.bf16 %v1296, %v1296
      %v1313 = vunpack.c.l.b16 %v1297
      %v1314 = vunpack.c.l.b16 %v1298
      %v1315 = vunpack.c.l.b16 %v1299
      %v1316 = vunpack.c.l.b16 %v1300
      %v1317 = vunpack.c.l.b16 %v1301
      %v1318 = vunpack.c.l.b16 %v1302
      %v1319 = vunpack.c.l.b16 %v1303
      %v1320 = vunpack.c.l.b16 %v1304
      %v1321 = vpack.c.b16 %v1314, %v1313
      %v1322 = vpack.c.b16 %v1316, %v1315
      %v1323 = vpack.c.b16 %v1318, %v1317
      %v1324 = vpack.c.b16 %v1320, %v1319
      %1329 = vst [vmem:[#allocation2 + $0xe0] sm:$0xff] %v1321
      %1330 = vst [vmem:[#allocation2 + $0xe8] sm:$0xff] %v1322
      %1331 = vst [vmem:[#allocation2 + $0xf0] sm:$0xff] %v1323
      %vm1332 = vcmask 916484
      %vm1333 = vmor %vm1332, %vm1089
      %1334 = vst.msk [vmem:[#allocation2 + $0xf8] sm:$0xff] %vm1333, %v1324
      %vm1335 = vcmask 1044352
      %1336 = vst.msk [vmem:[#allocation2 + $0xfc] sm:$0xf] %vm1335, 0
      %v1337 = vsel %vm419, 1, 0
      %v1338 = vlaneseq
      %v1339 = vshrl.u32 %v1338, 7
      %v1340 = vsub.s32 0, %v1339
      %v1341 = vrot.slane %v1337, %v1340
      %v1342 = vlaneseq
      %v1343 = vshrl.u32 %v1342, 7
      %v1344 = vsub.s32 1, %v1343
      %v1345 = vrot.slane %v1337, %v1344
      %v1346 = vlaneseq
      %v1347 = vshrl.u32 %v1346, 7
      %v1348 = vsub.s32 2, %v1347
      %v1349 = vrot.slane %v1337, %v1348
      %v1350 = vlaneseq
      %v1351 = vshrl.u32 %v1350, 7
      %v1352 = vsub.s32 3, %v1351
      %v1353 = vrot.slane %v1337, %v1352
      %v1354 = vlaneseq
      %v1355 = vshrl.u32 %v1354, 7
      %v1356 = vsub.s32 4, %v1355
      %v1357 = vrot.slane %v1337, %v1356
      %v1358 = vlaneseq
      %v1359 = vshrl.u32 %v1358, 7
      %v1360 = vsub.s32 5, %v1359
      %v1361 = vrot.slane %v1337, %v1360
      %v1362 = vlaneseq
      %v1363 = vshrl.u32 %v1362, 7
      %v1364 = vsub.s32 6, %v1363
      %v1365 = vrot.slane %v1337, %v1364
      %v1366 = vlaneseq
      %v1367 = vshrl.u32 %v1366, 7
      %v1368 = vsub.s32 7, %v1367
      %v1369 = vrot.slane %v1337, %v1368
      %vm1370 = vcmp.eq.s32.totalorder %v1341, 1
      %vm1371 = vcmp.eq.s32.totalorder %v1345, 1
      %vm1372 = vcmp.eq.s32.totalorder %v1349, 1
      %vm1373 = vcmp.eq.s32.totalorder %v1353, 1
      %vm1374 = vcmp.eq.s32.totalorder %v1357, 1
      %vm1375 = vcmp.eq.s32.totalorder %v1361, 1
      %vm1376 = vcmp.eq.s32.totalorder %v1365, 1
      %vm1377 = vcmp.eq.s32.totalorder %v1369, 1
      %1378 = vrot.lane.b32.xlu0 %v420, 111
      %v1379 = vpop.permute.xlu0 %1378
      %1380 = vrot.lane.b32.xlu0 %v421, 111
      %v1381 = vpop.permute.xlu0 %1380
      %1382 = vrot.lane.b32.xlu0 %v422, 111
      %v1383 = vpop.permute.xlu0 %1382
      %1384 = vrot.lane.b32.xlu0 %v423, 111
      %v1385 = vpop.permute.xlu0 %1384
      %1386 = vrot.lane.b32.xlu0 %v424, 111
      %v1387 = vpop.permute.xlu0 %1386
      %1388 = vrot.lane.b32.xlu0 %v425, 111
      %v1389 = vpop.permute.xlu0 %1388
      %1390 = vrot.lane.b32.xlu0 %v426, 111
      %v1391 = vpop.permute.xlu0 %1390
      %1392 = vrot.lane.b32.xlu0 %v427, 111
      %v1393 = vpop.permute.xlu0 %1392
      %vm1394 = vcmask 908288
      %v1395 = vsel %vm1394, %v1379, %v1381
      %v1396 = vsel %vm1394, %v1381, %v1383
      %v1397 = vsel %vm1394, %v1383, %v1385
      %v1398 = vsel %vm1394, %v1385, %v1387
      %v1399 = vsel %vm1394, %v1387, %v1389
      %v1400 = vsel %vm1394, %v1389, %v1391
      %v1401 = vsel %vm1394, %v1391, %v1393
      %v1410 = vsel %vm1370, %v1395, 0.0
      %v1411 = vsel %vm1371, %v1396, 0.0
      %v1412 = vsel %vm1372, %v1397, 0.0
      %v1413 = vsel %vm1373, %v1398, 0.0
      %v1414 = vsel %vm1374, %v1399, 0.0
      %v1415 = vsel %vm1375, %v1400, 0.0
      %v1416 = vsel %vm1376, %v1401, 0.0
      %v1417 = vsel %vm1377, %v1393, 0.0
      %v1418 = vpack.c.bf16 %v1410, %v1410
      %v1419 = vpack.c.bf16 %v1411, %v1411
      %v1420 = vpack.c.bf16 %v1412, %v1412
      %v1421 = vpack.c.bf16 %v1413, %v1413
      %v1422 = vpack.c.bf16 %v1414, %v1414
      %v1423 = vpack.c.bf16 %v1415, %v1415
      %v1424 = vpack.c.bf16 %v1416, %v1416
      %v1425 = vpack.c.bf16 %v1417, %v1417
      %v1434 = vunpack.c.l.b16 %v1418
      %v1435 = vunpack.c.l.b16 %v1419
      %v1436 = vunpack.c.l.b16 %v1420
      %v1437 = vunpack.c.l.b16 %v1421
      %v1438 = vunpack.c.l.b16 %v1422
      %v1439 = vunpack.c.l.b16 %v1423
      %v1440 = vunpack.c.l.b16 %v1424
      %v1441 = vunpack.c.l.b16 %v1425
      %v1442 = vpack.c.b16 %v1435, %v1434
      %v1443 = vpack.c.b16 %v1437, %v1436
      %v1444 = vpack.c.b16 %v1439, %v1438
      %v1445 = vpack.c.b16 %v1441, %v1440
      %1450 = vst [vmem:[#allocation2 + $0x100] sm:$0xff] %v1442
      %1451 = vst [vmem:[#allocation2 + $0x108] sm:$0xff] %v1443
      %1452 = vst [vmem:[#allocation2 + $0x110] sm:$0xff] %v1444
      %vm1453 = vcmask 908292
      %vm1454 = vmor %vm1453, %vm1089
      %1455 = vst.msk [vmem:[#allocation2 + $0x118] sm:$0xff] %vm1454, %v1445
      %vm1456 = vcmask 1044344
      %1457 = vst.msk [vmem:[#allocation2 + $0x11c] sm:$0xf] %vm1456, 0
      %1466 = vrot.lane.b32.xlu0 %v428, 17
      %v1467 = vpop.permute.xlu0 %1466
      %1468 = vrot.lane.b32.xlu0 %v429, 17
      %v1469 = vpop.permute.xlu0 %1468
      %1470 = vrot.lane.b32.xlu0 %v430, 17
      %v1471 = vpop.permute.xlu0 %1470
      %1472 = vrot.lane.b32.xlu0 %v431, 17
      %v1473 = vpop.permute.xlu0 %1472
      %1474 = vrot.lane.b32.xlu0 %v432, 17
      %v1475 = vpop.permute.xlu0 %1474
      %1476 = vrot.lane.b32.xlu0 %v433, 17
      %v1477 = vpop.permute.xlu0 %1476
      %1478 = vrot.lane.b32.xlu0 %v434, 17
      %v1479 = vpop.permute.xlu0 %1478
      %1480 = vrot.lane.b32.xlu0 %v435, 17
      %v1481 = vpop.permute.xlu0 %1480
      %v1482 = vsel %vm509, %v1467, %v1469
      %v1483 = vsel %vm509, %v1469, %v1471
      %v1484 = vsel %vm509, %v1471, %v1473
      %v1485 = vsel %vm509, %v1473, %v1475
      %v1486 = vsel %vm509, %v1475, %v1477
      %v1487 = vsel %vm509, %v1477, %v1479
      %v1488 = vsel %vm509, %v1479, %v1481
      %v1497 = vsel %vm477, %v1467, 0.0
      %v1498 = vsel %vm478, %v1482, 0.0
      %v1499 = vsel %vm479, %v1483, 0.0
      %v1500 = vsel %vm480, %v1484, 0.0
      %v1501 = vsel %vm481, %v1485, 0.0
      %v1502 = vsel %vm482, %v1486, 0.0
      %v1503 = vsel %vm483, %v1487, 0.0
      %v1504 = vsel %vm484, %v1488, 0.0
      %v1505 = vpack.c.bf16 %v1497, %v1497
      %v1506 = vpack.c.bf16 %v1498, %v1498
      %v1507 = vpack.c.bf16 %v1499, %v1499
      %v1508 = vpack.c.bf16 %v1500, %v1500
      %v1509 = vpack.c.bf16 %v1501, %v1501
      %v1510 = vpack.c.bf16 %v1502, %v1502
      %v1511 = vpack.c.bf16 %v1503, %v1503
      %v1512 = vpack.c.bf16 %v1504, %v1504
      %v1521 = vunpack.c.l.b16 %v1505
      %v1522 = vunpack.c.l.b16 %v1506
      %v1523 = vunpack.c.l.b16 %v1507
      %v1524 = vunpack.c.l.b16 %v1508
      %v1525 = vunpack.c.l.b16 %v1509
      %v1526 = vunpack.c.l.b16 %v1510
      %v1527 = vunpack.c.l.b16 %v1511
      %v1528 = vunpack.c.l.b16 %v1512
      %v1529 = vpack.c.b16 %v1522, %v1521
      %v1530 = vpack.c.b16 %v1524, %v1523
      %v1531 = vpack.c.b16 %v1526, %v1525
      %v1532 = vpack.c.b16 %v1528, %v1527
      %1537 = vst.msk [vmem:[#allocation2 + $0x120] sm:$0xff] %vm567, %v1529
      %1538 = vst [vmem:[#allocation2 + $0x128] sm:$0xff] %v1530
      %1539 = vst [vmem:[#allocation2 + $0x130] sm:$0xff] %v1531
      %1540 = vst [vmem:[#allocation2 + $0x138] sm:$0xff] %v1532
      %1541 = vst.msk [vmem:[#allocation2 + $0x120] sm:$0xf] %vm572, 0
      %1542 = vrot.lane.b32.xlu0 %v428, 16
      %v1543 = vpop.permute.xlu0 %1542
      %1544 = vrot.lane.b32.xlu0 %v429, 16
      %v1545 = vpop.permute.xlu0 %1544
      %1546 = vrot.lane.b32.xlu0 %v430, 16
      %v1547 = vpop.permute.xlu0 %1546
      %1548 = vrot.lane.b32.xlu0 %v431, 16
      %v1549 = vpop.permute.xlu0 %1548
      %1550 = vrot.lane.b32.xlu0 %v432, 16
      %v1551 = vpop.permute.xlu0 %1550
      %1552 = vrot.lane.b32.xlu0 %v433, 16
      %v1553 = vpop.permute.xlu0 %1552
      %1554 = vrot.lane.b32.xlu0 %v434, 16
      %v1555 = vpop.permute.xlu0 %1554
      %1556 = vrot.lane.b32.xlu0 %v435, 16
      %v1557 = vpop.permute.xlu0 %1556
      %v1558 = vsel %vm631, %v1543, %v1545
      %v1559 = vsel %vm631, %v1545, %v1547
      %v1560 = vsel %vm631, %v1547, %v1549
      %v1561 = vsel %vm631, %v1549, %v1551
      %v1562 = vsel %vm631, %v1551, %v1553
      %v1563 = vsel %vm631, %v1553, %v1555
      %v1564 = vsel %vm631, %v1555, %v1557
      %v1573 = vsel %vm607, %v1543, 0.0
      %v1574 = vsel %vm608, %v1558, 0.0
      %v1575 = vsel %vm609, %v1559, 0.0
      %v1576 = vsel %vm610, %v1560, 0.0
      %v1577 = vsel %vm611, %v1561, 0.0
      %v1578 = vsel %vm612, %v1562, 0.0
      %v1579 = vsel %vm613, %v1563, 0.0
      %v1580 = vsel %vm614, %v1564, 0.0
      %v1581 = vpack.c.bf16 %v1573, %v1573
      %v1582 = vpack.c.bf16 %v1574, %v1574
      %v1583 = vpack.c.bf16 %v1575, %v1575
      %v1584 = vpack.c.bf16 %v1576, %v1576
      %v1585 = vpack.c.bf16 %v1577, %v1577
      %v1586 = vpack.c.bf16 %v1578, %v1578
      %v1587 = vpack.c.bf16 %v1579, %v1579
      %v1588 = vpack.c.bf16 %v1580, %v1580
      %v1597 = vunpack.c.l.b16 %v1581
      %v1598 = vunpack.c.l.b16 %v1582
      %v1599 = vunpack.c.l.b16 %v1583
      %v1600 = vunpack.c.l.b16 %v1584
      %v1601 = vunpack.c.l.b16 %v1585
      %v1602 = vunpack.c.l.b16 %v1586
      %v1603 = vunpack.c.l.b16 %v1587
      %v1604 = vunpack.c.l.b16 %v1588
      %v1605 = vpack.c.b16 %v1598, %v1597
      %v1606 = vpack.c.b16 %v1600, %v1599
      %v1607 = vpack.c.b16 %v1602, %v1601
      %v1608 = vpack.c.b16 %v1604, %v1603
      %1613 = vst.msk [vmem:[#allocation2 + $0x140] sm:$0xff] %vm688, %v1605
      %1614 = vst [vmem:[#allocation2 + $0x148] sm:$0xff] %v1606
      %1615 = vst [vmem:[#allocation2 + $0x150] sm:$0xff] %v1607
      %1616 = vst [vmem:[#allocation2 + $0x158] sm:$0xff] %v1608
      %1617 = vst.msk [vmem:[#allocation2 + $0x140] sm:$0xf] %vm693, 0
      %1618 = vrot.lane.b32.xlu0 %v428, 15
      %v1619 = vpop.permute.xlu0 %1618
      %1620 = vrot.lane.b32.xlu0 %v429, 15
      %v1621 = vpop.permute.xlu0 %1620
      %1622 = vrot.lane.b32.xlu0 %v430, 15
      %v1623 = vpop.permute.xlu0 %1622
      %1624 = vrot.lane.b32.xlu0 %v431, 15
      %v1625 = vpop.permute.xlu0 %1624
      %1626 = vrot.lane.b32.xlu0 %v432, 15
      %v1627 = vpop.permute.xlu0 %1626
      %1628 = vrot.lane.b32.xlu0 %v433, 15
      %v1629 = vpop.permute.xlu0 %1628
      %1630 = vrot.lane.b32.xlu0 %v434, 15
      %v1631 = vpop.permute.xlu0 %1630
      %1632 = vrot.lane.b32.xlu0 %v435, 15
      %v1633 = vpop.permute.xlu0 %1632
      %v1634 = vsel %vm752, %v1619, %v1621
      %v1635 = vsel %vm752, %v1621, %v1623
      %v1636 = vsel %vm752, %v1623, %v1625
      %v1637 = vsel %vm752, %v1625, %v1627
      %v1638 = vsel %vm752, %v1627, %v1629
      %v1639 = vsel %vm752, %v1629, %v1631
      %v1640 = vsel %vm752, %v1631, %v1633
      %v1649 = vsel %vm728, %v1619, 0.0
      %v1650 = vsel %vm729, %v1634, 0.0
      %v1651 = vsel %vm730, %v1635, 0.0
      %v1652 = vsel %vm731, %v1636, 0.0
      %v1653 = vsel %vm732, %v1637, 0.0
      %v1654 = vsel %vm733, %v1638, 0.0
      %v1655 = vsel %vm734, %v1639, 0.0
      %v1656 = vsel %vm735, %v1640, 0.0
      %v1657 = vpack.c.bf16 %v1649, %v1649
      %v1658 = vpack.c.bf16 %v1650, %v1650
      %v1659 = vpack.c.bf16 %v1651, %v1651
      %v1660 = vpack.c.bf16 %v1652, %v1652
      %v1661 = vpack.c.bf16 %v1653, %v1653
      %v1662 = vpack.c.bf16 %v1654, %v1654
      %v1663 = vpack.c.bf16 %v1655, %v1655
      %v1664 = vpack.c.bf16 %v1656, %v1656
      %v1673 = vunpack.c.l.b16 %v1657
      %v1674 = vunpack.c.l.b16 %v1658
      %v1675 = vunpack.c.l.b16 %v1659
      %v1676 = vunpack.c.l.b16 %v1660
      %v1677 = vunpack.c.l.b16 %v1661
      %v1678 = vunpack.c.l.b16 %v1662
      %v1679 = vunpack.c.l.b16 %v1663
      %v1680 = vunpack.c.l.b16 %v1664
      %v1681 = vpack.c.b16 %v1674, %v1673
      %v1682 = vpack.c.b16 %v1676, %v1675
      %v1683 = vpack.c.b16 %v1678, %v1677
      %v1684 = vpack.c.b16 %v1680, %v1679
      %1689 = vst.msk [vmem:[#allocation2 + $0x160] sm:$0xff] %vm809, %v1681
      %1690 = vst [vmem:[#allocation2 + $0x168] sm:$0xff] %v1682
      %1691 = vst [vmem:[#allocation2 + $0x170] sm:$0xff] %v1683
      %1692 = vst [vmem:[#allocation2 + $0x178] sm:$0xff] %v1684
      %1693 = vst.msk [vmem:[#allocation2 + $0x160] sm:$0xf] %vm814, 0
      %1694 = vrot.lane.b32.xlu0 %v428, 1
      %v1695 = vpop.permute.xlu0 %1694
      %1696 = vrot.lane.b32.xlu0 %v429, 1
      %v1697 = vpop.permute.xlu0 %1696
      %1698 = vrot.lane.b32.xlu0 %v430, 1
      %v1699 = vpop.permute.xlu0 %1698
      %1700 = vrot.lane.b32.xlu0 %v431, 1
      %v1701 = vpop.permute.xlu0 %1700
      %1702 = vrot.lane.b32.xlu0 %v432, 1
      %v1703 = vpop.permute.xlu0 %1702
      %1704 = vrot.lane.b32.xlu0 %v433, 1
      %v1705 = vpop.permute.xlu0 %1704
      %1706 = vrot.lane.b32.xlu0 %v434, 1
      %v1707 = vpop.permute.xlu0 %1706
      %1708 = vrot.lane.b32.xlu0 %v435, 1
      %v1709 = vpop.permute.xlu0 %1708
      %v1710 = vsel %vm873, %v1695, %v1697
      %v1711 = vsel %vm873, %v1697, %v1699
      %v1712 = vsel %vm873, %v1699, %v1701
      %v1713 = vsel %vm873, %v1701, %v1703
      %v1714 = vsel %vm873, %v1703, %v1705
      %v1715 = vsel %vm873, %v1705, %v1707
      %v1716 = vsel %vm873, %v1707, %v1709
      %v1725 = vsel %vm849, %v1695, 0.0
      %v1726 = vsel %vm850, %v1710, 0.0
      %v1727 = vsel %vm851, %v1711, 0.0
      %v1728 = vsel %vm852, %v1712, 0.0
      %v1729 = vsel %vm853, %v1713, 0.0
      %v1730 = vsel %vm854, %v1714, 0.0
      %v1731 = vsel %vm855, %v1715, 0.0
      %v1732 = vsel %vm856, %v1716, 0.0
      %v1733 = vpack.c.bf16 %v1725, %v1725
      %v1734 = vpack.c.bf16 %v1726, %v1726
      %v1735 = vpack.c.bf16 %v1727, %v1727
      %v1736 = vpack.c.bf16 %v1728, %v1728
      %v1737 = vpack.c.bf16 %v1729, %v1729
      %v1738 = vpack.c.bf16 %v1730, %v1730
      %v1739 = vpack.c.bf16 %v1731, %v1731
      %v1740 = vpack.c.bf16 %v1732, %v1732
      %v1749 = vunpack.c.l.b16 %v1733
      %v1750 = vunpack.c.l.b16 %v1734
      %v1751 = vunpack.c.l.b16 %v1735
      %v1752 = vunpack.c.l.b16 %v1736
      %v1753 = vunpack.c.l.b16 %v1737
      %v1754 = vunpack.c.l.b16 %v1738
      %v1755 = vunpack.c.l.b16 %v1739
      %v1756 = vunpack.c.l.b16 %v1740
      %v1757 = vpack.c.b16 %v1750, %v1749
      %v1758 = vpack.c.b16 %v1752, %v1751
      %v1759 = vpack.c.b16 %v1754, %v1753
      %v1760 = vpack.c.b16 %v1756, %v1755
      %1765 = vst.msk [vmem:[#allocation2 + $0x180] sm:$0xff] %vm930, %v1757
      %1766 = vst [vmem:[#allocation2 + $0x188] sm:$0xff] %v1758
      %1767 = vst [vmem:[#allocation2 + $0x190] sm:$0xff] %v1759
      %1768 = vst [vmem:[#allocation2 + $0x198] sm:$0xff] %v1760
      %1769 = vst.msk [vmem:[#allocation2 + $0x180] sm:$0xf] %vm935, 0
      %v1770 = vpack.c.bf16 %v428, %v428
      %v1771 = vpack.c.bf16 %v429, %v429
      %v1772 = vpack.c.bf16 %v430, %v430
      %v1773 = vpack.c.bf16 %v431, %v431
      %v1774 = vpack.c.bf16 %v432, %v432
      %v1775 = vpack.c.bf16 %v433, %v433
      %v1776 = vpack.c.bf16 %v434, %v434
      %v1777 = vpack.c.bf16 %v435, %v435
      %v1786 = vunpack.c.l.b16 %v1770
      %v1787 = vunpack.c.l.b16 %v1771
      %v1788 = vunpack.c.l.b16 %v1772
      %v1789 = vunpack.c.l.b16 %v1773
      %v1790 = vunpack.c.l.b16 %v1774
      %v1791 = vunpack.c.l.b16 %v1775
      %v1792 = vunpack.c.l.b16 %v1776
      %v1793 = vunpack.c.l.b16 %v1777
      %v1794 = vpack.c.b16 %v1787, %v1786
      %v1795 = vpack.c.b16 %v1789, %v1788
      %v1796 = vpack.c.b16 %v1791, %v1790
      %v1797 = vpack.c.b16 %v1793, %v1792
      %1802 = vst [vmem:[#allocation2 + $0x1a0] sm:$0xff] %v1794
      %1803 = vst [vmem:[#allocation2 + $0x1a8] sm:$0xff] %v1795
      %1804 = vst [vmem:[#allocation2 + $0x1b0] sm:$0xff] %v1796
      %1805 = vst [vmem:[#allocation2 + $0x1b8] sm:$0xff] %v1797
      %1806 = vrot.lane.b32.xlu0 %v428, 127
      %v1807 = vpop.permute.xlu0 %1806
      %1808 = vrot.lane.b32.xlu0 %v429, 127
      %v1809 = vpop.permute.xlu0 %1808
      %1810 = vrot.lane.b32.xlu0 %v430, 127
      %v1811 = vpop.permute.xlu0 %1810
      %1812 = vrot.lane.b32.xlu0 %v431, 127
      %v1813 = vpop.permute.xlu0 %1812
      %1814 = vrot.lane.b32.xlu0 %v432, 127
      %v1815 = vpop.permute.xlu0 %1814
      %1816 = vrot.lane.b32.xlu0 %v433, 127
      %v1817 = vpop.permute.xlu0 %1816
      %1818 = vrot.lane.b32.xlu0 %v434, 127
      %v1819 = vpop.permute.xlu0 %1818
      %1820 = vrot.lane.b32.xlu0 %v435, 127
      %v1821 = vpop.permute.xlu0 %1820
      %v1822 = vsel %vm1030, %v1807, %v1809
      %v1823 = vsel %vm1030, %v1809, %v1811
      %v1824 = vsel %vm1030, %v1811, %v1813
      %v1825 = vsel %vm1030, %v1813, %v1815
      %v1826 = vsel %vm1030, %v1815, %v1817
      %v1827 = vsel %vm1030, %v1817, %v1819
      %v1828 = vsel %vm1030, %v1819, %v1821
      %v1837 = vsel %vm1006, %v1822, 0.0
      %v1838 = vsel %vm1007, %v1823, 0.0
      %v1839 = vsel %vm1008, %v1824, 0.0
      %v1840 = vsel %vm1009, %v1825, 0.0
      %v1841 = vsel %vm1010, %v1826, 0.0
      %v1842 = vsel %vm1011, %v1827, 0.0
      %v1843 = vsel %vm1012, %v1828, 0.0
      %v1844 = vsel %vm1013, %v1821, 0.0
      %v1845 = vpack.c.bf16 %v1837, %v1837
      %v1846 = vpack.c.bf16 %v1838, %v1838
      %v1847 = vpack.c.bf16 %v1839, %v1839
      %v1848 = vpack.c.bf16 %v1840, %v1840
      %v1849 = vpack.c.bf16 %v1841, %v1841
      %v1850 = vpack.c.bf16 %v1842, %v1842
      %v1851 = vpack.c.bf16 %v1843, %v1843
      %v1852 = vpack.c.bf16 %v1844, %v1844
      %v1861 = vunpack.c.l.b16 %v1845
      %v1862 = vunpack.c.l.b16 %v1846
      %v1863 = vunpack.c.l.b16 %v1847
      %v1864 = vunpack.c.l.b16 %v1848
      %v1865 = vunpack.c.l.b16 %v1849
      %v1866 = vunpack.c.l.b16 %v1850
      %v1867 = vunpack.c.l.b16 %v1851
      %v1868 = vunpack.c.l.b16 %v1852
      %v1869 = vpack.c.b16 %v1862, %v1861
      %v1870 = vpack.c.b16 %v1864, %v1863
      %v1871 = vpack.c.b16 %v1866, %v1865
      %v1872 = vpack.c.b16 %v1868, %v1867
      %1877 = vst [vmem:[#allocation2 + $0x1c0] sm:$0xff] %v1869
      %1878 = vst [vmem:[#allocation2 + $0x1c8] sm:$0xff] %v1870
      %1879 = vst [vmem:[#allocation2 + $0x1d0] sm:$0xff] %v1871
      %1880 = vst.msk [vmem:[#allocation2 + $0x1d8] sm:$0xff] %vm1091, %v1872
      %1881 = vst.msk [vmem:[#allocation2 + $0x1dc] sm:$0xf] %vm1093, 0
      %1882 = vrot.lane.b32.xlu0 %v428, 113
      %v1883 = vpop.permute.xlu0 %1882
      %1884 = vrot.lane.b32.xlu0 %v429, 113
      %v1885 = vpop.permute.xlu0 %1884
      %1886 = vrot.lane.b32.xlu0 %v430, 113
      %v1887 = vpop.permute.xlu0 %1886
      %1888 = vrot.lane.b32.xlu0 %v431, 113
      %v1889 = vpop.permute.xlu0 %1888
      %1890 = vrot.lane.b32.xlu0 %v432, 113
      %v1891 = vpop.permute.xlu0 %1890
      %1892 = vrot.lane.b32.xlu0 %v433, 113
      %v1893 = vpop.permute.xlu0 %1892
      %1894 = vrot.lane.b32.xlu0 %v434, 113
      %v1895 = vpop.permute.xlu0 %1894
      %1896 = vrot.lane.b32.xlu0 %v435, 113
      %v1897 = vpop.permute.xlu0 %1896
      %v1898 = vsel %vm1152, %v1883, %v1885
      %v1899 = vsel %vm1152, %v1885, %v1887
      %v1900 = vsel %vm1152, %v1887, %v1889
      %v1901 = vsel %vm1152, %v1889, %v1891
      %v1902 = vsel %vm1152, %v1891, %v1893
      %v1903 = vsel %vm1152, %v1893, %v1895
      %v1904 = vsel %vm1152, %v1895, %v1897
      %v1913 = vsel %vm1128, %v1898, 0.0
      %v1914 = vsel %vm1129, %v1899, 0.0
      %v1915 = vsel %vm1130, %v1900, 0.0
      %v1916 = vsel %vm1131, %v1901, 0.0
      %v1917 = vsel %vm1132, %v1902, 0.0
      %v1918 = vsel %vm1133, %v1903, 0.0
      %v1919 = vsel %vm1134, %v1904, 0.0
      %v1920 = vsel %vm1135, %v1897, 0.0
      %v1921 = vpack.c.bf16 %v1913, %v1913
      %v1922 = vpack.c.bf16 %v1914, %v1914
      %v1923 = vpack.c.bf16 %v1915, %v1915
      %v1924 = vpack.c.bf16 %v1916, %v1916
      %v1925 = vpack.c.bf16 %v1917, %v1917
      %v1926 = vpack.c.bf16 %v1918, %v1918
      %v1927 = vpack.c.bf16 %v1919, %v1919
      %v1928 = vpack.c.bf16 %v1920, %v1920
      %v1937 = vunpack.c.l.b16 %v1921
      %v1938 = vunpack.c.l.b16 %v1922
      %v1939 = vunpack.c.l.b16 %v1923
      %v1940 = vunpack.c.l.b16 %v1924
      %v1941 = vunpack.c.l.b16 %v1925
      %v1942 = vunpack.c.l.b16 %v1926
      %v1943 = vunpack.c.l.b16 %v1927
      %v1944 = vunpack.c.l.b16 %v1928
      %v1945 = vpack.c.b16 %v1938, %v1937
      %v1946 = vpack.c.b16 %v1940, %v1939
      %v1947 = vpack.c.b16 %v1942, %v1941
      %v1948 = vpack.c.b16 %v1944, %v1943
      %1953 = vst [vmem:[#allocation2 + $0x1e0] sm:$0xff] %v1945
      %1954 = vst [vmem:[#allocation2 + $0x1e8] sm:$0xff] %v1946
      %1955 = vst [vmem:[#allocation2 + $0x1f0] sm:$0xff] %v1947
      %1956 = vst.msk [vmem:[#allocation2 + $0x1f8] sm:$0xff] %vm1212, %v1948
      %1957 = vst.msk [vmem:[#allocation2 + $0x1fc] sm:$0xf] %vm1214, 0
      %1958 = vrot.lane.b32.xlu0 %v428, 112
      %v1959 = vpop.permute.xlu0 %1958
      %1960 = vrot.lane.b32.xlu0 %v429, 112
      %v1961 = vpop.permute.xlu0 %1960
      %1962 = vrot.lane.b32.xlu0 %v430, 112
      %v1963 = vpop.permute.xlu0 %1962
      %1964 = vrot.lane.b32.xlu0 %v431, 112
      %v1965 = vpop.permute.xlu0 %1964
      %1966 = vrot.lane.b32.xlu0 %v432, 112
      %v1967 = vpop.permute.xlu0 %1966
      %1968 = vrot.lane.b32.xlu0 %v433, 112
      %v1969 = vpop.permute.xlu0 %1968
      %1970 = vrot.lane.b32.xlu0 %v434, 112
      %v1971 = vpop.permute.xlu0 %1970
      %1972 = vrot.lane.b32.xlu0 %v435, 112
      %v1973 = vpop.permute.xlu0 %1972
      %v1974 = vsel %vm1273, %v1959, %v1961
      %v1975 = vsel %vm1273, %v1961, %v1963
      %v1976 = vsel %vm1273, %v1963, %v1965
      %v1977 = vsel %vm1273, %v1965, %v1967
      %v1978 = vsel %vm1273, %v1967, %v1969
      %v1979 = vsel %vm1273, %v1969, %v1971
      %v1980 = vsel %vm1273, %v1971, %v1973
      %v1989 = vsel %vm1249, %v1974, 0.0
      %v1990 = vsel %vm1250, %v1975, 0.0
      %v1991 = vsel %vm1251, %v1976, 0.0
      %v1992 = vsel %vm1252, %v1977, 0.0
      %v1993 = vsel %vm1253, %v1978, 0.0
      %v1994 = vsel %vm1254, %v1979, 0.0
      %v1995 = vsel %vm1255, %v1980, 0.0
      %v1996 = vsel %vm1256, %v1973, 0.0
      %v1997 = vpack.c.bf16 %v1989, %v1989
      %v1998 = vpack.c.bf16 %v1990, %v1990
      %v1999 = vpack.c.bf16 %v1991, %v1991
      %v2000 = vpack.c.bf16 %v1992, %v1992
      %v2001 = vpack.c.bf16 %v1993, %v1993
      %v2002 = vpack.c.bf16 %v1994, %v1994
      %v2003 = vpack.c.bf16 %v1995, %v1995
      %v2004 = vpack.c.bf16 %v1996, %v1996
      %v2013 = vunpack.c.l.b16 %v1997
      %v2014 = vunpack.c.l.b16 %v1998
      %v2015 = vunpack.c.l.b16 %v1999
      %v2016 = vunpack.c.l.b16 %v2000
      %v2017 = vunpack.c.l.b16 %v2001
      %v2018 = vunpack.c.l.b16 %v2002
      %v2019 = vunpack.c.l.b16 %v2003
      %v2020 = vunpack.c.l.b16 %v2004
      %v2021 = vpack.c.b16 %v2014, %v2013
      %v2022 = vpack.c.b16 %v2016, %v2015
      %v2023 = vpack.c.b16 %v2018, %v2017
      %v2024 = vpack.c.b16 %v2020, %v2019
      %2029 = vst [vmem:[#allocation2 + $0x200] sm:$0xff] %v2021
      %2030 = vst [vmem:[#allocation2 + $0x208] sm:$0xff] %v2022
      %2031 = vst [vmem:[#allocation2 + $0x210] sm:$0xff] %v2023
      %2032 = vst.msk [vmem:[#allocation2 + $0x218] sm:$0xff] %vm1333, %v2024
      %2033 = vst.msk [vmem:[#allocation2 + $0x21c] sm:$0xf] %vm1335, 0
      %2034 = vrot.lane.b32.xlu0 %v428, 111
      %v2035 = vpop.permute.xlu0 %2034
      %2036 = vrot.lane.b32.xlu0 %v429, 111
      %v2037 = vpop.permute.xlu0 %2036
      %2038 = vrot.lane.b32.xlu0 %v430, 111
      %v2039 = vpop.permute.xlu0 %2038
      %2040 = vrot.lane.b32.xlu0 %v431, 111
      %v2041 = vpop.permute.xlu0 %2040
      %2042 = vrot.lane.b32.xlu0 %v432, 111
      %v2043 = vpop.permute.xlu0 %2042
      %2044 = vrot.lane.b32.xlu0 %v433, 111
      %v2045 = vpop.permute.xlu0 %2044
      %2046 = vrot.lane.b32.xlu0 %v434, 111
      %v2047 = vpop.permute.xlu0 %2046
      %2048 = vrot.lane.b32.xlu0 %v435, 111
      %v2049 = vpop.permute.xlu0 %2048
      %v2050 = vsel %vm1394, %v2035, %v2037
      %v2051 = vsel %vm1394, %v2037, %v2039
      %v2052 = vsel %vm1394, %v2039, %v2041
      %v2053 = vsel %vm1394, %v2041, %v2043
      %v2054 = vsel %vm1394, %v2043, %v2045
      %v2055 = vsel %vm1394, %v2045, %v2047
      %v2056 = vsel %vm1394, %v2047, %v2049
      %v2065 = vsel %vm1370, %v2050, 0.0
      %v2066 = vsel %vm1371, %v2051, 0.0
      %v2067 = vsel %vm1372, %v2052, 0.0
      %v2068 = vsel %vm1373, %v2053, 0.0
      %v2069 = vsel %vm1374, %v2054, 0.0
      %v2070 = vsel %vm1375, %v2055, 0.0
      %v2071 = vsel %vm1376, %v2056, 0.0
      %v2072 = vsel %vm1377, %v2049, 0.0
      %v2073 = vpack.c.bf16 %v2065, %v2065
      %v2074 = vpack.c.bf16 %v2066, %v2066
      %v2075 = vpack.c.bf16 %v2067, %v2067
      %v2076 = vpack.c.bf16 %v2068, %v2068
      %v2077 = vpack.c.bf16 %v2069, %v2069
      %v2078 = vpack.c.bf16 %v2070, %v2070
      %v2079 = vpack.c.bf16 %v2071, %v2071
      %v2080 = vpack.c.bf16 %v2072, %v2072
      %v2089 = vunpack.c.l.b16 %v2073
      %v2090 = vunpack.c.l.b16 %v2074
      %v2091 = vunpack.c.l.b16 %v2075
      %v2092 = vunpack.c.l.b16 %v2076
      %v2093 = vunpack.c.l.b16 %v2077
      %v2094 = vunpack.c.l.b16 %v2078
      %v2095 = vunpack.c.l.b16 %v2079
      %v2096 = vunpack.c.l.b16 %v2080
      %v2097 = vpack.c.b16 %v2090, %v2089
      %v2098 = vpack.c.b16 %v2092, %v2091
      %v2099 = vpack.c.b16 %v2094, %v2093
      %v2100 = vpack.c.b16 %v2096, %v2095
      %2105 = vst [vmem:[#allocation2 + $0x220] sm:$0xff] %v2097
      %2106 = vst [vmem:[#allocation2 + $0x228] sm:$0xff] %v2098
      %2107 = vst [vmem:[#allocation2 + $0x230] sm:$0xff] %v2099
      %2108 = vst.msk [vmem:[#allocation2 + $0x238] sm:$0xff] %vm1454, %v2100
      %2109 = vst.msk [vmem:[#allocation2 + $0x23c] sm:$0xf] %vm1456, 0
      %2118 = vrot.lane.b32.xlu0 %v436, 17
      %v2119 = vpop.permute.xlu0 %2118
      %2120 = vrot.lane.b32.xlu0 %v437, 17
      %v2121 = vpop.permute.xlu0 %2120
      %2122 = vrot.lane.b32.xlu0 %v438, 17
      %v2123 = vpop.permute.xlu0 %2122
      %2124 = vrot.lane.b32.xlu0 %v439, 17
      %v2125 = vpop.permute.xlu0 %2124
      %2126 = vrot.lane.b32.xlu0 %v440, 17
      %v2127 = vpop.permute.xlu0 %2126
      %2128 = vrot.lane.b32.xlu0 %v441, 17
      %v2129 = vpop.permute.xlu0 %2128
      %2130 = vrot.lane.b32.xlu0 %v442, 17
      %v2131 = vpop.permute.xlu0 %2130
      %2132 = vrot.lane.b32.xlu0 %v443, 17
      %v2133 = vpop.permute.xlu0 %2132
      %v2134 = vsel %vm509, %v2119, %v2121
      %v2135 = vsel %vm509, %v2121, %v2123
      %v2136 = vsel %vm509, %v2123, %v2125
      %v2137 = vsel %vm509, %v2125, %v2127
      %v2138 = vsel %vm509, %v2127, %v2129
      %v2139 = vsel %vm509, %v2129, %v2131
      %v2140 = vsel %vm509, %v2131, %v2133
      %v2149 = vsel %vm477, %v2119, 0.0
      %v2150 = vsel %vm478, %v2134, 0.0
      %v2151 = vsel %vm479, %v2135, 0.0
      %v2152 = vsel %vm480, %v2136, 0.0
      %v2153 = vsel %vm481, %v2137, 0.0
      %v2154 = vsel %vm482, %v2138, 0.0
      %v2155 = vsel %vm483, %v2139, 0.0
      %v2156 = vsel %vm484, %v2140, 0.0
      %v2157 = vpack.c.bf16 %v2149, %v2149
      %v2158 = vpack.c.bf16 %v2150, %v2150
      %v2159 = vpack.c.bf16 %v2151, %v2151
      %v2160 = vpack.c.bf16 %v2152, %v2152
      %v2161 = vpack.c.bf16 %v2153, %v2153
      %v2162 = vpack.c.bf16 %v2154, %v2154
      %v2163 = vpack.c.bf16 %v2155, %v2155
      %v2164 = vpack.c.bf16 %v2156, %v2156
      %v2173 = vunpack.c.l.b16 %v2157
      %v2174 = vunpack.c.l.b16 %v2158
      %v2175 = vunpack.c.l.b16 %v2159
      %v2176 = vunpack.c.l.b16 %v2160
      %v2177 = vunpack.c.l.b16 %v2161
      %v2178 = vunpack.c.l.b16 %v2162
      %v2179 = vunpack.c.l.b16 %v2163
      %v2180 = vunpack.c.l.b16 %v2164
      %v2181 = vpack.c.b16 %v2174, %v2173
      %v2182 = vpack.c.b16 %v2176, %v2175
      %v2183 = vpack.c.b16 %v2178, %v2177
      %v2184 = vpack.c.b16 %v2180, %v2179
      %2189 = vst.msk [vmem:[#allocation2 + $0x240] sm:$0xff] %vm567, %v2181
      %2190 = vst [vmem:[#allocation2 + $0x248] sm:$0xff] %v2182
      %2191 = vst [vmem:[#allocation2 + $0x250] sm:$0xff] %v2183
      %2192 = vst [vmem:[#allocation2 + $0x258] sm:$0xff] %v2184
      %2193 = vst.msk [vmem:[#allocation2 + $0x240] sm:$0xf] %vm572, 0
      %2194 = vrot.lane.b32.xlu0 %v436, 16
      %v2195 = vpop.permute.xlu0 %2194
      %2196 = vrot.lane.b32.xlu0 %v437, 16
      %v2197 = vpop.permute.xlu0 %2196
      %2198 = vrot.lane.b32.xlu0 %v438, 16
      %v2199 = vpop.permute.xlu0 %2198
      %2200 = vrot.lane.b32.xlu0 %v439, 16
      %v2201 = vpop.permute.xlu0 %2200
      %2202 = vrot.lane.b32.xlu0 %v440, 16
      %v2203 = vpop.permute.xlu0 %2202
      %2204 = vrot.lane.b32.xlu0 %v441, 16
      %v2205 = vpop.permute.xlu0 %2204
      %2206 = vrot.lane.b32.xlu0 %v442, 16
      %v2207 = vpop.permute.xlu0 %2206
      %2208 = vrot.lane.b32.xlu0 %v443, 16
      %v2209 = vpop.permute.xlu0 %2208
      %v2210 = vsel %vm631, %v2195, %v2197
      %v2211 = vsel %vm631, %v2197, %v2199
      %v2212 = vsel %vm631, %v2199, %v2201
      %v2213 = vsel %vm631, %v2201, %v2203
      %v2214 = vsel %vm631, %v2203, %v2205
      %v2215 = vsel %vm631, %v2205, %v2207
      %v2216 = vsel %vm631, %v2207, %v2209
      %v2225 = vsel %vm607, %v2195, 0.0
      %v2226 = vsel %vm608, %v2210, 0.0
      %v2227 = vsel %vm609, %v2211, 0.0
      %v2228 = vsel %vm610, %v2212, 0.0
      %v2229 = vsel %vm611, %v2213, 0.0
      %v2230 = vsel %vm612, %v2214, 0.0
      %v2231 = vsel %vm613, %v2215, 0.0
      %v2232 = vsel %vm614, %v2216, 0.0
      %v2233 = vpack.c.bf16 %v2225, %v2225
      %v2234 = vpack.c.bf16 %v2226, %v2226
      %v2235 = vpack.c.bf16 %v2227, %v2227
      %v2236 = vpack.c.bf16 %v2228, %v2228
      %v2237 = vpack.c.bf16 %v2229, %v2229
      %v2238 = vpack.c.bf16 %v2230, %v2230
      %v2239 = vpack.c.bf16 %v2231, %v2231
      %v2240 = vpack.c.bf16 %v2232, %v2232
      %v2249 = vunpack.c.l.b16 %v2233
      %v2250 = vunpack.c.l.b16 %v2234
      %v2251 = vunpack.c.l.b16 %v2235
      %v2252 = vunpack.c.l.b16 %v2236
      %v2253 = vunpack.c.l.b16 %v2237
      %v2254 = vunpack.c.l.b16 %v2238
      %v2255 = vunpack.c.l.b16 %v2239
      %v2256 = vunpack.c.l.b16 %v2240
      %v2257 = vpack.c.b16 %v2250, %v2249
      %v2258 = vpack.c.b16 %v2252, %v2251
      %v2259 = vpack.c.b16 %v2254, %v2253
      %v2260 = vpack.c.b16 %v2256, %v2255
      %2265 = vst.msk [vmem:[#allocation2 + $0x260] sm:$0xff] %vm688, %v2257
      %2266 = vst [vmem:[#allocation2 + $0x268] sm:$0xff] %v2258
      %2267 = vst [vmem:[#allocation2 + $0x270] sm:$0xff] %v2259
      %2268 = vst [vmem:[#allocation2 + $0x278] sm:$0xff] %v2260
      %2269 = vst.msk [vmem:[#allocation2 + $0x260] sm:$0xf] %vm693, 0
      %2270 = vrot.lane.b32.xlu0 %v436, 15
      %v2271 = vpop.permute.xlu0 %2270
      %2272 = vrot.lane.b32.xlu0 %v437, 15
      %v2273 = vpop.permute.xlu0 %2272
      %2274 = vrot.lane.b32.xlu0 %v438, 15
      %v2275 = vpop.permute.xlu0 %2274
      %2276 = vrot.lane.b32.xlu0 %v439, 15
      %v2277 = vpop.permute.xlu0 %2276
      %2278 = vrot.lane.b32.xlu0 %v440, 15
      %v2279 = vpop.permute.xlu0 %2278
      %2280 = vrot.lane.b32.xlu0 %v441, 15
      %v2281 = vpop.permute.xlu0 %2280
      %2282 = vrot.lane.b32.xlu0 %v442, 15
      %v2283 = vpop.permute.xlu0 %2282
      %2284 = vrot.lane.b32.xlu0 %v443, 15
      %v2285 = vpop.permute.xlu0 %2284
      %v2286 = vsel %vm752, %v2271, %v2273
      %v2287 = vsel %vm752, %v2273, %v2275
      %v2288 = vsel %vm752, %v2275, %v2277
      %v2289 = vsel %vm752, %v2277, %v2279
      %v2290 = vsel %vm752, %v2279, %v2281
      %v2291 = vsel %vm752, %v2281, %v2283
      %v2292 = vsel %vm752, %v2283, %v2285
      %v2301 = vsel %vm728, %v2271, 0.0
      %v2302 = vsel %vm729, %v2286, 0.0
      %v2303 = vsel %vm730, %v2287, 0.0
      %v2304 = vsel %vm731, %v2288, 0.0
      %v2305 = vsel %vm732, %v2289, 0.0
      %v2306 = vsel %vm733, %v2290, 0.0
      %v2307 = vsel %vm734, %v2291, 0.0
      %v2308 = vsel %vm735, %v2292, 0.0
      %v2309 = vpack.c.bf16 %v2301, %v2301
      %v2310 = vpack.c.bf16 %v2302, %v2302
      %v2311 = vpack.c.bf16 %v2303, %v2303
      %v2312 = vpack.c.bf16 %v2304, %v2304
      %v2313 = vpack.c.bf16 %v2305, %v2305
      %v2314 = vpack.c.bf16 %v2306, %v2306
      %v2315 = vpack.c.bf16 %v2307, %v2307
      %v2316 = vpack.c.bf16 %v2308, %v2308
      %v2325 = vunpack.c.l.b16 %v2309
      %v2326 = vunpack.c.l.b16 %v2310
      %v2327 = vunpack.c.l.b16 %v2311
      %v2328 = vunpack.c.l.b16 %v2312
      %v2329 = vunpack.c.l.b16 %v2313
      %v2330 = vunpack.c.l.b16 %v2314
      %v2331 = vunpack.c.l.b16 %v2315
      %v2332 = vunpack.c.l.b16 %v2316
      %v2333 = vpack.c.b16 %v2326, %v2325
      %v2334 = vpack.c.b16 %v2328, %v2327
      %v2335 = vpack.c.b16 %v2330, %v2329
      %v2336 = vpack.c.b16 %v2332, %v2331
      %2341 = vst.msk [vmem:[#allocation2 + $0x280] sm:$0xff] %vm809, %v2333
      %2342 = vst [vmem:[#allocation2 + $0x288] sm:$0xff] %v2334
      %2343 = vst [vmem:[#allocation2 + $0x290] sm:$0xff] %v2335
      %2344 = vst [vmem:[#allocation2 + $0x298] sm:$0xff] %v2336
      %2345 = vst.msk [vmem:[#allocation2 + $0x280] sm:$0xf] %vm814, 0
      %2346 = vrot.lane.b32.xlu0 %v436, 1
      %v2347 = vpop.permute.xlu0 %2346
      %2348 = vrot.lane.b32.xlu0 %v437, 1
      %v2349 = vpop.permute.xlu0 %2348
      %2350 = vrot.lane.b32.xlu0 %v438, 1
      %v2351 = vpop.permute.xlu0 %2350
      %2352 = vrot.lane.b32.xlu0 %v439, 1
      %v2353 = vpop.permute.xlu0 %2352
      %2354 = vrot.lane.b32.xlu0 %v440, 1
      %v2355 = vpop.permute.xlu0 %2354
      %2356 = vrot.lane.b32.xlu0 %v441, 1
      %v2357 = vpop.permute.xlu0 %2356
      %2358 = vrot.lane.b32.xlu0 %v442, 1
      %v2359 = vpop.permute.xlu0 %2358
      %2360 = vrot.lane.b32.xlu0 %v443, 1
      %v2361 = vpop.permute.xlu0 %2360
      %v2362 = vsel %vm873, %v2347, %v2349
      %v2363 = vsel %vm873, %v2349, %v2351
      %v2364 = vsel %vm873, %v2351, %v2353
      %v2365 = vsel %vm873, %v2353, %v2355
      %v2366 = vsel %vm873, %v2355, %v2357
      %v2367 = vsel %vm873, %v2357, %v2359
      %v2368 = vsel %vm873, %v2359, %v2361
      %v2377 = vsel %vm849, %v2347, 0.0
      %v2378 = vsel %vm850, %v2362, 0.0
      %v2379 = vsel %vm851, %v2363, 0.0
      %v2380 = vsel %vm852, %v2364, 0.0
      %v2381 = vsel %vm853, %v2365, 0.0
      %v2382 = vsel %vm854, %v2366, 0.0
      %v2383 = vsel %vm855, %v2367, 0.0
      %v2384 = vsel %vm856, %v2368, 0.0
      %v2385 = vpack.c.bf16 %v2377, %v2377
      %v2386 = vpack.c.bf16 %v2378, %v2378
      %v2387 = vpack.c.bf16 %v2379, %v2379
      %v2388 = vpack.c.bf16 %v2380, %v2380
      %v2389 = vpack.c.bf16 %v2381, %v2381
      %v2390 = vpack.c.bf16 %v2382, %v2382
      %v2391 = vpack.c.bf16 %v2383, %v2383
      %v2392 = vpack.c.bf16 %v2384, %v2384
      %v2401 = vunpack.c.l.b16 %v2385
      %v2402 = vunpack.c.l.b16 %v2386
      %v2403 = vunpack.c.l.b16 %v2387
      %v2404 = vunpack.c.l.b16 %v2388
      %v2405 = vunpack.c.l.b16 %v2389
      %v2406 = vunpack.c.l.b16 %v2390
      %v2407 = vunpack.c.l.b16 %v2391
      %v2408 = vunpack.c.l.b16 %v2392
      %v2409 = vpack.c.b16 %v2402, %v2401
      %v2410 = vpack.c.b16 %v2404, %v2403
      %v2411 = vpack.c.b16 %v2406, %v2405
      %v2412 = vpack.c.b16 %v2408, %v2407
      %2417 = vst.msk [vmem:[#allocation2 + $0x2a0] sm:$0xff] %vm930, %v2409
      %2418 = vst [vmem:[#allocation2 + $0x2a8] sm:$0xff] %v2410
      %2419 = vst [vmem:[#allocation2 + $0x2b0] sm:$0xff] %v2411
      %2420 = vst [vmem:[#allocation2 + $0x2b8] sm:$0xff] %v2412
      %2421 = vst.msk [vmem:[#allocation2 + $0x2a0] sm:$0xf] %vm935, 0
      %v2422 = vpack.c.bf16 %v436, %v436
      %v2423 = vpack.c.bf16 %v437, %v437
      %v2424 = vpack.c.bf16 %v438, %v438
      %v2425 = vpack.c.bf16 %v439, %v439
      %v2426 = vpack.c.bf16 %v440, %v440
      %v2427 = vpack.c.bf16 %v441, %v441
      %v2428 = vpack.c.bf16 %v442, %v442
      %v2429 = vpack.c.bf16 %v443, %v443
      %v2438 = vunpack.c.l.b16 %v2422
      %v2439 = vunpack.c.l.b16 %v2423
      %v2440 = vunpack.c.l.b16 %v2424
      %v2441 = vunpack.c.l.b16 %v2425
      %v2442 = vunpack.c.l.b16 %v2426
      %v2443 = vunpack.c.l.b16 %v2427
      %v2444 = vunpack.c.l.b16 %v2428
      %v2445 = vunpack.c.l.b16 %v2429
      %v2446 = vpack.c.b16 %v2439, %v2438
      %v2447 = vpack.c.b16 %v2441, %v2440
      %v2448 = vpack.c.b16 %v2443, %v2442
      %v2449 = vpack.c.b16 %v2445, %v2444
      %2454 = vst [vmem:[#allocation2 + $0x2c0] sm:$0xff] %v2446
      %2455 = vst [vmem:[#allocation2 + $0x2c8] sm:$0xff] %v2447
      %2456 = vst [vmem:[#allocation2 + $0x2d0] sm:$0xff] %v2448
      %2457 = vst [vmem:[#allocation2 + $0x2d8] sm:$0xff] %v2449
      %2458 = vrot.lane.b32.xlu0 %v436, 127
      %v2459 = vpop.permute.xlu0 %2458
      %2460 = vrot.lane.b32.xlu0 %v437, 127
      %v2461 = vpop.permute.xlu0 %2460
      %2462 = vrot.lane.b32.xlu0 %v438, 127
      %v2463 = vpop.permute.xlu0 %2462
      %2464 = vrot.lane.b32.xlu0 %v439, 127
      %v2465 = vpop.permute.xlu0 %2464
      %2466 = vrot.lane.b32.xlu0 %v440, 127
      %v2467 = vpop.permute.xlu0 %2466
      %2468 = vrot.lane.b32.xlu0 %v441, 127
      %v2469 = vpop.permute.xlu0 %2468
      %2470 = vrot.lane.b32.xlu0 %v442, 127
      %v2471 = vpop.permute.xlu0 %2470
      %2472 = vrot.lane.b32.xlu0 %v443, 127
      %v2473 = vpop.permute.xlu0 %2472
      %v2474 = vsel %vm1030, %v2459, %v2461
      %v2475 = vsel %vm1030, %v2461, %v2463
      %v2476 = vsel %vm1030, %v2463, %v2465
      %v2477 = vsel %vm1030, %v2465, %v2467
      %v2478 = vsel %vm1030, %v2467, %v2469
      %v2479 = vsel %vm1030, %v2469, %v2471
      %v2480 = vsel %vm1030, %v2471, %v2473
      %v2489 = vsel %vm1006, %v2474, 0.0
      %v2490 = vsel %vm1007, %v2475, 0.0
      %v2491 = vsel %vm1008, %v2476, 0.0
      %v2492 = vsel %vm1009, %v2477, 0.0
      %v2493 = vsel %vm1010, %v2478, 0.0
      %v2494 = vsel %vm1011, %v2479, 0.0
      %v2495 = vsel %vm1012, %v2480, 0.0
      %v2496 = vsel %vm1013, %v2473, 0.0
      %v2497 = vpack.c.bf16 %v2489, %v2489
      %v2498 = vpack.c.bf16 %v2490, %v2490
      %v2499 = vpack.c.bf16 %v2491, %v2491
      %v2500 = vpack.c.bf16 %v2492, %v2492
      %v2501 = vpack.c.bf16 %v2493, %v2493
      %v2502 = vpack.c.bf16 %v2494, %v2494
      %v2503 = vpack.c.bf16 %v2495, %v2495
      %v2504 = vpack.c.bf16 %v2496, %v2496
      %v2513 = vunpack.c.l.b16 %v2497
      %v2514 = vunpack.c.l.b16 %v2498
      %v2515 = vunpack.c.l.b16 %v2499
      %v2516 = vunpack.c.l.b16 %v2500
      %v2517 = vunpack.c.l.b16 %v2501
      %v2518 = vunpack.c.l.b16 %v2502
      %v2519 = vunpack.c.l.b16 %v2503
      %v2520 = vunpack.c.l.b16 %v2504
      %v2521 = vpack.c.b16 %v2514, %v2513
      %v2522 = vpack.c.b16 %v2516, %v2515
      %v2523 = vpack.c.b16 %v2518, %v2517
      %v2524 = vpack.c.b16 %v2520, %v2519
      %2529 = vst [vmem:[#allocation2 + $0x2e0] sm:$0xff] %v2521
      %2530 = vst [vmem:[#allocation2 + $0x2e8] sm:$0xff] %v2522
      %2531 = vst [vmem:[#allocation2 + $0x2f0] sm:$0xff] %v2523
      %2532 = vst.msk [vmem:[#allocation2 + $0x2f8] sm:$0xff] %vm1091, %v2524
      %2533 = vst.msk [vmem:[#allocation2 + $0x2fc] sm:$0xf] %vm1093, 0
      %2534 = vrot.lane.b32.xlu0 %v436, 113
      %v2535 = vpop.permute.xlu0 %2534
      %2536 = vrot.lane.b32.xlu0 %v437, 113
      %v2537 = vpop.permute.xlu0 %2536
      %2538 = vrot.lane.b32.xlu0 %v438, 113
      %v2539 = vpop.permute.xlu0 %2538
      %2540 = vrot.lane.b32.xlu0 %v439, 113
      %v2541 = vpop.permute.xlu0 %2540
      %2542 = vrot.lane.b32.xlu0 %v440, 113
      %v2543 = vpop.permute.xlu0 %2542
      %2544 = vrot.lane.b32.xlu0 %v441, 113
      %v2545 = vpop.permute.xlu0 %2544
      %2546 = vrot.lane.b32.xlu0 %v442, 113
      %v2547 = vpop.permute.xlu0 %2546
      %2548 = vrot.lane.b32.xlu0 %v443, 113
      %v2549 = vpop.permute.xlu0 %2548
      %v2550 = vsel %vm1152, %v2535, %v2537
      %v2551 = vsel %vm1152, %v2537, %v2539
      %v2552 = vsel %vm1152, %v2539, %v2541
      %v2553 = vsel %vm1152, %v2541, %v2543
      %v2554 = vsel %vm1152, %v2543, %v2545
      %v2555 = vsel %vm1152, %v2545, %v2547
      %v2556 = vsel %vm1152, %v2547, %v2549
      %v2565 = vsel %vm1128, %v2550, 0.0
      %v2566 = vsel %vm1129, %v2551, 0.0
      %v2567 = vsel %vm1130, %v2552, 0.0
      %v2568 = vsel %vm1131, %v2553, 0.0
      %v2569 = vsel %vm1132, %v2554, 0.0
      %v2570 = vsel %vm1133, %v2555, 0.0
      %v2571 = vsel %vm1134, %v2556, 0.0
      %v2572 = vsel %vm1135, %v2549, 0.0
      %v2573 = vpack.c.bf16 %v2565, %v2565
      %v2574 = vpack.c.bf16 %v2566, %v2566
      %v2575 = vpack.c.bf16 %v2567, %v2567
      %v2576 = vpack.c.bf16 %v2568, %v2568
      %v2577 = vpack.c.bf16 %v2569, %v2569
      %v2578 = vpack.c.bf16 %v2570, %v2570
      %v2579 = vpack.c.bf16 %v2571, %v2571
      %v2580 = vpack.c.bf16 %v2572, %v2572
      %v2589 = vunpack.c.l.b16 %v2573
      %v2590 = vunpack.c.l.b16 %v2574
      %v2591 = vunpack.c.l.b16 %v2575
      %v2592 = vunpack.c.l.b16 %v2576
      %v2593 = vunpack.c.l.b16 %v2577
      %v2594 = vunpack.c.l.b16 %v2578
      %v2595 = vunpack.c.l.b16 %v2579
      %v2596 = vunpack.c.l.b16 %v2580
      %v2597 = vpack.c.b16 %v2590, %v2589
      %v2598 = vpack.c.b16 %v2592, %v2591
      %v2599 = vpack.c.b16 %v2594, %v2593
      %v2600 = vpack.c.b16 %v2596, %v2595
      %2605 = vst [vmem:[#allocation2 + $0x300] sm:$0xff] %v2597
      %2606 = vst [vmem:[#allocation2 + $0x308] sm:$0xff] %v2598
      %2607 = vst [vmem:[#allocation2 + $0x310] sm:$0xff] %v2599
      %2608 = vst.msk [vmem:[#allocation2 + $0x318] sm:$0xff] %vm1212, %v2600
      %2609 = vst.msk [vmem:[#allocation2 + $0x31c] sm:$0xf] %vm1214, 0
      %2610 = vrot.lane.b32.xlu0 %v436, 112
      %v2611 = vpop.permute.xlu0 %2610
      %2612 = vrot.lane.b32.xlu0 %v437, 112
      %v2613 = vpop.permute.xlu0 %2612
      %2614 = vrot.lane.b32.xlu0 %v438, 112
      %v2615 = vpop.permute.xlu0 %2614
      %2616 = vrot.lane.b32.xlu0 %v439, 112
      %v2617 = vpop.permute.xlu0 %2616
      %2618 = vrot.lane.b32.xlu0 %v440, 112
      %v2619 = vpop.permute.xlu0 %2618
      %2620 = vrot.lane.b32.xlu0 %v441, 112
      %v2621 = vpop.permute.xlu0 %2620
      %2622 = vrot.lane.b32.xlu0 %v442, 112
      %v2623 = vpop.permute.xlu0 %2622
      %2624 = vrot.lane.b32.xlu0 %v443, 112
      %v2625 = vpop.permute.xlu0 %2624
      %v2626 = vsel %vm1273, %v2611, %v2613
      %v2627 = vsel %vm1273, %v2613, %v2615
      %v2628 = vsel %vm1273, %v2615, %v2617
      %v2629 = vsel %vm1273, %v2617, %v2619
      %v2630 = vsel %vm1273, %v2619, %v2621
      %v2631 = vsel %vm1273, %v2621, %v2623
      %v2632 = vsel %vm1273, %v2623, %v2625
      %v2641 = vsel %vm1249, %v2626, 0.0
      %v2642 = vsel %vm1250, %v2627, 0.0
      %v2643 = vsel %vm1251, %v2628, 0.0
      %v2644 = vsel %vm1252, %v2629, 0.0
      %v2645 = vsel %vm1253, %v2630, 0.0
      %v2646 = vsel %vm1254, %v2631, 0.0
      %v2647 = vsel %vm1255, %v2632, 0.0
      %v2648 = vsel %vm1256, %v2625, 0.0
      %v2649 = vpack.c.bf16 %v2641, %v2641
      %v2650 = vpack.c.bf16 %v2642, %v2642
      %v2651 = vpack.c.bf16 %v2643, %v2643
      %v2652 = vpack.c.bf16 %v2644, %v2644
      %v2653 = vpack.c.bf16 %v2645, %v2645
      %v2654 = vpack.c.bf16 %v2646, %v2646
      %v2655 = vpack.c.bf16 %v2647, %v2647
      %v2656 = vpack.c.bf16 %v2648, %v2648
      %v2665 = vunpack.c.l.b16 %v2649
      %v2666 = vunpack.c.l.b16 %v2650
      %v2667 = vunpack.c.l.b16 %v2651
      %v2668 = vunpack.c.l.b16 %v2652
      %v2669 = vunpack.c.l.b16 %v2653
      %v2670 = vunpack.c.l.b16 %v2654
      %v2671 = vunpack.c.l.b16 %v2655
      %v2672 = vunpack.c.l.b16 %v2656
      %v2673 = vpack.c.b16 %v2666, %v2665
      %v2674 = vpack.c.b16 %v2668, %v2667
      %v2675 = vpack.c.b16 %v2670, %v2669
      %v2676 = vpack.c.b16 %v2672, %v2671
      %2681 = vst [vmem:[#allocation2 + $0x320] sm:$0xff] %v2673
      %2682 = vst [vmem:[#allocation2 + $0x328] sm:$0xff] %v2674
      %2683 = vst [vmem:[#allocation2 + $0x330] sm:$0xff] %v2675
      %2684 = vst.msk [vmem:[#allocation2 + $0x338] sm:$0xff] %vm1333, %v2676
      %2685 = vst.msk [vmem:[#allocation2 + $0x33c] sm:$0xf] %vm1335, 0
      %2686 = vrot.lane.b32.xlu0 %v436, 111
      %v2687 = vpop.permute.xlu0 %2686
      %2688 = vrot.lane.b32.xlu0 %v437, 111
      %v2689 = vpop.permute.xlu0 %2688
      %2690 = vrot.lane.b32.xlu0 %v438, 111
      %v2691 = vpop.permute.xlu0 %2690
      %2692 = vrot.lane.b32.xlu0 %v439, 111
      %v2693 = vpop.permute.xlu0 %2692
      %2694 = vrot.lane.b32.xlu0 %v440, 111
      %v2695 = vpop.permute.xlu0 %2694
      %2696 = vrot.lane.b32.xlu0 %v441, 111
      %v2697 = vpop.permute.xlu0 %2696
      %2698 = vrot.lane.b32.xlu0 %v442, 111
      %v2699 = vpop.permute.xlu0 %2698
      %2700 = vrot.lane.b32.xlu0 %v443, 111
      %v2701 = vpop.permute.xlu0 %2700
      %v2702 = vsel %vm1394, %v2687, %v2689
      %v2703 = vsel %vm1394, %v2689, %v2691
      %v2704 = vsel %vm1394, %v2691, %v2693
      %v2705 = vsel %vm1394, %v2693, %v2695
      %v2706 = vsel %vm1394, %v2695, %v2697
      %v2707 = vsel %vm1394, %v2697, %v2699
      %v2708 = vsel %vm1394, %v2699, %v2701
      %v2717 = vsel %vm1370, %v2702, 0.0
      %v2718 = vsel %vm1371, %v2703, 0.0
      %v2719 = vsel %vm1372, %v2704, 0.0
      %v2720 = vsel %vm1373, %v2705, 0.0
      %v2721 = vsel %vm1374, %v2706, 0.0
      %v2722 = vsel %vm1375, %v2707, 0.0
      %v2723 = vsel %vm1376, %v2708, 0.0
      %v2724 = vsel %vm1377, %v2701, 0.0
      %v2725 = vpack.c.bf16 %v2717, %v2717
      %v2726 = vpack.c.bf16 %v2718, %v2718
      %v2727 = vpack.c.bf16 %v2719, %v2719
      %v2728 = vpack.c.bf16 %v2720, %v2720
      %v2729 = vpack.c.bf16 %v2721, %v2721
      %v2730 = vpack.c.bf16 %v2722, %v2722
      %v2731 = vpack.c.bf16 %v2723, %v2723
      %v2732 = vpack.c.bf16 %v2724, %v2724
      %v2741 = vunpack.c.l.b16 %v2725
      %v2742 = vunpack.c.l.b16 %v2726
      %v2743 = vunpack.c.l.b16 %v2727
      %v2744 = vunpack.c.l.b16 %v2728
      %v2745 = vunpack.c.l.b16 %v2729
      %v2746 = vunpack.c.l.b16 %v2730
      %v2747 = vunpack.c.l.b16 %v2731
      %v2748 = vunpack.c.l.b16 %v2732
      %v2749 = vpack.c.b16 %v2742, %v2741
      %v2750 = vpack.c.b16 %v2744, %v2743
      %v2751 = vpack.c.b16 %v2746, %v2745
      %v2752 = vpack.c.b16 %v2748, %v2747
      %2757 = vst [vmem:[#allocation2 + $0x340] sm:$0xff] %v2749
      %2758 = vst [vmem:[#allocation2 + $0x348] sm:$0xff] %v2750
      %2759 = vst [vmem:[#allocation2 + $0x350] sm:$0xff] %v2751
      %2760 = vst.msk [vmem:[#allocation2 + $0x358] sm:$0xff] %vm1454, %v2752
      %2761 = vst.msk [vmem:[#allocation2 + $0x35c] sm:$0xf] %vm1456, 0
      %v2762 = vld [vmem:[%s4] sm:$0xff]
      %v2763 = vld [vmem:[#allocation2] sm:$0xff]
      %v2764 = vld [vmem:[#allocation2 + $0x8] sm:$0xff]
      %v2765 = vld [vmem:[#allocation2 + $0x10] sm:$0xff]
      %v2766 = vld [vmem:[#allocation2 + $0x18] sm:$0xff]
      %v2767 = vld [vmem:[#allocation2 + $0x20] sm:$0xff]
      %v2768 = vld [vmem:[#allocation2 + $0x28] sm:$0xff]
      %v2769 = vld [vmem:[#allocation2 + $0x30] sm:$0xff]
      %v2770 = vld [vmem:[#allocation2 + $0x38] sm:$0xff]
      %v2771 = vld [vmem:[#allocation2 + $0x40] sm:$0xff]
      %v2772 = vld [vmem:[#allocation2 + $0x48] sm:$0xff]
      %v2773 = vld [vmem:[#allocation2 + $0x50] sm:$0xff]
      %v2774 = vld [vmem:[#allocation2 + $0x58] sm:$0xff]
      %v2775 = vld [vmem:[#allocation2 + $0x60] sm:$0xff]
      %v2776 = vld [vmem:[#allocation2 + $0x68] sm:$0xff]
      %v2777 = vld [vmem:[#allocation2 + $0x70] sm:$0xff]
      %v2778 = vld [vmem:[#allocation2 + $0x78] sm:$0xff]
      %v2779 = vld [vmem:[#allocation2 + $0x80] sm:$0xff]
      %v2780 = vld [vmem:[#allocation2 + $0x88] sm:$0xff]
      %v2781 = vld [vmem:[#allocation2 + $0x90] sm:$0xff]
      %v2782 = vld [vmem:[#allocation2 + $0x98] sm:$0xff]
      %v2783 = vld [vmem:[#allocation2 + $0xa0] sm:$0xff]
      %v2784 = vld [vmem:[#allocation2 + $0xa8] sm:$0xff]
      %v2785 = vld [vmem:[#allocation2 + $0xb0] sm:$0xff]
      %v2786 = vld [vmem:[#allocation2 + $0xb8] sm:$0xff]
      %v2787 = vld [vmem:[#allocation2 + $0xc0] sm:$0xff]
      %v2788 = vld [vmem:[#allocation2 + $0xc8] sm:$0xff]
      %v2789 = vld [vmem:[#allocation2 + $0xd0] sm:$0xff]
      %v2790 = vld [vmem:[#allocation2 + $0xd8] sm:$0xff]
      %v2791 = vld [vmem:[#allocation2 + $0xe0] sm:$0xff]
      %v2792 = vld [vmem:[#allocation2 + $0xe8] sm:$0xff]
      %v2793 = vld [vmem:[#allocation2 + $0xf0] sm:$0xff]
      %v2794 = vld [vmem:[#allocation2 + $0xf8] sm:$0xff]
      %v2795 = vld [vmem:[#allocation2 + $0x100] sm:$0xff]
      %v2796 = vld [vmem:[#allocation2 + $0x108] sm:$0xff]
      %v2797 = vld [vmem:[#allocation2 + $0x110] sm:$0xff]
      %v2798 = vld [vmem:[#allocation2 + $0x118] sm:$0xff]
      %v2799 = vld [vmem:[#allocation2 + $0x120] sm:$0xff]
      %v2800 = vld [vmem:[#allocation2 + $0x128] sm:$0xff]
      %v2801 = vld [vmem:[#allocation2 + $0x130] sm:$0xff]
      %v2802 = vld [vmem:[#allocation2 + $0x138] sm:$0xff]
      %v2803 = vld [vmem:[#allocation2 + $0x140] sm:$0xff]
      %v2804 = vld [vmem:[#allocation2 + $0x148] sm:$0xff]
      %v2805 = vld [vmem:[#allocation2 + $0x150] sm:$0xff]
      %v2806 = vld [vmem:[#allocation2 + $0x158] sm:$0xff]
      %v2807 = vld [vmem:[#allocation2 + $0x160] sm:$0xff]
      %v2808 = vld [vmem:[#allocation2 + $0x168] sm:$0xff]
      %v2809 = vld [vmem:[#allocation2 + $0x170] sm:$0xff]
      %v2810 = vld [vmem:[#allocation2 + $0x178] sm:$0xff]
      %v2811 = vld [vmem:[#allocation2 + $0x180] sm:$0xff]
      %v2812 = vld [vmem:[#allocation2 + $0x188] sm:$0xff]
      %v2813 = vld [vmem:[#allocation2 + $0x190] sm:$0xff]
      %v2814 = vld [vmem:[#allocation2 + $0x198] sm:$0xff]
      %v2815 = vld [vmem:[#allocation2 + $0x1a0] sm:$0xff]
      %v2816 = vld [vmem:[#allocation2 + $0x1a8] sm:$0xff]
      %v2817 = vld [vmem:[#allocation2 + $0x1b0] sm:$0xff]
      %v2818 = vld [vmem:[#allocation2 + $0x1b8] sm:$0xff]
      %v2819 = vld [vmem:[#allocation2 + $0x1c0] sm:$0xff]
      %v2820 = vld [vmem:[#allocation2 + $0x1c8] sm:$0xff]
      %v2821 = vld [vmem:[#allocation2 + $0x1d0] sm:$0xff]
      %v2822 = vld [vmem:[#allocation2 + $0x1d8] sm:$0xff]
      %v2823 = vld [vmem:[#allocation2 + $0x1e0] sm:$0xff]
      %v2824 = vld [vmem:[#allocation2 + $0x1e8] sm:$0xff]
      %v2825 = vld [vmem:[#allocation2 + $0x1f0] sm:$0xff]
      %v2826 = vld [vmem:[#allocation2 + $0x1f8] sm:$0xff]
      %v2827 = vld [vmem:[#allocation2 + $0x200] sm:$0xff]
      %v2828 = vld [vmem:[#allocation2 + $0x208] sm:$0xff]
      %v2829 = vld [vmem:[#allocation2 + $0x210] sm:$0xff]
      %v2830 = vld [vmem:[#allocation2 + $0x218] sm:$0xff]
      %v2831 = vld [vmem:[#allocation2 + $0x220] sm:$0xff]
      %v2832 = vld [vmem:[#allocation2 + $0x228] sm:$0xff]
      %v2833 = vld [vmem:[#allocation2 + $0x230] sm:$0xff]
      %v2834 = vld [vmem:[#allocation2 + $0x238] sm:$0xff]
      %v2835 = vld [vmem:[#allocation2 + $0x240] sm:$0xff]
      %v2836 = vld [vmem:[#allocation2 + $0x248] sm:$0xff]
      %v2837 = vld [vmem:[#allocation2 + $0x250] sm:$0xff]
      %v2838 = vld [vmem:[#allocation2 + $0x258] sm:$0xff]
      %v2839 = vld [vmem:[#allocation2 + $0x260] sm:$0xff]
      %v2840 = vld [vmem:[#allocation2 + $0x268] sm:$0xff]
      %v2841 = vld [vmem:[#allocation2 + $0x270] sm:$0xff]
      %v2842 = vld [vmem:[#allocation2 + $0x278] sm:$0xff]
      %v2843 = vld [vmem:[#allocation2 + $0x280] sm:$0xff]
      %v2844 = vld [vmem:[#allocation2 + $0x288] sm:$0xff]
      %v2845 = vld [vmem:[#allocation2 + $0x290] sm:$0xff]
      %v2846 = vld [vmem:[#allocation2 + $0x298] sm:$0xff]
      %v2847 = vld [vmem:[#allocation2 + $0x2a0] sm:$0xff]
      %v2848 = vld [vmem:[#allocation2 + $0x2a8] sm:$0xff]
      %v2849 = vld [vmem:[#allocation2 + $0x2b0] sm:$0xff]
      %v2850 = vld [vmem:[#allocation2 + $0x2b8] sm:$0xff]
      %v2851 = vld [vmem:[#allocation2 + $0x2c0] sm:$0xff]
      %v2852 = vld [vmem:[#allocation2 + $0x2c8] sm:$0xff]
      %v2853 = vld [vmem:[#allocation2 + $0x2d0] sm:$0xff]
      %v2854 = vld [vmem:[#allocation2 + $0x2d8] sm:$0xff]
      %v2855 = vld [vmem:[#allocation2 + $0x2e0] sm:$0xff]
      %v2856 = vld [vmem:[#allocation2 + $0x2e8] sm:$0xff]
      %v2857 = vld [vmem:[#allocation2 + $0x2f0] sm:$0xff]
      %v2858 = vld [vmem:[#allocation2 + $0x2f8] sm:$0xff]
      %v2859 = vld [vmem:[#allocation2 + $0x300] sm:$0xff]
      %v2860 = vld [vmem:[#allocation2 + $0x308] sm:$0xff]
      %v2861 = vld [vmem:[#allocation2 + $0x310] sm:$0xff]
      %v2862 = vld [vmem:[#allocation2 + $0x318] sm:$0xff]
      %v2863 = vld [vmem:[#allocation2 + $0x320] sm:$0xff]
      %v2864 = vld [vmem:[#allocation2 + $0x328] sm:$0xff]
      %v2865 = vld [vmem:[#allocation2 + $0x330] sm:$0xff]
      %v2866 = vld [vmem:[#allocation2 + $0x338] sm:$0xff]
      %v2867 = vld [vmem:[#allocation2 + $0x340] sm:$0xff]
      %v2868 = vld [vmem:[#allocation2 + $0x348] sm:$0xff]
      %v2869 = vld [vmem:[#allocation2 + $0x350] sm:$0xff]
      %v2870 = vld [vmem:[#allocation2 + $0x358] sm:$0xff]
      %v2872 = vunpack.c.l.b16 %v2762
      %v2873 = vunpack.c.h.b16 %v2762
      %v2874 = vpack.c.b16 %v2872, %v2872
      %v2875 = vpack.c.b16 %v2873, %v2873
      %v2985 = vunpack.c.l.b16 %v2763
      %v2986 = vunpack.c.h.b16 %v2763
      %v2987 = vunpack.c.l.b16 %v2764
      %v2988 = vunpack.c.h.b16 %v2764
      %v2989 = vunpack.c.l.b16 %v2765
      %v2990 = vunpack.c.h.b16 %v2765
      %v2991 = vunpack.c.l.b16 %v2766
      %v2992 = vunpack.c.h.b16 %v2766
      %v2993 = vunpack.c.l.b16 %v2767
      %v2994 = vunpack.c.h.b16 %v2767
      %v2995 = vunpack.c.l.b16 %v2768
      %v2996 = vunpack.c.h.b16 %v2768
      %v2997 = vunpack.c.l.b16 %v2769
      %v2998 = vunpack.c.h.b16 %v2769
      %v2999 = vunpack.c.l.b16 %v2770
      %v3000 = vunpack.c.h.b16 %v2770
      %v3001 = vunpack.c.l.b16 %v2771
      %v3002 = vunpack.c.h.b16 %v2771
      %v3003 = vunpack.c.l.b16 %v2772
      %v3004 = vunpack.c.h.b16 %v2772
      %v3005 = vunpack.c.l.b16 %v2773
      %v3006 = vunpack.c.h.b16 %v2773
      %v3007 = vunpack.c.l.b16 %v2774
      %v3008 = vunpack.c.h.b16 %v2774
      %v3009 = vunpack.c.l.b16 %v2775
      %v3010 = vunpack.c.h.b16 %v2775
      %v3011 = vunpack.c.l.b16 %v2776
      %v3012 = vunpack.c.h.b16 %v2776
      %v3013 = vunpack.c.l.b16 %v2777
      %v3014 = vunpack.c.h.b16 %v2777
      %v3015 = vunpack.c.l.b16 %v2778
      %v3016 = vunpack.c.h.b16 %v2778
      %v3017 = vunpack.c.l.b16 %v2779
      %v3018 = vunpack.c.h.b16 %v2779
      %v3019 = vunpack.c.l.b16 %v2780
      %v3020 = vunpack.c.h.b16 %v2780
      %v3021 = vunpack.c.l.b16 %v2781
      %v3022 = vunpack.c.h.b16 %v2781
      %v3023 = vunpack.c.l.b16 %v2782
      %v3024 = vunpack.c.h.b16 %v2782
      %v3025 = vunpack.c.l.b16 %v2783
      %v3026 = vunpack.c.h.b16 %v2783
      %v3027 = vunpack.c.l.b16 %v2784
      %v3028 = vunpack.c.h.b16 %v2784
      %v3029 = vunpack.c.l.b16 %v2785
      %v3030 = vunpack.c.h.b16 %v2785
      %v3031 = vunpack.c.l.b16 %v2786
      %v3032 = vunpack.c.h.b16 %v2786
      %v3033 = vunpack.c.l.b16 %v2787
      %v3034 = vunpack.c.h.b16 %v2787
      %v3035 = vunpack.c.l.b16 %v2788
      %v3036 = vunpack.c.h.b16 %v2788
      %v3037 = vunpack.c.l.b16 %v2789
      %v3038 = vunpack.c.h.b16 %v2789
      %v3039 = vunpack.c.l.b16 %v2790
      %v3040 = vunpack.c.h.b16 %v2790
      %v3041 = vunpack.c.l.b16 %v2791
      %v3042 = vunpack.c.h.b16 %v2791
      %v3043 = vunpack.c.l.b16 %v2792
      %v3044 = vunpack.c.h.b16 %v2792
      %v3045 = vunpack.c.l.b16 %v2793
      %v3046 = vunpack.c.h.b16 %v2793
      %v3047 = vunpack.c.l.b16 %v2794
      %v3048 = vunpack.c.h.b16 %v2794
      %v3049 = vunpack.c.l.b16 %v2795
      %v3050 = vunpack.c.h.b16 %v2795
      %v3051 = vunpack.c.l.b16 %v2796
      %v3052 = vunpack.c.h.b16 %v2796
      %v3053 = vunpack.c.l.b16 %v2797
      %v3054 = vunpack.c.h.b16 %v2797
      %v3055 = vunpack.c.l.b16 %v2798
      %v3056 = vunpack.c.h.b16 %v2798
      %v3057 = vunpack.c.l.b16 %v2799
      %v3058 = vunpack.c.h.b16 %v2799
      %v3059 = vunpack.c.l.b16 %v2800
      %v3060 = vunpack.c.h.b16 %v2800
      %v3061 = vunpack.c.l.b16 %v2801
      %v3062 = vunpack.c.h.b16 %v2801
      %v3063 = vunpack.c.l.b16 %v2802
      %v3064 = vunpack.c.h.b16 %v2802
      %v3065 = vunpack.c.l.b16 %v2803
      %v3066 = vunpack.c.h.b16 %v2803
      %v3067 = vunpack.c.l.b16 %v2804
      %v3068 = vunpack.c.h.b16 %v2804
      %v3069 = vunpack.c.l.b16 %v2805
      %v3070 = vunpack.c.h.b16 %v2805
      %v3071 = vunpack.c.l.b16 %v2806
      %v3072 = vunpack.c.h.b16 %v2806
      %v3073 = vunpack.c.l.b16 %v2807
      %v3074 = vunpack.c.h.b16 %v2807
      %v3075 = vunpack.c.l.b16 %v2808
      %v3076 = vunpack.c.h.b16 %v2808
      %v3077 = vunpack.c.l.b16 %v2809
      %v3078 = vunpack.c.h.b16 %v2809
      %v3079 = vunpack.c.l.b16 %v2810
      %v3080 = vunpack.c.h.b16 %v2810
      %v3081 = vunpack.c.l.b16 %v2811
      %v3082 = vunpack.c.h.b16 %v2811
      %v3083 = vunpack.c.l.b16 %v2812
      %v3084 = vunpack.c.h.b16 %v2812
      %v3085 = vunpack.c.l.b16 %v2813
      %v3086 = vunpack.c.h.b16 %v2813
      %v3087 = vunpack.c.l.b16 %v2814
      %v3088 = vunpack.c.h.b16 %v2814
      %v3089 = vunpack.c.l.b16 %v2815
      %v3090 = vunpack.c.h.b16 %v2815
      %v3091 = vunpack.c.l.b16 %v2816
      %v3092 = vunpack.c.h.b16 %v2816
      %v3093 = vunpack.c.l.b16 %v2817
      %v3094 = vunpack.c.h.b16 %v2817
      %v3095 = vunpack.c.l.b16 %v2818
      %v3096 = vunpack.c.h.b16 %v2818
      %v3097 = vunpack.c.l.b16 %v2819
      %v3098 = vunpack.c.h.b16 %v2819
      %v3099 = vunpack.c.l.b16 %v2820
      %v3100 = vunpack.c.h.b16 %v2820
      %v3101 = vunpack.c.l.b16 %v2821
      %v3102 = vunpack.c.h.b16 %v2821
      %v3103 = vunpack.c.l.b16 %v2822
      %v3104 = vunpack.c.h.b16 %v2822
      %v3105 = vunpack.c.l.b16 %v2823
      %v3106 = vunpack.c.h.b16 %v2823
      %v3107 = vunpack.c.l.b16 %v2824
      %v3108 = vunpack.c.h.b16 %v2824
      %v3109 = vunpack.c.l.b16 %v2825
      %v3110 = vunpack.c.h.b16 %v2825
      %v3111 = vunpack.c.l.b16 %v2826
      %v3112 = vunpack.c.h.b16 %v2826
      %v3113 = vunpack.c.l.b16 %v2827
      %v3114 = vunpack.c.h.b16 %v2827
      %v3115 = vunpack.c.l.b16 %v2828
      %v3116 = vunpack.c.h.b16 %v2828
      %v3117 = vunpack.c.l.b16 %v2829
      %v3118 = vunpack.c.h.b16 %v2829
      %v3119 = vunpack.c.l.b16 %v2830
      %v3120 = vunpack.c.h.b16 %v2830
      %v3121 = vunpack.c.l.b16 %v2831
      %v3122 = vunpack.c.h.b16 %v2831
      %v3123 = vunpack.c.l.b16 %v2832
      %v3124 = vunpack.c.h.b16 %v2832
      %v3125 = vunpack.c.l.b16 %v2833
      %v3126 = vunpack.c.h.b16 %v2833
      %v3127 = vunpack.c.l.b16 %v2834
      %v3128 = vunpack.c.h.b16 %v2834
      %v3129 = vunpack.c.l.b16 %v2835
      %v3130 = vunpack.c.h.b16 %v2835
      %v3131 = vunpack.c.l.b16 %v2836
      %v3132 = vunpack.c.h.b16 %v2836
      %v3133 = vunpack.c.l.b16 %v2837
      %v3134 = vunpack.c.h.b16 %v2837
      %v3135 = vunpack.c.l.b16 %v2838
      %v3136 = vunpack.c.h.b16 %v2838
      %v3137 = vunpack.c.l.b16 %v2839
      %v3138 = vunpack.c.h.b16 %v2839
      %v3139 = vunpack.c.l.b16 %v2840
      %v3140 = vunpack.c.h.b16 %v2840
      %v3141 = vunpack.c.l.b16 %v2841
      %v3142 = vunpack.c.h.b16 %v2841
      %v3143 = vunpack.c.l.b16 %v2842
      %v3144 = vunpack.c.h.b16 %v2842
      %v3145 = vunpack.c.l.b16 %v2843
      %v3146 = vunpack.c.h.b16 %v2843
      %v3147 = vunpack.c.l.b16 %v2844
      %v3148 = vunpack.c.h.b16 %v2844
      %v3149 = vunpack.c.l.b16 %v2845
      %v3150 = vunpack.c.h.b16 %v2845
      %v3151 = vunpack.c.l.b16 %v2846
      %v3152 = vunpack.c.h.b16 %v2846
      %v3153 = vunpack.c.l.b16 %v2847
      %v3154 = vunpack.c.h.b16 %v2847
      %v3155 = vunpack.c.l.b16 %v2848
      %v3156 = vunpack.c.h.b16 %v2848
      %v3157 = vunpack.c.l.b16 %v2849
      %v3158 = vunpack.c.h.b16 %v2849
      %v3159 = vunpack.c.l.b16 %v2850
      %v3160 = vunpack.c.h.b16 %v2850
      %v3161 = vunpack.c.l.b16 %v2851
      %v3162 = vunpack.c.h.b16 %v2851
      %v3163 = vunpack.c.l.b16 %v2852
      %v3164 = vunpack.c.h.b16 %v2852
      %v3165 = vunpack.c.l.b16 %v2853
      %v3166 = vunpack.c.h.b16 %v2853
      %v3167 = vunpack.c.l.b16 %v2854
      %v3168 = vunpack.c.h.b16 %v2854
      %v3169 = vunpack.c.l.b16 %v2855
      %v3170 = vunpack.c.h.b16 %v2855
      %v3171 = vunpack.c.l.b16 %v2856
      %v3172 = vunpack.c.h.b16 %v2856
      %v3173 = vunpack.c.l.b16 %v2857
      %v3174 = vunpack.c.h.b16 %v2857
      %v3175 = vunpack.c.l.b16 %v2858
      %v3176 = vunpack.c.h.b16 %v2858
      %v3177 = vunpack.c.l.b16 %v2859
      %v3178 = vunpack.c.h.b16 %v2859
      %v3179 = vunpack.c.l.b16 %v2860
      %v3180 = vunpack.c.h.b16 %v2860
      %v3181 = vunpack.c.l.b16 %v2861
      %v3182 = vunpack.c.h.b16 %v2861
      %v3183 = vunpack.c.l.b16 %v2862
      %v3184 = vunpack.c.h.b16 %v2862
      %v3185 = vunpack.c.l.b16 %v2863
      %v3186 = vunpack.c.h.b16 %v2863
      %v3187 = vunpack.c.l.b16 %v2864
      %v3188 = vunpack.c.h.b16 %v2864
      %v3189 = vunpack.c.l.b16 %v2865
      %v3190 = vunpack.c.h.b16 %v2865
      %v3191 = vunpack.c.l.b16 %v2866
      %v3192 = vunpack.c.h.b16 %v2866
      %v3193 = vunpack.c.l.b16 %v2867
      %v3194 = vunpack.c.h.b16 %v2867
      %v3195 = vunpack.c.l.b16 %v2868
      %v3196 = vunpack.c.h.b16 %v2868
      %v3197 = vunpack.c.l.b16 %v2869
      %v3198 = vunpack.c.h.b16 %v2869
      %v3199 = vunpack.c.l.b16 %v2870
      %v3200 = vunpack.c.h.b16 %v2870
      %v3201 = vpack.c.b16 %v2993, %v2985
      %v3202 = vpack.c.b16 %v2994, %v2986
      %v3203 = vpack.c.b16 %v2995, %v2987
      %v3204 = vpack.c.b16 %v2996, %v2988
      %v3205 = vpack.c.b16 %v2997, %v2989
      %v3206 = vpack.c.b16 %v2998, %v2990
      %v3207 = vpack.c.b16 %v2999, %v2991
      %v3208 = vpack.c.b16 %v3000, %v2992
      %v3209 = vpack.c.b16 %v3009, %v3001
      %v3210 = vpack.c.b16 %v3010, %v3002
      %v3211 = vpack.c.b16 %v3011, %v3003
      %v3212 = vpack.c.b16 %v3012, %v3004
      %v3213 = vpack.c.b16 %v3013, %v3005
      %v3214 = vpack.c.b16 %v3014, %v3006
      %v3215 = vpack.c.b16 %v3015, %v3007
      %v3216 = vpack.c.b16 %v3016, %v3008
      %v3217 = vpack.c.b16 %v3025, %v3017
      %v3218 = vpack.c.b16 %v3026, %v3018
      %v3219 = vpack.c.b16 %v3027, %v3019
      %v3220 = vpack.c.b16 %v3028, %v3020
      %v3221 = vpack.c.b16 %v3029, %v3021
      %v3222 = vpack.c.b16 %v3030, %v3022
      %v3223 = vpack.c.b16 %v3031, %v3023
      %v3224 = vpack.c.b16 %v3032, %v3024
      %v3225 = vpack.c.b16 %v3041, %v3033
      %v3226 = vpack.c.b16 %v3042, %v3034
      %v3227 = vpack.c.b16 %v3043, %v3035
      %v3228 = vpack.c.b16 %v3044, %v3036
      %v3229 = vpack.c.b16 %v3045, %v3037
      %v3230 = vpack.c.b16 %v3046, %v3038
      %v3231 = vpack.c.b16 %v3047, %v3039
      %v3232 = vpack.c.b16 %v3048, %v3040
      %v3233 = vpack.c.b16 %v3057, %v3049
      %v3234 = vpack.c.b16 %v3058, %v3050
      %v3235 = vpack.c.b16 %v3059, %v3051
      %v3236 = vpack.c.b16 %v3060, %v3052
      %v3237 = vpack.c.b16 %v3061, %v3053
      %v3238 = vpack.c.b16 %v3062, %v3054
      %v3239 = vpack.c.b16 %v3063, %v3055
      %v3240 = vpack.c.b16 %v3064, %v3056
      %v3241 = vpack.c.b16 %v3073, %v3065
      %v3242 = vpack.c.b16 %v3074, %v3066
      %v3243 = vpack.c.b16 %v3075, %v3067
      %v3244 = vpack.c.b16 %v3076, %v3068
      %v3245 = vpack.c.b16 %v3077, %v3069
      %v3246 = vpack.c.b16 %v3078, %v3070
      %v3247 = vpack.c.b16 %v3079, %v3071
      %v3248 = vpack.c.b16 %v3080, %v3072
      %v3249 = vpack.c.b16 %v3089, %v3081
      %v3250 = vpack.c.b16 %v3090, %v3082
      %v3251 = vpack.c.b16 %v3091, %v3083
      %v3252 = vpack.c.b16 %v3092, %v3084
      %v3253 = vpack.c.b16 %v3093, %v3085
      %v3254 = vpack.c.b16 %v3094, %v3086
      %v3255 = vpack.c.b16 %v3095, %v3087
      %v3256 = vpack.c.b16 %v3096, %v3088
      %v3257 = vpack.c.b16 %v3105, %v3097
      %v3258 = vpack.c.b16 %v3106, %v3098
      %v3259 = vpack.c.b16 %v3107, %v3099
      %v3260 = vpack.c.b16 %v3108, %v3100
      %v3261 = vpack.c.b16 %v3109, %v3101
      %v3262 = vpack.c.b16 %v3110, %v3102
      %v3263 = vpack.c.b16 %v3111, %v3103
      %v3264 = vpack.c.b16 %v3112, %v3104
      %v3265 = vpack.c.b16 %v3121, %v3113
      %v3266 = vpack.c.b16 %v3122, %v3114
      %v3267 = vpack.c.b16 %v3123, %v3115
      %v3268 = vpack.c.b16 %v3124, %v3116
      %v3269 = vpack.c.b16 %v3125, %v3117
      %v3270 = vpack.c.b16 %v3126, %v3118
      %v3271 = vpack.c.b16 %v3127, %v3119
      %v3272 = vpack.c.b16 %v3128, %v3120
      %v3273 = vpack.c.b16 %v3137, %v3129
      %v3274 = vpack.c.b16 %v3138, %v3130
      %v3275 = vpack.c.b16 %v3139, %v3131
      %v3276 = vpack.c.b16 %v3140, %v3132
      %v3277 = vpack.c.b16 %v3141, %v3133
      %v3278 = vpack.c.b16 %v3142, %v3134
      %v3279 = vpack.c.b16 %v3143, %v3135
      %v3280 = vpack.c.b16 %v3144, %v3136
      %v3281 = vpack.c.b16 %v3153, %v3145
      %v3282 = vpack.c.b16 %v3154, %v3146
      %v3283 = vpack.c.b16 %v3155, %v3147
      %v3284 = vpack.c.b16 %v3156, %v3148
      %v3285 = vpack.c.b16 %v3157, %v3149
      %v3286 = vpack.c.b16 %v3158, %v3150
      %v3287 = vpack.c.b16 %v3159, %v3151
      %v3288 = vpack.c.b16 %v3160, %v3152
      %v3289 = vpack.c.b16 %v3169, %v3161
      %v3290 = vpack.c.b16 %v3170, %v3162
      %v3291 = vpack.c.b16 %v3171, %v3163
      %v3292 = vpack.c.b16 %v3172, %v3164
      %v3293 = vpack.c.b16 %v3173, %v3165
      %v3294 = vpack.c.b16 %v3174, %v3166
      %v3295 = vpack.c.b16 %v3175, %v3167
      %v3296 = vpack.c.b16 %v3176, %v3168
      %v3297 = vpack.c.b16 %v3185, %v3177
      %v3298 = vpack.c.b16 %v3186, %v3178
      %v3299 = vpack.c.b16 %v3187, %v3179
      %v3300 = vpack.c.b16 %v3188, %v3180
      %v3301 = vpack.c.b16 %v3189, %v3181
      %v3302 = vpack.c.b16 %v3190, %v3182
      %v3303 = vpack.c.b16 %v3191, %v3183
      %v3304 = vpack.c.b16 %v3192, %v3184
      %v3305 = vpack.c.b16 %v3193, %v3193
      %v3306 = vpack.c.b16 %v3194, %v3194
      %v3307 = vpack.c.b16 %v3195, %v3195
      %v3308 = vpack.c.b16 %v3196, %v3196
      %v3309 = vpack.c.b16 %v3197, %v3197
      %v3310 = vpack.c.b16 %v3198, %v3198
      %v3311 = vpack.c.b16 %v3199, %v3199
      %v3312 = vpack.c.b16 %v3200, %v3200
      %vm3417 = vcmask 719872
      %v3419 = vsel %vm3417, %v2875, 0
      %v3422 = vsel %vm1089, %v3305, 0
      %v3425 = vsel %vm1089, %v3306, 0
      %v3428 = vsel %vm1089, %v3307, 0
      %v3431 = vsel %vm1089, %v3308, 0
      %v3434 = vsel %vm1089, %v3309, 0
      %v3437 = vsel %vm1089, %v3310, 0
      %v3440 = vsel %vm1089, %v3311, 0
      %v3443 = vsel %vm1089, %v3312, 0
      %3445 = vmatprep.subr.bf16.mxu0 %v3202
      %3446 = vmatpush1.bf16.msra.mxu0 %v3201
      %3447 = vmatprep.subr.bf16.mxu0 %v3210
      %3448 = vmatpush1.bf16.msra.mxu0 %v3209
      %3449 = vmatprep.subr.bf16.mxu0 %v3218
      %3450 = vmatpush1.bf16.msra.mxu0 %v3217
      %3451 = vmatprep.subr.bf16.mxu0 %v3226
      %3452 = vmatpush1.bf16.msra.mxu0 %v3225
      %3453 = vmatprep.subr.bf16.mxu0 %v3234
      %3454 = vmatpush1.bf16.msra.mxu0 %v3233
      %3455 = vmatprep.subr.bf16.mxu0 %v3242
      %3456 = vmatpush1.bf16.msra.mxu0 %v3241
      %3457 = vmatprep.subr.bf16.mxu0 %v3250
      %3458 = vmatpush1.bf16.msra.mxu0 %v3249
      %3459 = vmatprep.subr.bf16.mxu0 %v3258
      %3460 = vmatpush1.bf16.msra.mxu0 %v3257
      %3461 = vmatprep.subr.bf16.mxu0 %v3266
      %3462 = vmatpush1.bf16.msra.mxu0 %v3265
      %3463 = vmatprep.subr.bf16.mxu0 %v3274
      %3464 = vmatpush1.bf16.msra.mxu0 %v3273
      %3465 = vmatprep.subr.bf16.mxu0 %v3282
      %3466 = vmatpush1.bf16.msra.mxu0 %v3281
      %3467 = vmatprep.subr.bf16.mxu0 %v3290
      %3468 = vmatpush1.bf16.msra.mxu0 %v3289
      %3469 = vmatprep.subr.bf16.mxu0 %v3298
      %3470 = vmatpush1.bf16.msra.mxu0 %v3297
      %3471 = vmatprep.subr.bf16.mxu0 %v3425
      %3472 = vmatpush1.bf16.msra.mxu0 %v3422
      %3473 = vmatprep.subr.bf16.mxu0 0
      %3474 = vmatpush1.bf16.msra.mxu0 0
      %3475 = vmatprep.subr.bf16.mxu0 0
      %3476 = vmatpush1.bf16.msra.mxu0 0
      %3477 = vmatprep.mubr.bf16.mxu0 %v3419
      %3478 = vmatmul.mubr.bf16.gmra.mrb[0].mxu0 %v2874
      %v3479 = vpop.f32.mrb[0].mxu0
      %v3480 = vadd.f32 0.0, %v3479
      %v3481 = vpop.f32.mrb[0].mxu0
      %v3482 = vadd.f32 0.0, %v3481
      %v3483 = vpop.f32.mrb[0].mxu0
      %v3484 = vpop.f32.mrb[0].mxu0
      %3485 = vdwg.mxu0
      %3486 = vmatprep.subr.bf16.mxu0 %v3204
      %3487 = vmatpush1.bf16.msra.mxu0 %v3203
      %3488 = vmatprep.subr.bf16.mxu0 %v3212
      %3489 = vmatpush1.bf16.msra.mxu0 %v3211
      %3490 = vmatprep.subr.bf16.mxu0 %v3220
      %3491 = vmatpush1.bf16.msra.mxu0 %v3219
      %3492 = vmatprep.subr.bf16.mxu0 %v3228
      %3493 = vmatpush1.bf16.msra.mxu0 %v3227
      %3494 = vmatprep.subr.bf16.mxu0 %v3236
      %3495 = vmatpush1.bf16.msra.mxu0 %v3235
      %3496 = vmatprep.subr.bf16.mxu0 %v3244
      %3497 = vmatpush1.bf16.msra.mxu0 %v3243
      %3498 = vmatprep.subr.bf16.mxu0 %v3252
      %3499 = vmatpush1.bf16.msra.mxu0 %v3251
      %3500 = vmatprep.subr.bf16.mxu0 %v3260
      %3501 = vmatpush1.bf16.msra.mxu0 %v3259
      %3502 = vmatprep.subr.bf16.mxu0 %v3268
      %3503 = vmatpush1.bf16.msra.mxu0 %v3267
      %3504 = vmatprep.subr.bf16.mxu0 %v3276
      %3505 = vmatpush1.bf16.msra.mxu0 %v3275
      %3506 = vmatprep.subr.bf16.mxu0 %v3284
      %3507 = vmatpush1.bf16.msra.mxu0 %v3283
      %3508 = vmatprep.subr.bf16.mxu0 %v3292
      %3509 = vmatpush1.bf16.msra.mxu0 %v3291
      %3510 = vmatprep.subr.bf16.mxu0 %v3300
      %3511 = vmatpush1.bf16.msra.mxu0 %v3299
      %3512 = vmatprep.subr.bf16.mxu0 %v3431
      %3513 = vmatpush1.bf16.msra.mxu0 %v3428
      %3514 = vmatprep.subr.bf16.mxu0 0
      %3515 = vmatpush1.bf16.msra.mxu0 0
      %3516 = vmatprep.subr.bf16.mxu0 0
      %3517 = vmatpush1.bf16.msra.mxu0 0
      %3518 = vmatprep.mubr.bf16.mxu0 %v3419
      %3519 = vmatmul.mubr.bf16.gmra.mrb[0].mxu0 %v2874
      %v3520 = vpop.f32.mrb[0].mxu0
      %v3521 = vadd.f32 0.0, %v3520
      %v3522 = vpop.f32.mrb[0].mxu0
      %v3523 = vadd.f32 0.0, %v3522
      %v3524 = vpop.f32.mrb[0].mxu0
      %v3525 = vpop.f32.mrb[0].mxu0
      %3526 = vdwg.mxu0
      %3527 = vmatprep.subr.bf16.mxu0 %v3206
      %3528 = vmatpush1.bf16.msra.mxu0 %v3205
      %3529 = vmatprep.subr.bf16.mxu0 %v3214
      %3530 = vmatpush1.bf16.msra.mxu0 %v3213
      %3531 = vmatprep.subr.bf16.mxu0 %v3222
      %3532 = vmatpush1.bf16.msra.mxu0 %v3221
      %3533 = vmatprep.subr.bf16.mxu0 %v3230
      %3534 = vmatpush1.bf16.msra.mxu0 %v3229
      %3535 = vmatprep.subr.bf16.mxu0 %v3238
      %3536 = vmatpush1.bf16.msra.mxu0 %v3237
      %3537 = vmatprep.subr.bf16.mxu0 %v3246
      %3538 = vmatpush1.bf16.msra.mxu0 %v3245
      %3539 = vmatprep.subr.bf16.mxu0 %v3254
      %3540 = vmatpush1.bf16.msra.mxu0 %v3253
      %3541 = vmatprep.subr.bf16.mxu0 %v3262
      %3542 = vmatpush1.bf16.msra.mxu0 %v3261
      %3543 = vmatprep.subr.bf16.mxu0 %v3270
      %3544 = vmatpush1.bf16.msra.mxu0 %v3269
      %3545 = vmatprep.subr.bf16.mxu0 %v3278
      %3546 = vmatpush1.bf16.msra.mxu0 %v3277
      %3547 = vmatprep.subr.bf16.mxu0 %v3286
      %3548 = vmatpush1.bf16.msra.mxu0 %v3285
      %3549 = vmatprep.subr.bf16.mxu0 %v3294
      %3550 = vmatpush1.bf16.msra.mxu0 %v3293
      %3551 = vmatprep.subr.bf16.mxu0 %v3302
      %3552 = vmatpush1.bf16.msra.mxu0 %v3301
      %3553 = vmatprep.subr.bf16.mxu0 %v3437
      %3554 = vmatpush1.bf16.msra.mxu0 %v3434
      %3555 = vmatprep.subr.bf16.mxu0 0
      %3556 = vmatpush1.bf16.msra.mxu0 0
      %3557 = vmatprep.subr.bf16.mxu0 0
      %3558 = vmatpush1.bf16.msra.mxu0 0
      %3559 = vmatprep.mubr.bf16.mxu0 %v3419
      %3560 = vmatmul.mubr.bf16.gmra.mrb[0].mxu0 %v2874
      %v3561 = vpop.f32.mrb[0].mxu0
      %v3562 = vadd.f32 0.0, %v3561
      %v3563 = vpop.f32.mrb[0].mxu0
      %v3564 = vadd.f32 0.0, %v3563
      %v3565 = vpop.f32.mrb[0].mxu0
      %v3566 = vpop.f32.mrb[0].mxu0
      %3567 = vdwg.mxu0
      %3568 = vmatprep.subr.bf16.mxu0 %v3208
      %3569 = vmatpush1.bf16.msra.mxu0 %v3207
      %3570 = vmatprep.subr.bf16.mxu0 %v3216
      %3571 = vmatpush1.bf16.msra.mxu0 %v3215
      %3572 = vmatprep.subr.bf16.mxu0 %v3224
      %3573 = vmatpush1.bf16.msra.mxu0 %v3223
      %3574 = vmatprep.subr.bf16.mxu0 %v3232
      %3575 = vmatpush1.bf16.msra.mxu0 %v3231
      %3576 = vmatprep.subr.bf16.mxu0 %v3240
      %3577 = vmatpush1.bf16.msra.mxu0 %v3239
      %3578 = vmatprep.subr.bf16.mxu0 %v3248
      %3579 = vmatpush1.bf16.msra.mxu0 %v3247
      %3580 = vmatprep.subr.bf16.mxu0 %v3256
      %3581 = vmatpush1.bf16.msra.mxu0 %v3255
      %3582 = vmatprep.subr.bf16.mxu0 %v3264
      %3583 = vmatpush1.bf16.msra.mxu0 %v3263
      %3584 = vmatprep.subr.bf16.mxu0 %v3272
      %3585 = vmatpush1.bf16.msra.mxu0 %v3271
      %3586 = vmatprep.subr.bf16.mxu0 %v3280
      %3587 = vmatpush1.bf16.msra.mxu0 %v3279
      %3588 = vmatprep.subr.bf16.mxu0 %v3288
      %3589 = vmatpush1.bf16.msra.mxu0 %v3287
      %3590 = vmatprep.subr.bf16.mxu0 %v3296
      %3591 = vmatpush1.bf16.msra.mxu0 %v3295
      %3592 = vmatprep.subr.bf16.mxu0 %v3304
      %3593 = vmatpush1.bf16.msra.mxu0 %v3303
      %3594 = vmatprep.subr.bf16.mxu0 %v3443
      %3595 = vmatpush1.bf16.msra.mxu0 %v3440
      %3596 = vmatprep.subr.bf16.mxu0 0
      %3597 = vmatpush1.bf16.msra.mxu0 0
      %3598 = vmatprep.subr.bf16.mxu0 0
      %3599 = vmatpush1.bf16.msra.mxu0 0
      %3600 = vmatprep.mubr.bf16.mxu0 %v3419
      %3601 = vmatmul.mubr.bf16.gmra.mrb[0].mxu0 %v2874
      %v3602 = vpop.f32.mrb[0].mxu0
      %v3603 = vadd.f32 0.0, %v3602
      %v3604 = vpop.f32.mrb[0].mxu0
      %v3605 = vadd.f32 0.0, %v3604
      %v3606 = vpop.f32.mrb[0].mxu0
      %v3607 = vpop.f32.mrb[0].mxu0
      %3608 = vdwg.mxu0
      %3609 = vst [vmem:[%s390] sm:$0xff] %v3480
      %3610 = vst [vmem:[%s390 + $0x8] sm:$0xff] %v3482
      %3611 = vst [vmem:[%s390 + $0x10] sm:$0xff] %v3521
      %3612 = vst [vmem:[%s390 + $0x18] sm:$0xff] %v3523
      %3613 = vst [vmem:[%s390 + $0x20] sm:$0xff] %v3562
      %3614 = vst [vmem:[%s390 + $0x28] sm:$0xff] %v3564
      %3615 = vst [vmem:[%s390 + $0x30] sm:$0xff] %v3603
      %3616 = vst [vmem:[%s390 + $0x38] sm:$0xff] %v3605
      %p3617 = scmp.eq.s32.totalorder %s23, 0
      // Predicated region
      $region41: #{conv_ins_block.2} parent=39 // pred_check
        %p3618 = pneg %p3617
      $region42: #{conv_ins_block.2} parent=39 // pred_check_branch
        %3620 = sbr.rel (%p3618) target = $region44
      $region43: #{conv_ins_block.2} parent=39 // pred_region
        %vm3621 = vcmask 15360
        %3622 = vst.msk [vmem:[#allocation3] sm:$0xff] %vm3621, 0.0
      $region44: #{conv_ins_block.2} parent=39 // pred_fallthru
        _
      %v3623 = vld [vmem:[#allocation3] sm:$0xff]
      %v3624 = vadd.f32 %v3480, %v3482
      %v3625 = vadd.f32 %v3624, %v3521
      %v3626 = vadd.f32 %v3625, %v3523
      %v3627 = vadd.f32 %v3626, %v3562
      %v3628 = vadd.f32 %v3627, %v3564
      %v3629 = vadd.f32 %v3628, %v3603
      %v3630 = vadd.f32 %v3629, %v3605
      %3631 = vadd.xlane.f32.xlu0 %v3630
      %v3632 = vpop.xlane.xlu0 %3631
      %v3633 = vadd.f32 %v3623, %v3632
      %3634 = vst.msk [vmem:[#allocation3] sm:$0xff] %vm873, %v3633
      %v3635 = vld [vmem:[#allocation3] sm:$0xff]
      %v3636 = vmul.f32 %v3480, %v3480
      %v3637 = vmul.f32 %v3482, %v3482
      %v3638 = vmul.f32 %v3521, %v3521
      %v3639 = vmul.f32 %v3523, %v3523
      %v3640 = vmul.f32 %v3562, %v3562
      %v3641 = vmul.f32 %v3564, %v3564
      %v3642 = vmul.f32 %v3603, %v3603
      %v3643 = vmul.f32 %v3605, %v3605
      %v3644 = vadd.f32 %v3636, %v3637
      %v3645 = vadd.f32 %v3644, %v3638
      %v3646 = vadd.f32 %v3645, %v3639
      %v3647 = vadd.f32 %v3646, %v3640
      %v3648 = vadd.f32 %v3647, %v3641
      %v3649 = vadd.f32 %v3648, %v3642
      %v3650 = vadd.f32 %v3649, %v3643
      %3651 = vadd.xlane.f32.xlu0 %v3650
      %v3652 = vpop.xlane.xlu0 %3651
      %v3653 = vadd.f32 %v3635, %v3652
      %vm3654 = vcmask 15368
      %3655 = vst.msk [vmem:[#allocation3] sm:$0xff] %vm3654, %v3653
      %v3656 = vld [vmem:[#allocation3] sm:$0xff]
      %vm3657 = vcmask 15360
      %3658 = vst.msk [vmem:[%s395] sm:$0xff] %vm3657, %v3656
      %s3659 = smul.u32 8, %s23
      %p3660 = scmp.lt.s32.totalorder %s22, 1
      %s3661 = scalar_select %p3660, %s22, 1
      %p3662 = scmp.lt.s32.totalorder %s3659, 31
      %s3663 = scalar_select %p3662, %s3659, 31
      %s3664 = smul.addr %s3661, 32
      %s3665 = sadd.s32 %s3663, %s3664
      %s3666 = smul.addr %s3665, 8
      %s3667 = scalar_lea.vmem %s5, %s3666
      %p3668 = scmp.lt.s32.totalorder %s22, 1
      %s3669 = scalar_select %p3668, %s22, 1
      %s3670 = smul.addr %s3669, 8
      %s3671 = scalar_lea.vmem %s6, %s3670
      // Predicated region
      $region45: #{conv_ins_block.2} parent=39 // pred_check
        %p3672 = pneg %p181
      $region46: #{conv_ins_block.2} parent=39 // pred_check_branch
        %3674 = sbr.rel (%p3672) target = $region48
      $region47: #{conv_ins_block.2} parent=39 // pred_region
        %s3675 = smul.u32 8, %s23
      $region48: #{conv_ins_block.2} parent=39 // pred_fallthru
        _
      // Predicated region
      $region49: #{conv_ins_block.2} parent=39 // pred_check
        %p3676 = pneg %p207
      $region50: #{conv_ins_block.2} parent=39 // pred_check_branch
        %3678 = sbr.rel (%p3676) target = $region52
      $region51: #{conv_ins_block.2} parent=39 // pred_region
        _
      $region52: #{conv_ins_block.2} parent=39 // pred_fallthru
        _
    $region40: #{conv_ins_block.2} parent=5 // pred_fallthru
      _
    %p3679 = scmp.le.s32.totalorder 2, %s13
    // Predicated region
    $region53: #{conv_ins_block.2} parent=5 // pred_check
      %p3680 = pneg %p3679
    $region54: #{conv_ins_block.2} parent=5 // pred_check_branch
      %3682 = sbr.rel (%p3680) target = $region56
    $region55: #{conv_ins_block.2} parent=5 // pred_region
      %s3683 = ssub.s32 %s13, 2
      // Predicated region
      $region57: #{conv_ins_block.2} parent=55 // pred_check
        %p3684 = pneg %p187
      $region58: #{conv_ins_block.2} parent=55 // pred_check_branch
        %3686 = sbr.rel (%p3684) target = $region60
      $region59: #{conv_ins_block.2} parent=55 // pred_region
        %s3687 = smul.u32 8, %s25
        %p3688 = scmp.lt.s32.totalorder %s24, 1
        %s3689 = scalar_select %p3688, %s24, 1
        %p3690 = scmp.lt.s32.totalorder %s3687, 31
        %s3691 = scalar_select %p3690, %s3687, 31
        %s3692 = smul.addr %s3689, 32
        %s3693 = sadd.s32 %s3691, %s3692
        %s3694 = smul.addr %s3693, 8
        %s3695 = scalar_lea.vmem %s5, %s3694
      $region60: #{conv_ins_block.2} parent=55 // pred_fallthru
        _
      // Predicated region
      $region61: #{conv_ins_block.2} parent=55 // pred_check
        %p3696 = pneg %p213
      $region62: #{conv_ins_block.2} parent=55 // pred_check_branch
        %3698 = sbr.rel (%p3696) target = $region64
      $region63: #{conv_ins_block.2} parent=55 // pred_region
        %p3699 = scmp.lt.s32.totalorder %s24, 1
        %s3700 = scalar_select %p3699, %s24, 1
        %s3701 = smul.addr %s3700, 8
        %s3702 = scalar_lea.vmem %s6, %s3701
      $region64: #{conv_ins_block.2} parent=55 // pred_fallthru
        _
    $region56: #{conv_ins_block.2} parent=5 // pred_fallthru
      _
  $region6: #{conv_ins_block.2} parent=0 // loop_footer
    %s17 = sadd.s32 1, %s13
  $region7: #{conv_ins_block.2} parent=0 // loop_footer_branch
    %12 = sbr.rel target = $region3
  $region8: #{conv_ins_block.2} parent=0 // loop_exit
    _

// kernel: conv_ins_block.3
$region0: #{conv_ins_block.3}
  #allocation0 [shape = 'u32[]', space=smem, size = 0x4, offset = 0x4, fixed_abs, tag = 'smem constant byte address 0x4 - core index']
  #allocation1 [shape = 'u32[144,128]{1,0:T(1,128)}', space=vmem, size = 0x12000, scoped, tag = 'internal scratch']
  #allocation2 [shape = 'bf16[216,1024]{1,0:T(8,128)(2,1)}', space=vmem, size = 0x6c000, scoped, tag = 'scratch operand']
  %s0 = inlined_call_operand.vmem [shape: f32[2,8,4096], index: 0, kind: input, shape index: {}]
  %s1 = inlined_call_operand.vmem [shape: f32[2,8,4096], index: 1, kind: input, shape index: {}]
  %s2 = inlined_call_operand.vmem [shape: f32[2,8,4096], index: 2, kind: input, shape index: {}]
  %s3 = inlined_call_operand.vmem [shape: s32[8,4096], index: 3, kind: input, shape index: {}]
  %s4 = inlined_call_operand.vmem [shape: f32[2,8,1], index: 4, kind: input, shape index: {}]
  %s5 = inlined_call_operand.vmem [shape: f32[2,8,1], index: 5, kind: input, shape index: {}]
  %s6 = inlined_call_operand.vmem [shape: bf16[8,216], index: 6, kind: input, shape index: {}]
  %s7 = inlined_call_operand.vmem [shape: f32[8,1], index: 7, kind: input, shape index: {}]
  %s8 = inlined_call_operand.vmem [shape: f32[2,8,4096], index: 8, kind: output, shape index: {}]
  %s9 = sld [smem:[#allocation0]]
  $region65: #{conv_ins_block.3} parent=0
    _
  %s11 = ssub.s32 1, %s9
  %s12 = scalar_select 0, %s11, %s9
  loop: start=0, step=1, limit=10
  $region2: #{conv_ins_block.3} parent=0 // loop_pre_header
    _
  $region3: #{conv_ins_block.3} parent=0 // loop_header
    %s14 = sphi 0, %s18
    %p15 = scmp.ge.s32.totalorder %s14, 10
    %s21 = sphi 0, %s33
    %s22 = sphi 0, %s29
    %s23 = sphi 0, %s21
    %s24 = sphi 0, %s22
    %s25 = sphi 0, %s23
    %s26 = sphi 0, %s24
    %s38 = sphi 0, %s40
    %s41 = sphi 0, %s38
    %s42 = sphi 0, %s41
    %s58 = sphi 0, %s42
    %s66 = sphi 0, %s68
    %s69 = sphi 0, %s66
    %s70 = sphi 0, %s69
    %s86 = sphi 0, %s70
    %s94 = sphi 0, %s96
    %s97 = sphi 0, %s94
    %s98 = sphi 0, %s97
    %s114 = sphi 0, %s98
    %s120 = sphi 0, %s122
    %s123 = sphi 0, %s120
    %s124 = sphi 0, %s123
    %s140 = sphi 0, %s124
    %s146 = sphi 0, %s148
    %s149 = sphi 0, %s146
    %s150 = sphi 0, %s149
    %s166 = sphi 0, %s150
    %s172 = sphi 0, %s174
    %s175 = sphi 0, %s172
    %s176 = sphi 0, %s175
    %s192 = sphi 0, %s176
    %s196 = sphi 0, %s196
    %s198 = sphi 0, %s196
    %s199 = sphi 0, %s198
    %s213 = sphi 0, %s199
    %s217 = sphi 0, %s217
    %s219 = sphi 0, %s217
    %s220 = sphi 0, %s219
    %s234 = sphi 0, %s220
    %s242 = sphi 0, %s244
    %s245 = sphi 0, %s242
    %s246 = sphi 0, %s245
    %s262 = sphi 0, %s246
  $region4: #{conv_ins_block.3} parent=0 // loop_header_branch
    %17 = sbr.rel (%p15) target = $region8
  $region5: #{conv_ins_block.3} parent=0 // loop_body
    %s19 = ssub.s32 %s14, 1
    %s20 = ssub.s32 %s14, 2
    %s27 = sadd.s32 1, %s22
    %p28 = scmp.ge.s32.totalorder %s27, 4
    %s29 = scalar_select %p28, 0, %s27
    %s30 = sadd.s32 1, %s21
    %s31 = scalar_select %p28, %s30, %s21
    %p32 = scmp.ge.s32.totalorder %s31, 2
    %s33 = scalar_select %p32, 0, %s31
    %s34 = ssub.s32 %s21, %s33
    %s35 = ssub.s32 %s22, %s29
    %s36 = sor.u32 %s34, %s35
    %p37 = scmp.eq.s32.totalorder %s36, 0
    %s39 = sadd.s32 %s38, 1
    %s40 = scalar_select %p37, %s38, %s39
    %p43 = pneg %p37
    %p44 = scmp.eq.s32.totalorder %s14, 7
    %p45 = por %p43, %p44
    %p46 = scmp.ne.s32.totalorder %s38, %s41
    %p47 = scmp.eq.s32.totalorder %s14, 0
    %p48 = por %p46, %p47
    %p49 = scmp.ne.s32.totalorder %s38, %s41
    %p50 = scmp.eq.s32.totalorder %s19, 7
    %p51 = por %p49, %p50
    %p52 = scmp.ne.s32.totalorder %s41, %s42
    %p53 = scmp.eq.s32.totalorder %s19, 0
    %p54 = por %p52, %p53
    %p55 = scmp.ne.s32.totalorder %s41, %s42
    %p56 = scmp.eq.s32.totalorder %s20, 7
    %p57 = por %p55, %p56
    %p59 = scmp.ne.s32.totalorder %s42, %s58
    %p60 = scmp.eq.s32.totalorder %s20, 0
    %p61 = por %p59, %p60
    %s62 = ssub.s32 %s21, %s33
    %s63 = ssub.s32 %s22, %s29
    %s64 = sor.u32 %s62, %s63
    %p65 = scmp.eq.s32.totalorder %s64, 0
    %s67 = sadd.s32 %s66, 1
    %s68 = scalar_select %p65, %s66, %s67
    %p71 = pneg %p65
    %p72 = scmp.eq.s32.totalorder %s14, 7
    %p73 = por %p71, %p72
    %p74 = scmp.ne.s32.totalorder %s66, %s69
    %p75 = scmp.eq.s32.totalorder %s14, 0
    %p76 = por %p74, %p75
    %p77 = scmp.ne.s32.totalorder %s66, %s69
    %p78 = scmp.eq.s32.totalorder %s19, 7
    %p79 = por %p77, %p78
    %p80 = scmp.ne.s32.totalorder %s69, %s70
    %p81 = scmp.eq.s32.totalorder %s19, 0
    %p82 = por %p80, %p81
    %p83 = scmp.ne.s32.totalorder %s69, %s70
    %p84 = scmp.eq.s32.totalorder %s20, 7
    %p85 = por %p83, %p84
    %p87 = scmp.ne.s32.totalorder %s70, %s86
    %p88 = scmp.eq.s32.totalorder %s20, 0
    %p89 = por %p87, %p88
    %s90 = ssub.s32 %s21, %s33
    %s91 = ssub.s32 %s22, %s29
    %s92 = sor.u32 %s90, %s91
    %p93 = scmp.eq.s32.totalorder %s92, 0
    %s95 = sadd.s32 %s94, 1
    %s96 = scalar_select %p93, %s94, %s95
    %p99 = pneg %p93
    %p100 = scmp.eq.s32.totalorder %s14, 7
    %p101 = por %p99, %p100
    %p102 = scmp.ne.s32.totalorder %s94, %s97
    %p103 = scmp.eq.s32.totalorder %s14, 0
    %p104 = por %p102, %p103
    %p105 = scmp.ne.s32.totalorder %s94, %s97
    %p106 = scmp.eq.s32.totalorder %s19, 7
    %p107 = por %p105, %p106
    %p108 = scmp.ne.s32.totalorder %s97, %s98
    %p109 = scmp.eq.s32.totalorder %s19, 0
    %p110 = por %p108, %p109
    %p111 = scmp.ne.s32.totalorder %s97, %s98
    %p112 = scmp.eq.s32.totalorder %s20, 7
    %p113 = por %p111, %p112
    %p115 = scmp.ne.s32.totalorder %s98, %s114
    %p116 = scmp.eq.s32.totalorder %s20, 0
    %p117 = por %p115, %p116
    %s118 = ssub.s32 %s22, %s29
    %p119 = scmp.eq.s32.totalorder %s118, 0
    %s121 = sadd.s32 %s120, 1
    %s122 = scalar_select %p119, %s120, %s121
    %p125 = pneg %p119
    %p126 = scmp.eq.s32.totalorder %s14, 7
    %p127 = por %p125, %p126
    %p128 = scmp.ne.s32.totalorder %s120, %s123
    %p129 = scmp.eq.s32.totalorder %s14, 0
    %p130 = por %p128, %p129
    %p131 = scmp.ne.s32.totalorder %s120, %s123
    %p132 = scmp.eq.s32.totalorder %s19, 7
    %p133 = por %p131, %p132
    %p134 = scmp.ne.s32.totalorder %s123, %s124
    %p135 = scmp.eq.s32.totalorder %s19, 0
    %p136 = por %p134, %p135
    %p137 = scmp.ne.s32.totalorder %s123, %s124
    %p138 = scmp.eq.s32.totalorder %s20, 7
    %p139 = por %p137, %p138
    %p141 = scmp.ne.s32.totalorder %s124, %s140
    %p142 = scmp.eq.s32.totalorder %s20, 0
    %p143 = por %p141, %p142
    %s144 = ssub.s32 %s21, %s33
    %p145 = scmp.eq.s32.totalorder %s144, 0
    %s147 = sadd.s32 %s146, 1
    %s148 = scalar_select %p145, %s146, %s147
    %p151 = pneg %p145
    %p152 = scmp.eq.s32.totalorder %s14, 7
    %p153 = por %p151, %p152
    %p154 = scmp.ne.s32.totalorder %s146, %s149
    %p155 = scmp.eq.s32.totalorder %s14, 0
    %p156 = por %p154, %p155
    %p157 = scmp.ne.s32.totalorder %s146, %s149
    %p158 = scmp.eq.s32.totalorder %s19, 7
    %p159 = por %p157, %p158
    %p160 = scmp.ne.s32.totalorder %s149, %s150
    %p161 = scmp.eq.s32.totalorder %s19, 0
    %p162 = por %p160, %p161
    %p163 = scmp.ne.s32.totalorder %s149, %s150
    %p164 = scmp.eq.s32.totalorder %s20, 7
    %p165 = por %p163, %p164
    %p167 = scmp.ne.s32.totalorder %s150, %s166
    %p168 = scmp.eq.s32.totalorder %s20, 0
    %p169 = por %p167, %p168
    %s170 = ssub.s32 %s21, %s33
    %p171 = scmp.eq.s32.totalorder %s170, 0
    %s173 = sadd.s32 %s172, 1
    %s174 = scalar_select %p171, %s172, %s173
    %p177 = pneg %p171
    %p178 = scmp.eq.s32.totalorder %s14, 7
    %p179 = por %p177, %p178
    %p180 = scmp.ne.s32.totalorder %s172, %s175
    %p181 = scmp.eq.s32.totalorder %s14, 0
    %p182 = por %p180, %p181
    %p183 = scmp.ne.s32.totalorder %s172, %s175
    %p184 = scmp.eq.s32.totalorder %s19, 7
    %p185 = por %p183, %p184
    %p186 = scmp.ne.s32.totalorder %s175, %s176
    %p187 = scmp.eq.s32.totalorder %s19, 0
    %p188 = por %p186, %p187
    %p189 = scmp.ne.s32.totalorder %s175, %s176
    %p190 = scmp.eq.s32.totalorder %s20, 7
    %p191 = por %p189, %p190
    %p193 = scmp.ne.s32.totalorder %s176, %s192
    %p194 = scmp.eq.s32.totalorder %s20, 0
    %p195 = por %p193, %p194
    %s197 = sadd.s32 %s196, 1
    %p200 = scmp.eq.s32.totalorder %s14, 7
    %p201 = scmp.ne.s32.totalorder %s196, %s198
    %p202 = scmp.eq.s32.totalorder %s14, 0
    %p203 = por %p201, %p202
    %p204 = scmp.ne.s32.totalorder %s196, %s198
    %p205 = scmp.eq.s32.totalorder %s19, 7
    %p206 = por %p204, %p205
    %p207 = scmp.ne.s32.totalorder %s198, %s199
    %p208 = scmp.eq.s32.totalorder %s19, 0
    %p209 = por %p207, %p208
    %p210 = scmp.ne.s32.totalorder %s198, %s199
    %p211 = scmp.eq.s32.totalorder %s20, 7
    %p212 = por %p210, %p211
    %p214 = scmp.ne.s32.totalorder %s199, %s213
    %p215 = scmp.eq.s32.totalorder %s20, 0
    %p216 = por %p214, %p215
    %s218 = sadd.s32 %s217, 1
    %p221 = scmp.eq.s32.totalorder %s14, 7
    %p222 = scmp.ne.s32.totalorder %s217, %s219
    %p223 = scmp.eq.s32.totalorder %s14, 0
    %p224 = por %p222, %p223
    %p225 = scmp.ne.s32.totalorder %s217, %s219
    %p226 = scmp.eq.s32.totalorder %s19, 7
    %p227 = por %p225, %p226
    %p228 = scmp.ne.s32.totalorder %s219, %s220
    %p229 = scmp.eq.s32.totalorder %s19, 0
    %p230 = por %p228, %p229
    %p231 = scmp.ne.s32.totalorder %s219, %s220
    %p232 = scmp.eq.s32.totalorder %s20, 7
    %p233 = por %p231, %p232
    %p235 = scmp.ne.s32.totalorder %s220, %s234
    %p236 = scmp.eq.s32.totalorder %s20, 0
    %p237 = por %p235, %p236
    %s238 = ssub.s32 %s21, %s33
    %s239 = ssub.s32 %s22, %s29
    %s240 = sor.u32 %s238, %s239
    %p241 = scmp.eq.s32.totalorder %s240, 0
    %s243 = sadd.s32 %s242, 1
    %s244 = scalar_select %p241, %s242, %s243
    %p247 = pneg %p241
    %p248 = scmp.eq.s32.totalorder %s14, 7
    %p249 = por %p247, %p248
    %p250 = scmp.ne.s32.totalorder %s242, %s245
    %p251 = scmp.eq.s32.totalorder %s14, 0
    %p252 = por %p250, %p251
    %p253 = scmp.ne.s32.totalorder %s242, %s245
    %p254 = scmp.eq.s32.totalorder %s19, 7
    %p255 = por %p253, %p254
    %p256 = scmp.ne.s32.totalorder %s245, %s246
    %p257 = scmp.eq.s32.totalorder %s19, 0
    %p258 = por %p256, %p257
    %p259 = scmp.ne.s32.totalorder %s245, %s246
    %p260 = scmp.eq.s32.totalorder %s20, 7
    %p261 = por %p259, %p260
    %p263 = scmp.ne.s32.totalorder %s246, %s262
    %p264 = scmp.eq.s32.totalorder %s20, 0
    %p265 = por %p263, %p264
    %p266 = scmp.le.s32.totalorder 1, %s14
    %p267 = scmp.lt.s32.totalorder %s14, 9
    %p268 = pnand %p266, %p267
    %p269 = pneg %p268
    // Predicated region
    $region9: #{conv_ins_block.3} parent=5 // pred_check
      _
    $region10: #{conv_ins_block.3} parent=5 // pred_check_branch
      %271 = sbr.rel (%p268) target = $region12
    $region11: #{conv_ins_block.3} parent=5 // pred_region
      %s272 = ssub.s32 %s14, 1
      // Predicated region
      $region13: #{conv_ins_block.3} parent=11 // pred_check
        %p273 = pneg %p209
      $region14: #{conv_ins_block.3} parent=11 // pred_check_branch
        %275 = sbr.rel (%p273) target = $region16
      $region15: #{conv_ins_block.3} parent=11 // pred_region
        _
      $region16: #{conv_ins_block.3} parent=11 // pred_fallthru
        _
      // Predicated region
      $region17: #{conv_ins_block.3} parent=11 // pred_check
        %p276 = pneg %p230
      $region18: #{conv_ins_block.3} parent=11 // pred_check_branch
        %278 = sbr.rel (%p276) target = $region20
      $region19: #{conv_ins_block.3} parent=11 // pred_region
        _
      $region20: #{conv_ins_block.3} parent=11 // pred_fallthru
        _
    $region12: #{conv_ins_block.3} parent=5 // pred_fallthru
      _
    %p279 = scmp.lt.s32.totalorder %s14, 8
    // Predicated region
    $region21: #{conv_ins_block.3} parent=5 // pred_check
      %p280 = pneg %p279
    $region22: #{conv_ins_block.3} parent=5 // pred_check_branch
      %282 = sbr.rel (%p280) target = $region24
    $region23: #{conv_ins_block.3} parent=5 // pred_region
      // Predicated region
      $region25: #{conv_ins_block.3} parent=23 // pred_check
        %p283 = pneg %p48
      $region26: #{conv_ins_block.3} parent=23 // pred_check_branch
        %285 = sbr.rel (%p283) target = $region28
      $region27: #{conv_ins_block.3} parent=23 // pred_region
        %s286 = smul.u32 8, %s22
        %p287 = scmp.lt.s32.totalorder %s21, 1
        %s288 = scalar_select %p287, %s21, 1
        %p289 = scmp.lt.s32.totalorder %s286, 31
        %s290 = scalar_select %p289, %s286, 31
        %s291 = smul.addr %s288, 32
        %s292 = sadd.s32 %s290, %s291
        %s293 = smul.addr %s292, 8
        %s294 = scalar_lea.vmem %s0, %s293
        %s295 = smul.u32 8, %s22
      $region28: #{conv_ins_block.3} parent=23 // pred_fallthru
        _
      // Predicated region
      $region29: #{conv_ins_block.3} parent=23 // pred_check
        %p296 = pneg %p76
      $region30: #{conv_ins_block.3} parent=23 // pred_check_branch
        %298 = sbr.rel (%p296) target = $region32
      $region31: #{conv_ins_block.3} parent=23 // pred_region
        %s299 = smul.u32 8, %s22
        %p300 = scmp.lt.s32.totalorder %s21, 1
        %s301 = scalar_select %p300, %s21, 1
        %p302 = scmp.lt.s32.totalorder %s299, 31
        %s303 = scalar_select %p302, %s299, 31
        %s304 = smul.addr %s301, 32
        %s305 = sadd.s32 %s303, %s304
        %s306 = smul.addr %s305, 8
        %s307 = scalar_lea.vmem %s1, %s306
        %s308 = smul.u32 8, %s22
      $region32: #{conv_ins_block.3} parent=23 // pred_fallthru
        _
      // Predicated region
      $region33: #{conv_ins_block.3} parent=23 // pred_check
        %p309 = pneg %p104
      $region34: #{conv_ins_block.3} parent=23 // pred_check_branch
        %311 = sbr.rel (%p309) target = $region36
      $region35: #{conv_ins_block.3} parent=23 // pred_region
        %s312 = smul.u32 8, %s22
        %p313 = scmp.lt.s32.totalorder %s21, 1
        %s314 = scalar_select %p313, %s21, 1
        %p315 = scmp.lt.s32.totalorder %s312, 31
        %s316 = scalar_select %p315, %s312, 31
        %s317 = smul.addr %s314, 32
        %s318 = sadd.s32 %s316, %s317
        %s319 = smul.addr %s318, 8
        %s320 = scalar_lea.vmem %s2, %s319
        %s321 = smul.u32 8, %s22
      $region36: #{conv_ins_block.3} parent=23 // pred_fallthru
        _
      // Predicated region
      $region37: #{conv_ins_block.3} parent=23 // pred_check
        %p322 = pneg %p130
      $region38: #{conv_ins_block.3} parent=23 // pred_check_branch
        %324 = sbr.rel (%p322) target = $region40
      $region39: #{conv_ins_block.3} parent=23 // pred_region
        %s325 = smul.u32 8, %s22
        %p326 = scmp.lt.s32.totalorder %s325, 31
        %s327 = scalar_select %p326, %s325, 31
        %s328 = smul.addr %s327, 8
        %s329 = scalar_lea.vmem %s3, %s328
        %s330 = smul.u32 8, %s22
      $region40: #{conv_ins_block.3} parent=23 // pred_fallthru
        _
      // Predicated region
      $region41: #{conv_ins_block.3} parent=23 // pred_check
        %p331 = pneg %p156
      $region42: #{conv_ins_block.3} parent=23 // pred_check_branch
        %333 = sbr.rel (%p331) target = $region44
      $region43: #{conv_ins_block.3} parent=23 // pred_region
        %p334 = scmp.lt.s32.totalorder %s21, 1
        %s335 = scalar_select %p334, %s21, 1
        %s336 = smul.addr %s335, 8
        %s337 = scalar_lea.vmem %s4, %s336
      $region44: #{conv_ins_block.3} parent=23 // pred_fallthru
        _
      // Predicated region
      $region45: #{conv_ins_block.3} parent=23 // pred_check
        %p338 = pneg %p182
      $region46: #{conv_ins_block.3} parent=23 // pred_check_branch
        %340 = sbr.rel (%p338) target = $region48
      $region47: #{conv_ins_block.3} parent=23 // pred_region
        %p341 = scmp.lt.s32.totalorder %s21, 1
        %s342 = scalar_select %p341, %s21, 1
        %s343 = smul.addr %s342, 8
        %s344 = scalar_lea.vmem %s5, %s343
      $region48: #{conv_ins_block.3} parent=23 // pred_fallthru
        _
    $region24: #{conv_ins_block.3} parent=5 // pred_fallthru
      _
    %p345 = scmp.le.s32.totalorder 1, %s14
    %p346 = scmp.lt.s32.totalorder %s14, 9
    %p347 = pnand %p345, %p346
    %p348 = pneg %p347
    // Predicated region
    $region49: #{conv_ins_block.3} parent=5 // pred_check
      _
    $region50: #{conv_ins_block.3} parent=5 // pred_check_branch
      %350 = sbr.rel (%p347) target = $region52
    $region51: #{conv_ins_block.3} parent=5 // pred_region
      %s351 = ssub.s32 %s14, 1
      %s352 = smul.u32 8, %s24
      %p353 = scmp.lt.s32.totalorder %s23, 1
      %s354 = scalar_select %p353, %s23, 1
      %p355 = scmp.lt.s32.totalorder %s352, 31
      %s356 = scalar_select %p355, %s352, 31
      %s357 = smul.addr %s354, 32
      %s358 = sadd.s32 %s356, %s357
      %s359 = smul.addr %s358, 8
      %s360 = scalar_lea.vmem %s0, %s359
      %p361 = pneg %p54
      %p362 = pneg %p51
      %s363 = smul.u32 8, %s24
      %p364 = scmp.lt.s32.totalorder %s23, 1
      %s365 = scalar_select %p364, %s23, 1
      %p366 = scmp.lt.s32.totalorder %s363, 31
      %s367 = scalar_select %p366, %s363, 31
      %s368 = smul.addr %s365, 32
      %s369 = sadd.s32 %s367, %s368
      %s370 = smul.addr %s369, 8
      %s371 = scalar_lea.vmem %s1, %s370
      %p372 = pneg %p82
      %p373 = pneg %p79
      %s374 = smul.u32 8, %s24
      %p375 = scmp.lt.s32.totalorder %s23, 1
      %s376 = scalar_select %p375, %s23, 1
      %p377 = scmp.lt.s32.totalorder %s374, 31
      %s378 = scalar_select %p377, %s374, 31
      %s379 = smul.addr %s376, 32
      %s380 = sadd.s32 %s378, %s379
      %s381 = smul.addr %s380, 8
      %s382 = scalar_lea.vmem %s2, %s381
      %p383 = pneg %p110
      %p384 = pneg %p107
      %s385 = smul.u32 8, %s24
      %p386 = scmp.lt.s32.totalorder %s385, 31
      %s387 = scalar_select %p386, %s385, 31
      %s388 = smul.addr %s387, 8
      %s389 = scalar_lea.vmem %s3, %s388
      %p390 = pneg %p136
      %p391 = pneg %p133
      %p392 = scmp.lt.s32.totalorder %s23, 1
      %s393 = scalar_select %p392, %s23, 1
      %s394 = smul.addr %s393, 8
      %s395 = scalar_lea.vmem %s4, %s394
      %p396 = pneg %p162
      %p397 = pneg %p159
      %p398 = scmp.lt.s32.totalorder %s23, 1
      %s399 = scalar_select %p398, %s23, 1
      %s400 = smul.addr %s399, 8
      %s401 = scalar_lea.vmem %s5, %s400
      %p402 = pneg %p188
      %p403 = pneg %p185
      %p404 = pneg %p209
      %p405 = pneg %p206
      %p406 = pneg %p230
      %p407 = pneg %p227
      %p408 = pneg %p258
      %p409 = pneg %p255
      %s410 = smul.u32 8, %s24
      %p411 = scmp.lt.s32.totalorder %s23, 1
      %s412 = scalar_select %p411, %s23, 1
      %p413 = scmp.lt.s32.totalorder %s410, 31
      %s414 = scalar_select %p413, %s410, 31
      %s415 = smul.addr %s412, 32
      %s416 = sadd.s32 %s414, %s415
      %s417 = smul.addr %s416, 8
      %s418 = scalar_lea.vmem %s8, %s417
      %s419 = smul.u32 8, %s24
      %p420 = scmp.lt.s32.totalorder %s23, 1
      %s421 = scalar_select %p420, %s23, 1
      %p422 = scmp.lt.s32.totalorder %s419, 31
      %s423 = scalar_select %p422, %s419, 31
      %s424 = smul.addr %s421, 32
      %s425 = sadd.s32 %s423, %s424
      %s426 = smul.addr %s425, 8
      %s427 = scalar_lea.vmem %s0, %s426
      %s428 = smul.u32 8, %s24
      %s429 = smul.u32 8, %s24
      %p430 = scmp.lt.s32.totalorder %s23, 1
      %s431 = scalar_select %p430, %s23, 1
      %p432 = scmp.lt.s32.totalorder %s429, 31
      %s433 = scalar_select %p432, %s429, 31
      %s434 = smul.addr %s431, 32
      %s435 = sadd.s32 %s433, %s434
      %s436 = smul.addr %s435, 8
      %s437 = scalar_lea.vmem %s1, %s436
      %s438 = smul.u32 8, %s24
      %s439 = smul.u32 8, %s24
      %p440 = scmp.lt.s32.totalorder %s23, 1
      %s441 = scalar_select %p440, %s23, 1
      %p442 = scmp.lt.s32.totalorder %s439, 31
      %s443 = scalar_select %p442, %s439, 31
      %s444 = smul.addr %s441, 32
      %s445 = sadd.s32 %s443, %s444
      %s446 = smul.addr %s445, 8
      %s447 = scalar_lea.vmem %s2, %s446
      %s448 = smul.u32 8, %s24
      %s449 = smul.u32 8, %s24
      %p450 = scmp.lt.s32.totalorder %s449, 31
      %s451 = scalar_select %p450, %s449, 31
      %s452 = smul.addr %s451, 8
      %s453 = scalar_lea.vmem %s3, %s452
      %s454 = smul.u32 8, %s24
      %p455 = scmp.lt.s32.totalorder %s23, 1
      %s456 = scalar_select %p455, %s23, 1
      %s457 = smul.addr %s456, 8
      %s458 = scalar_lea.vmem %s4, %s457
      %p459 = scmp.lt.s32.totalorder %s23, 1
      %s460 = scalar_select %p459, %s23, 1
      %s461 = smul.addr %s460, 8
      %s462 = scalar_lea.vmem %s5, %s461
      %s463 = smul.u32 8, %s24
      %p464 = scmp.lt.s32.totalorder %s23, 1
      %s465 = scalar_select %p464, %s23, 1
      %p466 = scmp.lt.s32.totalorder %s463, 31
      %s467 = scalar_select %p466, %s463, 31
      %s468 = smul.addr %s465, 32
      %s469 = sadd.s32 %s467, %s468
      %s470 = smul.addr %s469, 8
      %s471 = scalar_lea.vmem %s8, %s470
      %s472 = smul.u32 8, %s24
      %v474 = vld [vmem:[%s453] ss:$8 sm:$0xf]
      %v475 = vld [vmem:[%s453] ss:$8 sm:$0xf0]
      %v476 = vor.u32 %v474, %v475
      %vm477 = vcmp.ne.s32.totalorder %v476, 0
      %s478 = scalar_lea.vmem %s453, 1
      %v479 = vld [vmem:[%s478] ss:$8 sm:$0xf]
      %v480 = vld [vmem:[%s478] ss:$8 sm:$0xf0]
      %v481 = vor.u32 %v479, %v480
      %vm482 = vcmp.ne.s32.totalorder %v481, 0
      %s483 = scalar_lea.vmem %s453, 2
      %v484 = vld [vmem:[%s483] ss:$8 sm:$0xf]
      %v485 = vld [vmem:[%s483] ss:$8 sm:$0xf0]
      %v486 = vor.u32 %v484, %v485
      %vm487 = vcmp.ne.s32.totalorder %v486, 0
      %s488 = scalar_lea.vmem %s453, 3
      %v489 = vld [vmem:[%s488] ss:$8 sm:$0xf]
      %v490 = vld [vmem:[%s488] ss:$8 sm:$0xf0]
      %v491 = vor.u32 %v489, %v490
      %vm492 = vcmp.ne.s32.totalorder %v491, 0
      %s493 = scalar_lea.vmem %s453, 4
      %v494 = vld [vmem:[%s493] ss:$8 sm:$0xf]
      %v495 = vld [vmem:[%s493] ss:$8 sm:$0xf0]
      %v496 = vor.u32 %v494, %v495
      %vm497 = vcmp.ne.s32.totalorder %v496, 0
      %s498 = scalar_lea.vmem %s453, 5
      %v499 = vld [vmem:[%s498] ss:$8 sm:$0xf]
      %v500 = vld [vmem:[%s498] ss:$8 sm:$0xf0]
      %v501 = vor.u32 %v499, %v500
      %vm502 = vcmp.ne.s32.totalorder %v501, 0
      %vm503 = vmand %vm477, %vm487
      %vm504 = vmand %vm503, %vm497
      %vm505 = vmand %vm477, %vm497
      %vm506 = vmand %vm477, %vm492
      %vm507 = vmand %vm506, %vm497
      %vm508 = vmand %vm487, %vm497
      %vm509 = vmand %vm492, %vm497
      %vm510 = vmand %vm482, %vm487
      %vm511 = vmand %vm510, %vm497
      %vm512 = vmand %vm482, %vm497
      %vm513 = vmand %vm482, %vm492
      %vm514 = vmand %vm513, %vm497
      %vm515 = vmand %vm503, %vm502
      %vm516 = vmand %vm477, %vm502
      %vm517 = vmand %vm506, %vm502
      %vm518 = vmand %vm487, %vm502
      %vm519 = vmand %vm492, %vm502
      %vm520 = vmand %vm510, %vm502
      %vm521 = vmand %vm482, %vm502
      %vm522 = vmand %vm513, %vm502
      %v523 = vld [vmem:[%s458] sm:$0xff]
      %v524 = vld [vmem:[%s462] sm:$0xff]
      %v525 = vld [vmem:[%s427] sm:$0xff]
      %v526 = vld [vmem:[%s427 + $0x8] sm:$0xff]
      %v527 = vld [vmem:[%s427 + $0x10] sm:$0xff]
      %v528 = vld [vmem:[%s427 + $0x18] sm:$0xff]
      %v529 = vld [vmem:[%s427 + $0x20] sm:$0xff]
      %v530 = vld [vmem:[%s427 + $0x28] sm:$0xff]
      %v531 = vld [vmem:[%s427 + $0x30] sm:$0xff]
      %v532 = vld [vmem:[%s427 + $0x38] sm:$0xff]
      %534 = vset.pattern.permute.xlu0 0
      %535 = vperm.xlu0 %534, %v523
      %v536 = vpop.permute.xlu0 %535
      %v538 = vsub.f32 %v525, %v536
      %v539 = vsub.f32 %v526, %v536
      %v540 = vsub.f32 %v527, %v536
      %v541 = vsub.f32 %v528, %v536
      %v542 = vsub.f32 %v529, %v536
      %v543 = vsub.f32 %v530, %v536
      %v544 = vsub.f32 %v531, %v536
      %v545 = vsub.f32 %v532, %v536
      %547 = vset.pattern.permute.xlu0 0
      %548 = vperm.xlu0 %547, %v524
      %v549 = vpop.permute.xlu0 %548
      %v551 = vmul.f32 %v538, %v549
      %v552 = vmul.f32 %v539, %v549
      %v553 = vmul.f32 %v540, %v549
      %v554 = vmul.f32 %v541, %v549
      %v555 = vmul.f32 %v542, %v549
      %v556 = vmul.f32 %v543, %v549
      %v557 = vmul.f32 %v544, %v549
      %v558 = vmul.f32 %v545, %v549
      %v559 = vmul.f32 %v551, 0.5
      %v560 = vmul.f32 %v552, 0.5
      %v561 = vmul.f32 %v553, 0.5
      %v562 = vmul.f32 %v554, 0.5
      %v563 = vmul.f32 %v555, 0.5
      %v564 = vmul.f32 %v556, 0.5
      %v565 = vmul.f32 %v557, 0.5
      %v566 = vmul.f32 %v558, 0.5
      %v567 = vrcp.pop 1.4142135
      %v568 = vmul.f32 %v551, %v567
      %v569 = vmul.f32 %v552, %v567
      %v570 = vmul.f32 %v553, %v567
      %v571 = vmul.f32 %v554, %v567
      %v572 = vmul.f32 %v555, %v567
      %v573 = vmul.f32 %v556, %v567
      %v574 = vmul.f32 %v557, %v567
      %v575 = vmul.f32 %v558, %v567
      %v576 = verf.f32.pop %v568
      %v577 = verf.f32.pop %v569
      %v578 = verf.f32.pop %v570
      %v579 = verf.f32.pop %v571
      %v580 = verf.f32.pop %v572
      %v581 = verf.f32.pop %v573
      %v582 = verf.f32.pop %v574
      %v583 = verf.f32.pop %v575
      %v584 = vadd.f32 %v576, 1.0
      %v585 = vadd.f32 %v577, 1.0
      %v586 = vadd.f32 %v578, 1.0
      %v587 = vadd.f32 %v579, 1.0
      %v588 = vadd.f32 %v580, 1.0
      %v589 = vadd.f32 %v581, 1.0
      %v590 = vadd.f32 %v582, 1.0
      %v591 = vadd.f32 %v583, 1.0
      %v592 = vmul.f32 %v559, %v584
      %v593 = vmul.f32 %v560, %v585
      %v594 = vmul.f32 %v561, %v586
      %v595 = vmul.f32 %v562, %v587
      %v596 = vmul.f32 %v563, %v588
      %v597 = vmul.f32 %v564, %v589
      %v598 = vmul.f32 %v565, %v590
      %v599 = vmul.f32 %v566, %v591
      %v600 = vld [vmem:[%s437] sm:$0xff]
      %v601 = vld [vmem:[%s437 + $0x8] sm:$0xff]
      %v602 = vld [vmem:[%s437 + $0x10] sm:$0xff]
      %v603 = vld [vmem:[%s437 + $0x18] sm:$0xff]
      %v604 = vld [vmem:[%s437 + $0x20] sm:$0xff]
      %v605 = vld [vmem:[%s437 + $0x28] sm:$0xff]
      %v606 = vld [vmem:[%s437 + $0x30] sm:$0xff]
      %v607 = vld [vmem:[%s437 + $0x38] sm:$0xff]
      %v608 = vsub.f32 %v600, %v536
      %v609 = vsub.f32 %v601, %v536
      %v610 = vsub.f32 %v602, %v536
      %v611 = vsub.f32 %v603, %v536
      %v612 = vsub.f32 %v604, %v536
      %v613 = vsub.f32 %v605, %v536
      %v614 = vsub.f32 %v606, %v536
      %v615 = vsub.f32 %v607, %v536
      %v616 = vmul.f32 %v608, %v549
      %v617 = vmul.f32 %v609, %v549
      %v618 = vmul.f32 %v610, %v549
      %v619 = vmul.f32 %v611, %v549
      %v620 = vmul.f32 %v612, %v549
      %v621 = vmul.f32 %v613, %v549
      %v622 = vmul.f32 %v614, %v549
      %v623 = vmul.f32 %v615, %v549
      %v624 = vmul.f32 %v616, 0.5
      %v625 = vmul.f32 %v617, 0.5
      %v626 = vmul.f32 %v618, 0.5
      %v627 = vmul.f32 %v619, 0.5
      %v628 = vmul.f32 %v620, 0.5
      %v629 = vmul.f32 %v621, 0.5
      %v630 = vmul.f32 %v622, 0.5
      %v631 = vmul.f32 %v623, 0.5
      %v632 = vmul.f32 %v616, %v567
      %v633 = vmul.f32 %v617, %v567
      %v634 = vmul.f32 %v618, %v567
      %v635 = vmul.f32 %v619, %v567
      %v636 = vmul.f32 %v620, %v567
      %v637 = vmul.f32 %v621, %v567
      %v638 = vmul.f32 %v622, %v567
      %v639 = vmul.f32 %v623, %v567
      %v640 = verf.f32.pop %v632
      %v641 = verf.f32.pop %v633
      %v642 = verf.f32.pop %v634
      %v643 = verf.f32.pop %v635
      %v644 = verf.f32.pop %v636
      %v645 = verf.f32.pop %v637
      %v646 = verf.f32.pop %v638
      %v647 = verf.f32.pop %v639
      %v648 = vadd.f32 %v640, 1.0
      %v649 = vadd.f32 %v641, 1.0
      %v650 = vadd.f32 %v642, 1.0
      %v651 = vadd.f32 %v643, 1.0
      %v652 = vadd.f32 %v644, 1.0
      %v653 = vadd.f32 %v645, 1.0
      %v654 = vadd.f32 %v646, 1.0
      %v655 = vadd.f32 %v647, 1.0
      %v656 = vmul.f32 %v624, %v648
      %v657 = vmul.f32 %v625, %v649
      %v658 = vmul.f32 %v626, %v650
      %v659 = vmul.f32 %v627, %v651
      %v660 = vmul.f32 %v628, %v652
      %v661 = vmul.f32 %v629, %v653
      %v662 = vmul.f32 %v630, %v654
      %v663 = vmul.f32 %v631, %v655
      %v664 = vld [vmem:[%s447] sm:$0xff]
      %v665 = vld [vmem:[%s447 + $0x8] sm:$0xff]
      %v666 = vld [vmem:[%s447 + $0x10] sm:$0xff]
      %v667 = vld [vmem:[%s447 + $0x18] sm:$0xff]
      %v668 = vld [vmem:[%s447 + $0x20] sm:$0xff]
      %v669 = vld [vmem:[%s447 + $0x28] sm:$0xff]
      %v670 = vld [vmem:[%s447 + $0x30] sm:$0xff]
      %v671 = vld [vmem:[%s447 + $0x38] sm:$0xff]
      %v672 = vsub.f32 %v664, %v536
      %v673 = vsub.f32 %v665, %v536
      %v674 = vsub.f32 %v666, %v536
      %v675 = vsub.f32 %v667, %v536
      %v676 = vsub.f32 %v668, %v536
      %v677 = vsub.f32 %v669, %v536
      %v678 = vsub.f32 %v670, %v536
      %v679 = vsub.f32 %v671, %v536
      %v680 = vmul.f32 %v672, %v549
      %v681 = vmul.f32 %v673, %v549
      %v682 = vmul.f32 %v674, %v549
      %v683 = vmul.f32 %v675, %v549
      %v684 = vmul.f32 %v676, %v549
      %v685 = vmul.f32 %v677, %v549
      %v686 = vmul.f32 %v678, %v549
      %v687 = vmul.f32 %v679, %v549
      %v688 = vmul.f32 %v680, 0.5
      %v689 = vmul.f32 %v681, 0.5
      %v690 = vmul.f32 %v682, 0.5
      %v691 = vmul.f32 %v683, 0.5
      %v692 = vmul.f32 %v684, 0.5
      %v693 = vmul.f32 %v685, 0.5
      %v694 = vmul.f32 %v686, 0.5
      %v695 = vmul.f32 %v687, 0.5
      %v696 = vmul.f32 %v680, %v567
      %v697 = vmul.f32 %v681, %v567
      %v698 = vmul.f32 %v682, %v567
      %v699 = vmul.f32 %v683, %v567
      %v700 = vmul.f32 %v684, %v567
      %v701 = vmul.f32 %v685, %v567
      %v702 = vmul.f32 %v686, %v567
      %v703 = vmul.f32 %v687, %v567
      %v704 = verf.f32.pop %v696
      %v705 = verf.f32.pop %v697
      %v706 = verf.f32.pop %v698
      %v707 = verf.f32.pop %v699
      %v708 = verf.f32.pop %v700
      %v709 = verf.f32.pop %v701
      %v710 = verf.f32.pop %v702
      %v711 = verf.f32.pop %v703
      %v712 = vadd.f32 %v704, 1.0
      %v713 = vadd.f32 %v705, 1.0
      %v714 = vadd.f32 %v706, 1.0
      %v715 = vadd.f32 %v707, 1.0
      %v716 = vadd.f32 %v708, 1.0
      %v717 = vadd.f32 %v709, 1.0
      %v718 = vadd.f32 %v710, 1.0
      %v719 = vadd.f32 %v711, 1.0
      %v720 = vmul.f32 %v688, %v712
      %v721 = vmul.f32 %v689, %v713
      %v722 = vmul.f32 %v690, %v714
      %v723 = vmul.f32 %v691, %v715
      %v724 = vmul.f32 %v692, %v716
      %v725 = vmul.f32 %v693, %v717
      %v726 = vmul.f32 %v694, %v718
      %v727 = vmul.f32 %v695, %v719
      %v728 = vsel %vm504, 1, 0
      %v729 = vlaneseq
      %v730 = vshrl.u32 %v729, 7
      %v731 = vsub.s32 0, %v730
      %v732 = vrot.slane %v728, %v731
      %v733 = vlaneseq
      %v734 = vshrl.u32 %v733, 7
      %v735 = vsub.s32 1, %v734
      %v736 = vrot.slane %v728, %v735
      %v737 = vlaneseq
      %v738 = vshrl.u32 %v737, 7
      %v739 = vsub.s32 2, %v738
      %v740 = vrot.slane %v728, %v739
      %v741 = vlaneseq
      %v742 = vshrl.u32 %v741, 7
      %v743 = vsub.s32 3, %v742
      %v744 = vrot.slane %v728, %v743
      %v745 = vlaneseq
      %v746 = vshrl.u32 %v745, 7
      %v747 = vsub.s32 4, %v746
      %v748 = vrot.slane %v728, %v747
      %v749 = vlaneseq
      %v750 = vshrl.u32 %v749, 7
      %v751 = vsub.s32 5, %v750
      %v752 = vrot.slane %v728, %v751
      %v753 = vlaneseq
      %v754 = vshrl.u32 %v753, 7
      %v755 = vsub.s32 6, %v754
      %v756 = vrot.slane %v728, %v755
      %v757 = vlaneseq
      %v758 = vshrl.u32 %v757, 7
      %v759 = vsub.s32 7, %v758
      %v760 = vrot.slane %v728, %v759
      %vm761 = vcmp.eq.s32.totalorder %v732, 1
      %vm762 = vcmp.eq.s32.totalorder %v736, 1
      %vm763 = vcmp.eq.s32.totalorder %v740, 1
      %vm764 = vcmp.eq.s32.totalorder %v744, 1
      %vm765 = vcmp.eq.s32.totalorder %v748, 1
      %vm766 = vcmp.eq.s32.totalorder %v752, 1
      %vm767 = vcmp.eq.s32.totalorder %v756, 1
      %vm768 = vcmp.eq.s32.totalorder %v760, 1
      %777 = vrot.lane.b32.xlu0 %v592, 17
      %v778 = vpop.permute.xlu0 %777
      %779 = vrot.lane.b32.xlu0 %v593, 17
      %v780 = vpop.permute.xlu0 %779
      %781 = vrot.lane.b32.xlu0 %v594, 17
      %v782 = vpop.permute.xlu0 %781
      %783 = vrot.lane.b32.xlu0 %v595, 17
      %v784 = vpop.permute.xlu0 %783
      %785 = vrot.lane.b32.xlu0 %v596, 17
      %v786 = vpop.permute.xlu0 %785
      %787 = vrot.lane.b32.xlu0 %v597, 17
      %v788 = vpop.permute.xlu0 %787
      %789 = vrot.lane.b32.xlu0 %v598, 17
      %v790 = vpop.permute.xlu0 %789
      %791 = vrot.lane.b32.xlu0 %v599, 17
      %v792 = vpop.permute.xlu0 %791
      %vm793 = vcmask 138240
      %v794 = vsel %vm793, %v778, %v780
      %v795 = vsel %vm793, %v780, %v782
      %v796 = vsel %vm793, %v782, %v784
      %v797 = vsel %vm793, %v784, %v786
      %v798 = vsel %vm793, %v786, %v788
      %v799 = vsel %vm793, %v788, %v790
      %v800 = vsel %vm793, %v790, %v792
      %v809 = vsel %vm761, %v778, 0.0
      %v810 = vsel %vm762, %v794, 0.0
      %v811 = vsel %vm763, %v795, 0.0
      %v812 = vsel %vm764, %v796, 0.0
      %v813 = vsel %vm765, %v797, 0.0
      %v814 = vsel %vm766, %v798, 0.0
      %v815 = vsel %vm767, %v799, 0.0
      %v816 = vsel %vm768, %v800, 0.0
      %v817 = vpack.c.bf16 %v809, %v809
      %v818 = vpack.c.bf16 %v810, %v810
      %v819 = vpack.c.bf16 %v811, %v811
      %v820 = vpack.c.bf16 %v812, %v812
      %v821 = vpack.c.bf16 %v813, %v813
      %v822 = vpack.c.bf16 %v814, %v814
      %v823 = vpack.c.bf16 %v815, %v815
      %v824 = vpack.c.bf16 %v816, %v816
      %v833 = vunpack.c.l.b16 %v817
      %v834 = vunpack.c.l.b16 %v818
      %v835 = vunpack.c.l.b16 %v819
      %v836 = vunpack.c.l.b16 %v820
      %v837 = vunpack.c.l.b16 %v821
      %v838 = vunpack.c.l.b16 %v822
      %v839 = vunpack.c.l.b16 %v823
      %v840 = vunpack.c.l.b16 %v824
      %v841 = vpack.c.b16 %v834, %v833
      %v842 = vpack.c.b16 %v836, %v835
      %v843 = vpack.c.b16 %v838, %v837
      %v844 = vpack.c.b16 %v840, %v839
      %vm849 = vcmask 1043592
      %vm850 = vcmask 1047556
      %vm851 = vmor %vm850, %vm849
      %852 = vst.msk [vmem:[#allocation2] sm:$0xff] %vm851, %v841
      %853 = vst [vmem:[#allocation2 + $0x8] sm:$0xff] %v842
      %854 = vst [vmem:[#allocation2 + $0x10] sm:$0xff] %v843
      %855 = vst [vmem:[#allocation2 + $0x18] sm:$0xff] %v844
      %vm856 = vcmask 134144
      %857 = vst.msk [vmem:[#allocation2] sm:$0xf] %vm856, 0
      %v858 = vsel %vm505, 1, 0
      %v859 = vlaneseq
      %v860 = vshrl.u32 %v859, 7
      %v861 = vsub.s32 0, %v860
      %v862 = vrot.slane %v858, %v861
      %v863 = vlaneseq
      %v864 = vshrl.u32 %v863, 7
      %v865 = vsub.s32 1, %v864
      %v866 = vrot.slane %v858, %v865
      %v867 = vlaneseq
      %v868 = vshrl.u32 %v867, 7
      %v869 = vsub.s32 2, %v868
      %v870 = vrot.slane %v858, %v869
      %v871 = vlaneseq
      %v872 = vshrl.u32 %v871, 7
      %v873 = vsub.s32 3, %v872
      %v874 = vrot.slane %v858, %v873
      %v875 = vlaneseq
      %v876 = vshrl.u32 %v875, 7
      %v877 = vsub.s32 4, %v876
      %v878 = vrot.slane %v858, %v877
      %v879 = vlaneseq
      %v880 = vshrl.u32 %v879, 7
      %v881 = vsub.s32 5, %v880
      %v882 = vrot.slane %v858, %v881
      %v883 = vlaneseq
      %v884 = vshrl.u32 %v883, 7
      %v885 = vsub.s32 6, %v884
      %v886 = vrot.slane %v858, %v885
      %v887 = vlaneseq
      %v888 = vshrl.u32 %v887, 7
      %v889 = vsub.s32 7, %v888
      %v890 = vrot.slane %v858, %v889
      %vm891 = vcmp.eq.s32.totalorder %v862, 1
      %vm892 = vcmp.eq.s32.totalorder %v866, 1
      %vm893 = vcmp.eq.s32.totalorder %v870, 1
      %vm894 = vcmp.eq.s32.totalorder %v874, 1
      %vm895 = vcmp.eq.s32.totalorder %v878, 1
      %vm896 = vcmp.eq.s32.totalorder %v882, 1
      %vm897 = vcmp.eq.s32.totalorder %v886, 1
      %vm898 = vcmp.eq.s32.totalorder %v890, 1
      %899 = vrot.lane.b32.xlu0 %v592, 16
      %v900 = vpop.permute.xlu0 %899
      %901 = vrot.lane.b32.xlu0 %v593, 16
      %v902 = vpop.permute.xlu0 %901
      %903 = vrot.lane.b32.xlu0 %v594, 16
      %v904 = vpop.permute.xlu0 %903
      %905 = vrot.lane.b32.xlu0 %v595, 16
      %v906 = vpop.permute.xlu0 %905
      %907 = vrot.lane.b32.xlu0 %v596, 16
      %v908 = vpop.permute.xlu0 %907
      %909 = vrot.lane.b32.xlu0 %v597, 16
      %v910 = vpop.permute.xlu0 %909
      %911 = vrot.lane.b32.xlu0 %v598, 16
      %v912 = vpop.permute.xlu0 %911
      %913 = vrot.lane.b32.xlu0 %v599, 16
      %v914 = vpop.permute.xlu0 %913
      %vm915 = vcmask 130048
      %v916 = vsel %vm915, %v900, %v902
      %v917 = vsel %vm915, %v902, %v904
      %v918 = vsel %vm915, %v904, %v906
      %v919 = vsel %vm915, %v906, %v908
      %v920 = vsel %vm915, %v908, %v910
      %v921 = vsel %vm915, %v910, %v912
      %v922 = vsel %vm915, %v912, %v914
      %v931 = vsel %vm891, %v900, 0.0
      %v932 = vsel %vm892, %v916, 0.0
      %v933 = vsel %vm893, %v917, 0.0
      %v934 = vsel %vm894, %v918, 0.0
      %v935 = vsel %vm895, %v919, 0.0
      %v936 = vsel %vm896, %v920, 0.0
      %v937 = vsel %vm897, %v921, 0.0
      %v938 = vsel %vm898, %v922, 0.0
      %v939 = vpack.c.bf16 %v931, %v931
      %v940 = vpack.c.bf16 %v932, %v932
      %v941 = vpack.c.bf16 %v933, %v933
      %v942 = vpack.c.bf16 %v934, %v934
      %v943 = vpack.c.bf16 %v935, %v935
      %v944 = vpack.c.bf16 %v936, %v936
      %v945 = vpack.c.bf16 %v937, %v937
      %v946 = vpack.c.bf16 %v938, %v938
      %v955 = vunpack.c.l.b16 %v939
      %v956 = vunpack.c.l.b16 %v940
      %v957 = vunpack.c.l.b16 %v941
      %v958 = vunpack.c.l.b16 %v942
      %v959 = vunpack.c.l.b16 %v943
      %v960 = vunpack.c.l.b16 %v944
      %v961 = vunpack.c.l.b16 %v945
      %v962 = vunpack.c.l.b16 %v946
      %v963 = vpack.c.b16 %v956, %v955
      %v964 = vpack.c.b16 %v958, %v957
      %v965 = vpack.c.b16 %v960, %v959
      %v966 = vpack.c.b16 %v962, %v961
      %vm971 = vcmask 1043584
      %vm972 = vmor %vm850, %vm971
      %973 = vst.msk [vmem:[#allocation2 + $0x20] sm:$0xff] %vm972, %v963
      %974 = vst [vmem:[#allocation2 + $0x28] sm:$0xff] %v964
      %975 = vst [vmem:[#allocation2 + $0x30] sm:$0xff] %v965
      %976 = vst [vmem:[#allocation2 + $0x38] sm:$0xff] %v966
      %vm977 = vcmask 125952
      %978 = vst.msk [vmem:[#allocation2 + $0x20] sm:$0xf] %vm977, 0
      %v979 = vsel %vm507, 1, 0
      %v980 = vlaneseq
      %v981 = vshrl.u32 %v980, 7
      %v982 = vsub.s32 0, %v981
      %v983 = vrot.slane %v979, %v982
      %v984 = vlaneseq
      %v985 = vshrl.u32 %v984, 7
      %v986 = vsub.s32 1, %v985
      %v987 = vrot.slane %v979, %v986
      %v988 = vlaneseq
      %v989 = vshrl.u32 %v988, 7
      %v990 = vsub.s32 2, %v989
      %v991 = vrot.slane %v979, %v990
      %v992 = vlaneseq
      %v993 = vshrl.u32 %v992, 7
      %v994 = vsub.s32 3, %v993
      %v995 = vrot.slane %v979, %v994
      %v996 = vlaneseq
      %v997 = vshrl.u32 %v996, 7
      %v998 = vsub.s32 4, %v997
      %v999 = vrot.slane %v979, %v998
      %v1000 = vlaneseq
      %v1001 = vshrl.u32 %v1000, 7
      %v1002 = vsub.s32 5, %v1001
      %v1003 = vrot.slane %v979, %v1002
      %v1004 = vlaneseq
      %v1005 = vshrl.u32 %v1004, 7
      %v1006 = vsub.s32 6, %v1005
      %v1007 = vrot.slane %v979, %v1006
      %v1008 = vlaneseq
      %v1009 = vshrl.u32 %v1008, 7
      %v1010 = vsub.s32 7, %v1009
      %v1011 = vrot.slane %v979, %v1010
      %vm1012 = vcmp.eq.s32.totalorder %v983, 1
      %vm1013 = vcmp.eq.s32.totalorder %v987, 1
      %vm1014 = vcmp.eq.s32.totalorder %v991, 1
      %vm1015 = vcmp.eq.s32.totalorder %v995, 1
      %vm1016 = vcmp.eq.s32.totalorder %v999, 1
      %vm1017 = vcmp.eq.s32.totalorder %v1003, 1
      %vm1018 = vcmp.eq.s32.totalorder %v1007, 1
      %vm1019 = vcmp.eq.s32.totalorder %v1011, 1
      %1020 = vrot.lane.b32.xlu0 %v592, 15
      %v1021 = vpop.permute.xlu0 %1020
      %1022 = vrot.lane.b32.xlu0 %v593, 15
      %v1023 = vpop.permute.xlu0 %1022
      %1024 = vrot.lane.b32.xlu0 %v594, 15
      %v1025 = vpop.permute.xlu0 %1024
      %1026 = vrot.lane.b32.xlu0 %v595, 15
      %v1027 = vpop.permute.xlu0 %1026
      %1028 = vrot.lane.b32.xlu0 %v596, 15
      %v1029 = vpop.permute.xlu0 %1028
      %1030 = vrot.lane.b32.xlu0 %v597, 15
      %v1031 = vpop.permute.xlu0 %1030
      %1032 = vrot.lane.b32.xlu0 %v598, 15
      %v1033 = vpop.permute.xlu0 %1032
      %1034 = vrot.lane.b32.xlu0 %v599, 15
      %v1035 = vpop.permute.xlu0 %1034
      %vm1036 = vcmask 121856
      %v1037 = vsel %vm1036, %v1021, %v1023
      %v1038 = vsel %vm1036, %v1023, %v1025
      %v1039 = vsel %vm1036, %v1025, %v1027
      %v1040 = vsel %vm1036, %v1027, %v1029
      %v1041 = vsel %vm1036, %v1029, %v1031
      %v1042 = vsel %vm1036, %v1031, %v1033
      %v1043 = vsel %vm1036, %v1033, %v1035
      %v1052 = vsel %vm1012, %v1021, 0.0
      %v1053 = vsel %vm1013, %v1037, 0.0
      %v1054 = vsel %vm1014, %v1038, 0.0
      %v1055 = vsel %vm1015, %v1039, 0.0
      %v1056 = vsel %vm1016, %v1040, 0.0
      %v1057 = vsel %vm1017, %v1041, 0.0
      %v1058 = vsel %vm1018, %v1042, 0.0
      %v1059 = vsel %vm1019, %v1043, 0.0
      %v1060 = vpack.c.bf16 %v1052, %v1052
      %v1061 = vpack.c.bf16 %v1053, %v1053
      %v1062 = vpack.c.bf16 %v1054, %v1054
      %v1063 = vpack.c.bf16 %v1055, %v1055
      %v1064 = vpack.c.bf16 %v1056, %v1056
      %v1065 = vpack.c.bf16 %v1057, %v1057
      %v1066 = vpack.c.bf16 %v1058, %v1058
      %v1067 = vpack.c.bf16 %v1059, %v1059
      %v1076 = vunpack.c.l.b16 %v1060
      %v1077 = vunpack.c.l.b16 %v1061
      %v1078 = vunpack.c.l.b16 %v1062
      %v1079 = vunpack.c.l.b16 %v1063
      %v1080 = vunpack.c.l.b16 %v1064
      %v1081 = vunpack.c.l.b16 %v1065
      %v1082 = vunpack.c.l.b16 %v1066
      %v1083 = vunpack.c.l.b16 %v1067
      %v1084 = vpack.c.b16 %v1077, %v1076
      %v1085 = vpack.c.b16 %v1079, %v1078
      %v1086 = vpack.c.b16 %v1081, %v1080
      %v1087 = vpack.c.b16 %v1083, %v1082
      %vm1092 = vcmask 1043576
      %vm1093 = vmor %vm850, %vm1092
      %1094 = vst.msk [vmem:[#allocation2 + $0x40] sm:$0xff] %vm1093, %v1084
      %1095 = vst [vmem:[#allocation2 + $0x48] sm:$0xff] %v1085
      %1096 = vst [vmem:[#allocation2 + $0x50] sm:$0xff] %v1086
      %1097 = vst [vmem:[#allocation2 + $0x58] sm:$0xff] %v1087
      %vm1098 = vcmask 117760
      %1099 = vst.msk [vmem:[#allocation2 + $0x40] sm:$0xf] %vm1098, 0
      %v1100 = vsel %vm508, 1, 0
      %v1101 = vlaneseq
      %v1102 = vshrl.u32 %v1101, 7
      %v1103 = vsub.s32 0, %v1102
      %v1104 = vrot.slane %v1100, %v1103
      %v1105 = vlaneseq
      %v1106 = vshrl.u32 %v1105, 7
      %v1107 = vsub.s32 1, %v1106
      %v1108 = vrot.slane %v1100, %v1107
      %v1109 = vlaneseq
      %v1110 = vshrl.u32 %v1109, 7
      %v1111 = vsub.s32 2, %v1110
      %v1112 = vrot.slane %v1100, %v1111
      %v1113 = vlaneseq
      %v1114 = vshrl.u32 %v1113, 7
      %v1115 = vsub.s32 3, %v1114
      %v1116 = vrot.slane %v1100, %v1115
      %v1117 = vlaneseq
      %v1118 = vshrl.u32 %v1117, 7
      %v1119 = vsub.s32 4, %v1118
      %v1120 = vrot.slane %v1100, %v1119
      %v1121 = vlaneseq
      %v1122 = vshrl.u32 %v1121, 7
      %v1123 = vsub.s32 5, %v1122
      %v1124 = vrot.slane %v1100, %v1123
      %v1125 = vlaneseq
      %v1126 = vshrl.u32 %v1125, 7
      %v1127 = vsub.s32 6, %v1126
      %v1128 = vrot.slane %v1100, %v1127
      %v1129 = vlaneseq
      %v1130 = vshrl.u32 %v1129, 7
      %v1131 = vsub.s32 7, %v1130
      %v1132 = vrot.slane %v1100, %v1131
      %vm1133 = vcmp.eq.s32.totalorder %v1104, 1
      %vm1134 = vcmp.eq.s32.totalorder %v1108, 1
      %vm1135 = vcmp.eq.s32.totalorder %v1112, 1
      %vm1136 = vcmp.eq.s32.totalorder %v1116, 1
      %vm1137 = vcmp.eq.s32.totalorder %v1120, 1
      %vm1138 = vcmp.eq.s32.totalorder %v1124, 1
      %vm1139 = vcmp.eq.s32.totalorder %v1128, 1
      %vm1140 = vcmp.eq.s32.totalorder %v1132, 1
      %1141 = vrot.lane.b32.xlu0 %v592, 1
      %v1142 = vpop.permute.xlu0 %1141
      %1143 = vrot.lane.b32.xlu0 %v593, 1
      %v1144 = vpop.permute.xlu0 %1143
      %1145 = vrot.lane.b32.xlu0 %v594, 1
      %v1146 = vpop.permute.xlu0 %1145
      %1147 = vrot.lane.b32.xlu0 %v595, 1
      %v1148 = vpop.permute.xlu0 %1147
      %1149 = vrot.lane.b32.xlu0 %v596, 1
      %v1150 = vpop.permute.xlu0 %1149
      %1151 = vrot.lane.b32.xlu0 %v597, 1
      %v1152 = vpop.permute.xlu0 %1151
      %1153 = vrot.lane.b32.xlu0 %v598, 1
      %v1154 = vpop.permute.xlu0 %1153
      %1155 = vrot.lane.b32.xlu0 %v599, 1
      %v1156 = vpop.permute.xlu0 %1155
      %vm1157 = vcmask 7168
      %v1158 = vsel %vm1157, %v1142, %v1144
      %v1159 = vsel %vm1157, %v1144, %v1146
      %v1160 = vsel %vm1157, %v1146, %v1148
      %v1161 = vsel %vm1157, %v1148, %v1150
      %v1162 = vsel %vm1157, %v1150, %v1152
      %v1163 = vsel %vm1157, %v1152, %v1154
      %v1164 = vsel %vm1157, %v1154, %v1156
      %v1173 = vsel %vm1133, %v1142, 0.0
      %v1174 = vsel %vm1134, %v1158, 0.0
      %v1175 = vsel %vm1135, %v1159, 0.0
      %v1176 = vsel %vm1136, %v1160, 0.0
      %v1177 = vsel %vm1137, %v1161, 0.0
      %v1178 = vsel %vm1138, %v1162, 0.0
      %v1179 = vsel %vm1139, %v1163, 0.0
      %v1180 = vsel %vm1140, %v1164, 0.0
      %v1181 = vpack.c.bf16 %v1173, %v1173
      %v1182 = vpack.c.bf16 %v1174, %v1174
      %v1183 = vpack.c.bf16 %v1175, %v1175
      %v1184 = vpack.c.bf16 %v1176, %v1176
      %v1185 = vpack.c.bf16 %v1177, %v1177
      %v1186 = vpack.c.bf16 %v1178, %v1178
      %v1187 = vpack.c.bf16 %v1179, %v1179
      %v1188 = vpack.c.bf16 %v1180, %v1180
      %v1197 = vunpack.c.l.b16 %v1181
      %v1198 = vunpack.c.l.b16 %v1182
      %v1199 = vunpack.c.l.b16 %v1183
      %v1200 = vunpack.c.l.b16 %v1184
      %v1201 = vunpack.c.l.b16 %v1185
      %v1202 = vunpack.c.l.b16 %v1186
      %v1203 = vunpack.c.l.b16 %v1187
      %v1204 = vunpack.c.l.b16 %v1188
      %v1205 = vpack.c.b16 %v1198, %v1197
      %v1206 = vpack.c.b16 %v1200, %v1199
      %v1207 = vpack.c.b16 %v1202, %v1201
      %v1208 = vpack.c.b16 %v1204, %v1203
      %vm1213 = vcmask 1043464
      %vm1214 = vmor %vm850, %vm1213
      %1215 = vst.msk [vmem:[#allocation2 + $0x60] sm:$0xff] %vm1214, %v1205
      %1216 = vst [vmem:[#allocation2 + $0x68] sm:$0xff] %v1206
      %1217 = vst [vmem:[#allocation2 + $0x70] sm:$0xff] %v1207
      %1218 = vst [vmem:[#allocation2 + $0x78] sm:$0xff] %v1208
      %vm1219 = vcmask 3072
      %1220 = vst.msk [vmem:[#allocation2 + $0x60] sm:$0xf] %vm1219, 0
      %v1221 = vsel %vm497, 1, 0
      %v1222 = vlaneseq
      %v1223 = vshrl.u32 %v1222, 7
      %v1224 = vsub.s32 0, %v1223
      %v1225 = vrot.slane %v1221, %v1224
      %v1226 = vlaneseq
      %v1227 = vshrl.u32 %v1226, 7
      %v1228 = vsub.s32 1, %v1227
      %v1229 = vrot.slane %v1221, %v1228
      %v1230 = vlaneseq
      %v1231 = vshrl.u32 %v1230, 7
      %v1232 = vsub.s32 2, %v1231
      %v1233 = vrot.slane %v1221, %v1232
      %v1234 = vlaneseq
      %v1235 = vshrl.u32 %v1234, 7
      %v1236 = vsub.s32 3, %v1235
      %v1237 = vrot.slane %v1221, %v1236
      %v1238 = vlaneseq
      %v1239 = vshrl.u32 %v1238, 7
      %v1240 = vsub.s32 4, %v1239
      %v1241 = vrot.slane %v1221, %v1240
      %v1242 = vlaneseq
      %v1243 = vshrl.u32 %v1242, 7
      %v1244 = vsub.s32 5, %v1243
      %v1245 = vrot.slane %v1221, %v1244
      %v1246 = vlaneseq
      %v1247 = vshrl.u32 %v1246, 7
      %v1248 = vsub.s32 6, %v1247
      %v1249 = vrot.slane %v1221, %v1248
      %v1250 = vlaneseq
      %v1251 = vshrl.u32 %v1250, 7
      %v1252 = vsub.s32 7, %v1251
      %v1253 = vrot.slane %v1221, %v1252
      %vm1254 = vcmp.eq.s32.totalorder %v1225, 1
      %vm1255 = vcmp.eq.s32.totalorder %v1229, 1
      %vm1256 = vcmp.eq.s32.totalorder %v1233, 1
      %vm1257 = vcmp.eq.s32.totalorder %v1237, 1
      %vm1258 = vcmp.eq.s32.totalorder %v1241, 1
      %vm1259 = vcmp.eq.s32.totalorder %v1245, 1
      %vm1260 = vcmp.eq.s32.totalorder %v1249, 1
      %vm1261 = vcmp.eq.s32.totalorder %v1253, 1
      %v1262 = vsel %vm1254, %v592, 0.0
      %v1263 = vsel %vm1255, %v593, 0.0
      %v1264 = vsel %vm1256, %v594, 0.0
      %v1265 = vsel %vm1257, %v595, 0.0
      %v1266 = vsel %vm1258, %v596, 0.0
      %v1267 = vsel %vm1259, %v597, 0.0
      %v1268 = vsel %vm1260, %v598, 0.0
      %v1269 = vsel %vm1261, %v599, 0.0
      %v1270 = vpack.c.bf16 %v1262, %v1262
      %v1271 = vpack.c.bf16 %v1263, %v1263
      %v1272 = vpack.c.bf16 %v1264, %v1264
      %v1273 = vpack.c.bf16 %v1265, %v1265
      %v1274 = vpack.c.bf16 %v1266, %v1266
      %v1275 = vpack.c.bf16 %v1267, %v1267
      %v1276 = vpack.c.bf16 %v1268, %v1268
      %v1277 = vpack.c.bf16 %v1269, %v1269
      %v1286 = vunpack.c.l.b16 %v1270
      %v1287 = vunpack.c.l.b16 %v1271
      %v1288 = vunpack.c.l.b16 %v1272
      %v1289 = vunpack.c.l.b16 %v1273
      %v1290 = vunpack.c.l.b16 %v1274
      %v1291 = vunpack.c.l.b16 %v1275
      %v1292 = vunpack.c.l.b16 %v1276
      %v1293 = vunpack.c.l.b16 %v1277
      %v1294 = vpack.c.b16 %v1287, %v1286
      %v1295 = vpack.c.b16 %v1289, %v1288
      %v1296 = vpack.c.b16 %v1291, %v1290
      %v1297 = vpack.c.b16 %v1293, %v1292
      %1302 = vst [vmem:[#allocation2 + $0x80] sm:$0xff] %v1294
      %1303 = vst [vmem:[#allocation2 + $0x88] sm:$0xff] %v1295
      %1304 = vst [vmem:[#allocation2 + $0x90] sm:$0xff] %v1296
      %1305 = vst [vmem:[#allocation2 + $0x98] sm:$0xff] %v1297
      %v1306 = vsel %vm509, 1, 0
      %v1307 = vlaneseq
      %v1308 = vshrl.u32 %v1307, 7
      %v1309 = vsub.s32 0, %v1308
      %v1310 = vrot.slane %v1306, %v1309
      %v1311 = vlaneseq
      %v1312 = vshrl.u32 %v1311, 7
      %v1313 = vsub.s32 1, %v1312
      %v1314 = vrot.slane %v1306, %v1313
      %v1315 = vlaneseq
      %v1316 = vshrl.u32 %v1315, 7
      %v1317 = vsub.s32 2, %v1316
      %v1318 = vrot.slane %v1306, %v1317
      %v1319 = vlaneseq
      %v1320 = vshrl.u32 %v1319, 7
      %v1321 = vsub.s32 3, %v1320
      %v1322 = vrot.slane %v1306, %v1321
      %v1323 = vlaneseq
      %v1324 = vshrl.u32 %v1323, 7
      %v1325 = vsub.s32 4, %v1324
      %v1326 = vrot.slane %v1306, %v1325
      %v1327 = vlaneseq
      %v1328 = vshrl.u32 %v1327, 7
      %v1329 = vsub.s32 5, %v1328
      %v1330 = vrot.slane %v1306, %v1329
      %v1331 = vlaneseq
      %v1332 = vshrl.u32 %v1331, 7
      %v1333 = vsub.s32 6, %v1332
      %v1334 = vrot.slane %v1306, %v1333
      %v1335 = vlaneseq
      %v1336 = vshrl.u32 %v1335, 7
      %v1337 = vsub.s32 7, %v1336
      %v1338 = vrot.slane %v1306, %v1337
      %vm1339 = vcmp.eq.s32.totalorder %v1310, 1
      %vm1340 = vcmp.eq.s32.totalorder %v1314, 1
      %vm1341 = vcmp.eq.s32.totalorder %v1318, 1
      %vm1342 = vcmp.eq.s32.totalorder %v1322, 1
      %vm1343 = vcmp.eq.s32.totalorder %v1326, 1
      %vm1344 = vcmp.eq.s32.totalorder %v1330, 1
      %vm1345 = vcmp.eq.s32.totalorder %v1334, 1
      %vm1346 = vcmp.eq.s32.totalorder %v1338, 1
      %1347 = vrot.lane.b32.xlu0 %v592, 127
      %v1348 = vpop.permute.xlu0 %1347
      %1349 = vrot.lane.b32.xlu0 %v593, 127
      %v1350 = vpop.permute.xlu0 %1349
      %1351 = vrot.lane.b32.xlu0 %v594, 127
      %v1352 = vpop.permute.xlu0 %1351
      %1353 = vrot.lane.b32.xlu0 %v595, 127
      %v1354 = vpop.permute.xlu0 %1353
      %1355 = vrot.lane.b32.xlu0 %v596, 127
      %v1356 = vpop.permute.xlu0 %1355
      %1357 = vrot.lane.b32.xlu0 %v597, 127
      %v1358 = vpop.permute.xlu0 %1357
      %1359 = vrot.lane.b32.xlu0 %v598, 127
      %v1360 = vpop.permute.xlu0 %1359
      %1361 = vrot.lane.b32.xlu0 %v599, 127
      %v1362 = vpop.permute.xlu0 %1361
      %vm1363 = vcmask 1039360
      %v1364 = vsel %vm1363, %v1348, %v1350
      %v1365 = vsel %vm1363, %v1350, %v1352
      %v1366 = vsel %vm1363, %v1352, %v1354
      %v1367 = vsel %vm1363, %v1354, %v1356
      %v1368 = vsel %vm1363, %v1356, %v1358
      %v1369 = vsel %vm1363, %v1358, %v1360
      %v1370 = vsel %vm1363, %v1360, %v1362
      %v1379 = vsel %vm1339, %v1364, 0.0
      %v1380 = vsel %vm1340, %v1365, 0.0
      %v1381 = vsel %vm1341, %v1366, 0.0
      %v1382 = vsel %vm1342, %v1367, 0.0
      %v1383 = vsel %vm1343, %v1368, 0.0
      %v1384 = vsel %vm1344, %v1369, 0.0
      %v1385 = vsel %vm1345, %v1370, 0.0
      %v1386 = vsel %vm1346, %v1362, 0.0
      %v1387 = vpack.c.bf16 %v1379, %v1379
      %v1388 = vpack.c.bf16 %v1380, %v1380
      %v1389 = vpack.c.bf16 %v1381, %v1381
      %v1390 = vpack.c.bf16 %v1382, %v1382
      %v1391 = vpack.c.bf16 %v1383, %v1383
      %v1392 = vpack.c.bf16 %v1384, %v1384
      %v1393 = vpack.c.bf16 %v1385, %v1385
      %v1394 = vpack.c.bf16 %v1386, %v1386
      %v1403 = vunpack.c.l.b16 %v1387
      %v1404 = vunpack.c.l.b16 %v1388
      %v1405 = vunpack.c.l.b16 %v1389
      %v1406 = vunpack.c.l.b16 %v1390
      %v1407 = vunpack.c.l.b16 %v1391
      %v1408 = vunpack.c.l.b16 %v1392
      %v1409 = vunpack.c.l.b16 %v1393
      %v1410 = vunpack.c.l.b16 %v1394
      %v1411 = vpack.c.b16 %v1404, %v1403
      %v1412 = vpack.c.b16 %v1406, %v1405
      %v1413 = vpack.c.b16 %v1408, %v1407
      %v1414 = vpack.c.b16 %v1410, %v1409
      %1419 = vst [vmem:[#allocation2 + $0xa0] sm:$0xff] %v1411
      %1420 = vst [vmem:[#allocation2 + $0xa8] sm:$0xff] %v1412
      %1421 = vst [vmem:[#allocation2 + $0xb0] sm:$0xff] %v1413
      %vm1422 = vcmask 1043456
      %vm1423 = vcmask 1039364
      %vm1424 = vmor %vm1423, %vm1422
      %1425 = vst.msk [vmem:[#allocation2 + $0xb8] sm:$0xff] %vm1424, %v1414
      %vm1426 = vcmask 1044472
      %1427 = vst.msk [vmem:[#allocation2 + $0xbc] sm:$0xf] %vm1426, 0
      %v1428 = vsel %vm511, 1, 0
      %v1429 = vlaneseq
      %v1430 = vshrl.u32 %v1429, 7
      %v1431 = vsub.s32 0, %v1430
      %v1432 = vrot.slane %v1428, %v1431
      %v1433 = vlaneseq
      %v1434 = vshrl.u32 %v1433, 7
      %v1435 = vsub.s32 1, %v1434
      %v1436 = vrot.slane %v1428, %v1435
      %v1437 = vlaneseq
      %v1438 = vshrl.u32 %v1437, 7
      %v1439 = vsub.s32 2, %v1438
      %v1440 = vrot.slane %v1428, %v1439
      %v1441 = vlaneseq
      %v1442 = vshrl.u32 %v1441, 7
      %v1443 = vsub.s32 3, %v1442
      %v1444 = vrot.slane %v1428, %v1443
      %v1445 = vlaneseq
      %v1446 = vshrl.u32 %v1445, 7
      %v1447 = vsub.s32 4, %v1446
      %v1448 = vrot.slane %v1428, %v1447
      %v1449 = vlaneseq
      %v1450 = vshrl.u32 %v1449, 7
      %v1451 = vsub.s32 5, %v1450
      %v1452 = vrot.slane %v1428, %v1451
      %v1453 = vlaneseq
      %v1454 = vshrl.u32 %v1453, 7
      %v1455 = vsub.s32 6, %v1454
      %v1456 = vrot.slane %v1428, %v1455
      %v1457 = vlaneseq
      %v1458 = vshrl.u32 %v1457, 7
      %v1459 = vsub.s32 7, %v1458
      %v1460 = vrot.slane %v1428, %v1459
      %vm1461 = vcmp.eq.s32.totalorder %v1432, 1
      %vm1462 = vcmp.eq.s32.totalorder %v1436, 1
      %vm1463 = vcmp.eq.s32.totalorder %v1440, 1
      %vm1464 = vcmp.eq.s32.totalorder %v1444, 1
      %vm1465 = vcmp.eq.s32.totalorder %v1448, 1
      %vm1466 = vcmp.eq.s32.totalorder %v1452, 1
      %vm1467 = vcmp.eq.s32.totalorder %v1456, 1
      %vm1468 = vcmp.eq.s32.totalorder %v1460, 1
      %1469 = vrot.lane.b32.xlu0 %v592, 113
      %v1470 = vpop.permute.xlu0 %1469
      %1471 = vrot.lane.b32.xlu0 %v593, 113
      %v1472 = vpop.permute.xlu0 %1471
      %1473 = vrot.lane.b32.xlu0 %v594, 113
      %v1474 = vpop.permute.xlu0 %1473
      %1475 = vrot.lane.b32.xlu0 %v595, 113
      %v1476 = vpop.permute.xlu0 %1475
      %1477 = vrot.lane.b32.xlu0 %v596, 113
      %v1478 = vpop.permute.xlu0 %1477
      %1479 = vrot.lane.b32.xlu0 %v597, 113
      %v1480 = vpop.permute.xlu0 %1479
      %1481 = vrot.lane.b32.xlu0 %v598, 113
      %v1482 = vpop.permute.xlu0 %1481
      %1483 = vrot.lane.b32.xlu0 %v599, 113
      %v1484 = vpop.permute.xlu0 %1483
      %vm1485 = vcmask 924672
      %v1486 = vsel %vm1485, %v1470, %v1472
      %v1487 = vsel %vm1485, %v1472, %v1474
      %v1488 = vsel %vm1485, %v1474, %v1476
      %v1489 = vsel %vm1485, %v1476, %v1478
      %v1490 = vsel %vm1485, %v1478, %v1480
      %v1491 = vsel %vm1485, %v1480, %v1482
      %v1492 = vsel %vm1485, %v1482, %v1484
      %v1501 = vsel %vm1461, %v1486, 0.0
      %v1502 = vsel %vm1462, %v1487, 0.0
      %v1503 = vsel %vm1463, %v1488, 0.0
      %v1504 = vsel %vm1464, %v1489, 0.0
      %v1505 = vsel %vm1465, %v1490, 0.0
      %v1506 = vsel %vm1466, %v1491, 0.0
      %v1507 = vsel %vm1467, %v1492, 0.0
      %v1508 = vsel %vm1468, %v1484, 0.0
      %v1509 = vpack.c.bf16 %v1501, %v1501
      %v1510 = vpack.c.bf16 %v1502, %v1502
      %v1511 = vpack.c.bf16 %v1503, %v1503
      %v1512 = vpack.c.bf16 %v1504, %v1504
      %v1513 = vpack.c.bf16 %v1505, %v1505
      %v1514 = vpack.c.bf16 %v1506, %v1506
      %v1515 = vpack.c.bf16 %v1507, %v1507
      %v1516 = vpack.c.bf16 %v1508, %v1508
      %v1525 = vunpack.c.l.b16 %v1509
      %v1526 = vunpack.c.l.b16 %v1510
      %v1527 = vunpack.c.l.b16 %v1511
      %v1528 = vunpack.c.l.b16 %v1512
      %v1529 = vunpack.c.l.b16 %v1513
      %v1530 = vunpack.c.l.b16 %v1514
      %v1531 = vunpack.c.l.b16 %v1515
      %v1532 = vunpack.c.l.b16 %v1516
      %v1533 = vpack.c.b16 %v1526, %v1525
      %v1534 = vpack.c.b16 %v1528, %v1527
      %v1535 = vpack.c.b16 %v1530, %v1529
      %v1536 = vpack.c.b16 %v1532, %v1531
      %1541 = vst [vmem:[#allocation2 + $0xc0] sm:$0xff] %v1533
      %1542 = vst [vmem:[#allocation2 + $0xc8] sm:$0xff] %v1534
      %1543 = vst [vmem:[#allocation2 + $0xd0] sm:$0xff] %v1535
      %vm1544 = vcmask 924676
      %vm1545 = vmor %vm1544, %vm1422
      %1546 = vst.msk [vmem:[#allocation2 + $0xd8] sm:$0xff] %vm1545, %v1536
      %vm1547 = vcmask 1044360
      %1548 = vst.msk [vmem:[#allocation2 + $0xdc] sm:$0xf] %vm1547, 0
      %v1549 = vsel %vm512, 1, 0
      %v1550 = vlaneseq
      %v1551 = vshrl.u32 %v1550, 7
      %v1552 = vsub.s32 0, %v1551
      %v1553 = vrot.slane %v1549, %v1552
      %v1554 = vlaneseq
      %v1555 = vshrl.u32 %v1554, 7
      %v1556 = vsub.s32 1, %v1555
      %v1557 = vrot.slane %v1549, %v1556
      %v1558 = vlaneseq
      %v1559 = vshrl.u32 %v1558, 7
      %v1560 = vsub.s32 2, %v1559
      %v1561 = vrot.slane %v1549, %v1560
      %v1562 = vlaneseq
      %v1563 = vshrl.u32 %v1562, 7
      %v1564 = vsub.s32 3, %v1563
      %v1565 = vrot.slane %v1549, %v1564
      %v1566 = vlaneseq
      %v1567 = vshrl.u32 %v1566, 7
      %v1568 = vsub.s32 4, %v1567
      %v1569 = vrot.slane %v1549, %v1568
      %v1570 = vlaneseq
      %v1571 = vshrl.u32 %v1570, 7
      %v1572 = vsub.s32 5, %v1571
      %v1573 = vrot.slane %v1549, %v1572
      %v1574 = vlaneseq
      %v1575 = vshrl.u32 %v1574, 7
      %v1576 = vsub.s32 6, %v1575
      %v1577 = vrot.slane %v1549, %v1576
      %v1578 = vlaneseq
      %v1579 = vshrl.u32 %v1578, 7
      %v1580 = vsub.s32 7, %v1579
      %v1581 = vrot.slane %v1549, %v1580
      %vm1582 = vcmp.eq.s32.totalorder %v1553, 1
      %vm1583 = vcmp.eq.s32.totalorder %v1557, 1
      %vm1584 = vcmp.eq.s32.totalorder %v1561, 1
      %vm1585 = vcmp.eq.s32.totalorder %v1565, 1
      %vm1586 = vcmp.eq.s32.totalorder %v1569, 1
      %vm1587 = vcmp.eq.s32.totalorder %v1573, 1
      %vm1588 = vcmp.eq.s32.totalorder %v1577, 1
      %vm1589 = vcmp.eq.s32.totalorder %v1581, 1
      %1590 = vrot.lane.b32.xlu0 %v592, 112
      %v1591 = vpop.permute.xlu0 %1590
      %1592 = vrot.lane.b32.xlu0 %v593, 112
      %v1593 = vpop.permute.xlu0 %1592
      %1594 = vrot.lane.b32.xlu0 %v594, 112
      %v1595 = vpop.permute.xlu0 %1594
      %1596 = vrot.lane.b32.xlu0 %v595, 112
      %v1597 = vpop.permute.xlu0 %1596
      %1598 = vrot.lane.b32.xlu0 %v596, 112
      %v1599 = vpop.permute.xlu0 %1598
      %1600 = vrot.lane.b32.xlu0 %v597, 112
      %v1601 = vpop.permute.xlu0 %1600
      %1602 = vrot.lane.b32.xlu0 %v598, 112
      %v1603 = vpop.permute.xlu0 %1602
      %1604 = vrot.lane.b32.xlu0 %v599, 112
      %v1605 = vpop.permute.xlu0 %1604
      %vm1606 = vcmask 916480
      %v1607 = vsel %vm1606, %v1591, %v1593
      %v1608 = vsel %vm1606, %v1593, %v1595
      %v1609 = vsel %vm1606, %v1595, %v1597
      %v1610 = vsel %vm1606, %v1597, %v1599
      %v1611 = vsel %vm1606, %v1599, %v1601
      %v1612 = vsel %vm1606, %v1601, %v1603
      %v1613 = vsel %vm1606, %v1603, %v1605
      %v1622 = vsel %vm1582, %v1607, 0.0
      %v1623 = vsel %vm1583, %v1608, 0.0
      %v1624 = vsel %vm1584, %v1609, 0.0
      %v1625 = vsel %vm1585, %v1610, 0.0
      %v1626 = vsel %vm1586, %v1611, 0.0
      %v1627 = vsel %vm1587, %v1612, 0.0
      %v1628 = vsel %vm1588, %v1613, 0.0
      %v1629 = vsel %vm1589, %v1605, 0.0
      %v1630 = vpack.c.bf16 %v1622, %v1622
      %v1631 = vpack.c.bf16 %v1623, %v1623
      %v1632 = vpack.c.bf16 %v1624, %v1624
      %v1633 = vpack.c.bf16 %v1625, %v1625
      %v1634 = vpack.c.bf16 %v1626, %v1626
      %v1635 = vpack.c.bf16 %v1627, %v1627
      %v1636 = vpack.c.bf16 %v1628, %v1628
      %v1637 = vpack.c.bf16 %v1629, %v1629
      %v1646 = vunpack.c.l.b16 %v1630
      %v1647 = vunpack.c.l.b16 %v1631
      %v1648 = vunpack.c.l.b16 %v1632
      %v1649 = vunpack.c.l.b16 %v1633
      %v1650 = vunpack.c.l.b16 %v1634
      %v1651 = vunpack.c.l.b16 %v1635
      %v1652 = vunpack.c.l.b16 %v1636
      %v1653 = vunpack.c.l.b16 %v1637
      %v1654 = vpack.c.b16 %v1647, %v1646
      %v1655 = vpack.c.b16 %v1649, %v1648
      %v1656 = vpack.c.b16 %v1651, %v1650
      %v1657 = vpack.c.b16 %v1653, %v1652
      %1662 = vst [vmem:[#allocation2 + $0xe0] sm:$0xff] %v1654
      %1663 = vst [vmem:[#allocation2 + $0xe8] sm:$0xff] %v1655
      %1664 = vst [vmem:[#allocation2 + $0xf0] sm:$0xff] %v1656
      %vm1665 = vcmask 916484
      %vm1666 = vmor %vm1665, %vm1422
      %1667 = vst.msk [vmem:[#allocation2 + $0xf8] sm:$0xff] %vm1666, %v1657
      %vm1668 = vcmask 1044352
      %1669 = vst.msk [vmem:[#allocation2 + $0xfc] sm:$0xf] %vm1668, 0
      %v1670 = vsel %vm514, 1, 0
      %v1671 = vlaneseq
      %v1672 = vshrl.u32 %v1671, 7
      %v1673 = vsub.s32 0, %v1672
      %v1674 = vrot.slane %v1670, %v1673
      %v1675 = vlaneseq
      %v1676 = vshrl.u32 %v1675, 7
      %v1677 = vsub.s32 1, %v1676
      %v1678 = vrot.slane %v1670, %v1677
      %v1679 = vlaneseq
      %v1680 = vshrl.u32 %v1679, 7
      %v1681 = vsub.s32 2, %v1680
      %v1682 = vrot.slane %v1670, %v1681
      %v1683 = vlaneseq
      %v1684 = vshrl.u32 %v1683, 7
      %v1685 = vsub.s32 3, %v1684
      %v1686 = vrot.slane %v1670, %v1685
      %v1687 = vlaneseq
      %v1688 = vshrl.u32 %v1687, 7
      %v1689 = vsub.s32 4, %v1688
      %v1690 = vrot.slane %v1670, %v1689
      %v1691 = vlaneseq
      %v1692 = vshrl.u32 %v1691, 7
      %v1693 = vsub.s32 5, %v1692
      %v1694 = vrot.slane %v1670, %v1693
      %v1695 = vlaneseq
      %v1696 = vshrl.u32 %v1695, 7
      %v1697 = vsub.s32 6, %v1696
      %v1698 = vrot.slane %v1670, %v1697
      %v1699 = vlaneseq
      %v1700 = vshrl.u32 %v1699, 7
      %v1701 = vsub.s32 7, %v1700
      %v1702 = vrot.slane %v1670, %v1701
      %vm1703 = vcmp.eq.s32.totalorder %v1674, 1
      %vm1704 = vcmp.eq.s32.totalorder %v1678, 1
      %vm1705 = vcmp.eq.s32.totalorder %v1682, 1
      %vm1706 = vcmp.eq.s32.totalorder %v1686, 1
      %vm1707 = vcmp.eq.s32.totalorder %v1690, 1
      %vm1708 = vcmp.eq.s32.totalorder %v1694, 1
      %vm1709 = vcmp.eq.s32.totalorder %v1698, 1
      %vm1710 = vcmp.eq.s32.totalorder %v1702, 1
      %1711 = vrot.lane.b32.xlu0 %v592, 111
      %v1712 = vpop.permute.xlu0 %1711
      %1713 = vrot.lane.b32.xlu0 %v593, 111
      %v1714 = vpop.permute.xlu0 %1713
      %1715 = vrot.lane.b32.xlu0 %v594, 111
      %v1716 = vpop.permute.xlu0 %1715
      %1717 = vrot.lane.b32.xlu0 %v595, 111
      %v1718 = vpop.permute.xlu0 %1717
      %1719 = vrot.lane.b32.xlu0 %v596, 111
      %v1720 = vpop.permute.xlu0 %1719
      %1721 = vrot.lane.b32.xlu0 %v597, 111
      %v1722 = vpop.permute.xlu0 %1721
      %1723 = vrot.lane.b32.xlu0 %v598, 111
      %v1724 = vpop.permute.xlu0 %1723
      %1725 = vrot.lane.b32.xlu0 %v599, 111
      %v1726 = vpop.permute.xlu0 %1725
      %vm1727 = vcmask 908288
      %v1728 = vsel %vm1727, %v1712, %v1714
      %v1729 = vsel %vm1727, %v1714, %v1716
      %v1730 = vsel %vm1727, %v1716, %v1718
      %v1731 = vsel %vm1727, %v1718, %v1720
      %v1732 = vsel %vm1727, %v1720, %v1722
      %v1733 = vsel %vm1727, %v1722, %v1724
      %v1734 = vsel %vm1727, %v1724, %v1726
      %v1743 = vsel %vm1703, %v1728, 0.0
      %v1744 = vsel %vm1704, %v1729, 0.0
      %v1745 = vsel %vm1705, %v1730, 0.0
      %v1746 = vsel %vm1706, %v1731, 0.0
      %v1747 = vsel %vm1707, %v1732, 0.0
      %v1748 = vsel %vm1708, %v1733, 0.0
      %v1749 = vsel %vm1709, %v1734, 0.0
      %v1750 = vsel %vm1710, %v1726, 0.0
      %v1751 = vpack.c.bf16 %v1743, %v1743
      %v1752 = vpack.c.bf16 %v1744, %v1744
      %v1753 = vpack.c.bf16 %v1745, %v1745
      %v1754 = vpack.c.bf16 %v1746, %v1746
      %v1755 = vpack.c.bf16 %v1747, %v1747
      %v1756 = vpack.c.bf16 %v1748, %v1748
      %v1757 = vpack.c.bf16 %v1749, %v1749
      %v1758 = vpack.c.bf16 %v1750, %v1750
      %v1767 = vunpack.c.l.b16 %v1751
      %v1768 = vunpack.c.l.b16 %v1752
      %v1769 = vunpack.c.l.b16 %v1753
      %v1770 = vunpack.c.l.b16 %v1754
      %v1771 = vunpack.c.l.b16 %v1755
      %v1772 = vunpack.c.l.b16 %v1756
      %v1773 = vunpack.c.l.b16 %v1757
      %v1774 = vunpack.c.l.b16 %v1758
      %v1775 = vpack.c.b16 %v1768, %v1767
      %v1776 = vpack.c.b16 %v1770, %v1769
      %v1777 = vpack.c.b16 %v1772, %v1771
      %v1778 = vpack.c.b16 %v1774, %v1773
      %1783 = vst [vmem:[#allocation2 + $0x100] sm:$0xff] %v1775
      %1784 = vst [vmem:[#allocation2 + $0x108] sm:$0xff] %v1776
      %1785 = vst [vmem:[#allocation2 + $0x110] sm:$0xff] %v1777
      %vm1786 = vcmask 908292
      %vm1787 = vmor %vm1786, %vm1422
      %1788 = vst.msk [vmem:[#allocation2 + $0x118] sm:$0xff] %vm1787, %v1778
      %vm1789 = vcmask 1044344
      %1790 = vst.msk [vmem:[#allocation2 + $0x11c] sm:$0xf] %vm1789, 0
      %v1791 = vsel %vm503, 1, 0
      %v1792 = vlaneseq
      %v1793 = vshrl.u32 %v1792, 7
      %v1794 = vsub.s32 0, %v1793
      %v1795 = vrot.slane %v1791, %v1794
      %v1796 = vlaneseq
      %v1797 = vshrl.u32 %v1796, 7
      %v1798 = vsub.s32 1, %v1797
      %v1799 = vrot.slane %v1791, %v1798
      %v1800 = vlaneseq
      %v1801 = vshrl.u32 %v1800, 7
      %v1802 = vsub.s32 2, %v1801
      %v1803 = vrot.slane %v1791, %v1802
      %v1804 = vlaneseq
      %v1805 = vshrl.u32 %v1804, 7
      %v1806 = vsub.s32 3, %v1805
      %v1807 = vrot.slane %v1791, %v1806
      %v1808 = vlaneseq
      %v1809 = vshrl.u32 %v1808, 7
      %v1810 = vsub.s32 4, %v1809
      %v1811 = vrot.slane %v1791, %v1810
      %v1812 = vlaneseq
      %v1813 = vshrl.u32 %v1812, 7
      %v1814 = vsub.s32 5, %v1813
      %v1815 = vrot.slane %v1791, %v1814
      %v1816 = vlaneseq
      %v1817 = vshrl.u32 %v1816, 7
      %v1818 = vsub.s32 6, %v1817
      %v1819 = vrot.slane %v1791, %v1818
      %v1820 = vlaneseq
      %v1821 = vshrl.u32 %v1820, 7
      %v1822 = vsub.s32 7, %v1821
      %v1823 = vrot.slane %v1791, %v1822
      %vm1824 = vcmp.eq.s32.totalorder %v1795, 1
      %vm1825 = vcmp.eq.s32.totalorder %v1799, 1
      %vm1826 = vcmp.eq.s32.totalorder %v1803, 1
      %vm1827 = vcmp.eq.s32.totalorder %v1807, 1
      %vm1828 = vcmp.eq.s32.totalorder %v1811, 1
      %vm1829 = vcmp.eq.s32.totalorder %v1815, 1
      %vm1830 = vcmp.eq.s32.totalorder %v1819, 1
      %vm1831 = vcmp.eq.s32.totalorder %v1823, 1
      %1840 = vrot.lane.b32.xlu0 %v656, 17
      %v1841 = vpop.permute.xlu0 %1840
      %1842 = vrot.lane.b32.xlu0 %v657, 17
      %v1843 = vpop.permute.xlu0 %1842
      %1844 = vrot.lane.b32.xlu0 %v658, 17
      %v1845 = vpop.permute.xlu0 %1844
      %1846 = vrot.lane.b32.xlu0 %v659, 17
      %v1847 = vpop.permute.xlu0 %1846
      %1848 = vrot.lane.b32.xlu0 %v660, 17
      %v1849 = vpop.permute.xlu0 %1848
      %1850 = vrot.lane.b32.xlu0 %v661, 17
      %v1851 = vpop.permute.xlu0 %1850
      %1852 = vrot.lane.b32.xlu0 %v662, 17
      %v1853 = vpop.permute.xlu0 %1852
      %1854 = vrot.lane.b32.xlu0 %v663, 17
      %v1855 = vpop.permute.xlu0 %1854
      %v1856 = vsel %vm793, %v1841, %v1843
      %v1857 = vsel %vm793, %v1843, %v1845
      %v1858 = vsel %vm793, %v1845, %v1847
      %v1859 = vsel %vm793, %v1847, %v1849
      %v1860 = vsel %vm793, %v1849, %v1851
      %v1861 = vsel %vm793, %v1851, %v1853
      %v1862 = vsel %vm793, %v1853, %v1855
      %v1871 = vsel %vm1824, %v1841, 0.0
      %v1872 = vsel %vm1825, %v1856, 0.0
      %v1873 = vsel %vm1826, %v1857, 0.0
      %v1874 = vsel %vm1827, %v1858, 0.0
      %v1875 = vsel %vm1828, %v1859, 0.0
      %v1876 = vsel %vm1829, %v1860, 0.0
      %v1877 = vsel %vm1830, %v1861, 0.0
      %v1878 = vsel %vm1831, %v1862, 0.0
      %v1879 = vpack.c.bf16 %v1871, %v1871
      %v1880 = vpack.c.bf16 %v1872, %v1872
      %v1881 = vpack.c.bf16 %v1873, %v1873
      %v1882 = vpack.c.bf16 %v1874, %v1874
      %v1883 = vpack.c.bf16 %v1875, %v1875
      %v1884 = vpack.c.bf16 %v1876, %v1876
      %v1885 = vpack.c.bf16 %v1877, %v1877
      %v1886 = vpack.c.bf16 %v1878, %v1878
      %v1895 = vunpack.c.l.b16 %v1879
      %v1896 = vunpack.c.l.b16 %v1880
      %v1897 = vunpack.c.l.b16 %v1881
      %v1898 = vunpack.c.l.b16 %v1882
      %v1899 = vunpack.c.l.b16 %v1883
      %v1900 = vunpack.c.l.b16 %v1884
      %v1901 = vunpack.c.l.b16 %v1885
      %v1902 = vunpack.c.l.b16 %v1886
      %v1903 = vpack.c.b16 %v1896, %v1895
      %v1904 = vpack.c.b16 %v1898, %v1897
      %v1905 = vpack.c.b16 %v1900, %v1899
      %v1906 = vpack.c.b16 %v1902, %v1901
      %1911 = vst.msk [vmem:[#allocation2 + $0x120] sm:$0xff] %vm851, %v1903
      %1912 = vst [vmem:[#allocation2 + $0x128] sm:$0xff] %v1904
      %1913 = vst [vmem:[#allocation2 + $0x130] sm:$0xff] %v1905
      %1914 = vst [vmem:[#allocation2 + $0x138] sm:$0xff] %v1906
      %1915 = vst.msk [vmem:[#allocation2 + $0x120] sm:$0xf] %vm856, 0
      %v1916 = vsel %vm477, 1, 0
      %v1917 = vlaneseq
      %v1918 = vshrl.u32 %v1917, 7
      %v1919 = vsub.s32 0, %v1918
      %v1920 = vrot.slane %v1916, %v1919
      %v1921 = vlaneseq
      %v1922 = vshrl.u32 %v1921, 7
      %v1923 = vsub.s32 1, %v1922
      %v1924 = vrot.slane %v1916, %v1923
      %v1925 = vlaneseq
      %v1926 = vshrl.u32 %v1925, 7
      %v1927 = vsub.s32 2, %v1926
      %v1928 = vrot.slane %v1916, %v1927
      %v1929 = vlaneseq
      %v1930 = vshrl.u32 %v1929, 7
      %v1931 = vsub.s32 3, %v1930
      %v1932 = vrot.slane %v1916, %v1931
      %v1933 = vlaneseq
      %v1934 = vshrl.u32 %v1933, 7
      %v1935 = vsub.s32 4, %v1934
      %v1936 = vrot.slane %v1916, %v1935
      %v1937 = vlaneseq
      %v1938 = vshrl.u32 %v1937, 7
      %v1939 = vsub.s32 5, %v1938
      %v1940 = vrot.slane %v1916, %v1939
      %v1941 = vlaneseq
      %v1942 = vshrl.u32 %v1941, 7
      %v1943 = vsub.s32 6, %v1942
      %v1944 = vrot.slane %v1916, %v1943
      %v1945 = vlaneseq
      %v1946 = vshrl.u32 %v1945, 7
      %v1947 = vsub.s32 7, %v1946
      %v1948 = vrot.slane %v1916, %v1947
      %vm1949 = vcmp.eq.s32.totalorder %v1920, 1
      %vm1950 = vcmp.eq.s32.totalorder %v1924, 1
      %vm1951 = vcmp.eq.s32.totalorder %v1928, 1
      %vm1952 = vcmp.eq.s32.totalorder %v1932, 1
      %vm1953 = vcmp.eq.s32.totalorder %v1936, 1
      %vm1954 = vcmp.eq.s32.totalorder %v1940, 1
      %vm1955 = vcmp.eq.s32.totalorder %v1944, 1
      %vm1956 = vcmp.eq.s32.totalorder %v1948, 1
      %1957 = vrot.lane.b32.xlu0 %v656, 16
      %v1958 = vpop.permute.xlu0 %1957
      %1959 = vrot.lane.b32.xlu0 %v657, 16
      %v1960 = vpop.permute.xlu0 %1959
      %1961 = vrot.lane.b32.xlu0 %v658, 16
      %v1962 = vpop.permute.xlu0 %1961
      %1963 = vrot.lane.b32.xlu0 %v659, 16
      %v1964 = vpop.permute.xlu0 %1963
      %1965 = vrot.lane.b32.xlu0 %v660, 16
      %v1966 = vpop.permute.xlu0 %1965
      %1967 = vrot.lane.b32.xlu0 %v661, 16
      %v1968 = vpop.permute.xlu0 %1967
      %1969 = vrot.lane.b32.xlu0 %v662, 16
      %v1970 = vpop.permute.xlu0 %1969
      %1971 = vrot.lane.b32.xlu0 %v663, 16
      %v1972 = vpop.permute.xlu0 %1971
      %v1973 = vsel %vm915, %v1958, %v1960
      %v1974 = vsel %vm915, %v1960, %v1962
      %v1975 = vsel %vm915, %v1962, %v1964
      %v1976 = vsel %vm915, %v1964, %v1966
      %v1977 = vsel %vm915, %v1966, %v1968
      %v1978 = vsel %vm915, %v1968, %v1970
      %v1979 = vsel %vm915, %v1970, %v1972
      %v1988 = vsel %vm1949, %v1958, 0.0
      %v1989 = vsel %vm1950, %v1973, 0.0
      %v1990 = vsel %vm1951, %v1974, 0.0
      %v1991 = vsel %vm1952, %v1975, 0.0
      %v1992 = vsel %vm1953, %v1976, 0.0
      %v1993 = vsel %vm1954, %v1977, 0.0
      %v1994 = vsel %vm1955, %v1978, 0.0
      %v1995 = vsel %vm1956, %v1979, 0.0
      %v1996 = vpack.c.bf16 %v1988, %v1988
      %v1997 = vpack.c.bf16 %v1989, %v1989
      %v1998 = vpack.c.bf16 %v1990, %v1990
      %v1999 = vpack.c.bf16 %v1991, %v1991
      %v2000 = vpack.c.bf16 %v1992, %v1992
      %v2001 = vpack.c.bf16 %v1993, %v1993
      %v2002 = vpack.c.bf16 %v1994, %v1994
      %v2003 = vpack.c.bf16 %v1995, %v1995
      %v2012 = vunpack.c.l.b16 %v1996
      %v2013 = vunpack.c.l.b16 %v1997
      %v2014 = vunpack.c.l.b16 %v1998
      %v2015 = vunpack.c.l.b16 %v1999
      %v2016 = vunpack.c.l.b16 %v2000
      %v2017 = vunpack.c.l.b16 %v2001
      %v2018 = vunpack.c.l.b16 %v2002
      %v2019 = vunpack.c.l.b16 %v2003
      %v2020 = vpack.c.b16 %v2013, %v2012
      %v2021 = vpack.c.b16 %v2015, %v2014
      %v2022 = vpack.c.b16 %v2017, %v2016
      %v2023 = vpack.c.b16 %v2019, %v2018
      %2028 = vst.msk [vmem:[#allocation2 + $0x140] sm:$0xff] %vm972, %v2020
      %2029 = vst [vmem:[#allocation2 + $0x148] sm:$0xff] %v2021
      %2030 = vst [vmem:[#allocation2 + $0x150] sm:$0xff] %v2022
      %2031 = vst [vmem:[#allocation2 + $0x158] sm:$0xff] %v2023
      %2032 = vst.msk [vmem:[#allocation2 + $0x140] sm:$0xf] %vm977, 0
      %v2033 = vsel %vm506, 1, 0
      %v2034 = vlaneseq
      %v2035 = vshrl.u32 %v2034, 7
      %v2036 = vsub.s32 0, %v2035
      %v2037 = vrot.slane %v2033, %v2036
      %v2038 = vlaneseq
      %v2039 = vshrl.u32 %v2038, 7
      %v2040 = vsub.s32 1, %v2039
      %v2041 = vrot.slane %v2033, %v2040
      %v2042 = vlaneseq
      %v2043 = vshrl.u32 %v2042, 7
      %v2044 = vsub.s32 2, %v2043
      %v2045 = vrot.slane %v2033, %v2044
      %v2046 = vlaneseq
      %v2047 = vshrl.u32 %v2046, 7
      %v2048 = vsub.s32 3, %v2047
      %v2049 = vrot.slane %v2033, %v2048
      %v2050 = vlaneseq
      %v2051 = vshrl.u32 %v2050, 7
      %v2052 = vsub.s32 4, %v2051
      %v2053 = vrot.slane %v2033, %v2052
      %v2054 = vlaneseq
      %v2055 = vshrl.u32 %v2054, 7
      %v2056 = vsub.s32 5, %v2055
      %v2057 = vrot.slane %v2033, %v2056
      %v2058 = vlaneseq
      %v2059 = vshrl.u32 %v2058, 7
      %v2060 = vsub.s32 6, %v2059
      %v2061 = vrot.slane %v2033, %v2060
      %v2062 = vlaneseq
      %v2063 = vshrl.u32 %v2062, 7
      %v2064 = vsub.s32 7, %v2063
      %v2065 = vrot.slane %v2033, %v2064
      %vm2066 = vcmp.eq.s32.totalorder %v2037, 1
      %vm2067 = vcmp.eq.s32.totalorder %v2041, 1
      %vm2068 = vcmp.eq.s32.totalorder %v2045, 1
      %vm2069 = vcmp.eq.s32.totalorder %v2049, 1
      %vm2070 = vcmp.eq.s32.totalorder %v2053, 1
      %vm2071 = vcmp.eq.s32.totalorder %v2057, 1
      %vm2072 = vcmp.eq.s32.totalorder %v2061, 1
      %vm2073 = vcmp.eq.s32.totalorder %v2065, 1
      %2074 = vrot.lane.b32.xlu0 %v656, 15
      %v2075 = vpop.permute.xlu0 %2074
      %2076 = vrot.lane.b32.xlu0 %v657, 15
      %v2077 = vpop.permute.xlu0 %2076
      %2078 = vrot.lane.b32.xlu0 %v658, 15
      %v2079 = vpop.permute.xlu0 %2078
      %2080 = vrot.lane.b32.xlu0 %v659, 15
      %v2081 = vpop.permute.xlu0 %2080
      %2082 = vrot.lane.b32.xlu0 %v660, 15
      %v2083 = vpop.permute.xlu0 %2082
      %2084 = vrot.lane.b32.xlu0 %v661, 15
      %v2085 = vpop.permute.xlu0 %2084
      %2086 = vrot.lane.b32.xlu0 %v662, 15
      %v2087 = vpop.permute.xlu0 %2086
      %2088 = vrot.lane.b32.xlu0 %v663, 15
      %v2089 = vpop.permute.xlu0 %2088
      %v2090 = vsel %vm1036, %v2075, %v2077
      %v2091 = vsel %vm1036, %v2077, %v2079
      %v2092 = vsel %vm1036, %v2079, %v2081
      %v2093 = vsel %vm1036, %v2081, %v2083
      %v2094 = vsel %vm1036, %v2083, %v2085
      %v2095 = vsel %vm1036, %v2085, %v2087
      %v2096 = vsel %vm1036, %v2087, %v2089
      %v2105 = vsel %vm2066, %v2075, 0.0
      %v2106 = vsel %vm2067, %v2090, 0.0
      %v2107 = vsel %vm2068, %v2091, 0.0
      %v2108 = vsel %vm2069, %v2092, 0.0
      %v2109 = vsel %vm2070, %v2093, 0.0
      %v2110 = vsel %vm2071, %v2094, 0.0
      %v2111 = vsel %vm2072, %v2095, 0.0
      %v2112 = vsel %vm2073, %v2096, 0.0
      %v2113 = vpack.c.bf16 %v2105, %v2105
      %v2114 = vpack.c.bf16 %v2106, %v2106
      %v2115 = vpack.c.bf16 %v2107, %v2107
      %v2116 = vpack.c.bf16 %v2108, %v2108
      %v2117 = vpack.c.bf16 %v2109, %v2109
      %v2118 = vpack.c.bf16 %v2110, %v2110
      %v2119 = vpack.c.bf16 %v2111, %v2111
      %v2120 = vpack.c.bf16 %v2112, %v2112
      %v2129 = vunpack.c.l.b16 %v2113
      %v2130 = vunpack.c.l.b16 %v2114
      %v2131 = vunpack.c.l.b16 %v2115
      %v2132 = vunpack.c.l.b16 %v2116
      %v2133 = vunpack.c.l.b16 %v2117
      %v2134 = vunpack.c.l.b16 %v2118
      %v2135 = vunpack.c.l.b16 %v2119
      %v2136 = vunpack.c.l.b16 %v2120
      %v2137 = vpack.c.b16 %v2130, %v2129
      %v2138 = vpack.c.b16 %v2132, %v2131
      %v2139 = vpack.c.b16 %v2134, %v2133
      %v2140 = vpack.c.b16 %v2136, %v2135
      %2145 = vst.msk [vmem:[#allocation2 + $0x160] sm:$0xff] %vm1093, %v2137
      %2146 = vst [vmem:[#allocation2 + $0x168] sm:$0xff] %v2138
      %2147 = vst [vmem:[#allocation2 + $0x170] sm:$0xff] %v2139
      %2148 = vst [vmem:[#allocation2 + $0x178] sm:$0xff] %v2140
      %2149 = vst.msk [vmem:[#allocation2 + $0x160] sm:$0xf] %vm1098, 0
      %v2150 = vsel %vm487, 1, 0
      %v2151 = vlaneseq
      %v2152 = vshrl.u32 %v2151, 7
      %v2153 = vsub.s32 0, %v2152
      %v2154 = vrot.slane %v2150, %v2153
      %v2155 = vlaneseq
      %v2156 = vshrl.u32 %v2155, 7
      %v2157 = vsub.s32 1, %v2156
      %v2158 = vrot.slane %v2150, %v2157
      %v2159 = vlaneseq
      %v2160 = vshrl.u32 %v2159, 7
      %v2161 = vsub.s32 2, %v2160
      %v2162 = vrot.slane %v2150, %v2161
      %v2163 = vlaneseq
      %v2164 = vshrl.u32 %v2163, 7
      %v2165 = vsub.s32 3, %v2164
      %v2166 = vrot.slane %v2150, %v2165
      %v2167 = vlaneseq
      %v2168 = vshrl.u32 %v2167, 7
      %v2169 = vsub.s32 4, %v2168
      %v2170 = vrot.slane %v2150, %v2169
      %v2171 = vlaneseq
      %v2172 = vshrl.u32 %v2171, 7
      %v2173 = vsub.s32 5, %v2172
      %v2174 = vrot.slane %v2150, %v2173
      %v2175 = vlaneseq
      %v2176 = vshrl.u32 %v2175, 7
      %v2177 = vsub.s32 6, %v2176
      %v2178 = vrot.slane %v2150, %v2177
      %v2179 = vlaneseq
      %v2180 = vshrl.u32 %v2179, 7
      %v2181 = vsub.s32 7, %v2180
      %v2182 = vrot.slane %v2150, %v2181
      %vm2183 = vcmp.eq.s32.totalorder %v2154, 1
      %vm2184 = vcmp.eq.s32.totalorder %v2158, 1
      %vm2185 = vcmp.eq.s32.totalorder %v2162, 1
      %vm2186 = vcmp.eq.s32.totalorder %v2166, 1
      %vm2187 = vcmp.eq.s32.totalorder %v2170, 1
      %vm2188 = vcmp.eq.s32.totalorder %v2174, 1
      %vm2189 = vcmp.eq.s32.totalorder %v2178, 1
      %vm2190 = vcmp.eq.s32.totalorder %v2182, 1
      %2191 = vrot.lane.b32.xlu0 %v656, 1
      %v2192 = vpop.permute.xlu0 %2191
      %2193 = vrot.lane.b32.xlu0 %v657, 1
      %v2194 = vpop.permute.xlu0 %2193
      %2195 = vrot.lane.b32.xlu0 %v658, 1
      %v2196 = vpop.permute.xlu0 %2195
      %2197 = vrot.lane.b32.xlu0 %v659, 1
      %v2198 = vpop.permute.xlu0 %2197
      %2199 = vrot.lane.b32.xlu0 %v660, 1
      %v2200 = vpop.permute.xlu0 %2199
      %2201 = vrot.lane.b32.xlu0 %v661, 1
      %v2202 = vpop.permute.xlu0 %2201
      %2203 = vrot.lane.b32.xlu0 %v662, 1
      %v2204 = vpop.permute.xlu0 %2203
      %2205 = vrot.lane.b32.xlu0 %v663, 1
      %v2206 = vpop.permute.xlu0 %2205
      %v2207 = vsel %vm1157, %v2192, %v2194
      %v2208 = vsel %vm1157, %v2194, %v2196
      %v2209 = vsel %vm1157, %v2196, %v2198
      %v2210 = vsel %vm1157, %v2198, %v2200
      %v2211 = vsel %vm1157, %v2200, %v2202
      %v2212 = vsel %vm1157, %v2202, %v2204
      %v2213 = vsel %vm1157, %v2204, %v2206
      %v2222 = vsel %vm2183, %v2192, 0.0
      %v2223 = vsel %vm2184, %v2207, 0.0
      %v2224 = vsel %vm2185, %v2208, 0.0
      %v2225 = vsel %vm2186, %v2209, 0.0
      %v2226 = vsel %vm2187, %v2210, 0.0
      %v2227 = vsel %vm2188, %v2211, 0.0
      %v2228 = vsel %vm2189, %v2212, 0.0
      %v2229 = vsel %vm2190, %v2213, 0.0
      %v2230 = vpack.c.bf16 %v2222, %v2222
      %v2231 = vpack.c.bf16 %v2223, %v2223
      %v2232 = vpack.c.bf16 %v2224, %v2224
      %v2233 = vpack.c.bf16 %v2225, %v2225
      %v2234 = vpack.c.bf16 %v2226, %v2226
      %v2235 = vpack.c.bf16 %v2227, %v2227
      %v2236 = vpack.c.bf16 %v2228, %v2228
      %v2237 = vpack.c.bf16 %v2229, %v2229
      %v2246 = vunpack.c.l.b16 %v2230
      %v2247 = vunpack.c.l.b16 %v2231
      %v2248 = vunpack.c.l.b16 %v2232
      %v2249 = vunpack.c.l.b16 %v2233
      %v2250 = vunpack.c.l.b16 %v2234
      %v2251 = vunpack.c.l.b16 %v2235
      %v2252 = vunpack.c.l.b16 %v2236
      %v2253 = vunpack.c.l.b16 %v2237
      %v2254 = vpack.c.b16 %v2247, %v2246
      %v2255 = vpack.c.b16 %v2249, %v2248
      %v2256 = vpack.c.b16 %v2251, %v2250
      %v2257 = vpack.c.b16 %v2253, %v2252
      %2262 = vst.msk [vmem:[#allocation2 + $0x180] sm:$0xff] %vm1214, %v2254
      %2263 = vst [vmem:[#allocation2 + $0x188] sm:$0xff] %v2255
      %2264 = vst [vmem:[#allocation2 + $0x190] sm:$0xff] %v2256
      %2265 = vst [vmem:[#allocation2 + $0x198] sm:$0xff] %v2257
      %2266 = vst.msk [vmem:[#allocation2 + $0x180] sm:$0xf] %vm1219, 0
      %v2267 = vpack.c.bf16 %v656, %v656
      %v2268 = vpack.c.bf16 %v657, %v657
      %v2269 = vpack.c.bf16 %v658, %v658
      %v2270 = vpack.c.bf16 %v659, %v659
      %v2271 = vpack.c.bf16 %v660, %v660
      %v2272 = vpack.c.bf16 %v661, %v661
      %v2273 = vpack.c.bf16 %v662, %v662
      %v2274 = vpack.c.bf16 %v663, %v663
      %v2283 = vunpack.c.l.b16 %v2267
      %v2284 = vunpack.c.l.b16 %v2268
      %v2285 = vunpack.c.l.b16 %v2269
      %v2286 = vunpack.c.l.b16 %v2270
      %v2287 = vunpack.c.l.b16 %v2271
      %v2288 = vunpack.c.l.b16 %v2272
      %v2289 = vunpack.c.l.b16 %v2273
      %v2290 = vunpack.c.l.b16 %v2274
      %v2291 = vpack.c.b16 %v2284, %v2283
      %v2292 = vpack.c.b16 %v2286, %v2285
      %v2293 = vpack.c.b16 %v2288, %v2287
      %v2294 = vpack.c.b16 %v2290, %v2289
      %2299 = vst [vmem:[#allocation2 + $0x1a0] sm:$0xff] %v2291
      %2300 = vst [vmem:[#allocation2 + $0x1a8] sm:$0xff] %v2292
      %2301 = vst [vmem:[#allocation2 + $0x1b0] sm:$0xff] %v2293
      %2302 = vst [vmem:[#allocation2 + $0x1b8] sm:$0xff] %v2294
      %v2303 = vsel %vm492, 1, 0
      %v2304 = vlaneseq
      %v2305 = vshrl.u32 %v2304, 7
      %v2306 = vsub.s32 0, %v2305
      %v2307 = vrot.slane %v2303, %v2306
      %v2308 = vlaneseq
      %v2309 = vshrl.u32 %v2308, 7
      %v2310 = vsub.s32 1, %v2309
      %v2311 = vrot.slane %v2303, %v2310
      %v2312 = vlaneseq
      %v2313 = vshrl.u32 %v2312, 7
      %v2314 = vsub.s32 2, %v2313
      %v2315 = vrot.slane %v2303, %v2314
      %v2316 = vlaneseq
      %v2317 = vshrl.u32 %v2316, 7
      %v2318 = vsub.s32 3, %v2317
      %v2319 = vrot.slane %v2303, %v2318
      %v2320 = vlaneseq
      %v2321 = vshrl.u32 %v2320, 7
      %v2322 = vsub.s32 4, %v2321
      %v2323 = vrot.slane %v2303, %v2322
      %v2324 = vlaneseq
      %v2325 = vshrl.u32 %v2324, 7
      %v2326 = vsub.s32 5, %v2325
      %v2327 = vrot.slane %v2303, %v2326
      %v2328 = vlaneseq
      %v2329 = vshrl.u32 %v2328, 7
      %v2330 = vsub.s32 6, %v2329
      %v2331 = vrot.slane %v2303, %v2330
      %v2332 = vlaneseq
      %v2333 = vshrl.u32 %v2332, 7
      %v2334 = vsub.s32 7, %v2333
      %v2335 = vrot.slane %v2303, %v2334
      %vm2336 = vcmp.eq.s32.totalorder %v2307, 1
      %vm2337 = vcmp.eq.s32.totalorder %v2311, 1
      %vm2338 = vcmp.eq.s32.totalorder %v2315, 1
      %vm2339 = vcmp.eq.s32.totalorder %v2319, 1
      %vm2340 = vcmp.eq.s32.totalorder %v2323, 1
      %vm2341 = vcmp.eq.s32.totalorder %v2327, 1
      %vm2342 = vcmp.eq.s32.totalorder %v2331, 1
      %vm2343 = vcmp.eq.s32.totalorder %v2335, 1
      %2344 = vrot.lane.b32.xlu0 %v656, 127
      %v2345 = vpop.permute.xlu0 %2344
      %2346 = vrot.lane.b32.xlu0 %v657, 127
      %v2347 = vpop.permute.xlu0 %2346
      %2348 = vrot.lane.b32.xlu0 %v658, 127
      %v2349 = vpop.permute.xlu0 %2348
      %2350 = vrot.lane.b32.xlu0 %v659, 127
      %v2351 = vpop.permute.xlu0 %2350
      %2352 = vrot.lane.b32.xlu0 %v660, 127
      %v2353 = vpop.permute.xlu0 %2352
      %2354 = vrot.lane.b32.xlu0 %v661, 127
      %v2355 = vpop.permute.xlu0 %2354
      %2356 = vrot.lane.b32.xlu0 %v662, 127
      %v2357 = vpop.permute.xlu0 %2356
      %2358 = vrot.lane.b32.xlu0 %v663, 127
      %v2359 = vpop.permute.xlu0 %2358
      %v2360 = vsel %vm1363, %v2345, %v2347
      %v2361 = vsel %vm1363, %v2347, %v2349
      %v2362 = vsel %vm1363, %v2349, %v2351
      %v2363 = vsel %vm1363, %v2351, %v2353
      %v2364 = vsel %vm1363, %v2353, %v2355
      %v2365 = vsel %vm1363, %v2355, %v2357
      %v2366 = vsel %vm1363, %v2357, %v2359
      %v2375 = vsel %vm2336, %v2360, 0.0
      %v2376 = vsel %vm2337, %v2361, 0.0
      %v2377 = vsel %vm2338, %v2362, 0.0
      %v2378 = vsel %vm2339, %v2363, 0.0
      %v2379 = vsel %vm2340, %v2364, 0.0
      %v2380 = vsel %vm2341, %v2365, 0.0
      %v2381 = vsel %vm2342, %v2366, 0.0
      %v2382 = vsel %vm2343, %v2359, 0.0
      %v2383 = vpack.c.bf16 %v2375, %v2375
      %v2384 = vpack.c.bf16 %v2376, %v2376
      %v2385 = vpack.c.bf16 %v2377, %v2377
      %v2386 = vpack.c.bf16 %v2378, %v2378
      %v2387 = vpack.c.bf16 %v2379, %v2379
      %v2388 = vpack.c.bf16 %v2380, %v2380
      %v2389 = vpack.c.bf16 %v2381, %v2381
      %v2390 = vpack.c.bf16 %v2382, %v2382
      %v2399 = vunpack.c.l.b16 %v2383
      %v2400 = vunpack.c.l.b16 %v2384
      %v2401 = vunpack.c.l.b16 %v2385
      %v2402 = vunpack.c.l.b16 %v2386
      %v2403 = vunpack.c.l.b16 %v2387
      %v2404 = vunpack.c.l.b16 %v2388
      %v2405 = vunpack.c.l.b16 %v2389
      %v2406 = vunpack.c.l.b16 %v2390
      %v2407 = vpack.c.b16 %v2400, %v2399
      %v2408 = vpack.c.b16 %v2402, %v2401
      %v2409 = vpack.c.b16 %v2404, %v2403
      %v2410 = vpack.c.b16 %v2406, %v2405
      %2415 = vst [vmem:[#allocation2 + $0x1c0] sm:$0xff] %v2407
      %2416 = vst [vmem:[#allocation2 + $0x1c8] sm:$0xff] %v2408
      %2417 = vst [vmem:[#allocation2 + $0x1d0] sm:$0xff] %v2409
      %2418 = vst.msk [vmem:[#allocation2 + $0x1d8] sm:$0xff] %vm1424, %v2410
      %2419 = vst.msk [vmem:[#allocation2 + $0x1dc] sm:$0xf] %vm1426, 0
      %v2420 = vsel %vm510, 1, 0
      %v2421 = vlaneseq
      %v2422 = vshrl.u32 %v2421, 7
      %v2423 = vsub.s32 0, %v2422
      %v2424 = vrot.slane %v2420, %v2423
      %v2425 = vlaneseq
      %v2426 = vshrl.u32 %v2425, 7
      %v2427 = vsub.s32 1, %v2426
      %v2428 = vrot.slane %v2420, %v2427
      %v2429 = vlaneseq
      %v2430 = vshrl.u32 %v2429, 7
      %v2431 = vsub.s32 2, %v2430
      %v2432 = vrot.slane %v2420, %v2431
      %v2433 = vlaneseq
      %v2434 = vshrl.u32 %v2433, 7
      %v2435 = vsub.s32 3, %v2434
      %v2436 = vrot.slane %v2420, %v2435
      %v2437 = vlaneseq
      %v2438 = vshrl.u32 %v2437, 7
      %v2439 = vsub.s32 4, %v2438
      %v2440 = vrot.slane %v2420, %v2439
      %v2441 = vlaneseq
      %v2442 = vshrl.u32 %v2441, 7
      %v2443 = vsub.s32 5, %v2442
      %v2444 = vrot.slane %v2420, %v2443
      %v2445 = vlaneseq
      %v2446 = vshrl.u32 %v2445, 7
      %v2447 = vsub.s32 6, %v2446
      %v2448 = vrot.slane %v2420, %v2447
      %v2449 = vlaneseq
      %v2450 = vshrl.u32 %v2449, 7
      %v2451 = vsub.s32 7, %v2450
      %v2452 = vrot.slane %v2420, %v2451
      %vm2453 = vcmp.eq.s32.totalorder %v2424, 1
      %vm2454 = vcmp.eq.s32.totalorder %v2428, 1
      %vm2455 = vcmp.eq.s32.totalorder %v2432, 1
      %vm2456 = vcmp.eq.s32.totalorder %v2436, 1
      %vm2457 = vcmp.eq.s32.totalorder %v2440, 1
      %vm2458 = vcmp.eq.s32.totalorder %v2444, 1
      %vm2459 = vcmp.eq.s32.totalorder %v2448, 1
      %vm2460 = vcmp.eq.s32.totalorder %v2452, 1
      %2461 = vrot.lane.b32.xlu0 %v656, 113
      %v2462 = vpop.permute.xlu0 %2461
      %2463 = vrot.lane.b32.xlu0 %v657, 113
      %v2464 = vpop.permute.xlu0 %2463
      %2465 = vrot.lane.b32.xlu0 %v658, 113
      %v2466 = vpop.permute.xlu0 %2465
      %2467 = vrot.lane.b32.xlu0 %v659, 113
      %v2468 = vpop.permute.xlu0 %2467
      %2469 = vrot.lane.b32.xlu0 %v660, 113
      %v2470 = vpop.permute.xlu0 %2469
      %2471 = vrot.lane.b32.xlu0 %v661, 113
      %v2472 = vpop.permute.xlu0 %2471
      %2473 = vrot.lane.b32.xlu0 %v662, 113
      %v2474 = vpop.permute.xlu0 %2473
      %2475 = vrot.lane.b32.xlu0 %v663, 113
      %v2476 = vpop.permute.xlu0 %2475
      %v2477 = vsel %vm1485, %v2462, %v2464
      %v2478 = vsel %vm1485, %v2464, %v2466
      %v2479 = vsel %vm1485, %v2466, %v2468
      %v2480 = vsel %vm1485, %v2468, %v2470
      %v2481 = vsel %vm1485, %v2470, %v2472
      %v2482 = vsel %vm1485, %v2472, %v2474
      %v2483 = vsel %vm1485, %v2474, %v2476
      %v2492 = vsel %vm2453, %v2477, 0.0
      %v2493 = vsel %vm2454, %v2478, 0.0
      %v2494 = vsel %vm2455, %v2479, 0.0
      %v2495 = vsel %vm2456, %v2480, 0.0
      %v2496 = vsel %vm2457, %v2481, 0.0
      %v2497 = vsel %vm2458, %v2482, 0.0
      %v2498 = vsel %vm2459, %v2483, 0.0
      %v2499 = vsel %vm2460, %v2476, 0.0
      %v2500 = vpack.c.bf16 %v2492, %v2492
      %v2501 = vpack.c.bf16 %v2493, %v2493
      %v2502 = vpack.c.bf16 %v2494, %v2494
      %v2503 = vpack.c.bf16 %v2495, %v2495
      %v2504 = vpack.c.bf16 %v2496, %v2496
      %v2505 = vpack.c.bf16 %v2497, %v2497
      %v2506 = vpack.c.bf16 %v2498, %v2498
      %v2507 = vpack.c.bf16 %v2499, %v2499
      %v2516 = vunpack.c.l.b16 %v2500
      %v2517 = vunpack.c.l.b16 %v2501
      %v2518 = vunpack.c.l.b16 %v2502
      %v2519 = vunpack.c.l.b16 %v2503
      %v2520 = vunpack.c.l.b16 %v2504
      %v2521 = vunpack.c.l.b16 %v2505
      %v2522 = vunpack.c.l.b16 %v2506
      %v2523 = vunpack.c.l.b16 %v2507
      %v2524 = vpack.c.b16 %v2517, %v2516
      %v2525 = vpack.c.b16 %v2519, %v2518
      %v2526 = vpack.c.b16 %v2521, %v2520
      %v2527 = vpack.c.b16 %v2523, %v2522
      %2532 = vst [vmem:[#allocation2 + $0x1e0] sm:$0xff] %v2524
      %2533 = vst [vmem:[#allocation2 + $0x1e8] sm:$0xff] %v2525
      %2534 = vst [vmem:[#allocation2 + $0x1f0] sm:$0xff] %v2526
      %2535 = vst.msk [vmem:[#allocation2 + $0x1f8] sm:$0xff] %vm1545, %v2527
      %2536 = vst.msk [vmem:[#allocation2 + $0x1fc] sm:$0xf] %vm1547, 0
      %v2537 = vsel %vm482, 1, 0
      %v2538 = vlaneseq
      %v2539 = vshrl.u32 %v2538, 7
      %v2540 = vsub.s32 0, %v2539
      %v2541 = vrot.slane %v2537, %v2540
      %v2542 = vlaneseq
      %v2543 = vshrl.u32 %v2542, 7
      %v2544 = vsub.s32 1, %v2543
      %v2545 = vrot.slane %v2537, %v2544
      %v2546 = vlaneseq
      %v2547 = vshrl.u32 %v2546, 7
      %v2548 = vsub.s32 2, %v2547
      %v2549 = vrot.slane %v2537, %v2548
      %v2550 = vlaneseq
      %v2551 = vshrl.u32 %v2550, 7
      %v2552 = vsub.s32 3, %v2551
      %v2553 = vrot.slane %v2537, %v2552
      %v2554 = vlaneseq
      %v2555 = vshrl.u32 %v2554, 7
      %v2556 = vsub.s32 4, %v2555
      %v2557 = vrot.slane %v2537, %v2556
      %v2558 = vlaneseq
      %v2559 = vshrl.u32 %v2558, 7
      %v2560 = vsub.s32 5, %v2559
      %v2561 = vrot.slane %v2537, %v2560
      %v2562 = vlaneseq
      %v2563 = vshrl.u32 %v2562, 7
      %v2564 = vsub.s32 6, %v2563
      %v2565 = vrot.slane %v2537, %v2564
      %v2566 = vlaneseq
      %v2567 = vshrl.u32 %v2566, 7
      %v2568 = vsub.s32 7, %v2567
      %v2569 = vrot.slane %v2537, %v2568
      %vm2570 = vcmp.eq.s32.totalorder %v2541, 1
      %vm2571 = vcmp.eq.s32.totalorder %v2545, 1
      %vm2572 = vcmp.eq.s32.totalorder %v2549, 1
      %vm2573 = vcmp.eq.s32.totalorder %v2553, 1
      %vm2574 = vcmp.eq.s32.totalorder %v2557, 1
      %vm2575 = vcmp.eq.s32.totalorder %v2561, 1
      %vm2576 = vcmp.eq.s32.totalorder %v2565, 1
      %vm2577 = vcmp.eq.s32.totalorder %v2569, 1
      %2578 = vrot.lane.b32.xlu0 %v656, 112
      %v2579 = vpop.permute.xlu0 %2578
      %2580 = vrot.lane.b32.xlu0 %v657, 112
      %v2581 = vpop.permute.xlu0 %2580
      %2582 = vrot.lane.b32.xlu0 %v658, 112
      %v2583 = vpop.permute.xlu0 %2582
      %2584 = vrot.lane.b32.xlu0 %v659, 112
      %v2585 = vpop.permute.xlu0 %2584
      %2586 = vrot.lane.b32.xlu0 %v660, 112
      %v2587 = vpop.permute.xlu0 %2586
      %2588 = vrot.lane.b32.xlu0 %v661, 112
      %v2589 = vpop.permute.xlu0 %2588
      %2590 = vrot.lane.b32.xlu0 %v662, 112
      %v2591 = vpop.permute.xlu0 %2590
      %2592 = vrot.lane.b32.xlu0 %v663, 112
      %v2593 = vpop.permute.xlu0 %2592
      %v2594 = vsel %vm1606, %v2579, %v2581
      %v2595 = vsel %vm1606, %v2581, %v2583
      %v2596 = vsel %vm1606, %v2583, %v2585
      %v2597 = vsel %vm1606, %v2585, %v2587
      %v2598 = vsel %vm1606, %v2587, %v2589
      %v2599 = vsel %vm1606, %v2589, %v2591
      %v2600 = vsel %vm1606, %v2591, %v2593
      %v2609 = vsel %vm2570, %v2594, 0.0
      %v2610 = vsel %vm2571, %v2595, 0.0
      %v2611 = vsel %vm2572, %v2596, 0.0
      %v2612 = vsel %vm2573, %v2597, 0.0
      %v2613 = vsel %vm2574, %v2598, 0.0
      %v2614 = vsel %vm2575, %v2599, 0.0
      %v2615 = vsel %vm2576, %v2600, 0.0
      %v2616 = vsel %vm2577, %v2593, 0.0
      %v2617 = vpack.c.bf16 %v2609, %v2609
      %v2618 = vpack.c.bf16 %v2610, %v2610
      %v2619 = vpack.c.bf16 %v2611, %v2611
      %v2620 = vpack.c.bf16 %v2612, %v2612
      %v2621 = vpack.c.bf16 %v2613, %v2613
      %v2622 = vpack.c.bf16 %v2614, %v2614
      %v2623 = vpack.c.bf16 %v2615, %v2615
      %v2624 = vpack.c.bf16 %v2616, %v2616
      %v2633 = vunpack.c.l.b16 %v2617
      %v2634 = vunpack.c.l.b16 %v2618
      %v2635 = vunpack.c.l.b16 %v2619
      %v2636 = vunpack.c.l.b16 %v2620
      %v2637 = vunpack.c.l.b16 %v2621
      %v2638 = vunpack.c.l.b16 %v2622
      %v2639 = vunpack.c.l.b16 %v2623
      %v2640 = vunpack.c.l.b16 %v2624
      %v2641 = vpack.c.b16 %v2634, %v2633
      %v2642 = vpack.c.b16 %v2636, %v2635
      %v2643 = vpack.c.b16 %v2638, %v2637
      %v2644 = vpack.c.b16 %v2640, %v2639
      %2649 = vst [vmem:[#allocation2 + $0x200] sm:$0xff] %v2641
      %2650 = vst [vmem:[#allocation2 + $0x208] sm:$0xff] %v2642
      %2651 = vst [vmem:[#allocation2 + $0x210] sm:$0xff] %v2643
      %2652 = vst.msk [vmem:[#allocation2 + $0x218] sm:$0xff] %vm1666, %v2644
      %2653 = vst.msk [vmem:[#allocation2 + $0x21c] sm:$0xf] %vm1668, 0
      %v2654 = vsel %vm513, 1, 0
      %v2655 = vlaneseq
      %v2656 = vshrl.u32 %v2655, 7
      %v2657 = vsub.s32 0, %v2656
      %v2658 = vrot.slane %v2654, %v2657
      %v2659 = vlaneseq
      %v2660 = vshrl.u32 %v2659, 7
      %v2661 = vsub.s32 1, %v2660
      %v2662 = vrot.slane %v2654, %v2661
      %v2663 = vlaneseq
      %v2664 = vshrl.u32 %v2663, 7
      %v2665 = vsub.s32 2, %v2664
      %v2666 = vrot.slane %v2654, %v2665
      %v2667 = vlaneseq
      %v2668 = vshrl.u32 %v2667, 7
      %v2669 = vsub.s32 3, %v2668
      %v2670 = vrot.slane %v2654, %v2669
      %v2671 = vlaneseq
      %v2672 = vshrl.u32 %v2671, 7
      %v2673 = vsub.s32 4, %v2672
      %v2674 = vrot.slane %v2654, %v2673
      %v2675 = vlaneseq
      %v2676 = vshrl.u32 %v2675, 7
      %v2677 = vsub.s32 5, %v2676
      %v2678 = vrot.slane %v2654, %v2677
      %v2679 = vlaneseq
      %v2680 = vshrl.u32 %v2679, 7
      %v2681 = vsub.s32 6, %v2680
      %v2682 = vrot.slane %v2654, %v2681
      %v2683 = vlaneseq
      %v2684 = vshrl.u32 %v2683, 7
      %v2685 = vsub.s32 7, %v2684
      %v2686 = vrot.slane %v2654, %v2685
      %vm2687 = vcmp.eq.s32.totalorder %v2658, 1
      %vm2688 = vcmp.eq.s32.totalorder %v2662, 1
      %vm2689 = vcmp.eq.s32.totalorder %v2666, 1
      %vm2690 = vcmp.eq.s32.totalorder %v2670, 1
      %vm2691 = vcmp.eq.s32.totalorder %v2674, 1
      %vm2692 = vcmp.eq.s32.totalorder %v2678, 1
      %vm2693 = vcmp.eq.s32.totalorder %v2682, 1
      %vm2694 = vcmp.eq.s32.totalorder %v2686, 1
      %2695 = vrot.lane.b32.xlu0 %v656, 111
      %v2696 = vpop.permute.xlu0 %2695
      %2697 = vrot.lane.b32.xlu0 %v657, 111
      %v2698 = vpop.permute.xlu0 %2697
      %2699 = vrot.lane.b32.xlu0 %v658, 111
      %v2700 = vpop.permute.xlu0 %2699
      %2701 = vrot.lane.b32.xlu0 %v659, 111
      %v2702 = vpop.permute.xlu0 %2701
      %2703 = vrot.lane.b32.xlu0 %v660, 111
      %v2704 = vpop.permute.xlu0 %2703
      %2705 = vrot.lane.b32.xlu0 %v661, 111
      %v2706 = vpop.permute.xlu0 %2705
      %2707 = vrot.lane.b32.xlu0 %v662, 111
      %v2708 = vpop.permute.xlu0 %2707
      %2709 = vrot.lane.b32.xlu0 %v663, 111
      %v2710 = vpop.permute.xlu0 %2709
      %v2711 = vsel %vm1727, %v2696, %v2698
      %v2712 = vsel %vm1727, %v2698, %v2700
      %v2713 = vsel %vm1727, %v2700, %v2702
      %v2714 = vsel %vm1727, %v2702, %v2704
      %v2715 = vsel %vm1727, %v2704, %v2706
      %v2716 = vsel %vm1727, %v2706, %v2708
      %v2717 = vsel %vm1727, %v2708, %v2710
      %v2726 = vsel %vm2687, %v2711, 0.0
      %v2727 = vsel %vm2688, %v2712, 0.0
      %v2728 = vsel %vm2689, %v2713, 0.0
      %v2729 = vsel %vm2690, %v2714, 0.0
      %v2730 = vsel %vm2691, %v2715, 0.0
      %v2731 = vsel %vm2692, %v2716, 0.0
      %v2732 = vsel %vm2693, %v2717, 0.0
      %v2733 = vsel %vm2694, %v2710, 0.0
      %v2734 = vpack.c.bf16 %v2726, %v2726
      %v2735 = vpack.c.bf16 %v2727, %v2727
      %v2736 = vpack.c.bf16 %v2728, %v2728
      %v2737 = vpack.c.bf16 %v2729, %v2729
      %v2738 = vpack.c.bf16 %v2730, %v2730
      %v2739 = vpack.c.bf16 %v2731, %v2731
      %v2740 = vpack.c.bf16 %v2732, %v2732
      %v2741 = vpack.c.bf16 %v2733, %v2733
      %v2750 = vunpack.c.l.b16 %v2734
      %v2751 = vunpack.c.l.b16 %v2735
      %v2752 = vunpack.c.l.b16 %v2736
      %v2753 = vunpack.c.l.b16 %v2737
      %v2754 = vunpack.c.l.b16 %v2738
      %v2755 = vunpack.c.l.b16 %v2739
      %v2756 = vunpack.c.l.b16 %v2740
      %v2757 = vunpack.c.l.b16 %v2741
      %v2758 = vpack.c.b16 %v2751, %v2750
      %v2759 = vpack.c.b16 %v2753, %v2752
      %v2760 = vpack.c.b16 %v2755, %v2754
      %v2761 = vpack.c.b16 %v2757, %v2756
      %2766 = vst [vmem:[#allocation2 + $0x220] sm:$0xff] %v2758
      %2767 = vst [vmem:[#allocation2 + $0x228] sm:$0xff] %v2759
      %2768 = vst [vmem:[#allocation2 + $0x230] sm:$0xff] %v2760
      %2769 = vst.msk [vmem:[#allocation2 + $0x238] sm:$0xff] %vm1787, %v2761
      %2770 = vst.msk [vmem:[#allocation2 + $0x23c] sm:$0xf] %vm1789, 0
      %v2771 = vsel %vm515, 1, 0
      %v2772 = vlaneseq
      %v2773 = vshrl.u32 %v2772, 7
      %v2774 = vsub.s32 0, %v2773
      %v2775 = vrot.slane %v2771, %v2774
      %v2776 = vlaneseq
      %v2777 = vshrl.u32 %v2776, 7
      %v2778 = vsub.s32 1, %v2777
      %v2779 = vrot.slane %v2771, %v2778
      %v2780 = vlaneseq
      %v2781 = vshrl.u32 %v2780, 7
      %v2782 = vsub.s32 2, %v2781
      %v2783 = vrot.slane %v2771, %v2782
      %v2784 = vlaneseq
      %v2785 = vshrl.u32 %v2784, 7
      %v2786 = vsub.s32 3, %v2785
      %v2787 = vrot.slane %v2771, %v2786
      %v2788 = vlaneseq
      %v2789 = vshrl.u32 %v2788, 7
      %v2790 = vsub.s32 4, %v2789
      %v2791 = vrot.slane %v2771, %v2790
      %v2792 = vlaneseq
      %v2793 = vshrl.u32 %v2792, 7
      %v2794 = vsub.s32 5, %v2793
      %v2795 = vrot.slane %v2771, %v2794
      %v2796 = vlaneseq
      %v2797 = vshrl.u32 %v2796, 7
      %v2798 = vsub.s32 6, %v2797
      %v2799 = vrot.slane %v2771, %v2798
      %v2800 = vlaneseq
      %v2801 = vshrl.u32 %v2800, 7
      %v2802 = vsub.s32 7, %v2801
      %v2803 = vrot.slane %v2771, %v2802
      %vm2804 = vcmp.eq.s32.totalorder %v2775, 1
      %vm2805 = vcmp.eq.s32.totalorder %v2779, 1
      %vm2806 = vcmp.eq.s32.totalorder %v2783, 1
      %vm2807 = vcmp.eq.s32.totalorder %v2787, 1
      %vm2808 = vcmp.eq.s32.totalorder %v2791, 1
      %vm2809 = vcmp.eq.s32.totalorder %v2795, 1
      %vm2810 = vcmp.eq.s32.totalorder %v2799, 1
      %vm2811 = vcmp.eq.s32.totalorder %v2803, 1
      %2820 = vrot.lane.b32.xlu0 %v720, 17
      %v2821 = vpop.permute.xlu0 %2820
      %2822 = vrot.lane.b32.xlu0 %v721, 17
      %v2823 = vpop.permute.xlu0 %2822
      %2824 = vrot.lane.b32.xlu0 %v722, 17
      %v2825 = vpop.permute.xlu0 %2824
      %2826 = vrot.lane.b32.xlu0 %v723, 17
      %v2827 = vpop.permute.xlu0 %2826
      %2828 = vrot.lane.b32.xlu0 %v724, 17
      %v2829 = vpop.permute.xlu0 %2828
      %2830 = vrot.lane.b32.xlu0 %v725, 17
      %v2831 = vpop.permute.xlu0 %2830
      %2832 = vrot.lane.b32.xlu0 %v726, 17
      %v2833 = vpop.permute.xlu0 %2832
      %2834 = vrot.lane.b32.xlu0 %v727, 17
      %v2835 = vpop.permute.xlu0 %2834
      %v2836 = vsel %vm793, %v2821, %v2823
      %v2837 = vsel %vm793, %v2823, %v2825
      %v2838 = vsel %vm793, %v2825, %v2827
      %v2839 = vsel %vm793, %v2827, %v2829
      %v2840 = vsel %vm793, %v2829, %v2831
      %v2841 = vsel %vm793, %v2831, %v2833
      %v2842 = vsel %vm793, %v2833, %v2835
      %v2851 = vsel %vm2804, %v2821, 0.0
      %v2852 = vsel %vm2805, %v2836, 0.0
      %v2853 = vsel %vm2806, %v2837, 0.0
      %v2854 = vsel %vm2807, %v2838, 0.0
      %v2855 = vsel %vm2808, %v2839, 0.0
      %v2856 = vsel %vm2809, %v2840, 0.0
      %v2857 = vsel %vm2810, %v2841, 0.0
      %v2858 = vsel %vm2811, %v2842, 0.0
      %v2859 = vpack.c.bf16 %v2851, %v2851
      %v2860 = vpack.c.bf16 %v2852, %v2852
      %v2861 = vpack.c.bf16 %v2853, %v2853
      %v2862 = vpack.c.bf16 %v2854, %v2854
      %v2863 = vpack.c.bf16 %v2855, %v2855
      %v2864 = vpack.c.bf16 %v2856, %v2856
      %v2865 = vpack.c.bf16 %v2857, %v2857
      %v2866 = vpack.c.bf16 %v2858, %v2858
      %v2875 = vunpack.c.l.b16 %v2859
      %v2876 = vunpack.c.l.b16 %v2860
      %v2877 = vunpack.c.l.b16 %v2861
      %v2878 = vunpack.c.l.b16 %v2862
      %v2879 = vunpack.c.l.b16 %v2863
      %v2880 = vunpack.c.l.b16 %v2864
      %v2881 = vunpack.c.l.b16 %v2865
      %v2882 = vunpack.c.l.b16 %v2866
      %v2883 = vpack.c.b16 %v2876, %v2875
      %v2884 = vpack.c.b16 %v2878, %v2877
      %v2885 = vpack.c.b16 %v2880, %v2879
      %v2886 = vpack.c.b16 %v2882, %v2881
      %2891 = vst.msk [vmem:[#allocation2 + $0x240] sm:$0xff] %vm851, %v2883
      %2892 = vst [vmem:[#allocation2 + $0x248] sm:$0xff] %v2884
      %2893 = vst [vmem:[#allocation2 + $0x250] sm:$0xff] %v2885
      %2894 = vst [vmem:[#allocation2 + $0x258] sm:$0xff] %v2886
      %2895 = vst.msk [vmem:[#allocation2 + $0x240] sm:$0xf] %vm856, 0
      %v2896 = vsel %vm516, 1, 0
      %v2897 = vlaneseq
      %v2898 = vshrl.u32 %v2897, 7
      %v2899 = vsub.s32 0, %v2898
      %v2900 = vrot.slane %v2896, %v2899
      %v2901 = vlaneseq
      %v2902 = vshrl.u32 %v2901, 7
      %v2903 = vsub.s32 1, %v2902
      %v2904 = vrot.slane %v2896, %v2903
      %v2905 = vlaneseq
      %v2906 = vshrl.u32 %v2905, 7
      %v2907 = vsub.s32 2, %v2906
      %v2908 = vrot.slane %v2896, %v2907
      %v2909 = vlaneseq
      %v2910 = vshrl.u32 %v2909, 7
      %v2911 = vsub.s32 3, %v2910
      %v2912 = vrot.slane %v2896, %v2911
      %v2913 = vlaneseq
      %v2914 = vshrl.u32 %v2913, 7
      %v2915 = vsub.s32 4, %v2914
      %v2916 = vrot.slane %v2896, %v2915
      %v2917 = vlaneseq
      %v2918 = vshrl.u32 %v2917, 7
      %v2919 = vsub.s32 5, %v2918
      %v2920 = vrot.slane %v2896, %v2919
      %v2921 = vlaneseq
      %v2922 = vshrl.u32 %v2921, 7
      %v2923 = vsub.s32 6, %v2922
      %v2924 = vrot.slane %v2896, %v2923
      %v2925 = vlaneseq
      %v2926 = vshrl.u32 %v2925, 7
      %v2927 = vsub.s32 7, %v2926
      %v2928 = vrot.slane %v2896, %v2927
      %vm2929 = vcmp.eq.s32.totalorder %v2900, 1
      %vm2930 = vcmp.eq.s32.totalorder %v2904, 1
      %vm2931 = vcmp.eq.s32.totalorder %v2908, 1
      %vm2932 = vcmp.eq.s32.totalorder %v2912, 1
      %vm2933 = vcmp.eq.s32.totalorder %v2916, 1
      %vm2934 = vcmp.eq.s32.totalorder %v2920, 1
      %vm2935 = vcmp.eq.s32.totalorder %v2924, 1
      %vm2936 = vcmp.eq.s32.totalorder %v2928, 1
      %2937 = vrot.lane.b32.xlu0 %v720, 16
      %v2938 = vpop.permute.xlu0 %2937
      %2939 = vrot.lane.b32.xlu0 %v721, 16
      %v2940 = vpop.permute.xlu0 %2939
      %2941 = vrot.lane.b32.xlu0 %v722, 16
      %v2942 = vpop.permute.xlu0 %2941
      %2943 = vrot.lane.b32.xlu0 %v723, 16
      %v2944 = vpop.permute.xlu0 %2943
      %2945 = vrot.lane.b32.xlu0 %v724, 16
      %v2946 = vpop.permute.xlu0 %2945
      %2947 = vrot.lane.b32.xlu0 %v725, 16
      %v2948 = vpop.permute.xlu0 %2947
      %2949 = vrot.lane.b32.xlu0 %v726, 16
      %v2950 = vpop.permute.xlu0 %2949
      %2951 = vrot.lane.b32.xlu0 %v727, 16
      %v2952 = vpop.permute.xlu0 %2951
      %v2953 = vsel %vm915, %v2938, %v2940
      %v2954 = vsel %vm915, %v2940, %v2942
      %v2955 = vsel %vm915, %v2942, %v2944
      %v2956 = vsel %vm915, %v2944, %v2946
      %v2957 = vsel %vm915, %v2946, %v2948
      %v2958 = vsel %vm915, %v2948, %v2950
      %v2959 = vsel %vm915, %v2950, %v2952
      %v2968 = vsel %vm2929, %v2938, 0.0
      %v2969 = vsel %vm2930, %v2953, 0.0
      %v2970 = vsel %vm2931, %v2954, 0.0
      %v2971 = vsel %vm2932, %v2955, 0.0
      %v2972 = vsel %vm2933, %v2956, 0.0
      %v2973 = vsel %vm2934, %v2957, 0.0
      %v2974 = vsel %vm2935, %v2958, 0.0
      %v2975 = vsel %vm2936, %v2959, 0.0
      %v2976 = vpack.c.bf16 %v2968, %v2968
      %v2977 = vpack.c.bf16 %v2969, %v2969
      %v2978 = vpack.c.bf16 %v2970, %v2970
      %v2979 = vpack.c.bf16 %v2971, %v2971
      %v2980 = vpack.c.bf16 %v2972, %v2972
      %v2981 = vpack.c.bf16 %v2973, %v2973
      %v2982 = vpack.c.bf16 %v2974, %v2974
      %v2983 = vpack.c.bf16 %v2975, %v2975
      %v2992 = vunpack.c.l.b16 %v2976
      %v2993 = vunpack.c.l.b16 %v2977
      %v2994 = vunpack.c.l.b16 %v2978
      %v2995 = vunpack.c.l.b16 %v2979
      %v2996 = vunpack.c.l.b16 %v2980
      %v2997 = vunpack.c.l.b16 %v2981
      %v2998 = vunpack.c.l.b16 %v2982
      %v2999 = vunpack.c.l.b16 %v2983
      %v3000 = vpack.c.b16 %v2993, %v2992
      %v3001 = vpack.c.b16 %v2995, %v2994
      %v3002 = vpack.c.b16 %v2997, %v2996
      %v3003 = vpack.c.b16 %v2999, %v2998
      %3008 = vst.msk [vmem:[#allocation2 + $0x260] sm:$0xff] %vm972, %v3000
      %3009 = vst [vmem:[#allocation2 + $0x268] sm:$0xff] %v3001
      %3010 = vst [vmem:[#allocation2 + $0x270] sm:$0xff] %v3002
      %3011 = vst [vmem:[#allocation2 + $0x278] sm:$0xff] %v3003
      %3012 = vst.msk [vmem:[#allocation2 + $0x260] sm:$0xf] %vm977, 0
      %v3013 = vsel %vm517, 1, 0
      %v3014 = vlaneseq
      %v3015 = vshrl.u32 %v3014, 7
      %v3016 = vsub.s32 0, %v3015
      %v3017 = vrot.slane %v3013, %v3016
      %v3018 = vlaneseq
      %v3019 = vshrl.u32 %v3018, 7
      %v3020 = vsub.s32 1, %v3019
      %v3021 = vrot.slane %v3013, %v3020
      %v3022 = vlaneseq
      %v3023 = vshrl.u32 %v3022, 7
      %v3024 = vsub.s32 2, %v3023
      %v3025 = vrot.slane %v3013, %v3024
      %v3026 = vlaneseq
      %v3027 = vshrl.u32 %v3026, 7
      %v3028 = vsub.s32 3, %v3027
      %v3029 = vrot.slane %v3013, %v3028
      %v3030 = vlaneseq
      %v3031 = vshrl.u32 %v3030, 7
      %v3032 = vsub.s32 4, %v3031
      %v3033 = vrot.slane %v3013, %v3032
      %v3034 = vlaneseq
      %v3035 = vshrl.u32 %v3034, 7
      %v3036 = vsub.s32 5, %v3035
      %v3037 = vrot.slane %v3013, %v3036
      %v3038 = vlaneseq
      %v3039 = vshrl.u32 %v3038, 7
      %v3040 = vsub.s32 6, %v3039
      %v3041 = vrot.slane %v3013, %v3040
      %v3042 = vlaneseq
      %v3043 = vshrl.u32 %v3042, 7
      %v3044 = vsub.s32 7, %v3043
      %v3045 = vrot.slane %v3013, %v3044
      %vm3046 = vcmp.eq.s32.totalorder %v3017, 1
      %vm3047 = vcmp.eq.s32.totalorder %v3021, 1
      %vm3048 = vcmp.eq.s32.totalorder %v3025, 1
      %vm3049 = vcmp.eq.s32.totalorder %v3029, 1
      %vm3050 = vcmp.eq.s32.totalorder %v3033, 1
      %vm3051 = vcmp.eq.s32.totalorder %v3037, 1
      %vm3052 = vcmp.eq.s32.totalorder %v3041, 1
      %vm3053 = vcmp.eq.s32.totalorder %v3045, 1
      %3054 = vrot.lane.b32.xlu0 %v720, 15
      %v3055 = vpop.permute.xlu0 %3054
      %3056 = vrot.lane.b32.xlu0 %v721, 15
      %v3057 = vpop.permute.xlu0 %3056
      %3058 = vrot.lane.b32.xlu0 %v722, 15
      %v3059 = vpop.permute.xlu0 %3058
      %3060 = vrot.lane.b32.xlu0 %v723, 15
      %v3061 = vpop.permute.xlu0 %3060
      %3062 = vrot.lane.b32.xlu0 %v724, 15
      %v3063 = vpop.permute.xlu0 %3062
      %3064 = vrot.lane.b32.xlu0 %v725, 15
      %v3065 = vpop.permute.xlu0 %3064
      %3066 = vrot.lane.b32.xlu0 %v726, 15
      %v3067 = vpop.permute.xlu0 %3066
      %3068 = vrot.lane.b32.xlu0 %v727, 15
      %v3069 = vpop.permute.xlu0 %3068
      %v3070 = vsel %vm1036, %v3055, %v3057
      %v3071 = vsel %vm1036, %v3057, %v3059
      %v3072 = vsel %vm1036, %v3059, %v3061
      %v3073 = vsel %vm1036, %v3061, %v3063
      %v3074 = vsel %vm1036, %v3063, %v3065
      %v3075 = vsel %vm1036, %v3065, %v3067
      %v3076 = vsel %vm1036, %v3067, %v3069
      %v3085 = vsel %vm3046, %v3055, 0.0
      %v3086 = vsel %vm3047, %v3070, 0.0
      %v3087 = vsel %vm3048, %v3071, 0.0
      %v3088 = vsel %vm3049, %v3072, 0.0
      %v3089 = vsel %vm3050, %v3073, 0.0
      %v3090 = vsel %vm3051, %v3074, 0.0
      %v3091 = vsel %vm3052, %v3075, 0.0
      %v3092 = vsel %vm3053, %v3076, 0.0
      %v3093 = vpack.c.bf16 %v3085, %v3085
      %v3094 = vpack.c.bf16 %v3086, %v3086
      %v3095 = vpack.c.bf16 %v3087, %v3087
      %v3096 = vpack.c.bf16 %v3088, %v3088
      %v3097 = vpack.c.bf16 %v3089, %v3089
      %v3098 = vpack.c.bf16 %v3090, %v3090
      %v3099 = vpack.c.bf16 %v3091, %v3091
      %v3100 = vpack.c.bf16 %v3092, %v3092
      %v3109 = vunpack.c.l.b16 %v3093
      %v3110 = vunpack.c.l.b16 %v3094
      %v3111 = vunpack.c.l.b16 %v3095
      %v3112 = vunpack.c.l.b16 %v3096
      %v3113 = vunpack.c.l.b16 %v3097
      %v3114 = vunpack.c.l.b16 %v3098
      %v3115 = vunpack.c.l.b16 %v3099
      %v3116 = vunpack.c.l.b16 %v3100
      %v3117 = vpack.c.b16 %v3110, %v3109
      %v3118 = vpack.c.b16 %v3112, %v3111
      %v3119 = vpack.c.b16 %v3114, %v3113
      %v3120 = vpack.c.b16 %v3116, %v3115
      %3125 = vst.msk [vmem:[#allocation2 + $0x280] sm:$0xff] %vm1093, %v3117
      %3126 = vst [vmem:[#allocation2 + $0x288] sm:$0xff] %v3118
      %3127 = vst [vmem:[#allocation2 + $0x290] sm:$0xff] %v3119
      %3128 = vst [vmem:[#allocation2 + $0x298] sm:$0xff] %v3120
      %3129 = vst.msk [vmem:[#allocation2 + $0x280] sm:$0xf] %vm1098, 0
      %v3130 = vsel %vm518, 1, 0
      %v3131 = vlaneseq
      %v3132 = vshrl.u32 %v3131, 7
      %v3133 = vsub.s32 0, %v3132
      %v3134 = vrot.slane %v3130, %v3133
      %v3135 = vlaneseq
      %v3136 = vshrl.u32 %v3135, 7
      %v3137 = vsub.s32 1, %v3136
      %v3138 = vrot.slane %v3130, %v3137
      %v3139 = vlaneseq
      %v3140 = vshrl.u32 %v3139, 7
      %v3141 = vsub.s32 2, %v3140
      %v3142 = vrot.slane %v3130, %v3141
      %v3143 = vlaneseq
      %v3144 = vshrl.u32 %v3143, 7
      %v3145 = vsub.s32 3, %v3144
      %v3146 = vrot.slane %v3130, %v3145
      %v3147 = vlaneseq
      %v3148 = vshrl.u32 %v3147, 7
      %v3149 = vsub.s32 4, %v3148
      %v3150 = vrot.slane %v3130, %v3149
      %v3151 = vlaneseq
      %v3152 = vshrl.u32 %v3151, 7
      %v3153 = vsub.s32 5, %v3152
      %v3154 = vrot.slane %v3130, %v3153
      %v3155 = vlaneseq
      %v3156 = vshrl.u32 %v3155, 7
      %v3157 = vsub.s32 6, %v3156
      %v3158 = vrot.slane %v3130, %v3157
      %v3159 = vlaneseq
      %v3160 = vshrl.u32 %v3159, 7
      %v3161 = vsub.s32 7, %v3160
      %v3162 = vrot.slane %v3130, %v3161
      %vm3163 = vcmp.eq.s32.totalorder %v3134, 1
      %vm3164 = vcmp.eq.s32.totalorder %v3138, 1
      %vm3165 = vcmp.eq.s32.totalorder %v3142, 1
      %vm3166 = vcmp.eq.s32.totalorder %v3146, 1
      %vm3167 = vcmp.eq.s32.totalorder %v3150, 1
      %vm3168 = vcmp.eq.s32.totalorder %v3154, 1
      %vm3169 = vcmp.eq.s32.totalorder %v3158, 1
      %vm3170 = vcmp.eq.s32.totalorder %v3162, 1
      %3171 = vrot.lane.b32.xlu0 %v720, 1
      %v3172 = vpop.permute.xlu0 %3171
      %3173 = vrot.lane.b32.xlu0 %v721, 1
      %v3174 = vpop.permute.xlu0 %3173
      %3175 = vrot.lane.b32.xlu0 %v722, 1
      %v3176 = vpop.permute.xlu0 %3175
      %3177 = vrot.lane.b32.xlu0 %v723, 1
      %v3178 = vpop.permute.xlu0 %3177
      %3179 = vrot.lane.b32.xlu0 %v724, 1
      %v3180 = vpop.permute.xlu0 %3179
      %3181 = vrot.lane.b32.xlu0 %v725, 1
      %v3182 = vpop.permute.xlu0 %3181
      %3183 = vrot.lane.b32.xlu0 %v726, 1
      %v3184 = vpop.permute.xlu0 %3183
      %3185 = vrot.lane.b32.xlu0 %v727, 1
      %v3186 = vpop.permute.xlu0 %3185
      %v3187 = vsel %vm1157, %v3172, %v3174
      %v3188 = vsel %vm1157, %v3174, %v3176
      %v3189 = vsel %vm1157, %v3176, %v3178
      %v3190 = vsel %vm1157, %v3178, %v3180
      %v3191 = vsel %vm1157, %v3180, %v3182
      %v3192 = vsel %vm1157, %v3182, %v3184
      %v3193 = vsel %vm1157, %v3184, %v3186
      %v3202 = vsel %vm3163, %v3172, 0.0
      %v3203 = vsel %vm3164, %v3187, 0.0
      %v3204 = vsel %vm3165, %v3188, 0.0
      %v3205 = vsel %vm3166, %v3189, 0.0
      %v3206 = vsel %vm3167, %v3190, 0.0
      %v3207 = vsel %vm3168, %v3191, 0.0
      %v3208 = vsel %vm3169, %v3192, 0.0
      %v3209 = vsel %vm3170, %v3193, 0.0
      %v3210 = vpack.c.bf16 %v3202, %v3202
      %v3211 = vpack.c.bf16 %v3203, %v3203
      %v3212 = vpack.c.bf16 %v3204, %v3204
      %v3213 = vpack.c.bf16 %v3205, %v3205
      %v3214 = vpack.c.bf16 %v3206, %v3206
      %v3215 = vpack.c.bf16 %v3207, %v3207
      %v3216 = vpack.c.bf16 %v3208, %v3208
      %v3217 = vpack.c.bf16 %v3209, %v3209
      %v3226 = vunpack.c.l.b16 %v3210
      %v3227 = vunpack.c.l.b16 %v3211
      %v3228 = vunpack.c.l.b16 %v3212
      %v3229 = vunpack.c.l.b16 %v3213
      %v3230 = vunpack.c.l.b16 %v3214
      %v3231 = vunpack.c.l.b16 %v3215
      %v3232 = vunpack.c.l.b16 %v3216
      %v3233 = vunpack.c.l.b16 %v3217
      %v3234 = vpack.c.b16 %v3227, %v3226
      %v3235 = vpack.c.b16 %v3229, %v3228
      %v3236 = vpack.c.b16 %v3231, %v3230
      %v3237 = vpack.c.b16 %v3233, %v3232
      %3242 = vst.msk [vmem:[#allocation2 + $0x2a0] sm:$0xff] %vm1214, %v3234
      %3243 = vst [vmem:[#allocation2 + $0x2a8] sm:$0xff] %v3235
      %3244 = vst [vmem:[#allocation2 + $0x2b0] sm:$0xff] %v3236
      %3245 = vst [vmem:[#allocation2 + $0x2b8] sm:$0xff] %v3237
      %3246 = vst.msk [vmem:[#allocation2 + $0x2a0] sm:$0xf] %vm1219, 0
      %v3247 = vsel %vm502, 1, 0
      %v3248 = vlaneseq
      %v3249 = vshrl.u32 %v3248, 7
      %v3250 = vsub.s32 0, %v3249
      %v3251 = vrot.slane %v3247, %v3250
      %v3252 = vlaneseq
      %v3253 = vshrl.u32 %v3252, 7
      %v3254 = vsub.s32 1, %v3253
      %v3255 = vrot.slane %v3247, %v3254
      %v3256 = vlaneseq
      %v3257 = vshrl.u32 %v3256, 7
      %v3258 = vsub.s32 2, %v3257
      %v3259 = vrot.slane %v3247, %v3258
      %v3260 = vlaneseq
      %v3261 = vshrl.u32 %v3260, 7
      %v3262 = vsub.s32 3, %v3261
      %v3263 = vrot.slane %v3247, %v3262
      %v3264 = vlaneseq
      %v3265 = vshrl.u32 %v3264, 7
      %v3266 = vsub.s32 4, %v3265
      %v3267 = vrot.slane %v3247, %v3266
      %v3268 = vlaneseq
      %v3269 = vshrl.u32 %v3268, 7
      %v3270 = vsub.s32 5, %v3269
      %v3271 = vrot.slane %v3247, %v3270
      %v3272 = vlaneseq
      %v3273 = vshrl.u32 %v3272, 7
      %v3274 = vsub.s32 6, %v3273
      %v3275 = vrot.slane %v3247, %v3274
      %v3276 = vlaneseq
      %v3277 = vshrl.u32 %v3276, 7
      %v3278 = vsub.s32 7, %v3277
      %v3279 = vrot.slane %v3247, %v3278
      %vm3280 = vcmp.eq.s32.totalorder %v3251, 1
      %vm3281 = vcmp.eq.s32.totalorder %v3255, 1
      %vm3282 = vcmp.eq.s32.totalorder %v3259, 1
      %vm3283 = vcmp.eq.s32.totalorder %v3263, 1
      %vm3284 = vcmp.eq.s32.totalorder %v3267, 1
      %vm3285 = vcmp.eq.s32.totalorder %v3271, 1
      %vm3286 = vcmp.eq.s32.totalorder %v3275, 1
      %vm3287 = vcmp.eq.s32.totalorder %v3279, 1
      %v3288 = vsel %vm3280, %v720, 0.0
      %v3289 = vsel %vm3281, %v721, 0.0
      %v3290 = vsel %vm3282, %v722, 0.0
      %v3291 = vsel %vm3283, %v723, 0.0
      %v3292 = vsel %vm3284, %v724, 0.0
      %v3293 = vsel %vm3285, %v725, 0.0
      %v3294 = vsel %vm3286, %v726, 0.0
      %v3295 = vsel %vm3287, %v727, 0.0
      %v3296 = vpack.c.bf16 %v3288, %v3288
      %v3297 = vpack.c.bf16 %v3289, %v3289
      %v3298 = vpack.c.bf16 %v3290, %v3290
      %v3299 = vpack.c.bf16 %v3291, %v3291
      %v3300 = vpack.c.bf16 %v3292, %v3292
      %v3301 = vpack.c.bf16 %v3293, %v3293
      %v3302 = vpack.c.bf16 %v3294, %v3294
      %v3303 = vpack.c.bf16 %v3295, %v3295
      %v3312 = vunpack.c.l.b16 %v3296
      %v3313 = vunpack.c.l.b16 %v3297
      %v3314 = vunpack.c.l.b16 %v3298
      %v3315 = vunpack.c.l.b16 %v3299
      %v3316 = vunpack.c.l.b16 %v3300
      %v3317 = vunpack.c.l.b16 %v3301
      %v3318 = vunpack.c.l.b16 %v3302
      %v3319 = vunpack.c.l.b16 %v3303
      %v3320 = vpack.c.b16 %v3313, %v3312
      %v3321 = vpack.c.b16 %v3315, %v3314
      %v3322 = vpack.c.b16 %v3317, %v3316
      %v3323 = vpack.c.b16 %v3319, %v3318
      %3328 = vst [vmem:[#allocation2 + $0x2c0] sm:$0xff] %v3320
      %3329 = vst [vmem:[#allocation2 + $0x2c8] sm:$0xff] %v3321
      %3330 = vst [vmem:[#allocation2 + $0x2d0] sm:$0xff] %v3322
      %3331 = vst [vmem:[#allocation2 + $0x2d8] sm:$0xff] %v3323
      %v3332 = vsel %vm519, 1, 0
      %v3333 = vlaneseq
      %v3334 = vshrl.u32 %v3333, 7
      %v3335 = vsub.s32 0, %v3334
      %v3336 = vrot.slane %v3332, %v3335
      %v3337 = vlaneseq
      %v3338 = vshrl.u32 %v3337, 7
      %v3339 = vsub.s32 1, %v3338
      %v3340 = vrot.slane %v3332, %v3339
      %v3341 = vlaneseq
      %v3342 = vshrl.u32 %v3341, 7
      %v3343 = vsub.s32 2, %v3342
      %v3344 = vrot.slane %v3332, %v3343
      %v3345 = vlaneseq
      %v3346 = vshrl.u32 %v3345, 7
      %v3347 = vsub.s32 3, %v3346
      %v3348 = vrot.slane %v3332, %v3347
      %v3349 = vlaneseq
      %v3350 = vshrl.u32 %v3349, 7
      %v3351 = vsub.s32 4, %v3350
      %v3352 = vrot.slane %v3332, %v3351
      %v3353 = vlaneseq
      %v3354 = vshrl.u32 %v3353, 7
      %v3355 = vsub.s32 5, %v3354
      %v3356 = vrot.slane %v3332, %v3355
      %v3357 = vlaneseq
      %v3358 = vshrl.u32 %v3357, 7
      %v3359 = vsub.s32 6, %v3358
      %v3360 = vrot.slane %v3332, %v3359
      %v3361 = vlaneseq
      %v3362 = vshrl.u32 %v3361, 7
      %v3363 = vsub.s32 7, %v3362
      %v3364 = vrot.slane %v3332, %v3363
      %vm3365 = vcmp.eq.s32.totalorder %v3336, 1
      %vm3366 = vcmp.eq.s32.totalorder %v3340, 1
      %vm3367 = vcmp.eq.s32.totalorder %v3344, 1
      %vm3368 = vcmp.eq.s32.totalorder %v3348, 1
      %vm3369 = vcmp.eq.s32.totalorder %v3352, 1
      %vm3370 = vcmp.eq.s32.totalorder %v3356, 1
      %vm3371 = vcmp.eq.s32.totalorder %v3360, 1
      %vm3372 = vcmp.eq.s32.totalorder %v3364, 1
      %3373 = vrot.lane.b32.xlu0 %v720, 127
      %v3374 = vpop.permute.xlu0 %3373
      %3375 = vrot.lane.b32.xlu0 %v721, 127
      %v3376 = vpop.permute.xlu0 %3375
      %3377 = vrot.lane.b32.xlu0 %v722, 127
      %v3378 = vpop.permute.xlu0 %3377
      %3379 = vrot.lane.b32.xlu0 %v723, 127
      %v3380 = vpop.permute.xlu0 %3379
      %3381 = vrot.lane.b32.xlu0 %v724, 127
      %v3382 = vpop.permute.xlu0 %3381
      %3383 = vrot.lane.b32.xlu0 %v725, 127
      %v3384 = vpop.permute.xlu0 %3383
      %3385 = vrot.lane.b32.xlu0 %v726, 127
      %v3386 = vpop.permute.xlu0 %3385
      %3387 = vrot.lane.b32.xlu0 %v727, 127
      %v3388 = vpop.permute.xlu0 %3387
      %v3389 = vsel %vm1363, %v3374, %v3376
      %v3390 = vsel %vm1363, %v3376, %v3378
      %v3391 = vsel %vm1363, %v3378, %v3380
      %v3392 = vsel %vm1363, %v3380, %v3382
      %v3393 = vsel %vm1363, %v3382, %v3384
      %v3394 = vsel %vm1363, %v3384, %v3386
      %v3395 = vsel %vm1363, %v3386, %v3388
      %v3404 = vsel %vm3365, %v3389, 0.0
      %v3405 = vsel %vm3366, %v3390, 0.0
      %v3406 = vsel %vm3367, %v3391, 0.0
      %v3407 = vsel %vm3368, %v3392, 0.0
      %v3408 = vsel %vm3369, %v3393, 0.0
      %v3409 = vsel %vm3370, %v3394, 0.0
      %v3410 = vsel %vm3371, %v3395, 0.0
      %v3411 = vsel %vm3372, %v3388, 0.0
      %v3412 = vpack.c.bf16 %v3404, %v3404
      %v3413 = vpack.c.bf16 %v3405, %v3405
      %v3414 = vpack.c.bf16 %v3406, %v3406
      %v3415 = vpack.c.bf16 %v3407, %v3407
      %v3416 = vpack.c.bf16 %v3408, %v3408
      %v3417 = vpack.c.bf16 %v3409, %v3409
      %v3418 = vpack.c.bf16 %v3410, %v3410
      %v3419 = vpack.c.bf16 %v3411, %v3411
      %v3428 = vunpack.c.l.b16 %v3412
      %v3429 = vunpack.c.l.b16 %v3413
      %v3430 = vunpack.c.l.b16 %v3414
      %v3431 = vunpack.c.l.b16 %v3415
      %v3432 = vunpack.c.l.b16 %v3416
      %v3433 = vunpack.c.l.b16 %v3417
      %v3434 = vunpack.c.l.b16 %v3418
      %v3435 = vunpack.c.l.b16 %v3419
      %v3436 = vpack.c.b16 %v3429, %v3428
      %v3437 = vpack.c.b16 %v3431, %v3430
      %v3438 = vpack.c.b16 %v3433, %v3432
      %v3439 = vpack.c.b16 %v3435, %v3434
      %3444 = vst [vmem:[#allocation2 + $0x2e0] sm:$0xff] %v3436
      %3445 = vst [vmem:[#allocation2 + $0x2e8] sm:$0xff] %v3437
      %3446 = vst [vmem:[#allocation2 + $0x2f0] sm:$0xff] %v3438
      %3447 = vst.msk [vmem:[#allocation2 + $0x2f8] sm:$0xff] %vm1424, %v3439
      %3448 = vst.msk [vmem:[#allocation2 + $0x2fc] sm:$0xf] %vm1426, 0
      %v3449 = vsel %vm520, 1, 0
      %v3450 = vlaneseq
      %v3451 = vshrl.u32 %v3450, 7
      %v3452 = vsub.s32 0, %v3451
      %v3453 = vrot.slane %v3449, %v3452
      %v3454 = vlaneseq
      %v3455 = vshrl.u32 %v3454, 7
      %v3456 = vsub.s32 1, %v3455
      %v3457 = vrot.slane %v3449, %v3456
      %v3458 = vlaneseq
      %v3459 = vshrl.u32 %v3458, 7
      %v3460 = vsub.s32 2, %v3459
      %v3461 = vrot.slane %v3449, %v3460
      %v3462 = vlaneseq
      %v3463 = vshrl.u32 %v3462, 7
      %v3464 = vsub.s32 3, %v3463
      %v3465 = vrot.slane %v3449, %v3464
      %v3466 = vlaneseq
      %v3467 = vshrl.u32 %v3466, 7
      %v3468 = vsub.s32 4, %v3467
      %v3469 = vrot.slane %v3449, %v3468
      %v3470 = vlaneseq
      %v3471 = vshrl.u32 %v3470, 7
      %v3472 = vsub.s32 5, %v3471
      %v3473 = vrot.slane %v3449, %v3472
      %v3474 = vlaneseq
      %v3475 = vshrl.u32 %v3474, 7
      %v3476 = vsub.s32 6, %v3475
      %v3477 = vrot.slane %v3449, %v3476
      %v3478 = vlaneseq
      %v3479 = vshrl.u32 %v3478, 7
      %v3480 = vsub.s32 7, %v3479
      %v3481 = vrot.slane %v3449, %v3480
      %vm3482 = vcmp.eq.s32.totalorder %v3453, 1
      %vm3483 = vcmp.eq.s32.totalorder %v3457, 1
      %vm3484 = vcmp.eq.s32.totalorder %v3461, 1
      %vm3485 = vcmp.eq.s32.totalorder %v3465, 1
      %vm3486 = vcmp.eq.s32.totalorder %v3469, 1
      %vm3487 = vcmp.eq.s32.totalorder %v3473, 1
      %vm3488 = vcmp.eq.s32.totalorder %v3477, 1
      %vm3489 = vcmp.eq.s32.totalorder %v3481, 1
      %3490 = vrot.lane.b32.xlu0 %v720, 113
      %v3491 = vpop.permute.xlu0 %3490
      %3492 = vrot.lane.b32.xlu0 %v721, 113
      %v3493 = vpop.permute.xlu0 %3492
      %3494 = vrot.lane.b32.xlu0 %v722, 113
      %v3495 = vpop.permute.xlu0 %3494
      %3496 = vrot.lane.b32.xlu0 %v723, 113
      %v3497 = vpop.permute.xlu0 %3496
      %3498 = vrot.lane.b32.xlu0 %v724, 113
      %v3499 = vpop.permute.xlu0 %3498
      %3500 = vrot.lane.b32.xlu0 %v725, 113
      %v3501 = vpop.permute.xlu0 %3500
      %3502 = vrot.lane.b32.xlu0 %v726, 113
      %v3503 = vpop.permute.xlu0 %3502
      %3504 = vrot.lane.b32.xlu0 %v727, 113
      %v3505 = vpop.permute.xlu0 %3504
      %v3506 = vsel %vm1485, %v3491, %v3493
      %v3507 = vsel %vm1485, %v3493, %v3495
      %v3508 = vsel %vm1485, %v3495, %v3497
      %v3509 = vsel %vm1485, %v3497, %v3499
      %v3510 = vsel %vm1485, %v3499, %v3501
      %v3511 = vsel %vm1485, %v3501, %v3503
      %v3512 = vsel %vm1485, %v3503, %v3505
      %v3521 = vsel %vm3482, %v3506, 0.0
      %v3522 = vsel %vm3483, %v3507, 0.0
      %v3523 = vsel %vm3484, %v3508, 0.0
      %v3524 = vsel %vm3485, %v3509, 0.0
      %v3525 = vsel %vm3486, %v3510, 0.0
      %v3526 = vsel %vm3487, %v3511, 0.0
      %v3527 = vsel %vm3488, %v3512, 0.0
      %v3528 = vsel %vm3489, %v3505, 0.0
      %v3529 = vpack.c.bf16 %v3521, %v3521
      %v3530 = vpack.c.bf16 %v3522, %v3522
      %v3531 = vpack.c.bf16 %v3523, %v3523
      %v3532 = vpack.c.bf16 %v3524, %v3524
      %v3533 = vpack.c.bf16 %v3525, %v3525
      %v3534 = vpack.c.bf16 %v3526, %v3526
      %v3535 = vpack.c.bf16 %v3527, %v3527
      %v3536 = vpack.c.bf16 %v3528, %v3528
      %v3545 = vunpack.c.l.b16 %v3529
      %v3546 = vunpack.c.l.b16 %v3530
      %v3547 = vunpack.c.l.b16 %v3531
      %v3548 = vunpack.c.l.b16 %v3532
      %v3549 = vunpack.c.l.b16 %v3533
      %v3550 = vunpack.c.l.b16 %v3534
      %v3551 = vunpack.c.l.b16 %v3535
      %v3552 = vunpack.c.l.b16 %v3536
      %v3553 = vpack.c.b16 %v3546, %v3545
      %v3554 = vpack.c.b16 %v3548, %v3547
      %v3555 = vpack.c.b16 %v3550, %v3549
      %v3556 = vpack.c.b16 %v3552, %v3551
      %3561 = vst [vmem:[#allocation2 + $0x300] sm:$0xff] %v3553
      %3562 = vst [vmem:[#allocation2 + $0x308] sm:$0xff] %v3554
      %3563 = vst [vmem:[#allocation2 + $0x310] sm:$0xff] %v3555
      %3564 = vst.msk [vmem:[#allocation2 + $0x318] sm:$0xff] %vm1545, %v3556
      %3565 = vst.msk [vmem:[#allocation2 + $0x31c] sm:$0xf] %vm1547, 0
      %v3566 = vsel %vm521, 1, 0
      %v3567 = vlaneseq
      %v3568 = vshrl.u32 %v3567, 7
      %v3569 = vsub.s32 0, %v3568
      %v3570 = vrot.slane %v3566, %v3569
      %v3571 = vlaneseq
      %v3572 = vshrl.u32 %v3571, 7
      %v3573 = vsub.s32 1, %v3572
      %v3574 = vrot.slane %v3566, %v3573
      %v3575 = vlaneseq
      %v3576 = vshrl.u32 %v3575, 7
      %v3577 = vsub.s32 2, %v3576
      %v3578 = vrot.slane %v3566, %v3577
      %v3579 = vlaneseq
      %v3580 = vshrl.u32 %v3579, 7
      %v3581 = vsub.s32 3, %v3580
      %v3582 = vrot.slane %v3566, %v3581
      %v3583 = vlaneseq
      %v3584 = vshrl.u32 %v3583, 7
      %v3585 = vsub.s32 4, %v3584
      %v3586 = vrot.slane %v3566, %v3585
      %v3587 = vlaneseq
      %v3588 = vshrl.u32 %v3587, 7
      %v3589 = vsub.s32 5, %v3588
      %v3590 = vrot.slane %v3566, %v3589
      %v3591 = vlaneseq
      %v3592 = vshrl.u32 %v3591, 7
      %v3593 = vsub.s32 6, %v3592
      %v3594 = vrot.slane %v3566, %v3593
      %v3595 = vlaneseq
      %v3596 = vshrl.u32 %v3595, 7
      %v3597 = vsub.s32 7, %v3596
      %v3598 = vrot.slane %v3566, %v3597
      %vm3599 = vcmp.eq.s32.totalorder %v3570, 1
      %vm3600 = vcmp.eq.s32.totalorder %v3574, 1
      %vm3601 = vcmp.eq.s32.totalorder %v3578, 1
      %vm3602 = vcmp.eq.s32.totalorder %v3582, 1
      %vm3603 = vcmp.eq.s32.totalorder %v3586, 1
      %vm3604 = vcmp.eq.s32.totalorder %v3590, 1
      %vm3605 = vcmp.eq.s32.totalorder %v3594, 1
      %vm3606 = vcmp.eq.s32.totalorder %v3598, 1
      %3607 = vrot.lane.b32.xlu0 %v720, 112
      %v3608 = vpop.permute.xlu0 %3607
      %3609 = vrot.lane.b32.xlu0 %v721, 112
      %v3610 = vpop.permute.xlu0 %3609
      %3611 = vrot.lane.b32.xlu0 %v722, 112
      %v3612 = vpop.permute.xlu0 %3611
      %3613 = vrot.lane.b32.xlu0 %v723, 112
      %v3614 = vpop.permute.xlu0 %3613
      %3615 = vrot.lane.b32.xlu0 %v724, 112
      %v3616 = vpop.permute.xlu0 %3615
      %3617 = vrot.lane.b32.xlu0 %v725, 112
      %v3618 = vpop.permute.xlu0 %3617
      %3619 = vrot.lane.b32.xlu0 %v726, 112
      %v3620 = vpop.permute.xlu0 %3619
      %3621 = vrot.lane.b32.xlu0 %v727, 112
      %v3622 = vpop.permute.xlu0 %3621
      %v3623 = vsel %vm1606, %v3608, %v3610
      %v3624 = vsel %vm1606, %v3610, %v3612
      %v3625 = vsel %vm1606, %v3612, %v3614
      %v3626 = vsel %vm1606, %v3614, %v3616
      %v3627 = vsel %vm1606, %v3616, %v3618
      %v3628 = vsel %vm1606, %v3618, %v3620
      %v3629 = vsel %vm1606, %v3620, %v3622
      %v3638 = vsel %vm3599, %v3623, 0.0
      %v3639 = vsel %vm3600, %v3624, 0.0
      %v3640 = vsel %vm3601, %v3625, 0.0
      %v3641 = vsel %vm3602, %v3626, 0.0
      %v3642 = vsel %vm3603, %v3627, 0.0
      %v3643 = vsel %vm3604, %v3628, 0.0
      %v3644 = vsel %vm3605, %v3629, 0.0
      %v3645 = vsel %vm3606, %v3622, 0.0
      %v3646 = vpack.c.bf16 %v3638, %v3638
      %v3647 = vpack.c.bf16 %v3639, %v3639
      %v3648 = vpack.c.bf16 %v3640, %v3640
      %v3649 = vpack.c.bf16 %v3641, %v3641
      %v3650 = vpack.c.bf16 %v3642, %v3642
      %v3651 = vpack.c.bf16 %v3643, %v3643
      %v3652 = vpack.c.bf16 %v3644, %v3644
      %v3653 = vpack.c.bf16 %v3645, %v3645
      %v3662 = vunpack.c.l.b16 %v3646
      %v3663 = vunpack.c.l.b16 %v3647
      %v3664 = vunpack.c.l.b16 %v3648
      %v3665 = vunpack.c.l.b16 %v3649
      %v3666 = vunpack.c.l.b16 %v3650
      %v3667 = vunpack.c.l.b16 %v3651
      %v3668 = vunpack.c.l.b16 %v3652
      %v3669 = vunpack.c.l.b16 %v3653
      %v3670 = vpack.c.b16 %v3663, %v3662
      %v3671 = vpack.c.b16 %v3665, %v3664
      %v3672 = vpack.c.b16 %v3667, %v3666
      %v3673 = vpack.c.b16 %v3669, %v3668
      %3678 = vst [vmem:[#allocation2 + $0x320] sm:$0xff] %v3670
      %3679 = vst [vmem:[#allocation2 + $0x328] sm:$0xff] %v3671
      %3680 = vst [vmem:[#allocation2 + $0x330] sm:$0xff] %v3672
      %3681 = vst.msk [vmem:[#allocation2 + $0x338] sm:$0xff] %vm1666, %v3673
      %3682 = vst.msk [vmem:[#allocation2 + $0x33c] sm:$0xf] %vm1668, 0
      %v3683 = vsel %vm522, 1, 0
      %v3684 = vlaneseq
      %v3685 = vshrl.u32 %v3684, 7
      %v3686 = vsub.s32 0, %v3685
      %v3687 = vrot.slane %v3683, %v3686
      %v3688 = vlaneseq
      %v3689 = vshrl.u32 %v3688, 7
      %v3690 = vsub.s32 1, %v3689
      %v3691 = vrot.slane %v3683, %v3690
      %v3692 = vlaneseq
      %v3693 = vshrl.u32 %v3692, 7
      %v3694 = vsub.s32 2, %v3693
      %v3695 = vrot.slane %v3683, %v3694
      %v3696 = vlaneseq
      %v3697 = vshrl.u32 %v3696, 7
      %v3698 = vsub.s32 3, %v3697
      %v3699 = vrot.slane %v3683, %v3698
      %v3700 = vlaneseq
      %v3701 = vshrl.u32 %v3700, 7
      %v3702 = vsub.s32 4, %v3701
      %v3703 = vrot.slane %v3683, %v3702
      %v3704 = vlaneseq
      %v3705 = vshrl.u32 %v3704, 7
      %v3706 = vsub.s32 5, %v3705
      %v3707 = vrot.slane %v3683, %v3706
      %v3708 = vlaneseq
      %v3709 = vshrl.u32 %v3708, 7
      %v3710 = vsub.s32 6, %v3709
      %v3711 = vrot.slane %v3683, %v3710
      %v3712 = vlaneseq
      %v3713 = vshrl.u32 %v3712, 7
      %v3714 = vsub.s32 7, %v3713
      %v3715 = vrot.slane %v3683, %v3714
      %vm3716 = vcmp.eq.s32.totalorder %v3687, 1
      %vm3717 = vcmp.eq.s32.totalorder %v3691, 1
      %vm3718 = vcmp.eq.s32.totalorder %v3695, 1
      %vm3719 = vcmp.eq.s32.totalorder %v3699, 1
      %vm3720 = vcmp.eq.s32.totalorder %v3703, 1
      %vm3721 = vcmp.eq.s32.totalorder %v3707, 1
      %vm3722 = vcmp.eq.s32.totalorder %v3711, 1
      %vm3723 = vcmp.eq.s32.totalorder %v3715, 1
      %3724 = vrot.lane.b32.xlu0 %v720, 111
      %v3725 = vpop.permute.xlu0 %3724
      %3726 = vrot.lane.b32.xlu0 %v721, 111
      %v3727 = vpop.permute.xlu0 %3726
      %3728 = vrot.lane.b32.xlu0 %v722, 111
      %v3729 = vpop.permute.xlu0 %3728
      %3730 = vrot.lane.b32.xlu0 %v723, 111
      %v3731 = vpop.permute.xlu0 %3730
      %3732 = vrot.lane.b32.xlu0 %v724, 111
      %v3733 = vpop.permute.xlu0 %3732
      %3734 = vrot.lane.b32.xlu0 %v725, 111
      %v3735 = vpop.permute.xlu0 %3734
      %3736 = vrot.lane.b32.xlu0 %v726, 111
      %v3737 = vpop.permute.xlu0 %3736
      %3738 = vrot.lane.b32.xlu0 %v727, 111
      %v3739 = vpop.permute.xlu0 %3738
      %v3740 = vsel %vm1727, %v3725, %v3727
      %v3741 = vsel %vm1727, %v3727, %v3729
      %v3742 = vsel %vm1727, %v3729, %v3731
      %v3743 = vsel %vm1727, %v3731, %v3733
      %v3744 = vsel %vm1727, %v3733, %v3735
      %v3745 = vsel %vm1727, %v3735, %v3737
      %v3746 = vsel %vm1727, %v3737, %v3739
      %v3755 = vsel %vm3716, %v3740, 0.0
      %v3756 = vsel %vm3717, %v3741, 0.0
      %v3757 = vsel %vm3718, %v3742, 0.0
      %v3758 = vsel %vm3719, %v3743, 0.0
      %v3759 = vsel %vm3720, %v3744, 0.0
      %v3760 = vsel %vm3721, %v3745, 0.0
      %v3761 = vsel %vm3722, %v3746, 0.0
      %v3762 = vsel %vm3723, %v3739, 0.0
      %v3763 = vpack.c.bf16 %v3755, %v3755
      %v3764 = vpack.c.bf16 %v3756, %v3756
      %v3765 = vpack.c.bf16 %v3757, %v3757
      %v3766 = vpack.c.bf16 %v3758, %v3758
      %v3767 = vpack.c.bf16 %v3759, %v3759
      %v3768 = vpack.c.bf16 %v3760, %v3760
      %v3769 = vpack.c.bf16 %v3761, %v3761
      %v3770 = vpack.c.bf16 %v3762, %v3762
      %v3779 = vunpack.c.l.b16 %v3763
      %v3780 = vunpack.c.l.b16 %v3764
      %v3781 = vunpack.c.l.b16 %v3765
      %v3782 = vunpack.c.l.b16 %v3766
      %v3783 = vunpack.c.l.b16 %v3767
      %v3784 = vunpack.c.l.b16 %v3768
      %v3785 = vunpack.c.l.b16 %v3769
      %v3786 = vunpack.c.l.b16 %v3770
      %v3787 = vpack.c.b16 %v3780, %v3779
      %v3788 = vpack.c.b16 %v3782, %v3781
      %v3789 = vpack.c.b16 %v3784, %v3783
      %v3790 = vpack.c.b16 %v3786, %v3785
      %3795 = vst [vmem:[#allocation2 + $0x340] sm:$0xff] %v3787
      %3796 = vst [vmem:[#allocation2 + $0x348] sm:$0xff] %v3788
      %3797 = vst [vmem:[#allocation2 + $0x350] sm:$0xff] %v3789
      %3798 = vst.msk [vmem:[#allocation2 + $0x358] sm:$0xff] %vm1787, %v3790
      %3799 = vst.msk [vmem:[#allocation2 + $0x35c] sm:$0xf] %vm1789, 0
      %v3800 = vld [vmem:[%s6] sm:$0xff]
      %v3801 = vld [vmem:[#allocation2] sm:$0xff]
      %v3802 = vld [vmem:[#allocation2 + $0x8] sm:$0xff]
      %v3803 = vld [vmem:[#allocation2 + $0x10] sm:$0xff]
      %v3804 = vld [vmem:[#allocation2 + $0x18] sm:$0xff]
      %v3805 = vld [vmem:[#allocation2 + $0x20] sm:$0xff]
      %v3806 = vld [vmem:[#allocation2 + $0x28] sm:$0xff]
      %v3807 = vld [vmem:[#allocation2 + $0x30] sm:$0xff]
      %v3808 = vld [vmem:[#allocation2 + $0x38] sm:$0xff]
      %v3809 = vld [vmem:[#allocation2 + $0x40] sm:$0xff]
      %v3810 = vld [vmem:[#allocation2 + $0x48] sm:$0xff]
      %v3811 = vld [vmem:[#allocation2 + $0x50] sm:$0xff]
      %v3812 = vld [vmem:[#allocation2 + $0x58] sm:$0xff]
      %v3813 = vld [vmem:[#allocation2 + $0x60] sm:$0xff]
      %v3814 = vld [vmem:[#allocation2 + $0x68] sm:$0xff]
      %v3815 = vld [vmem:[#allocation2 + $0x70] sm:$0xff]
      %v3816 = vld [vmem:[#allocation2 + $0x78] sm:$0xff]
      %v3817 = vld [vmem:[#allocation2 + $0x80] sm:$0xff]
      %v3818 = vld [vmem:[#allocation2 + $0x88] sm:$0xff]
      %v3819 = vld [vmem:[#allocation2 + $0x90] sm:$0xff]
      %v3820 = vld [vmem:[#allocation2 + $0x98] sm:$0xff]
      %v3821 = vld [vmem:[#allocation2 + $0xa0] sm:$0xff]
      %v3822 = vld [vmem:[#allocation2 + $0xa8] sm:$0xff]
      %v3823 = vld [vmem:[#allocation2 + $0xb0] sm:$0xff]
      %v3824 = vld [vmem:[#allocation2 + $0xb8] sm:$0xff]
      %v3825 = vld [vmem:[#allocation2 + $0xc0] sm:$0xff]
      %v3826 = vld [vmem:[#allocation2 + $0xc8] sm:$0xff]
      %v3827 = vld [vmem:[#allocation2 + $0xd0] sm:$0xff]
      %v3828 = vld [vmem:[#allocation2 + $0xd8] sm:$0xff]
      %v3829 = vld [vmem:[#allocation2 + $0xe0] sm:$0xff]
      %v3830 = vld [vmem:[#allocation2 + $0xe8] sm:$0xff]
      %v3831 = vld [vmem:[#allocation2 + $0xf0] sm:$0xff]
      %v3832 = vld [vmem:[#allocation2 + $0xf8] sm:$0xff]
      %v3833 = vld [vmem:[#allocation2 + $0x100] sm:$0xff]
      %v3834 = vld [vmem:[#allocation2 + $0x108] sm:$0xff]
      %v3835 = vld [vmem:[#allocation2 + $0x110] sm:$0xff]
      %v3836 = vld [vmem:[#allocation2 + $0x118] sm:$0xff]
      %v3837 = vld [vmem:[#allocation2 + $0x120] sm:$0xff]
      %v3838 = vld [vmem:[#allocation2 + $0x128] sm:$0xff]
      %v3839 = vld [vmem:[#allocation2 + $0x130] sm:$0xff]
      %v3840 = vld [vmem:[#allocation2 + $0x138] sm:$0xff]
      %v3841 = vld [vmem:[#allocation2 + $0x140] sm:$0xff]
      %v3842 = vld [vmem:[#allocation2 + $0x148] sm:$0xff]
      %v3843 = vld [vmem:[#allocation2 + $0x150] sm:$0xff]
      %v3844 = vld [vmem:[#allocation2 + $0x158] sm:$0xff]
      %v3845 = vld [vmem:[#allocation2 + $0x160] sm:$0xff]
      %v3846 = vld [vmem:[#allocation2 + $0x168] sm:$0xff]
      %v3847 = vld [vmem:[#allocation2 + $0x170] sm:$0xff]
      %v3848 = vld [vmem:[#allocation2 + $0x178] sm:$0xff]
      %v3849 = vld [vmem:[#allocation2 + $0x180] sm:$0xff]
      %v3850 = vld [vmem:[#allocation2 + $0x188] sm:$0xff]
      %v3851 = vld [vmem:[#allocation2 + $0x190] sm:$0xff]
      %v3852 = vld [vmem:[#allocation2 + $0x198] sm:$0xff]
      %v3853 = vld [vmem:[#allocation2 + $0x1a0] sm:$0xff]
      %v3854 = vld [vmem:[#allocation2 + $0x1a8] sm:$0xff]
      %v3855 = vld [vmem:[#allocation2 + $0x1b0] sm:$0xff]
      %v3856 = vld [vmem:[#allocation2 + $0x1b8] sm:$0xff]
      %v3857 = vld [vmem:[#allocation2 + $0x1c0] sm:$0xff]
      %v3858 = vld [vmem:[#allocation2 + $0x1c8] sm:$0xff]
      %v3859 = vld [vmem:[#allocation2 + $0x1d0] sm:$0xff]
      %v3860 = vld [vmem:[#allocation2 + $0x1d8] sm:$0xff]
      %v3861 = vld [vmem:[#allocation2 + $0x1e0] sm:$0xff]
      %v3862 = vld [vmem:[#allocation2 + $0x1e8] sm:$0xff]
      %v3863 = vld [vmem:[#allocation2 + $0x1f0] sm:$0xff]
      %v3864 = vld [vmem:[#allocation2 + $0x1f8] sm:$0xff]
      %v3865 = vld [vmem:[#allocation2 + $0x200] sm:$0xff]
      %v3866 = vld [vmem:[#allocation2 + $0x208] sm:$0xff]
      %v3867 = vld [vmem:[#allocation2 + $0x210] sm:$0xff]
      %v3868 = vld [vmem:[#allocation2 + $0x218] sm:$0xff]
      %v3869 = vld [vmem:[#allocation2 + $0x220] sm:$0xff]
      %v3870 = vld [vmem:[#allocation2 + $0x228] sm:$0xff]
      %v3871 = vld [vmem:[#allocation2 + $0x230] sm:$0xff]
      %v3872 = vld [vmem:[#allocation2 + $0x238] sm:$0xff]
      %v3873 = vld [vmem:[#allocation2 + $0x240] sm:$0xff]
      %v3874 = vld [vmem:[#allocation2 + $0x248] sm:$0xff]
      %v3875 = vld [vmem:[#allocation2 + $0x250] sm:$0xff]
      %v3876 = vld [vmem:[#allocation2 + $0x258] sm:$0xff]
      %v3877 = vld [vmem:[#allocation2 + $0x260] sm:$0xff]
      %v3878 = vld [vmem:[#allocation2 + $0x268] sm:$0xff]
      %v3879 = vld [vmem:[#allocation2 + $0x270] sm:$0xff]
      %v3880 = vld [vmem:[#allocation2 + $0x278] sm:$0xff]
      %v3881 = vld [vmem:[#allocation2 + $0x280] sm:$0xff]
      %v3882 = vld [vmem:[#allocation2 + $0x288] sm:$0xff]
      %v3883 = vld [vmem:[#allocation2 + $0x290] sm:$0xff]
      %v3884 = vld [vmem:[#allocation2 + $0x298] sm:$0xff]
      %v3885 = vld [vmem:[#allocation2 + $0x2a0] sm:$0xff]
      %v3886 = vld [vmem:[#allocation2 + $0x2a8] sm:$0xff]
      %v3887 = vld [vmem:[#allocation2 + $0x2b0] sm:$0xff]
      %v3888 = vld [vmem:[#allocation2 + $0x2b8] sm:$0xff]
      %v3889 = vld [vmem:[#allocation2 + $0x2c0] sm:$0xff]
      %v3890 = vld [vmem:[#allocation2 + $0x2c8] sm:$0xff]
      %v3891 = vld [vmem:[#allocation2 + $0x2d0] sm:$0xff]
      %v3892 = vld [vmem:[#allocation2 + $0x2d8] sm:$0xff]
      %v3893 = vld [vmem:[#allocation2 + $0x2e0] sm:$0xff]
      %v3894 = vld [vmem:[#allocation2 + $0x2e8] sm:$0xff]
      %v3895 = vld [vmem:[#allocation2 + $0x2f0] sm:$0xff]
      %v3896 = vld [vmem:[#allocation2 + $0x2f8] sm:$0xff]
      %v3897 = vld [vmem:[#allocation2 + $0x300] sm:$0xff]
      %v3898 = vld [vmem:[#allocation2 + $0x308] sm:$0xff]
      %v3899 = vld [vmem:[#allocation2 + $0x310] sm:$0xff]
      %v3900 = vld [vmem:[#allocation2 + $0x318] sm:$0xff]
      %v3901 = vld [vmem:[#allocation2 + $0x320] sm:$0xff]
      %v3902 = vld [vmem:[#allocation2 + $0x328] sm:$0xff]
      %v3903 = vld [vmem:[#allocation2 + $0x330] sm:$0xff]
      %v3904 = vld [vmem:[#allocation2 + $0x338] sm:$0xff]
      %v3905 = vld [vmem:[#allocation2 + $0x340] sm:$0xff]
      %v3906 = vld [vmem:[#allocation2 + $0x348] sm:$0xff]
      %v3907 = vld [vmem:[#allocation2 + $0x350] sm:$0xff]
      %v3908 = vld [vmem:[#allocation2 + $0x358] sm:$0xff]
      %v3909 = vld [vmem:[%s7] sm:$0xff]
      %3911 = vset.pattern.permute.xlu0 0
      %3912 = vperm.xlu0 %3911, %v3909
      %v3913 = vpop.permute.xlu0 %3912
      %v3916 = vunpack.c.l.b16 %v3800
      %v3917 = vunpack.c.h.b16 %v3800
      %v3918 = vpack.c.b16 %v3916, %v3916
      %v3919 = vpack.c.b16 %v3917, %v3917
      %v4029 = vunpack.c.l.b16 %v3801
      %v4030 = vunpack.c.h.b16 %v3801
      %v4031 = vunpack.c.l.b16 %v3802
      %v4032 = vunpack.c.h.b16 %v3802
      %v4033 = vunpack.c.l.b16 %v3803
      %v4034 = vunpack.c.h.b16 %v3803
      %v4035 = vunpack.c.l.b16 %v3804
      %v4036 = vunpack.c.h.b16 %v3804
      %v4037 = vunpack.c.l.b16 %v3805
      %v4038 = vunpack.c.h.b16 %v3805
      %v4039 = vunpack.c.l.b16 %v3806
      %v4040 = vunpack.c.h.b16 %v3806
      %v4041 = vunpack.c.l.b16 %v3807
      %v4042 = vunpack.c.h.b16 %v3807
      %v4043 = vunpack.c.l.b16 %v3808
      %v4044 = vunpack.c.h.b16 %v3808
      %v4045 = vunpack.c.l.b16 %v3809
      %v4046 = vunpack.c.h.b16 %v3809
      %v4047 = vunpack.c.l.b16 %v3810
      %v4048 = vunpack.c.h.b16 %v3810
      %v4049 = vunpack.c.l.b16 %v3811
      %v4050 = vunpack.c.h.b16 %v3811
      %v4051 = vunpack.c.l.b16 %v3812
      %v4052 = vunpack.c.h.b16 %v3812
      %v4053 = vunpack.c.l.b16 %v3813
      %v4054 = vunpack.c.h.b16 %v3813
      %v4055 = vunpack.c.l.b16 %v3814
      %v4056 = vunpack.c.h.b16 %v3814
      %v4057 = vunpack.c.l.b16 %v3815
      %v4058 = vunpack.c.h.b16 %v3815
      %v4059 = vunpack.c.l.b16 %v3816
      %v4060 = vunpack.c.h.b16 %v3816
      %v4061 = vunpack.c.l.b16 %v3817
      %v4062 = vunpack.c.h.b16 %v3817
      %v4063 = vunpack.c.l.b16 %v3818
      %v4064 = vunpack.c.h.b16 %v3818
      %v4065 = vunpack.c.l.b16 %v3819
      %v4066 = vunpack.c.h.b16 %v3819
      %v4067 = vunpack.c.l.b16 %v3820
      %v4068 = vunpack.c.h.b16 %v3820
      %v4069 = vunpack.c.l.b16 %v3821
      %v4070 = vunpack.c.h.b16 %v3821
      %v4071 = vunpack.c.l.b16 %v3822
      %v4072 = vunpack.c.h.b16 %v3822
      %v4073 = vunpack.c.l.b16 %v3823
      %v4074 = vunpack.c.h.b16 %v3823
      %v4075 = vunpack.c.l.b16 %v3824
      %v4076 = vunpack.c.h.b16 %v3824
      %v4077 = vunpack.c.l.b16 %v3825
      %v4078 = vunpack.c.h.b16 %v3825
      %v4079 = vunpack.c.l.b16 %v3826
      %v4080 = vunpack.c.h.b16 %v3826
      %v4081 = vunpack.c.l.b16 %v3827
      %v4082 = vunpack.c.h.b16 %v3827
      %v4083 = vunpack.c.l.b16 %v3828
      %v4084 = vunpack.c.h.b16 %v3828
      %v4085 = vunpack.c.l.b16 %v3829
      %v4086 = vunpack.c.h.b16 %v3829
      %v4087 = vunpack.c.l.b16 %v3830
      %v4088 = vunpack.c.h.b16 %v3830
      %v4089 = vunpack.c.l.b16 %v3831
      %v4090 = vunpack.c.h.b16 %v3831
      %v4091 = vunpack.c.l.b16 %v3832
      %v4092 = vunpack.c.h.b16 %v3832
      %v4093 = vunpack.c.l.b16 %v3833
      %v4094 = vunpack.c.h.b16 %v3833
      %v4095 = vunpack.c.l.b16 %v3834
      %v4096 = vunpack.c.h.b16 %v3834
      %v4097 = vunpack.c.l.b16 %v3835
      %v4098 = vunpack.c.h.b16 %v3835
      %v4099 = vunpack.c.l.b16 %v3836
      %v4100 = vunpack.c.h.b16 %v3836
      %v4101 = vunpack.c.l.b16 %v3837
      %v4102 = vunpack.c.h.b16 %v3837
      %v4103 = vunpack.c.l.b16 %v3838
      %v4104 = vunpack.c.h.b16 %v3838
      %v4105 = vunpack.c.l.b16 %v3839
      %v4106 = vunpack.c.h.b16 %v3839
      %v4107 = vunpack.c.l.b16 %v3840
      %v4108 = vunpack.c.h.b16 %v3840
      %v4109 = vunpack.c.l.b16 %v3841
      %v4110 = vunpack.c.h.b16 %v3841
      %v4111 = vunpack.c.l.b16 %v3842
      %v4112 = vunpack.c.h.b16 %v3842
      %v4113 = vunpack.c.l.b16 %v3843
      %v4114 = vunpack.c.h.b16 %v3843
      %v4115 = vunpack.c.l.b16 %v3844
      %v4116 = vunpack.c.h.b16 %v3844
      %v4117 = vunpack.c.l.b16 %v3845
      %v4118 = vunpack.c.h.b16 %v3845
      %v4119 = vunpack.c.l.b16 %v3846
      %v4120 = vunpack.c.h.b16 %v3846
      %v4121 = vunpack.c.l.b16 %v3847
      %v4122 = vunpack.c.h.b16 %v3847
      %v4123 = vunpack.c.l.b16 %v3848
      %v4124 = vunpack.c.h.b16 %v3848
      %v4125 = vunpack.c.l.b16 %v3849
      %v4126 = vunpack.c.h.b16 %v3849
      %v4127 = vunpack.c.l.b16 %v3850
      %v4128 = vunpack.c.h.b16 %v3850
      %v4129 = vunpack.c.l.b16 %v3851
      %v4130 = vunpack.c.h.b16 %v3851
      %v4131 = vunpack.c.l.b16 %v3852
      %v4132 = vunpack.c.h.b16 %v3852
      %v4133 = vunpack.c.l.b16 %v3853
      %v4134 = vunpack.c.h.b16 %v3853
      %v4135 = vunpack.c.l.b16 %v3854
      %v4136 = vunpack.c.h.b16 %v3854
      %v4137 = vunpack.c.l.b16 %v3855
      %v4138 = vunpack.c.h.b16 %v3855
      %v4139 = vunpack.c.l.b16 %v3856
      %v4140 = vunpack.c.h.b16 %v3856
      %v4141 = vunpack.c.l.b16 %v3857
      %v4142 = vunpack.c.h.b16 %v3857
      %v4143 = vunpack.c.l.b16 %v3858
      %v4144 = vunpack.c.h.b16 %v3858
      %v4145 = vunpack.c.l.b16 %v3859
      %v4146 = vunpack.c.h.b16 %v3859
      %v4147 = vunpack.c.l.b16 %v3860
      %v4148 = vunpack.c.h.b16 %v3860
      %v4149 = vunpack.c.l.b16 %v3861
      %v4150 = vunpack.c.h.b16 %v3861
      %v4151 = vunpack.c.l.b16 %v3862
      %v4152 = vunpack.c.h.b16 %v3862
      %v4153 = vunpack.c.l.b16 %v3863
      %v4154 = vunpack.c.h.b16 %v3863
      %v4155 = vunpack.c.l.b16 %v3864
      %v4156 = vunpack.c.h.b16 %v3864
      %v4157 = vunpack.c.l.b16 %v3865
      %v4158 = vunpack.c.h.b16 %v3865
      %v4159 = vunpack.c.l.b16 %v3866
      %v4160 = vunpack.c.h.b16 %v3866
      %v4161 = vunpack.c.l.b16 %v3867
      %v4162 = vunpack.c.h.b16 %v3867
      %v4163 = vunpack.c.l.b16 %v3868
      %v4164 = vunpack.c.h.b16 %v3868
      %v4165 = vunpack.c.l.b16 %v3869
      %v4166 = vunpack.c.h.b16 %v3869
      %v4167 = vunpack.c.l.b16 %v3870
      %v4168 = vunpack.c.h.b16 %v3870
      %v4169 = vunpack.c.l.b16 %v3871
      %v4170 = vunpack.c.h.b16 %v3871
      %v4171 = vunpack.c.l.b16 %v3872
      %v4172 = vunpack.c.h.b16 %v3872
      %v4173 = vunpack.c.l.b16 %v3873
      %v4174 = vunpack.c.h.b16 %v3873
      %v4175 = vunpack.c.l.b16 %v3874
      %v4176 = vunpack.c.h.b16 %v3874
      %v4177 = vunpack.c.l.b16 %v3875
      %v4178 = vunpack.c.h.b16 %v3875
      %v4179 = vunpack.c.l.b16 %v3876
      %v4180 = vunpack.c.h.b16 %v3876
      %v4181 = vunpack.c.l.b16 %v3877
      %v4182 = vunpack.c.h.b16 %v3877
      %v4183 = vunpack.c.l.b16 %v3878
      %v4184 = vunpack.c.h.b16 %v3878
      %v4185 = vunpack.c.l.b16 %v3879
      %v4186 = vunpack.c.h.b16 %v3879
      %v4187 = vunpack.c.l.b16 %v3880
      %v4188 = vunpack.c.h.b16 %v3880
      %v4189 = vunpack.c.l.b16 %v3881
      %v4190 = vunpack.c.h.b16 %v3881
      %v4191 = vunpack.c.l.b16 %v3882
      %v4192 = vunpack.c.h.b16 %v3882
      %v4193 = vunpack.c.l.b16 %v3883
      %v4194 = vunpack.c.h.b16 %v3883
      %v4195 = vunpack.c.l.b16 %v3884
      %v4196 = vunpack.c.h.b16 %v3884
      %v4197 = vunpack.c.l.b16 %v3885
      %v4198 = vunpack.c.h.b16 %v3885
      %v4199 = vunpack.c.l.b16 %v3886
      %v4200 = vunpack.c.h.b16 %v3886
      %v4201 = vunpack.c.l.b16 %v3887
      %v4202 = vunpack.c.h.b16 %v3887
      %v4203 = vunpack.c.l.b16 %v3888
      %v4204 = vunpack.c.h.b16 %v3888
      %v4205 = vunpack.c.l.b16 %v3889
      %v4206 = vunpack.c.h.b16 %v3889
      %v4207 = vunpack.c.l.b16 %v3890
      %v4208 = vunpack.c.h.b16 %v3890
      %v4209 = vunpack.c.l.b16 %v3891
      %v4210 = vunpack.c.h.b16 %v3891
      %v4211 = vunpack.c.l.b16 %v3892
      %v4212 = vunpack.c.h.b16 %v3892
      %v4213 = vunpack.c.l.b16 %v3893
      %v4214 = vunpack.c.h.b16 %v3893
      %v4215 = vunpack.c.l.b16 %v3894
      %v4216 = vunpack.c.h.b16 %v3894
      %v4217 = vunpack.c.l.b16 %v3895
      %v4218 = vunpack.c.h.b16 %v3895
      %v4219 = vunpack.c.l.b16 %v3896
      %v4220 = vunpack.c.h.b16 %v3896
      %v4221 = vunpack.c.l.b16 %v3897
      %v4222 = vunpack.c.h.b16 %v3897
      %v4223 = vunpack.c.l.b16 %v3898
      %v4224 = vunpack.c.h.b16 %v3898
      %v4225 = vunpack.c.l.b16 %v3899
      %v4226 = vunpack.c.h.b16 %v3899
      %v4227 = vunpack.c.l.b16 %v3900
      %v4228 = vunpack.c.h.b16 %v3900
      %v4229 = vunpack.c.l.b16 %v3901
      %v4230 = vunpack.c.h.b16 %v3901
      %v4231 = vunpack.c.l.b16 %v3902
      %v4232 = vunpack.c.h.b16 %v3902
      %v4233 = vunpack.c.l.b16 %v3903
      %v4234 = vunpack.c.h.b16 %v3903
      %v4235 = vunpack.c.l.b16 %v3904
      %v4236 = vunpack.c.h.b16 %v3904
      %v4237 = vunpack.c.l.b16 %v3905
      %v4238 = vunpack.c.h.b16 %v3905
      %v4239 = vunpack.c.l.b16 %v3906
      %v4240 = vunpack.c.h.b16 %v3906
      %v4241 = vunpack.c.l.b16 %v3907
      %v4242 = vunpack.c.h.b16 %v3907
      %v4243 = vunpack.c.l.b16 %v3908
      %v4244 = vunpack.c.h.b16 %v3908
      %v4245 = vpack.c.b16 %v4037, %v4029
      %v4246 = vpack.c.b16 %v4038, %v4030
      %v4247 = vpack.c.b16 %v4039, %v4031
      %v4248 = vpack.c.b16 %v4040, %v4032
      %v4249 = vpack.c.b16 %v4041, %v4033
      %v4250 = vpack.c.b16 %v4042, %v4034
      %v4251 = vpack.c.b16 %v4043, %v4035
      %v4252 = vpack.c.b16 %v4044, %v4036
      %v4253 = vpack.c.b16 %v4053, %v4045
      %v4254 = vpack.c.b16 %v4054, %v4046
      %v4255 = vpack.c.b16 %v4055, %v4047
      %v4256 = vpack.c.b16 %v4056, %v4048
      %v4257 = vpack.c.b16 %v4057, %v4049
      %v4258 = vpack.c.b16 %v4058, %v4050
      %v4259 = vpack.c.b16 %v4059, %v4051
      %v4260 = vpack.c.b16 %v4060, %v4052
      %v4261 = vpack.c.b16 %v4069, %v4061
      %v4262 = vpack.c.b16 %v4070, %v4062
      %v4263 = vpack.c.b16 %v4071, %v4063
      %v4264 = vpack.c.b16 %v4072, %v4064
      %v4265 = vpack.c.b16 %v4073, %v4065
      %v4266 = vpack.c.b16 %v4074, %v4066
      %v4267 = vpack.c.b16 %v4075, %v4067
      %v4268 = vpack.c.b16 %v4076, %v4068
      %v4269 = vpack.c.b16 %v4085, %v4077
      %v4270 = vpack.c.b16 %v4086, %v4078
      %v4271 = vpack.c.b16 %v4087, %v4079
      %v4272 = vpack.c.b16 %v4088, %v4080
      %v4273 = vpack.c.b16 %v4089, %v4081
      %v4274 = vpack.c.b16 %v4090, %v4082
      %v4275 = vpack.c.b16 %v4091, %v4083
      %v4276 = vpack.c.b16 %v4092, %v4084
      %v4277 = vpack.c.b16 %v4101, %v4093
      %v4278 = vpack.c.b16 %v4102, %v4094
      %v4279 = vpack.c.b16 %v4103, %v4095
      %v4280 = vpack.c.b16 %v4104, %v4096
      %v4281 = vpack.c.b16 %v4105, %v4097
      %v4282 = vpack.c.b16 %v4106, %v4098
      %v4283 = vpack.c.b16 %v4107, %v4099
      %v4284 = vpack.c.b16 %v4108, %v4100
      %v4285 = vpack.c.b16 %v4117, %v4109
      %v4286 = vpack.c.b16 %v4118, %v4110
      %v4287 = vpack.c.b16 %v4119, %v4111
      %v4288 = vpack.c.b16 %v4120, %v4112
      %v4289 = vpack.c.b16 %v4121, %v4113
      %v4290 = vpack.c.b16 %v4122, %v4114
      %v4291 = vpack.c.b16 %v4123, %v4115
      %v4292 = vpack.c.b16 %v4124, %v4116
      %v4293 = vpack.c.b16 %v4133, %v4125
      %v4294 = vpack.c.b16 %v4134, %v4126
      %v4295 = vpack.c.b16 %v4135, %v4127
      %v4296 = vpack.c.b16 %v4136, %v4128
      %v4297 = vpack.c.b16 %v4137, %v4129
      %v4298 = vpack.c.b16 %v4138, %v4130
      %v4299 = vpack.c.b16 %v4139, %v4131
      %v4300 = vpack.c.b16 %v4140, %v4132
      %v4301 = vpack.c.b16 %v4149, %v4141
      %v4302 = vpack.c.b16 %v4150, %v4142
      %v4303 = vpack.c.b16 %v4151, %v4143
      %v4304 = vpack.c.b16 %v4152, %v4144
      %v4305 = vpack.c.b16 %v4153, %v4145
      %v4306 = vpack.c.b16 %v4154, %v4146
      %v4307 = vpack.c.b16 %v4155, %v4147
      %v4308 = vpack.c.b16 %v4156, %v4148
      %v4309 = vpack.c.b16 %v4165, %v4157
      %v4310 = vpack.c.b16 %v4166, %v4158
      %v4311 = vpack.c.b16 %v4167, %v4159
      %v4312 = vpack.c.b16 %v4168, %v4160
      %v4313 = vpack.c.b16 %v4169, %v4161
      %v4314 = vpack.c.b16 %v4170, %v4162
      %v4315 = vpack.c.b16 %v4171, %v4163
      %v4316 = vpack.c.b16 %v4172, %v4164
      %v4317 = vpack.c.b16 %v4181, %v4173
      %v4318 = vpack.c.b16 %v4182, %v4174
      %v4319 = vpack.c.b16 %v4183, %v4175
      %v4320 = vpack.c.b16 %v4184, %v4176
      %v4321 = vpack.c.b16 %v4185, %v4177
      %v4322 = vpack.c.b16 %v4186, %v4178
      %v4323 = vpack.c.b16 %v4187, %v4179
      %v4324 = vpack.c.b16 %v4188, %v4180
      %v4325 = vpack.c.b16 %v4197, %v4189
      %v4326 = vpack.c.b16 %v4198, %v4190
      %v4327 = vpack.c.b16 %v4199, %v4191
      %v4328 = vpack.c.b16 %v4200, %v4192
      %v4329 = vpack.c.b16 %v4201, %v4193
      %v4330 = vpack.c.b16 %v4202, %v4194
      %v4331 = vpack.c.b16 %v4203, %v4195
      %v4332 = vpack.c.b16 %v4204, %v4196
      %v4333 = vpack.c.b16 %v4213, %v4205
      %v4334 = vpack.c.b16 %v4214, %v4206
      %v4335 = vpack.c.b16 %v4215, %v4207
      %v4336 = vpack.c.b16 %v4216, %v4208
      %v4337 = vpack.c.b16 %v4217, %v4209
      %v4338 = vpack.c.b16 %v4218, %v4210
      %v4339 = vpack.c.b16 %v4219, %v4211
      %v4340 = vpack.c.b16 %v4220, %v4212
      %v4341 = vpack.c.b16 %v4229, %v4221
      %v4342 = vpack.c.b16 %v4230, %v4222
      %v4343 = vpack.c.b16 %v4231, %v4223
      %v4344 = vpack.c.b16 %v4232, %v4224
      %v4345 = vpack.c.b16 %v4233, %v4225
      %v4346 = vpack.c.b16 %v4234, %v4226
      %v4347 = vpack.c.b16 %v4235, %v4227
      %v4348 = vpack.c.b16 %v4236, %v4228
      %v4349 = vpack.c.b16 %v4237, %v4237
      %v4350 = vpack.c.b16 %v4238, %v4238
      %v4351 = vpack.c.b16 %v4239, %v4239
      %v4352 = vpack.c.b16 %v4240, %v4240
      %v4353 = vpack.c.b16 %v4241, %v4241
      %v4354 = vpack.c.b16 %v4242, %v4242
      %v4355 = vpack.c.b16 %v4243, %v4243
      %v4356 = vpack.c.b16 %v4244, %v4244
      %vm4461 = vcmask 719872
      %v4463 = vsel %vm4461, %v3919, 0
      %v4466 = vsel %vm1422, %v4349, 0
      %v4469 = vsel %vm1422, %v4350, 0
      %v4472 = vsel %vm1422, %v4351, 0
      %v4475 = vsel %vm1422, %v4352, 0
      %v4478 = vsel %vm1422, %v4353, 0
      %v4481 = vsel %vm1422, %v4354, 0
      %v4484 = vsel %vm1422, %v4355, 0
      %v4487 = vsel %vm1422, %v4356, 0
      %4489 = vmatprep.subr.bf16.mxu0 %v4246
      %4490 = vmatpush1.bf16.msra.mxu0 %v4245
      %4491 = vmatprep.subr.bf16.mxu0 %v4254
      %4492 = vmatpush1.bf16.msra.mxu0 %v4253
      %4493 = vmatprep.subr.bf16.mxu0 %v4262
      %4494 = vmatpush1.bf16.msra.mxu0 %v4261
      %4495 = vmatprep.subr.bf16.mxu0 %v4270
      %4496 = vmatpush1.bf16.msra.mxu0 %v4269
      %4497 = vmatprep.subr.bf16.mxu0 %v4278
      %4498 = vmatpush1.bf16.msra.mxu0 %v4277
      %4499 = vmatprep.subr.bf16.mxu0 %v4286
      %4500 = vmatpush1.bf16.msra.mxu0 %v4285
      %4501 = vmatprep.subr.bf16.mxu0 %v4294
      %4502 = vmatpush1.bf16.msra.mxu0 %v4293
      %4503 = vmatprep.subr.bf16.mxu0 %v4302
      %4504 = vmatpush1.bf16.msra.mxu0 %v4301
      %4505 = vmatprep.subr.bf16.mxu0 %v4310
      %4506 = vmatpush1.bf16.msra.mxu0 %v4309
      %4507 = vmatprep.subr.bf16.mxu0 %v4318
      %4508 = vmatpush1.bf16.msra.mxu0 %v4317
      %4509 = vmatprep.subr.bf16.mxu0 %v4326
      %4510 = vmatpush1.bf16.msra.mxu0 %v4325
      %4511 = vmatprep.subr.bf16.mxu0 %v4334
      %4512 = vmatpush1.bf16.msra.mxu0 %v4333
      %4513 = vmatprep.subr.bf16.mxu0 %v4342
      %4514 = vmatpush1.bf16.msra.mxu0 %v4341
      %4515 = vmatprep.subr.bf16.mxu0 %v4469
      %4516 = vmatpush1.bf16.msra.mxu0 %v4466
      %4517 = vmatprep.subr.bf16.mxu0 0
      %4518 = vmatpush1.bf16.msra.mxu0 0
      %4519 = vmatprep.subr.bf16.mxu0 0
      %4520 = vmatpush1.bf16.msra.mxu0 0
      %4521 = vmatprep.mubr.bf16.mxu0 %v4463
      %4522 = vmatmul.mubr.bf16.gmra.mrb[0].mxu0 %v3918
      %v4523 = vpop.f32.mrb[0].mxu0
      %v4524 = vadd.f32 %v3913, %v4523
      %v4525 = vpop.f32.mrb[0].mxu0
      %v4526 = vadd.f32 %v3913, %v4525
      %v4527 = vpop.f32.mrb[0].mxu0
      %v4528 = vpop.f32.mrb[0].mxu0
      %4529 = vdwg.mxu0
      %4530 = vmatprep.subr.bf16.mxu0 %v4248
      %4531 = vmatpush1.bf16.msra.mxu0 %v4247
      %4532 = vmatprep.subr.bf16.mxu0 %v4256
      %4533 = vmatpush1.bf16.msra.mxu0 %v4255
      %4534 = vmatprep.subr.bf16.mxu0 %v4264
      %4535 = vmatpush1.bf16.msra.mxu0 %v4263
      %4536 = vmatprep.subr.bf16.mxu0 %v4272
      %4537 = vmatpush1.bf16.msra.mxu0 %v4271
      %4538 = vmatprep.subr.bf16.mxu0 %v4280
      %4539 = vmatpush1.bf16.msra.mxu0 %v4279
      %4540 = vmatprep.subr.bf16.mxu0 %v4288
      %4541 = vmatpush1.bf16.msra.mxu0 %v4287
      %4542 = vmatprep.subr.bf16.mxu0 %v4296
      %4543 = vmatpush1.bf16.msra.mxu0 %v4295
      %4544 = vmatprep.subr.bf16.mxu0 %v4304
      %4545 = vmatpush1.bf16.msra.mxu0 %v4303
      %4546 = vmatprep.subr.bf16.mxu0 %v4312
      %4547 = vmatpush1.bf16.msra.mxu0 %v4311
      %4548 = vmatprep.subr.bf16.mxu0 %v4320
      %4549 = vmatpush1.bf16.msra.mxu0 %v4319
      %4550 = vmatprep.subr.bf16.mxu0 %v4328
      %4551 = vmatpush1.bf16.msra.mxu0 %v4327
      %4552 = vmatprep.subr.bf16.mxu0 %v4336
      %4553 = vmatpush1.bf16.msra.mxu0 %v4335
      %4554 = vmatprep.subr.bf16.mxu0 %v4344
      %4555 = vmatpush1.bf16.msra.mxu0 %v4343
      %4556 = vmatprep.subr.bf16.mxu0 %v4475
      %4557 = vmatpush1.bf16.msra.mxu0 %v4472
      %4558 = vmatprep.subr.bf16.mxu0 0
      %4559 = vmatpush1.bf16.msra.mxu0 0
      %4560 = vmatprep.subr.bf16.mxu0 0
      %4561 = vmatpush1.bf16.msra.mxu0 0
      %4562 = vmatprep.mubr.bf16.mxu0 %v4463
      %4563 = vmatmul.mubr.bf16.gmra.mrb[0].mxu0 %v3918
      %v4564 = vpop.f32.mrb[0].mxu0
      %v4565 = vadd.f32 %v3913, %v4564
      %v4566 = vpop.f32.mrb[0].mxu0
      %v4567 = vadd.f32 %v3913, %v4566
      %v4568 = vpop.f32.mrb[0].mxu0
      %v4569 = vpop.f32.mrb[0].mxu0
      %4570 = vdwg.mxu0
      %4571 = vmatprep.subr.bf16.mxu0 %v4250
      %4572 = vmatpush1.bf16.msra.mxu0 %v4249
      %4573 = vmatprep.subr.bf16.mxu0 %v4258
      %4574 = vmatpush1.bf16.msra.mxu0 %v4257
      %4575 = vmatprep.subr.bf16.mxu0 %v4266
      %4576 = vmatpush1.bf16.msra.mxu0 %v4265
      %4577 = vmatprep.subr.bf16.mxu0 %v4274
      %4578 = vmatpush1.bf16.msra.mxu0 %v4273
      %4579 = vmatprep.subr.bf16.mxu0 %v4282
      %4580 = vmatpush1.bf16.msra.mxu0 %v4281
      %4581 = vmatprep.subr.bf16.mxu0 %v4290
      %4582 = vmatpush1.bf16.msra.mxu0 %v4289
      %4583 = vmatprep.subr.bf16.mxu0 %v4298
      %4584 = vmatpush1.bf16.msra.mxu0 %v4297
      %4585 = vmatprep.subr.bf16.mxu0 %v4306
      %4586 = vmatpush1.bf16.msra.mxu0 %v4305
      %4587 = vmatprep.subr.bf16.mxu0 %v4314
      %4588 = vmatpush1.bf16.msra.mxu0 %v4313
      %4589 = vmatprep.subr.bf16.mxu0 %v4322
      %4590 = vmatpush1.bf16.msra.mxu0 %v4321
      %4591 = vmatprep.subr.bf16.mxu0 %v4330
      %4592 = vmatpush1.bf16.msra.mxu0 %v4329
      %4593 = vmatprep.subr.bf16.mxu0 %v4338
      %4594 = vmatpush1.bf16.msra.mxu0 %v4337
      %4595 = vmatprep.subr.bf16.mxu0 %v4346
      %4596 = vmatpush1.bf16.msra.mxu0 %v4345
      %4597 = vmatprep.subr.bf16.mxu0 %v4481
      %4598 = vmatpush1.bf16.msra.mxu0 %v4478
      %4599 = vmatprep.subr.bf16.mxu0 0
      %4600 = vmatpush1.bf16.msra.mxu0 0
      %4601 = vmatprep.subr.bf16.mxu0 0
      %4602 = vmatpush1.bf16.msra.mxu0 0
      %4603 = vmatprep.mubr.bf16.mxu0 %v4463
      %4604 = vmatmul.mubr.bf16.gmra.mrb[0].mxu0 %v3918
      %v4605 = vpop.f32.mrb[0].mxu0
      %v4606 = vadd.f32 %v3913, %v4605
      %v4607 = vpop.f32.mrb[0].mxu0
      %v4608 = vadd.f32 %v3913, %v4607
      %v4609 = vpop.f32.mrb[0].mxu0
      %v4610 = vpop.f32.mrb[0].mxu0
      %4611 = vdwg.mxu0
      %4612 = vmatprep.subr.bf16.mxu0 %v4252
      %4613 = vmatpush1.bf16.msra.mxu0 %v4251
      %4614 = vmatprep.subr.bf16.mxu0 %v4260
      %4615 = vmatpush1.bf16.msra.mxu0 %v4259
      %4616 = vmatprep.subr.bf16.mxu0 %v4268
      %4617 = vmatpush1.bf16.msra.mxu0 %v4267
      %4618 = vmatprep.subr.bf16.mxu0 %v4276
      %4619 = vmatpush1.bf16.msra.mxu0 %v4275
      %4620 = vmatprep.subr.bf16.mxu0 %v4284
      %4621 = vmatpush1.bf16.msra.mxu0 %v4283
      %4622 = vmatprep.subr.bf16.mxu0 %v4292
      %4623 = vmatpush1.bf16.msra.mxu0 %v4291
      %4624 = vmatprep.subr.bf16.mxu0 %v4300
      %4625 = vmatpush1.bf16.msra.mxu0 %v4299
      %4626 = vmatprep.subr.bf16.mxu0 %v4308
      %4627 = vmatpush1.bf16.msra.mxu0 %v4307
      %4628 = vmatprep.subr.bf16.mxu0 %v4316
      %4629 = vmatpush1.bf16.msra.mxu0 %v4315
      %4630 = vmatprep.subr.bf16.mxu0 %v4324
      %4631 = vmatpush1.bf16.msra.mxu0 %v4323
      %4632 = vmatprep.subr.bf16.mxu0 %v4332
      %4633 = vmatpush1.bf16.msra.mxu0 %v4331
      %4634 = vmatprep.subr.bf16.mxu0 %v4340
      %4635 = vmatpush1.bf16.msra.mxu0 %v4339
      %4636 = vmatprep.subr.bf16.mxu0 %v4348
      %4637 = vmatpush1.bf16.msra.mxu0 %v4347
      %4638 = vmatprep.subr.bf16.mxu0 %v4487
      %4639 = vmatpush1.bf16.msra.mxu0 %v4484
      %4640 = vmatprep.subr.bf16.mxu0 0
      %4641 = vmatpush1.bf16.msra.mxu0 0
      %4642 = vmatprep.subr.bf16.mxu0 0
      %4643 = vmatpush1.bf16.msra.mxu0 0
      %4644 = vmatprep.mubr.bf16.mxu0 %v4463
      %4645 = vmatmul.mubr.bf16.gmra.mrb[0].mxu0 %v3918
      %v4646 = vpop.f32.mrb[0].mxu0
      %v4647 = vadd.f32 %v3913, %v4646
      %v4648 = vpop.f32.mrb[0].mxu0
      %v4649 = vadd.f32 %v3913, %v4648
      %v4650 = vpop.f32.mrb[0].mxu0
      %v4651 = vpop.f32.mrb[0].mxu0
      %4652 = vdwg.mxu0
      %v4653 = vmul.f32 %v4524, 0.5
      %v4654 = vmul.f32 %v4526, 0.5
      %v4655 = vmul.f32 %v4565, 0.5
      %v4656 = vmul.f32 %v4567, 0.5
      %v4657 = vmul.f32 %v4606, 0.5
      %v4658 = vmul.f32 %v4608, 0.5
      %v4659 = vmul.f32 %v4647, 0.5
      %v4660 = vmul.f32 %v4649, 0.5
      %v4661 = vmul.f32 %v4524, %v567
      %v4662 = vmul.f32 %v4526, %v567
      %v4663 = vmul.f32 %v4565, %v567
      %v4664 = vmul.f32 %v4567, %v567
      %v4665 = vmul.f32 %v4606, %v567
      %v4666 = vmul.f32 %v4608, %v567
      %v4667 = vmul.f32 %v4647, %v567
      %v4668 = vmul.f32 %v4649, %v567
      %v4669 = verf.f32.pop %v4661
      %v4670 = verf.f32.pop %v4662
      %v4671 = verf.f32.pop %v4663
      %v4672 = verf.f32.pop %v4664
      %v4673 = verf.f32.pop %v4665
      %v4674 = verf.f32.pop %v4666
      %v4675 = verf.f32.pop %v4667
      %v4676 = verf.f32.pop %v4668
      %v4677 = vadd.f32 %v4669, 1.0
      %v4678 = vadd.f32 %v4670, 1.0
      %v4679 = vadd.f32 %v4671, 1.0
      %v4680 = vadd.f32 %v4672, 1.0
      %v4681 = vadd.f32 %v4673, 1.0
      %v4682 = vadd.f32 %v4674, 1.0
      %v4683 = vadd.f32 %v4675, 1.0
      %v4684 = vadd.f32 %v4676, 1.0
      %v4685 = vmul.f32 %v4653, %v4677
      %v4686 = vmul.f32 %v4654, %v4678
      %v4687 = vmul.f32 %v4655, %v4679
      %v4688 = vmul.f32 %v4656, %v4680
      %v4689 = vmul.f32 %v4657, %v4681
      %v4690 = vmul.f32 %v4658, %v4682
      %v4691 = vmul.f32 %v4659, %v4683
      %v4692 = vmul.f32 %v4660, %v4684
      %v4693 = vadd.f32 %v4685, %v656
      %v4694 = vadd.f32 %v4686, %v657
      %v4695 = vadd.f32 %v4687, %v658
      %v4696 = vadd.f32 %v4688, %v659
      %v4697 = vadd.f32 %v4689, %v660
      %v4698 = vadd.f32 %v4690, %v661
      %v4699 = vadd.f32 %v4691, %v662
      %v4700 = vadd.f32 %v4692, %v663
      %4701 = vst [vmem:[%s471] sm:$0xff] %v4693
      %4702 = vst [vmem:[%s471 + $0x8] sm:$0xff] %v4694
      %4703 = vst [vmem:[%s471 + $0x10] sm:$0xff] %v4695
      %4704 = vst [vmem:[%s471 + $0x18] sm:$0xff] %v4696
      %4705 = vst [vmem:[%s471 + $0x20] sm:$0xff] %v4697
      %4706 = vst [vmem:[%s471 + $0x28] sm:$0xff] %v4698
      %4707 = vst [vmem:[%s471 + $0x30] sm:$0xff] %v4699
      %4708 = vst [vmem:[%s471 + $0x38] sm:$0xff] %v4700
      %s4709 = smul.u32 8, %s24
      %p4710 = scmp.lt.s32.totalorder %s23, 1
      %s4711 = scalar_select %p4710, %s23, 1
      %p4712 = scmp.lt.s32.totalorder %s4709, 31
      %s4713 = scalar_select %p4712, %s4709, 31
      %s4714 = smul.addr %s4711, 32
      %s4715 = sadd.s32 %s4713, %s4714
      %s4716 = smul.addr %s4715, 8
      %s4717 = scalar_lea.vmem %s8, %s4716
      // Predicated region
      $region53: #{conv_ins_block.3} parent=51 // pred_check
        %p4718 = pneg %p255
      $region54: #{conv_ins_block.3} parent=51 // pred_check_branch
        %4720 = sbr.rel (%p4718) target = $region56
      $region55: #{conv_ins_block.3} parent=51 // pred_region
        %s4721 = smul.u32 8, %s24
      $region56: #{conv_ins_block.3} parent=51 // pred_fallthru
        _
    $region52: #{conv_ins_block.3} parent=5 // pred_fallthru
      _
    %p4722 = scmp.le.s32.totalorder 2, %s14
    // Predicated region
    $region57: #{conv_ins_block.3} parent=5 // pred_check
      %p4723 = pneg %p4722
    $region58: #{conv_ins_block.3} parent=5 // pred_check_branch
      %4725 = sbr.rel (%p4723) target = $region60
    $region59: #{conv_ins_block.3} parent=5 // pred_region
      %s4726 = ssub.s32 %s14, 2
      // Predicated region
      $region61: #{conv_ins_block.3} parent=59 // pred_check
        %p4727 = pneg %p261
      $region62: #{conv_ins_block.3} parent=59 // pred_check_branch
        %4729 = sbr.rel (%p4727) target = $region64
      $region63: #{conv_ins_block.3} parent=59 // pred_region
        %s4730 = smul.u32 8, %s26
        %p4731 = scmp.lt.s32.totalorder %s25, 1
        %s4732 = scalar_select %p4731, %s25, 1
        %p4733 = scmp.lt.s32.totalorder %s4730, 31
        %s4734 = scalar_select %p4733, %s4730, 31
        %s4735 = smul.addr %s4732, 32
        %s4736 = sadd.s32 %s4734, %s4735
        %s4737 = smul.addr %s4736, 8
        %s4738 = scalar_lea.vmem %s8, %s4737
      $region64: #{conv_ins_block.3} parent=59 // pred_fallthru
        _
    $region60: #{conv_ins_block.3} parent=5 // pred_fallthru
      _
  $region6: #{conv_ins_block.3} parent=0 // loop_footer
    %s18 = sadd.s32 1, %s14
  $region7: #{conv_ins_block.3} parent=0 // loop_footer_branch
    %13 = sbr.rel target = $region3
  $region8: #{conv_ins_block.3} parent=0 // loop_exit
    _

</llo_original>
